<compile_context>
chip_gen: v6e
topology: v6e:2x2x1
jax: 0.10.0
libtpu: 0.0.40
codegen_flags: <defaults>
</compile_context>

<pallas_src>
import numpy as np
import jax
import jax.numpy as jnp
from jax.experimental import pallas as pl
from jax.experimental.pallas import tpu as pltpu

SOS_INDEX = 0  # stand-in for letter2index['<sos>']


# ----------------------------------------------------------------------------
# Pallas kernel
# ----------------------------------------------------------------------------
def make_decoder_kernel(T_dec, B, E, KV, H1, BT_pad, V_pad):
    G1 = 4 * H1          # lstm1 gate width
    G2 = 4 * KV          # lstm2 gate width

    def kernel(embeds_ref, w1e_ref, b1_ref, b2_ref,
               w1combo_ref, kqw_ref, vwc_ref, maskb_ref,
               preds_ref, attns_ref, g1e_scr):
        f32 = jnp.float32
        bf16 = jnp.bfloat16

        # Small (few-vreg) loop constants may stay live; the big weight
        # matrices are deliberately NOT hoisted into SSA values — every dot
        # indexes its ref at the point of use so operands stream from VMEM
        # into the MXU without long live ranges / spills.
        mask_bias = maskb_ref[...]                                    # (B, BT_pad) f32
        b2b = jnp.broadcast_to(b2_ref[...], (B, G2))                  # hoisted broadcast

        # Loop-invariant embedding half of the lstm1 gates, b1 folded in.
        # Kept in VMEM scratch (not vregs), sliced per step.
        g1e_scr[...] = (jnp.dot(embeds_ref[...], w1e_ref[...],
                                preferred_element_type=f32)
                        + jnp.broadcast_to(b1_ref[...], (T_dec * B, G1)))

        def softmax_rows(energy):
            m = jnp.max(energy, axis=-1, keepdims=True)
            p = jnp.exp(energy - m)
            denom = jnp.sum(p, axis=-1, keepdims=True)
            return p * pl.reciprocal(denom, approx=True)              # EUP slot

        def lstm_gates_to_state(gates, c, H):
            # PyTorch LSTMCell gate order: i, f, g, o  (all f32 VPU/EUP math)
            i = jax.nn.sigmoid(gates[:, 0 * H:1 * H])
            f = jax.nn.sigmoid(gates[:, 1 * H:2 * H])
            g = jnp.tanh(gates[:, 2 * H:3 * H])
            o = jax.nn.sigmoid(gates[:, 3 * H:4 * H])
            c_new = f * c + i * g
            return o * jnp.tanh(c_new), c_new

        # hidden_states = [None, None] -> zero initial (h, c).  Cross-step
        # carries are kept in pre-multiplied form so a step never starts with
        # a matmul:
        #   ctx_gates = attn @ (value @ wih1_ctx)   (context half of gates1)
        #   h1whh1    = h1 @ whh1                   (recurrent half of gates1)
        #   h2whh2    = h2 @ whh2                   (recurrent half of gates2)
        c1 = jnp.zeros((B, H1), f32)
        c2 = jnp.zeros((B, KV), f32)
        h1whh1 = jnp.zeros((B, G1), f32)
        h2whh2 = jnp.zeros((B, G2), f32)

        # Initial attend with a zero query: energy == mask bias.
        attn0 = softmax_rows(mask_bias)
        av0 = jnp.dot(attn0.astype(bf16), vwc_ref[...],
                      preferred_element_type=f32)                     # (B, V_pad+G1)
        ctx_gates = av0[:, V_pad:]

        # Decode loop (unrolled; T_dec is a small static constant).
        for t in range(T_dec):
            # ---- lstm1: all three gate pieces already available (no matmul)
            gates1 = g1e_scr[t * B:(t + 1) * B, :] + ctx_gates + h1whh1
            h1, c1 = lstm_gates_to_state(gates1, c1, H1)

            # ---- fused push #1: h1 @ [wih2 | whh1]
            f1 = jnp.dot(h1.astype(bf16), w1combo_ref[...],
                         preferred_element_type=f32)                  # (B, G2+G1)
            h1whh1 = f1[:, G2:]                                       # for step t+1

            # ---- lstm2
            gates2 = f1[:, :G2] + h2whh2 + b2b
            h2, c2 = lstm_gates_to_state(gates2, c2, KV)

            # ---- fused push #2: h2 @ [key^T/sqrt(dk) | wout_q | whh2]
            f2 = jnp.dot(h2.astype(bf16), kqw_ref[...],
                         preferred_element_type=f32)                  # (B, BT_pad+V_pad+G2)
            energy = f2[:, :BT_pad] + mask_bias                       # f32 mask add
            logits_q = f2[:, BT_pad:BT_pad + V_pad]
            h2whh2 = f2[:, BT_pad + V_pad:]                           # for step t+1

            attn = softmax_rows(energy)                               # (B, BT_pad) f32
            attns_ref[t] = attn                                       # dense (8,128) vst

            # ---- fused push #3: attn @ [value@wout_c + bout | value@wih1_ctx]
            av = jnp.dot(attn.astype(bf16), vwc_ref[...],
                         preferred_element_type=f32)                  # (B, V_pad+G1)
            ctx_gates = av[:, V_pad:]                                 # for step t+1
            preds_ref[t] = logits_q + av[:, :V_pad]                   # dense (8,128) vst

    return kernel


# ----------------------------------------------------------------------------
# Wrapper (glue in plain JAX)
# ----------------------------------------------------------------------------
def decoder_forward(params, key, value, encoder_len, y):
    B, T_enc, KV = key.shape
    T_dec = y.shape[1]
    emb = params['embedding']                  # (V, E)
    V, E = emb.shape
    H1 = params['whh1_t'].shape[0]
    hp = jax.lax.Precision.HIGHEST

    BT = B * T_enc
    BT_pad = ((BT + 127) // 128) * 128
    V_pad = ((V + 127) // 128) * 128

    # Teacher forcing with rate 1.0: step 0 uses <sos>, step i>0 uses y[:, i-1].
    # TODO(synk): stochastic teacher forcing (np.random.rand), the inference
    #   argmax-feedback path, and attention dropout are not modeled.
    sos_embed = jnp.broadcast_to(emb[SOS_INDEX][None, :], (B, E))
    prev_tok_embed = jnp.transpose(emb[y[:, :T_dec - 1]], (1, 0, 2))     # (T_dec-1, B, E)
    embeds_flat = jnp.concatenate([sos_embed[None], prev_tok_embed],
                                  axis=0).reshape(T_dec * B, E)          # (T_dec*B, E)

    # Flattened-batch attention operands (column c = b*T_enc + t), lane-padded;
    # 1/sqrt(dk) folded into the keys.
    key_t = key.reshape(BT, KV).T * np.float32(1.0 / np.sqrt(KV))        # (KV, BT)
    value_flat = value.reshape(BT, KV)                                   # (BT, KV)
    if BT_pad != BT:
        key_t = jnp.pad(key_t, ((0, 0), (0, BT_pad - BT)))
        value_flat = jnp.pad(value_flat, ((0, BT_pad - BT), (0, 0)))

    cols = jnp.arange(BT_pad)
    valid = ((cols[None, :] < BT)
             & ((cols // T_enc)[None, :] == jnp.arange(B)[:, None])
             & ((cols % T_enc)[None, :] < encoder_len[:, None]))
    mask_bias = jnp.where(valid, 0.0, -1e30).astype(jnp.float32)         # (B, BT_pad)

    # Offline weight fusion / vocab padding.
    wih1 = params['wih1_t']                     # (E+KV, 4*H1)
    w1e, w1c = wih1[:E, :], wih1[E:, :]         # embedding / context halves
    whh1 = params['whh1_t']                     # (H1, 4*H1)
    wih2 = params['wih2_t']                     # (H1, 4*KV)
    whh2 = params['whh2_t']                     # (KV, 4*KV)
    wout = params['wout_t']                     # (2*KV, V) tied projection
    bout = params['bout']                       # (1, V)
    wout_q, wout_c = wout[:KV, :], wout[KV:, :]
    if V_pad != V:
        wout_q = jnp.pad(wout_q, ((0, 0), (0, V_pad - V)))
        wout_c = jnp.pad(wout_c, ((0, 0), (0, V_pad - V)))
        bout = jnp.pad(bout, ((0, 0), (0, V_pad - V)))

    # Fused per-step matmul operands (see kernel docstring).
    kqw = jnp.concatenate([key_t, wout_q, whh2], axis=1)        # (KV, BT_pad+V_pad+4*KV)
    w1combo = jnp.concatenate([wih2, whh1], axis=1)             # (H1, 4*KV+4*H1)
    # Pre-multiply value through both consumers of the attention context so the
    # context never needs to be materialized; fold bout in (rows of attn sum to 1).
    vwc = jnp.dot(value_flat, jnp.concatenate([wout_c, w1c], axis=1), precision=hp)
    vwc = vwc.at[:, :V_pad].add(bout)                           # (BT_pad, V_pad+4*H1)

    bf = lambda a: a.astype(jnp.bfloat16)      # MXU operands bf16, f32 accumulate

    kernel = make_decoder_kernel(T_dec, B, E, KV, H1, BT_pad, V_pad)
    vmem = pl.BlockSpec(memory_space=pltpu.MemorySpace.VMEM)
    preds, attns = pl.pallas_call(
        kernel,
        out_shape=(jax.ShapeDtypeStruct((T_dec, B, V_pad), jnp.float32),
                   jax.ShapeDtypeStruct((T_dec, B, BT_pad), jnp.float32)),
        in_specs=[vmem] * 8,
        out_specs=(vmem, vmem),
        scratch_shapes=[pltpu.VMEM((T_dec * B, 4 * H1), jnp.float32)],
        compiler_params=pltpu.CompilerParams(vmem_limit_bytes=8 * 1024 * 1024),
    )(bf(embeds_flat), bf(w1e), params['b1'], params['b2'],
      bf(w1combo), bf(kqw), bf(vwc), mask_bias)

    predictions = jnp.transpose(preds[:, :, :V], (1, 0, 2))   # (B, max_len, vocab_size)
    attentions = attns[:, 0, :T_enc]                          # stack of batch-0 attn rows
    return predictions, attentions


# ----------------------------------------------------------------------------
# Pure-JAX reference (same math, XLA path, f32 HIGHEST) for correctness checking
# ----------------------------------------------------------------------------
def decoder_reference(params, key, value, encoder_len, y):
    hp = jax.lax.Precision.HIGHEST
    B, T_enc, KV = key.shape
    T_dec = y.shape[1]
    emb = params['embedding']
    V, E = emb.shape
    H1 = params['whh1_t'].shape[0]
    mask = jnp.arange(T_enc)[None, :] < encoder_len[:, None]

    def attend(q):
        energy = jnp.einsum('bd,btd->bt', q, key, precision=hp) / np.sqrt(KV)
        energy = jnp.where(mask, energy, -1e30)
        attn = jax.nn.softmax(energy, axis=-1)
        ctx = jnp.einsum('bt,btd->bd', attn, value, precision=hp)
        return ctx, attn

    def cell(x, h, c, wih_t, whh_t, b, H):
        gates = (jnp.dot(x, wih_t, precision=hp) + jnp.dot(h, whh_t, precision=hp) + b)
        i = jax.nn.sigmoid(gates[:, 0 * H:1 * H])
        f = jax.nn.sigmoid(gates[:, 1 * H:2 * H])
        g = jnp.tanh(gates[:, 2 * H:3 * H])
        o = jax.nn.sigmoid(gates[:, 3 * H:4 * H])
        c_new = f * c + i * g
        return o * jnp.tanh(c_new), c_new

    h1 = jnp.zeros((B, H1)); c1 = jnp.zeros((B, H1))
    h2 = jnp.zeros((B, KV)); c2 = jnp.zeros((B, KV))
    context, _ = attend(jnp.zeros((B, KV)))

    preds, attn_plot = [], []
    for t in range(T_dec):
        char_embed = emb[jnp.full((B,), SOS_INDEX)] if t == 0 else emb[y[:, t - 1]]
        x = jnp.concatenate([char_embed, context], axis=1)
        h1, c1 = cell(x, h1, c1, params['wih1_t'], params['whh1_t'], params['b1'], H1)
        h2, c2 = cell(h1, h2, c2, params['wih2_t'], params['whh2_t'], params['b2'], KV)
        context, attn = attend(h2)
        attn_plot.append(attn[0])
        oc = jnp.concatenate([h2, context], axis=1)
        preds.append(jnp.dot(oc, params['wout_t'], precision=hp) + params['bout'])
    return jnp.stack(preds, axis=1), jnp.stack(attn_plot, axis=0)


# ----------------------------------------------------------------------------
# Deterministic parameter init (shapes from Decoder.__init__)
# ----------------------------------------------------------------------------
def init_params(rng, vocab_size, decoder_hidden_dim, embed_dim, key_value_size):
    # weight tying (character_prob.weight = embedding.weight) requires this:
    assert embed_dim == 2 * key_value_size
    V, E, H1, KV = vocab_size, embed_dim, decoder_hidden_dim, key_value_size
    ks = jax.random.split(rng, 8)

    def norm(k, shape, fan_in):
        return (jax.random.normal(k, shape, jnp.float32) / np.sqrt(fan_in)).astype(jnp.float32)

    embedding = norm(ks[0], (V, E), E)
    return dict(
        embedding=embedding,                       # nn.Embedding(V, E)
        wih1_t=norm(ks[1], (E + KV, 4 * H1), H1),  # LSTMCell1 W_ih^T
        whh1_t=norm(ks[2], (H1, 4 * H1), H1),      # LSTMCell1 W_hh^T
        b1=norm(ks[3], (1, 4 * H1), H1),           # b_ih + b_hh (combined)
        wih2_t=norm(ks[4], (H1, 4 * KV), KV),      # LSTMCell2 W_ih^T
        whh2_t=norm(ks[5], (KV, 4 * KV), KV),      # LSTMCell2 W_hh^T
        b2=norm(ks[6], (1, 4 * KV), KV),
        wout_t=embedding.T,                        # tied output projection (2*KV, V)
        bout=norm(ks[7], (1, V), 2 * KV),
    )


if __name__ == "__main__":
    B, T_enc, T_dec = 8, 16, 6
    KV, H1, E, V = 128, 128, 256, 40   # key_value_size, decoder_hidden_dim, embed_dim, vocab

    rng = jax.random.PRNGKey(0)
    r_par, r_key, r_val, r_y = jax.random.split(rng, 4)
    params = init_params(r_par, V, H1, E, KV)

    key = jax.random.normal(r_key, (B, T_enc, KV), jnp.float32)
    value = jax.random.normal(r_val, (B, T_enc, KV), jnp.float32)
    y = jax.random.randint(r_y, (B, T_dec), 0, V)
    encoder_len = jnp.array([16, 13, 10, 7, 16, 5, 12, 9], jnp.int32)

    preds, attns = decoder_forward(params, key, value, encoder_len, y)
    jax.block_until_ready((preds, attns))

    ref_p, ref_a = decoder_reference(params, key, value, encoder_len, y)
    assert preds.shape == (B, T_dec, V) and attns.shape == (T_dec, T_enc)
    # Tolerance 2e-2 (was 1e-2 for the all-f32 kernel): MXU operands are now
    # bf16 per the perf review; softmax / mask / LSTM state math remains f32.
    np.testing.assert_allclose(np.asarray(preds), np.asarray(ref_p), rtol=2e-2, atol=2e-2)
    np.testing.assert_allclose(np.asarray(attns), np.asarray(ref_a), rtol=2e-2, atol=2e-2)
    print("KERNEL_OK")
</pallas_src>

<mosaic_0001>
module attributes {stable_mosaic.version = 11 : i64} {
  func.func @kernel(%arg0: memref<48x256xbf16, #tpu.memory_space<vmem>>, %arg1: memref<256x512xbf16, #tpu.memory_space<vmem>>, %arg2: memref<1x512xf32, #tpu.memory_space<vmem>>, %arg3: memref<1x512xf32, #tpu.memory_space<vmem>>, %arg4: memref<128x1024xbf16, #tpu.memory_space<vmem>>, %arg5: memref<128x768xbf16, #tpu.memory_space<vmem>>, %arg6: memref<128x640xbf16, #tpu.memory_space<vmem>>, %arg7: memref<8x128xf32, #tpu.memory_space<vmem>>, %arg8: memref<6x8x128xf32, #tpu.memory_space<vmem>>, %arg9: memref<6x8x128xf32, #tpu.memory_space<vmem>>, %arg10: memref<48x512xf32, #tpu.memory_space<vmem>>) attributes {dimension_semantics = [], scalar_prefetch = 0 : i64, scratch_operands = 1 : i64, tpu.core_type = #tpu.core_type<tc>} {
    %c0 = arith.constant 0 : index
    %c0_0 = arith.constant 0 : index
    %0 = vector.load %arg7[%c0, %c0_0] : memref<8x128xf32, #tpu.memory_space<vmem>>, vector<8x128xf32>
    %c0_1 = arith.constant 0 : index
    %c0_2 = arith.constant 0 : index
    %1 = vector.load %arg3[%c0_1, %c0_2] : memref<1x512xf32, #tpu.memory_space<vmem>>, vector<1x512xf32>
    %2 = vector.shape_cast %1 : vector<1x512xf32> to vector<1x512xf32>
    %3 = vector.broadcast %2 : vector<1x512xf32> to vector<8x512xf32>
    %c0_3 = arith.constant 0 : index
    %c0_4 = arith.constant 0 : index
    %4 = vector.load %arg0[%c0_3, %c0_4] : memref<48x256xbf16, #tpu.memory_space<vmem>>, vector<48x256xbf16>
    %c0_5 = arith.constant 0 : index
    %c0_6 = arith.constant 0 : index
    %5 = vector.load %arg1[%c0_5, %c0_6] : memref<256x512xbf16, #tpu.memory_space<vmem>>, vector<256x512xbf16>
    %cst = arith.constant dense<0.000000e+00> : vector<48x512xf32>
    %6 = tpu.matmul %4, %5, %cst {dimension_numbers = #tpu.dot_dimension_numbers<[1], [0], [0], [1], [0, 0, 1, 1], [], []>} : vector<48x256xbf16>, vector<256x512xbf16>, vector<48x512xf32> -> vector<48x512xf32>
    %c0_7 = arith.constant 0 : index
    %c0_8 = arith.constant 0 : index
    %7 = vector.load %arg2[%c0_7, %c0_8] : memref<1x512xf32, #tpu.memory_space<vmem>>, vector<1x512xf32>
    %8 = vector.shape_cast %7 : vector<1x512xf32> to vector<1x512xf32>
    %9 = vector.broadcast %8 : vector<1x512xf32> to vector<48x512xf32>
    %10 = arith.addf %6, %9 : vector<48x512xf32>
    %c0_9 = arith.constant 0 : index
    %c0_10 = arith.constant 0 : index
    %11 = vector.load %arg10[%c0_9, %c0_10] : memref<48x512xf32, #tpu.memory_space<vmem>>, vector<48x512xf32>
    tpu.vector_store %arg10[%c0_9, %c0_10], %10 {strides = array<i32>} : memref<48x512xf32, #tpu.memory_space<vmem>>, vector<48x512xf32>,
    %cst_11 = arith.constant 0.000000e+00 : f32
    %12 = vector.broadcast %cst_11 : f32 to vector<8x128xf32>
    %cst_12 = arith.constant 0.000000e+00 : f32
    %13 = vector.broadcast %cst_12 : f32 to vector<8x128xf32>
    %cst_13 = arith.constant 0.000000e+00 : f32
    %14 = vector.broadcast %cst_13 : f32 to vector<8x512xf32>
    %cst_14 = arith.constant 0.000000e+00 : f32
    %15 = vector.broadcast %cst_14 : f32 to vector<8x512xf32>
    %cst_15 = arith.constant dense<0xFF800000> : vector<8xf32>
    %16 = vector.multi_reduction <maximumf>, %0, %cst_15 [1] : vector<8x128xf32> to vector<8xf32>
    %17 = vector.shape_cast %16 : vector<8xf32> to vector<8x1xf32>
    %18 = vector.broadcast %17 : vector<8x1xf32> to vector<8x128xf32>
    %19 = arith.subf %0, %18 : vector<8x128xf32>
    %20 = math.exp %19 : vector<8x128xf32>
    %cst_16 = arith.constant dense<0.000000e+00> : vector<8xf32>
    %21 = vector.multi_reduction <add>, %20, %cst_16 [1] : vector<8x128xf32> to vector<8xf32>
    %22 = vector.shape_cast %21 : vector<8xf32> to vector<8x1xf32>
    %23 = tpu.reciprocal %22 {approx = true} : vector<8x1xf32> -> vector<8x1xf32>
    %24 = vector.broadcast %23 : vector<8x1xf32> to vector<8x128xf32>
    %25 = arith.mulf %20, %24 : vector<8x128xf32>
    %26 = arith.truncf %25 : vector<8x128xf32> to vector<8x128xbf16>
    %c0_17 = arith.constant 0 : index
    %c0_18 = arith.constant 0 : index
    %27 = vector.load %arg6[%c0_17, %c0_18] : memref<128x640xbf16, #tpu.memory_space<vmem>>, vector<128x640xbf16>
    %cst_19 = arith.constant dense<0.000000e+00> : vector<8x640xf32>
    %28 = tpu.matmul %26, %27, %cst_19 {dimension_numbers = #tpu.dot_dimension_numbers<[1], [0], [0], [1], [0, 0, 1, 1], [], []>} : vector<8x128xbf16>, vector<128x640xbf16>, vector<8x640xf32> -> vector<8x640xf32>
    %29 = vector.extract_strided_slice %28 {offsets = [0, 128], sizes = [8, 512], strides = [1, 1]} : vector<8x640xf32> to vector<8x512xf32>
    %c0_20 = arith.constant 0 : index
    %c0_21 = arith.constant 0 : index
    %30 = vector.load %arg10[%c0_20, %c0_21] : memref<48x512xf32, #tpu.memory_space<vmem>>, vector<8x512xf32>
    %31 = arith.addf %30, %29 : vector<8x512xf32>
    %32 = arith.addf %31, %14 : vector<8x512xf32>
    %33 = vector.extract_strided_slice %32 {offsets = [0, 0], sizes = [8, 128], strides = [1, 1]} : vector<8x512xf32> to vector<8x128xf32>
    %34 = arith.negf %33 : vector<8x128xf32>
    %35 = math.exp %34 : vector<8x128xf32>
    %cst_22 = arith.constant 1.000000e+00 : f32
    %36 = vector.broadcast %cst_22 : f32 to vector<8x128xf32>
    %37 = arith.addf %36, %35 : vector<8x128xf32>
    %38 = arith.divf %36, %37 : vector<8x128xf32>
    %39 = vector.extract_strided_slice %32 {offsets = [0, 128], sizes = [8, 128], strides = [1, 1]} : vector<8x512xf32> to vector<8x128xf32>
    %40 = arith.negf %39 : vector<8x128xf32>
    %41 = math.exp %40 : vector<8x128xf32>
    %cst_23 = arith.constant 1.000000e+00 : f32
    %42 = vector.broadcast %cst_23 : f32 to vector<8x128xf32>
    %43 = arith.addf %42, %41 : vector<8x128xf32>
    %44 = arith.divf %42, %43 : vector<8x128xf32>
    %45 = vector.extract_strided_slice %32 {offsets = [0, 256], sizes = [8, 128], strides = [1, 1]} : vector<8x512xf32> to vector<8x128xf32>
    %46 = math.tanh %45 : vector<8x128xf32>
    %47 = vector.extract_strided_slice %32 {offsets = [0, 384], sizes = [8, 128], strides = [1, 1]} : vector<8x512xf32> to vector<8x128xf32>
    %48 = arith.negf %47 : vector<8x128xf32>
    %49 = math.exp %48 : vector<8x128xf32>
    %cst_24 = arith.constant 1.000000e+00 : f32
    %50 = vector.broadcast %cst_24 : f32 to vector<8x128xf32>
    %51 = arith.addf %50, %49 : vector<8x128xf32>
    %52 = arith.divf %50, %51 : vector<8x128xf32>
    %53 = arith.mulf %44, %12 : vector<8x128xf32>
    %54 = arith.mulf %38, %46 : vector<8x128xf32>
    %55 = arith.addf %53, %54 : vector<8x128xf32>
    %56 = math.tanh %55 : vector<8x128xf32>
    %57 = arith.mulf %52, %56 : vector<8x128xf32>
    %58 = arith.truncf %57 : vector<8x128xf32> to vector<8x128xbf16>
    %c0_25 = arith.constant 0 : index
    %c0_26 = arith.constant 0 : index
    %59 = vector.load %arg4[%c0_25, %c0_26] : memref<128x1024xbf16, #tpu.memory_space<vmem>>, vector<128x1024xbf16>
    %cst_27 = arith.constant dense<0.000000e+00> : vector<8x1024xf32>
    %60 = tpu.matmul %58, %59, %cst_27 {dimension_numbers = #tpu.dot_dimension_numbers<[1], [0], [0], [1], [0, 0, 1, 1], [], []>} : vector<8x128xbf16>, vector<128x1024xbf16>, vector<8x1024xf32> -> vector<8x1024xf32>
    %61 = vector.extract_strided_slice %60 {offsets = [0, 512], sizes = [8, 512], strides = [1, 1]} : vector<8x1024xf32> to vector<8x512xf32>
    %62 = vector.extract_strided_slice %60 {offsets = [0, 0], sizes = [8, 512], strides = [1, 1]} : vector<8x1024xf32> to vector<8x512xf32>
    %63 = arith.addf %62, %15 : vector<8x512xf32>
    %64 = arith.addf %63, %3 : vector<8x512xf32>
    %65 = vector.extract_strided_slice %64 {offsets = [0, 0], sizes = [8, 128], strides = [1, 1]} : vector<8x512xf32> to vector<8x128xf32>
    %66 = arith.negf %65 : vector<8x128xf32>
    %67 = math.exp %66 : vector<8x128xf32>
    %cst_28 = arith.constant 1.000000e+00 : f32
    %68 = vector.broadcast %cst_28 : f32 to vector<8x128xf32>
    %69 = arith.addf %68, %67 : vector<8x128xf32>
    %70 = arith.divf %68, %69 : vector<8x128xf32>
    %71 = vector.extract_strided_slice %64 {offsets = [0, 128], sizes = [8, 128], strides = [1, 1]} : vector<8x512xf32> to vector<8x128xf32>
    %72 = arith.negf %71 : vector<8x128xf32>
    %73 = math.exp %72 : vector<8x128xf32>
    %cst_29 = arith.constant 1.000000e+00 : f32
    %74 = vector.broadcast %cst_29 : f32 to vector<8x128xf32>
    %75 = arith.addf %74, %73 : vector<8x128xf32>
    %76 = arith.divf %74, %75 : vector<8x128xf32>
    %77 = vector.extract_strided_slice %64 {offsets = [0, 256], sizes = [8, 128], strides = [1, 1]} : vector<8x512xf32> to vector<8x128xf32>
    %78 = math.tanh %77 : vector<8x128xf32>
    %79 = vector.extract_strided_slice %64 {offsets = [0, 384], sizes = [8, 128], strides = [1, 1]} : vector<8x512xf32> to vector<8x128xf32>
    %80 = arith.negf %79 : vector<8x128xf32>
    %81 = math.exp %80 : vector<8x128xf32>
    %cst_30 = arith.constant 1.000000e+00 : f32
    %82 = vector.broadcast %cst_30 : f32 to vector<8x128xf32>
    %83 = arith.addf %82, %81 : vector<8x128xf32>
    %84 = arith.divf %82, %83 : vector<8x128xf32>
    %85 = arith.mulf %76, %13 : vector<8x128xf32>
    %86 = arith.mulf %70, %78 : vector<8x128xf32>
    %87 = arith.addf %85, %86 : vector<8x128xf32>
    %88 = math.tanh %87 : vector<8x128xf32>
    %89 = arith.mulf %84, %88 : vector<8x128xf32>
    %90 = arith.truncf %89 : vector<8x128xf32> to vector<8x128xbf16>
    %c0_31 = arith.constant 0 : index
    %c0_32 = arith.constant 0 : index
    %91 = vector.load %arg5[%c0_31, %c0_32] : memref<128x768xbf16, #tpu.memory_space<vmem>>, vector<128x768xbf16>
    %cst_33 = arith.constant dense<0.000000e+00> : vector<8x768xf32>
    %92 = tpu.matmul %90, %91, %cst_33 {dimension_numbers = #tpu.dot_dimension_numbers<[1], [0], [0], [1], [0, 0, 1, 1], [], []>} : vector<8x128xbf16>, vector<128x768xbf16>, vector<8x768xf32> -> vector<8x768xf32>
    %93 = vector.extract_strided_slice %92 {offsets = [0, 0], sizes = [8, 128], strides = [1, 1]} : vector<8x768xf32> to vector<8x128xf32>
    %94 = arith.addf %93, %0 : vector<8x128xf32>
    %95 = vector.extract_strided_slice %92 {offsets = [0, 128], sizes = [8, 128], strides = [1, 1]} : vector<8x768xf32> to vector<8x128xf32>
    %96 = vector.extract_strided_slice %92 {offsets = [0, 256], sizes = [8, 512], strides = [1, 1]} : vector<8x768xf32> to vector<8x512xf32>
    %cst_34 = arith.constant dense<0xFF800000> : vector<8xf32>
    %97 = vector.multi_reduction <maximumf>, %94, %cst_34 [1] : vector<8x128xf32> to vector<8xf32>
    %98 = vector.shape_cast %97 : vector<8xf32> to vector<8x1xf32>
    %99 = vector.broadcast %98 : vector<8x1xf32> to vector<8x128xf32>
    %100 = arith.subf %94, %99 : vector<8x128xf32>
    %101 = math.exp %100 : vector<8x128xf32>
    %cst_35 = arith.constant dense<0.000000e+00> : vector<8xf32>
    %102 = vector.multi_reduction <add>, %101, %cst_35 [1] : vector<8x128xf32> to vector<8xf32>
    %103 = vector.shape_cast %102 : vector<8xf32> to vector<8x1xf32>
    %104 = tpu.reciprocal %103 {approx = true} : vector<8x1xf32> -> vector<8x1xf32>
    %105 = vector.broadcast %104 : vector<8x1xf32> to vector<8x128xf32>
    %106 = arith.mulf %101, %105 : vector<8x128xf32>
    %c0_36 = arith.constant 0 : index
    %c0_37 = arith.constant 0 : index
    %c0_38 = arith.constant 0 : index
    %107 = vector.load %arg9[%c0_36, %c0_37, %c0_38] : memref<6x8x128xf32, #tpu.memory_space<vmem>>, vector<1x8x128xf32>
    %108 = vector.shape_cast %107 : vector<1x8x128xf32> to vector<8x128xf32>
    %109 = vector.shape_cast %106 : vector<8x128xf32> to vector<1x8x128xf32>
    tpu.vector_store %arg9[%c0_36, %c0_37, %c0_38], %109 {strides = array<i32>} : memref<6x8x128xf32, #tpu.memory_space<vmem>>, vector<1x8x128xf32>,
    %110 = arith.truncf %106 : vector<8x128xf32> to vector<8x128xbf16>
    %c0_39 = arith.constant 0 : index
    %c0_40 = arith.constant 0 : index
    %111 = vector.load %arg6[%c0_39, %c0_40] : memref<128x640xbf16, #tpu.memory_space<vmem>>, vector<128x640xbf16>
    %cst_41 = arith.constant dense<0.000000e+00> : vector<8x640xf32>
    %112 = tpu.matmul %110, %111, %cst_41 {dimension_numbers = #tpu.dot_dimension_numbers<[1], [0], [0], [1], [0, 0, 1, 1], [], []>} : vector<8x128xbf16>, vector<128x640xbf16>, vector<8x640xf32> -> vector<8x640xf32>
    %113 = vector.extract_strided_slice %112 {offsets = [0, 128], sizes = [8, 512], strides = [1, 1]} : vector<8x640xf32> to vector<8x512xf32>
    %114 = vector.extract_strided_slice %112 {offsets = [0, 0], sizes = [8, 128], strides = [1, 1]} : vector<8x640xf32> to vector<8x128xf32>
    %115 = arith.addf %95, %114 : vector<8x128xf32>
    %c0_42 = arith.constant 0 : index
    %c0_43 = arith.constant 0 : index
    %c0_44 = arith.constant 0 : index
    %116 = vector.load %arg8[%c0_42, %c0_43, %c0_44] : memref<6x8x128xf32, #tpu.memory_space<vmem>>, vector<1x8x128xf32>
    %117 = vector.shape_cast %116 : vector<1x8x128xf32> to vector<8x128xf32>
    %118 = vector.shape_cast %115 : vector<8x128xf32> to vector<1x8x128xf32>
    tpu.vector_store %arg8[%c0_42, %c0_43, %c0_44], %118 {strides = array<i32>} : memref<6x8x128xf32, #tpu.memory_space<vmem>>, vector<1x8x128xf32>,
    %c8 = arith.constant 8 : index
    %c0_45 = arith.constant 0 : index
    %119 = vector.load %arg10[%c8, %c0_45] : memref<48x512xf32, #tpu.memory_space<vmem>>, vector<8x512xf32>
    %120 = arith.addf %119, %113 : vector<8x512xf32>
    %121 = arith.addf %120, %61 : vector<8x512xf32>
    %122 = vector.extract_strided_slice %121 {offsets = [0, 0], sizes = [8, 128], strides = [1, 1]} : vector<8x512xf32> to vector<8x128xf32>
    %123 = arith.negf %122 : vector<8x128xf32>
    %124 = math.exp %123 : vector<8x128xf32>
    %cst_46 = arith.constant 1.000000e+00 : f32
    %125 = vector.broadcast %cst_46 : f32 to vector<8x128xf32>
    %126 = arith.addf %125, %124 : vector<8x128xf32>
    %127 = arith.divf %125, %126 : vector<8x128xf32>
    %128 = vector.extract_strided_slice %121 {offsets = [0, 128], sizes = [8, 128], strides = [1, 1]} : vector<8x512xf32> to vector<8x128xf32>
    %129 = arith.negf %128 : vector<8x128xf32>
    %130 = math.exp %129 : vector<8x128xf32>
    %cst_47 = arith.constant 1.000000e+00 : f32
    %131 = vector.broadcast %cst_47 : f32 to vector<8x128xf32>
    %132 = arith.addf %131, %130 : vector<8x128xf32>
    %133 = arith.divf %131, %132 : vector<8x128xf32>
    %134 = vector.extract_strided_slice %121 {offsets = [0, 256], sizes = [8, 128], strides = [1, 1]} : vector<8x512xf32> to vector<8x128xf32>
    %135 = math.tanh %134 : vector<8x128xf32>
    %136 = vector.extract_strided_slice %121 {offsets = [0, 384], sizes = [8, 128], strides = [1, 1]} : vector<8x512xf32> to vector<8x128xf32>
    %137 = arith.negf %136 : vector<8x128xf32>
    %138 = math.exp %137 : vector<8x128xf32>
    %cst_48 = arith.constant 1.000000e+00 : f32
    %139 = vector.broadcast %cst_48 : f32 to vector<8x128xf32>
    %140 = arith.addf %139, %138 : vector<8x128xf32>
    %141 = arith.divf %139, %140 : vector<8x128xf32>
    %142 = arith.mulf %133, %55 : vector<8x128xf32>
    %143 = arith.mulf %127, %135 : vector<8x128xf32>
    %144 = arith.addf %142, %143 : vector<8x128xf32>
    %145 = math.tanh %144 : vector<8x128xf32>
    %146 = arith.mulf %141, %145 : vector<8x128xf32>
    %147 = arith.truncf %146 : vector<8x128xf32> to vector<8x128xbf16>
    %c0_49 = arith.constant 0 : index
    %c0_50 = arith.constant 0 : index
    %148 = vector.load %arg4[%c0_49, %c0_50] : memref<128x1024xbf16, #tpu.memory_space<vmem>>, vector<128x1024xbf16>
    %cst_51 = arith.constant dense<0.000000e+00> : vector<8x1024xf32>
    %149 = tpu.matmul %147, %148, %cst_51 {dimension_numbers = #tpu.dot_dimension_numbers<[1], [0], [0], [1], [0, 0, 1, 1], [], []>} : vector<8x128xbf16>, vector<128x1024xbf16>, vector<8x1024xf32> -> vector<8x1024xf32>
    %150 = vector.extract_strided_slice %149 {offsets = [0, 512], sizes = [8, 512], strides = [1, 1]} : vector<8x1024xf32> to vector<8x512xf32>
    %151 = vector.extract_strided_slice %149 {offsets = [0, 0], sizes = [8, 512], strides = [1, 1]} : vector<8x1024xf32> to vector<8x512xf32>
    %152 = arith.addf %151, %96 : vector<8x512xf32>
    %153 = arith.addf %152, %3 : vector<8x512xf32>
    %154 = vector.extract_strided_slice %153 {offsets = [0, 0], sizes = [8, 128], strides = [1, 1]} : vector<8x512xf32> to vector<8x128xf32>
    %155 = arith.negf %154 : vector<8x128xf32>
    %156 = math.exp %155 : vector<8x128xf32>
    %cst_52 = arith.constant 1.000000e+00 : f32
    %157 = vector.broadcast %cst_52 : f32 to vector<8x128xf32>
    %158 = arith.addf %157, %156 : vector<8x128xf32>
    %159 = arith.divf %157, %158 : vector<8x128xf32>
    %160 = vector.extract_strided_slice %153 {offsets = [0, 128], sizes = [8, 128], strides = [1, 1]} : vector<8x512xf32> to vector<8x128xf32>
    %161 = arith.negf %160 : vector<8x128xf32>
    %162 = math.exp %161 : vector<8x128xf32>
    %cst_53 = arith.constant 1.000000e+00 : f32
    %163 = vector.broadcast %cst_53 : f32 to vector<8x128xf32>
    %164 = arith.addf %163, %162 : vector<8x128xf32>
    %165 = arith.divf %163, %164 : vector<8x128xf32>
    %166 = vector.extract_strided_slice %153 {offsets = [0, 256], sizes = [8, 128], strides = [1, 1]} : vector<8x512xf32> to vector<8x128xf32>
    %167 = math.tanh %166 : vector<8x128xf32>
    %168 = vector.extract_strided_slice %153 {offsets = [0, 384], sizes = [8, 128], strides = [1, 1]} : vector<8x512xf32> to vector<8x128xf32>
    %169 = arith.negf %168 : vector<8x128xf32>
    %170 = math.exp %169 : vector<8x128xf32>
    %cst_54 = arith.constant 1.000000e+00 : f32
    %171 = vector.broadcast %cst_54 : f32 to vector<8x128xf32>
    %172 = arith.addf %171, %170 : vector<8x128xf32>
    %173 = arith.divf %171, %172 : vector<8x128xf32>
    %174 = arith.mulf %165, %87 : vector<8x128xf32>
    %175 = arith.mulf %159, %167 : vector<8x128xf32>
    %176 = arith.addf %174, %175 : vector<8x128xf32>
    %177 = math.tanh %176 : vector<8x128xf32>
    %178 = arith.mulf %173, %177 : vector<8x128xf32>
    %179 = arith.truncf %178 : vector<8x128xf32> to vector<8x128xbf16>
    %c0_55 = arith.constant 0 : index
    %c0_56 = arith.constant 0 : index
    %180 = vector.load %arg5[%c0_55, %c0_56] : memref<128x768xbf16, #tpu.memory_space<vmem>>, vector<128x768xbf16>
    %cst_57 = arith.constant dense<0.000000e+00> : vector<8x768xf32>
    %181 = tpu.matmul %179, %180, %cst_57 {dimension_numbers = #tpu.dot_dimension_numbers<[1], [0], [0], [1], [0, 0, 1, 1], [], []>} : vector<8x128xbf16>, vector<128x768xbf16>, vector<8x768xf32> -> vector<8x768xf32>
    %182 = vector.extract_strided_slice %181 {offsets = [0, 0], sizes = [8, 128], strides = [1, 1]} : vector<8x768xf32> to vector<8x128xf32>
    %183 = arith.addf %182, %0 : vector<8x128xf32>
    %184 = vector.extract_strided_slice %181 {offsets = [0, 128], sizes = [8, 128], strides = [1, 1]} : vector<8x768xf32> to vector<8x128xf32>
    %185 = vector.extract_strided_slice %181 {offsets = [0, 256], sizes = [8, 512], strides = [1, 1]} : vector<8x768xf32> to vector<8x512xf32>
    %cst_58 = arith.constant dense<0xFF800000> : vector<8xf32>
    %186 = vector.multi_reduction <maximumf>, %183, %cst_58 [1] : vector<8x128xf32> to vector<8xf32>
    %187 = vector.shape_cast %186 : vector<8xf32> to vector<8x1xf32>
    %188 = vector.broadcast %187 : vector<8x1xf32> to vector<8x128xf32>
    %189 = arith.subf %183, %188 : vector<8x128xf32>
    %190 = math.exp %189 : vector<8x128xf32>
    %cst_59 = arith.constant dense<0.000000e+00> : vector<8xf32>
    %191 = vector.multi_reduction <add>, %190, %cst_59 [1] : vector<8x128xf32> to vector<8xf32>
    %192 = vector.shape_cast %191 : vector<8xf32> to vector<8x1xf32>
    %193 = tpu.reciprocal %192 {approx = true} : vector<8x1xf32> -> vector<8x1xf32>
    %194 = vector.broadcast %193 : vector<8x1xf32> to vector<8x128xf32>
    %195 = arith.mulf %190, %194 : vector<8x128xf32>
    %c1 = arith.constant 1 : index
    %c0_60 = arith.constant 0 : index
    %c0_61 = arith.constant 0 : index
    %196 = vector.load %arg9[%c1, %c0_60, %c0_61] : memref<6x8x128xf32, #tpu.memory_space<vmem>>, vector<1x8x128xf32>
    %197 = vector.shape_cast %196 : vector<1x8x128xf32> to vector<8x128xf32>
    %198 = vector.shape_cast %195 : vector<8x128xf32> to vector<1x8x128xf32>
    tpu.vector_store %arg9[%c1, %c0_60, %c0_61], %198 {strides = array<i32>} : memref<6x8x128xf32, #tpu.memory_space<vmem>>, vector<1x8x128xf32>,
    %199 = arith.truncf %195 : vector<8x128xf32> to vector<8x128xbf16>
    %c0_62 = arith.constant 0 : index
    %c0_63 = arith.constant 0 : index
    %200 = vector.load %arg6[%c0_62, %c0_63] : memref<128x640xbf16, #tpu.memory_space<vmem>>, vector<128x640xbf16>
    %cst_64 = arith.constant dense<0.000000e+00> : vector<8x640xf32>
    %201 = tpu.matmul %199, %200, %cst_64 {dimension_numbers = #tpu.dot_dimension_numbers<[1], [0], [0], [1], [0, 0, 1, 1], [], []>} : vector<8x128xbf16>, vector<128x640xbf16>, vector<8x640xf32> -> vector<8x640xf32>
    %202 = vector.extract_strided_slice %201 {offsets = [0, 128], sizes = [8, 512], strides = [1, 1]} : vector<8x640xf32> to vector<8x512xf32>
    %203 = vector.extract_strided_slice %201 {offsets = [0, 0], sizes = [8, 128], strides = [1, 1]} : vector<8x640xf32> to vector<8x128xf32>
    %204 = arith.addf %184, %203 : vector<8x128xf32>
    %c1_65 = arith.constant 1 : index
    %c0_66 = arith.constant 0 : index
    %c0_67 = arith.constant 0 : index
    %205 = vector.load %arg8[%c1_65, %c0_66, %c0_67] : memref<6x8x128xf32, #tpu.memory_space<vmem>>, vector<1x8x128xf32>
    %206 = vector.shape_cast %205 : vector<1x8x128xf32> to vector<8x128xf32>
    %207 = vector.shape_cast %204 : vector<8x128xf32> to vector<1x8x128xf32>
    tpu.vector_store %arg8[%c1_65, %c0_66, %c0_67], %207 {strides = array<i32>} : memref<6x8x128xf32, #tpu.memory_space<vmem>>, vector<1x8x128xf32>,
    %c16 = arith.constant 16 : index
    %c0_68 = arith.constant 0 : index
    %208 = vector.load %arg10[%c16, %c0_68] : memref<48x512xf32, #tpu.memory_space<vmem>>, vector<8x512xf32>
    %209 = arith.addf %208, %202 : vector<8x512xf32>
    %210 = arith.addf %209, %150 : vector<8x512xf32>
    %211 = vector.extract_strided_slice %210 {offsets = [0, 0], sizes = [8, 128], strides = [1, 1]} : vector<8x512xf32> to vector<8x128xf32>
    %212 = arith.negf %211 : vector<8x128xf32>
    %213 = math.exp %212 : vector<8x128xf32>
    %cst_69 = arith.constant 1.000000e+00 : f32
    %214 = vector.broadcast %cst_69 : f32 to vector<8x128xf32>
    %215 = arith.addf %214, %213 : vector<8x128xf32>
    %216 = arith.divf %214, %215 : vector<8x128xf32>
    %217 = vector.extract_strided_slice %210 {offsets = [0, 128], sizes = [8, 128], strides = [1, 1]} : vector<8x512xf32> to vector<8x128xf32>
    %218 = arith.negf %217 : vector<8x128xf32>
    %219 = math.exp %218 : vector<8x128xf32>
    %cst_70 = arith.constant 1.000000e+00 : f32
    %220 = vector.broadcast %cst_70 : f32 to vector<8x128xf32>
    %221 = arith.addf %220, %219 : vector<8x128xf32>
    %222 = arith.divf %220, %221 : vector<8x128xf32>
    %223 = vector.extract_strided_slice %210 {offsets = [0, 256], sizes = [8, 128], strides = [1, 1]} : vector<8x512xf32> to vector<8x128xf32>
    %224 = math.tanh %223 : vector<8x128xf32>
    %225 = vector.extract_strided_slice %210 {offsets = [0, 384], sizes = [8, 128], strides = [1, 1]} : vector<8x512xf32> to vector<8x128xf32>
    %226 = arith.negf %225 : vector<8x128xf32>
    %227 = math.exp %226 : vector<8x128xf32>
    %cst_71 = arith.constant 1.000000e+00 : f32
    %228 = vector.broadcast %cst_71 : f32 to vector<8x128xf32>
    %229 = arith.addf %228, %227 : vector<8x128xf32>
    %230 = arith.divf %228, %229 : vector<8x128xf32>
    %231 = arith.mulf %222, %144 : vector<8x128xf32>
    %232 = arith.mulf %216, %224 : vector<8x128xf32>
    %233 = arith.addf %231, %232 : vector<8x128xf32>
    %234 = math.tanh %233 : vector<8x128xf32>
    %235 = arith.mulf %230, %234 : vector<8x128xf32>
    %236 = arith.truncf %235 : vector<8x128xf32> to vector<8x128xbf16>
    %c0_72 = arith.constant 0 : index
    %c0_73 = arith.constant 0 : index
    %237 = vector.load %arg4[%c0_72, %c0_73] : memref<128x1024xbf16, #tpu.memory_space<vmem>>, vector<128x1024xbf16>
    %cst_74 = arith.constant dense<0.000000e+00> : vector<8x1024xf32>
    %238 = tpu.matmul %236, %237, %cst_74 {dimension_numbers = #tpu.dot_dimension_numbers<[1], [0], [0], [1], [0, 0, 1, 1], [], []>} : vector<8x128xbf16>, vector<128x1024xbf16>, vector<8x1024xf32> -> vector<8x1024xf32>
    %239 = vector.extract_strided_slice %238 {offsets = [0, 512], sizes = [8, 512], strides = [1, 1]} : vector<8x1024xf32> to vector<8x512xf32>
    %240 = vector.extract_strided_slice %238 {offsets = [0, 0], sizes = [8, 512], strides = [1, 1]} : vector<8x1024xf32> to vector<8x512xf32>
    %241 = arith.addf %240, %185 : vector<8x512xf32>
    %242 = arith.addf %241, %3 : vector<8x512xf32>
    %243 = vector.extract_strided_slice %242 {offsets = [0, 0], sizes = [8, 128], strides = [1, 1]} : vector<8x512xf32> to vector<8x128xf32>
    %244 = arith.negf %243 : vector<8x128xf32>
    %245 = math.exp %244 : vector<8x128xf32>
    %cst_75 = arith.constant 1.000000e+00 : f32
    %246 = vector.broadcast %cst_75 : f32 to vector<8x128xf32>
    %247 = arith.addf %246, %245 : vector<8x128xf32>
    %248 = arith.divf %246, %247 : vector<8x128xf32>
    %249 = vector.extract_strided_slice %242 {offsets = [0, 128], sizes = [8, 128], strides = [1, 1]} : vector<8x512xf32> to vector<8x128xf32>
    %250 = arith.negf %249 : vector<8x128xf32>
    %251 = math.exp %250 : vector<8x128xf32>
    %cst_76 = arith.constant 1.000000e+00 : f32
    %252 = vector.broadcast %cst_76 : f32 to vector<8x128xf32>
    %253 = arith.addf %252, %251 : vector<8x128xf32>
    %254 = arith.divf %252, %253 : vector<8x128xf32>
    %255 = vector.extract_strided_slice %242 {offsets = [0, 256], sizes = [8, 128], strides = [1, 1]} : vector<8x512xf32> to vector<8x128xf32>
    %256 = math.tanh %255 : vector<8x128xf32>
    %257 = vector.extract_strided_slice %242 {offsets = [0, 384], sizes = [8, 128], strides = [1, 1]} : vector<8x512xf32> to vector<8x128xf32>
    %258 = arith.negf %257 : vector<8x128xf32>
    %259 = math.exp %258 : vector<8x128xf32>
    %cst_77 = arith.constant 1.000000e+00 : f32
    %260 = vector.broadcast %cst_77 : f32 to vector<8x128xf32>
    %261 = arith.addf %260, %259 : vector<8x128xf32>
    %262 = arith.divf %260, %261 : vector<8x128xf32>
    %263 = arith.mulf %254, %176 : vector<8x128xf32>
    %264 = arith.mulf %248, %256 : vector<8x128xf32>
    %265 = arith.addf %263, %264 : vector<8x128xf32>
    %266 = math.tanh %265 : vector<8x128xf32>
    %267 = arith.mulf %262, %266 : vector<8x128xf32>
    %268 = arith.truncf %267 : vector<8x128xf32> to vector<8x128xbf16>
    %c0_78 = arith.constant 0 : index
    %c0_79 = arith.constant 0 : index
    %269 = vector.load %arg5[%c0_78, %c0_79] : memref<128x768xbf16, #tpu.memory_space<vmem>>, vector<128x768xbf16>
    %cst_80 = arith.constant dense<0.000000e+00> : vector<8x768xf32>
    %270 = tpu.matmul %268, %269, %cst_80 {dimension_numbers = #tpu.dot_dimension_numbers<[1], [0], [0], [1], [0, 0, 1, 1], [], []>} : vector<8x128xbf16>, vector<128x768xbf16>, vector<8x768xf32> -> vector<8x768xf32>
    %271 = vector.extract_strided_slice %270 {offsets = [0, 0], sizes = [8, 128], strides = [1, 1]} : vector<8x768xf32> to vector<8x128xf32>
    %272 = arith.addf %271, %0 : vector<8x128xf32>
    %273 = vector.extract_strided_slice %270 {offsets = [0, 128], sizes = [8, 128], strides = [1, 1]} : vector<8x768xf32> to vector<8x128xf32>
    %274 = vector.extract_strided_slice %270 {offsets = [0, 256], sizes = [8, 512], strides = [1, 1]} : vector<8x768xf32> to vector<8x512xf32>
    %cst_81 = arith.constant dense<0xFF800000> : vector<8xf32>
    %275 = vector.multi_reduction <maximumf>, %272, %cst_81 [1] : vector<8x128xf32> to vector<8xf32>
    %276 = vector.shape_cast %275 : vector<8xf32> to vector<8x1xf32>
    %277 = vector.broadcast %276 : vector<8x1xf32> to vector<8x128xf32>
    %278 = arith.subf %272, %277 : vector<8x128xf32>
    %279 = math.exp %278 : vector<8x128xf32>
    %cst_82 = arith.constant dense<0.000000e+00> : vector<8xf32>
    %280 = vector.multi_reduction <add>, %279, %cst_82 [1] : vector<8x128xf32> to vector<8xf32>
    %281 = vector.shape_cast %280 : vector<8xf32> to vector<8x1xf32>
    %282 = tpu.reciprocal %281 {approx = true} : vector<8x1xf32> -> vector<8x1xf32>
    %283 = vector.broadcast %282 : vector<8x1xf32> to vector<8x128xf32>
    %284 = arith.mulf %279, %283 : vector<8x128xf32>
    %c2 = arith.constant 2 : index
    %c0_83 = arith.constant 0 : index
    %c0_84 = arith.constant 0 : index
    %285 = vector.load %arg9[%c2, %c0_83, %c0_84] : memref<6x8x128xf32, #tpu.memory_space<vmem>>, vector<1x8x128xf32>
    %286 = vector.shape_cast %285 : vector<1x8x128xf32> to vector<8x128xf32>
    %287 = vector.shape_cast %284 : vector<8x128xf32> to vector<1x8x128xf32>
    tpu.vector_store %arg9[%c2, %c0_83, %c0_84], %287 {strides = array<i32>} : memref<6x8x128xf32, #tpu.memory_space<vmem>>, vector<1x8x128xf32>,
    %288 = arith.truncf %284 : vector<8x128xf32> to vector<8x128xbf16>
    %c0_85 = arith.constant 0 : index
    %c0_86 = arith.constant 0 : index
    %289 = vector.load %arg6[%c0_85, %c0_86] : memref<128x640xbf16, #tpu.memory_space<vmem>>, vector<128x640xbf16>
    %cst_87 = arith.constant dense<0.000000e+00> : vector<8x640xf32>
    %290 = tpu.matmul %288, %289, %cst_87 {dimension_numbers = #tpu.dot_dimension_numbers<[1], [0], [0], [1], [0, 0, 1, 1], [], []>} : vector<8x128xbf16>, vector<128x640xbf16>, vector<8x640xf32> -> vector<8x640xf32>
    %291 = vector.extract_strided_slice %290 {offsets = [0, 128], sizes = [8, 512], strides = [1, 1]} : vector<8x640xf32> to vector<8x512xf32>
    %292 = vector.extract_strided_slice %290 {offsets = [0, 0], sizes = [8, 128], strides = [1, 1]} : vector<8x640xf32> to vector<8x128xf32>
    %293 = arith.addf %273, %292 : vector<8x128xf32>
    %c2_88 = arith.constant 2 : index
    %c0_89 = arith.constant 0 : index
    %c0_90 = arith.constant 0 : index
    %294 = vector.load %arg8[%c2_88, %c0_89, %c0_90] : memref<6x8x128xf32, #tpu.memory_space<vmem>>, vector<1x8x128xf32>
    %295 = vector.shape_cast %294 : vector<1x8x128xf32> to vector<8x128xf32>
    %296 = vector.shape_cast %293 : vector<8x128xf32> to vector<1x8x128xf32>
    tpu.vector_store %arg8[%c2_88, %c0_89, %c0_90], %296 {strides = array<i32>} : memref<6x8x128xf32, #tpu.memory_space<vmem>>, vector<1x8x128xf32>,
    %c24 = arith.constant 24 : index
    %c0_91 = arith.constant 0 : index
    %297 = vector.load %arg10[%c24, %c0_91] : memref<48x512xf32, #tpu.memory_space<vmem>>, vector<8x512xf32>
    %298 = arith.addf %297, %291 : vector<8x512xf32>
    %299 = arith.addf %298, %239 : vector<8x512xf32>
    %300 = vector.extract_strided_slice %299 {offsets = [0, 0], sizes = [8, 128], strides = [1, 1]} : vector<8x512xf32> to vector<8x128xf32>
    %301 = arith.negf %300 : vector<8x128xf32>
    %302 = math.exp %301 : vector<8x128xf32>
    %cst_92 = arith.constant 1.000000e+00 : f32
    %303 = vector.broadcast %cst_92 : f32 to vector<8x128xf32>
    %304 = arith.addf %303, %302 : vector<8x128xf32>
    %305 = arith.divf %303, %304 : vector<8x128xf32>
    %306 = vector.extract_strided_slice %299 {offsets = [0, 128], sizes = [8, 128], strides = [1, 1]} : vector<8x512xf32> to vector<8x128xf32>
    %307 = arith.negf %306 : vector<8x128xf32>
    %308 = math.exp %307 : vector<8x128xf32>
    %cst_93 = arith.constant 1.000000e+00 : f32
    %309 = vector.broadcast %cst_93 : f32 to vector<8x128xf32>
    %310 = arith.addf %309, %308 : vector<8x128xf32>
    %311 = arith.divf %309, %310 : vector<8x128xf32>
    %312 = vector.extract_strided_slice %299 {offsets = [0, 256], sizes = [8, 128], strides = [1, 1]} : vector<8x512xf32> to vector<8x128xf32>
    %313 = math.tanh %312 : vector<8x128xf32>
    %314 = vector.extract_strided_slice %299 {offsets = [0, 384], sizes = [8, 128], strides = [1, 1]} : vector<8x512xf32> to vector<8x128xf32>
    %315 = arith.negf %314 : vector<8x128xf32>
    %316 = math.exp %315 : vector<8x128xf32>
    %cst_94 = arith.constant 1.000000e+00 : f32
    %317 = vector.broadcast %cst_94 : f32 to vector<8x128xf32>
    %318 = arith.addf %317, %316 : vector<8x128xf32>
    %319 = arith.divf %317, %318 : vector<8x128xf32>
    %320 = arith.mulf %311, %233 : vector<8x128xf32>
    %321 = arith.mulf %305, %313 : vector<8x128xf32>
    %322 = arith.addf %320, %321 : vector<8x128xf32>
    %323 = math.tanh %322 : vector<8x128xf32>
    %324 = arith.mulf %319, %323 : vector<8x128xf32>
    %325 = arith.truncf %324 : vector<8x128xf32> to vector<8x128xbf16>
    %c0_95 = arith.constant 0 : index
    %c0_96 = arith.constant 0 : index
    %326 = vector.load %arg4[%c0_95, %c0_96] : memref<128x1024xbf16, #tpu.memory_space<vmem>>, vector<128x1024xbf16>
    %cst_97 = arith.constant dense<0.000000e+00> : vector<8x1024xf32>
    %327 = tpu.matmul %325, %326, %cst_97 {dimension_numbers = #tpu.dot_dimension_numbers<[1], [0], [0], [1], [0, 0, 1, 1], [], []>} : vector<8x128xbf16>, vector<128x1024xbf16>, vector<8x1024xf32> -> vector<8x1024xf32>
    %328 = vector.extract_strided_slice %327 {offsets = [0, 512], sizes = [8, 512], strides = [1, 1]} : vector<8x1024xf32> to vector<8x512xf32>
    %329 = vector.extract_strided_slice %327 {offsets = [0, 0], sizes = [8, 512], strides = [1, 1]} : vector<8x1024xf32> to vector<8x512xf32>
    %330 = arith.addf %329, %274 : vector<8x512xf32>
    %331 = arith.addf %330, %3 : vector<8x512xf32>
    %332 = vector.extract_strided_slice %331 {offsets = [0, 0], sizes = [8, 128], strides = [1, 1]} : vector<8x512xf32> to vector<8x128xf32>
    %333 = arith.negf %332 : vector<8x128xf32>
    %334 = math.exp %333 : vector<8x128xf32>
    %cst_98 = arith.constant 1.000000e+00 : f32
    %335 = vector.broadcast %cst_98 : f32 to vector<8x128xf32>
    %336 = arith.addf %335, %334 : vector<8x128xf32>
    %337 = arith.divf %335, %336 : vector<8x128xf32>
    %338 = vector.extract_strided_slice %331 {offsets = [0, 128], sizes = [8, 128], strides = [1, 1]} : vector<8x512xf32> to vector<8x128xf32>
    %339 = arith.negf %338 : vector<8x128xf32>
    %340 = math.exp %339 : vector<8x128xf32>
    %cst_99 = arith.constant 1.000000e+00 : f32
    %341 = vector.broadcast %cst_99 : f32 to vector<8x128xf32>
    %342 = arith.addf %341, %340 : vector<8x128xf32>
    %343 = arith.divf %341, %342 : vector<8x128xf32>
    %344 = vector.extract_strided_slice %331 {offsets = [0, 256], sizes = [8, 128], strides = [1, 1]} : vector<8x512xf32> to vector<8x128xf32>
    %345 = math.tanh %344 : vector<8x128xf32>
    %346 = vector.extract_strided_slice %331 {offsets = [0, 384], sizes = [8, 128], strides = [1, 1]} : vector<8x512xf32> to vector<8x128xf32>
    %347 = arith.negf %346 : vector<8x128xf32>
    %348 = math.exp %347 : vector<8x128xf32>
    %cst_100 = arith.constant 1.000000e+00 : f32
    %349 = vector.broadcast %cst_100 : f32 to vector<8x128xf32>
    %350 = arith.addf %349, %348 : vector<8x128xf32>
    %351 = arith.divf %349, %350 : vector<8x128xf32>
    %352 = arith.mulf %343, %265 : vector<8x128xf32>
    %353 = arith.mulf %337, %345 : vector<8x128xf32>
    %354 = arith.addf %352, %353 : vector<8x128xf32>
    %355 = math.tanh %354 : vector<8x128xf32>
    %356 = arith.mulf %351, %355 : vector<8x128xf32>
    %357 = arith.truncf %356 : vector<8x128xf32> to vector<8x128xbf16>
    %c0_101 = arith.constant 0 : index
    %c0_102 = arith.constant 0 : index
    %358 = vector.load %arg5[%c0_101, %c0_102] : memref<128x768xbf16, #tpu.memory_space<vmem>>, vector<128x768xbf16>
    %cst_103 = arith.constant dense<0.000000e+00> : vector<8x768xf32>
    %359 = tpu.matmul %357, %358, %cst_103 {dimension_numbers = #tpu.dot_dimension_numbers<[1], [0], [0], [1], [0, 0, 1, 1], [], []>} : vector<8x128xbf16>, vector<128x768xbf16>, vector<8x768xf32> -> vector<8x768xf32>
    %360 = vector.extract_strided_slice %359 {offsets = [0, 0], sizes = [8, 128], strides = [1, 1]} : vector<8x768xf32> to vector<8x128xf32>
    %361 = arith.addf %360, %0 : vector<8x128xf32>
    %362 = vector.extract_strided_slice %359 {offsets = [0, 128], sizes = [8, 128], strides = [1, 1]} : vector<8x768xf32> to vector<8x128xf32>
    %363 = vector.extract_strided_slice %359 {offsets = [0, 256], sizes = [8, 512], strides = [1, 1]} : vector<8x768xf32> to vector<8x512xf32>
    %cst_104 = arith.constant dense<0xFF800000> : vector<8xf32>
    %364 = vector.multi_reduction <maximumf>, %361, %cst_104 [1] : vector<8x128xf32> to vector<8xf32>
    %365 = vector.shape_cast %364 : vector<8xf32> to vector<8x1xf32>
    %366 = vector.broadcast %365 : vector<8x1xf32> to vector<8x128xf32>
    %367 = arith.subf %361, %366 : vector<8x128xf32>
    %368 = math.exp %367 : vector<8x128xf32>
    %cst_105 = arith.constant dense<0.000000e+00> : vector<8xf32>
    %369 = vector.multi_reduction <add>, %368, %cst_105 [1] : vector<8x128xf32> to vector<8xf32>
    %370 = vector.shape_cast %369 : vector<8xf32> to vector<8x1xf32>
    %371 = tpu.reciprocal %370 {approx = true} : vector<8x1xf32> -> vector<8x1xf32>
    %372 = vector.broadcast %371 : vector<8x1xf32> to vector<8x128xf32>
    %373 = arith.mulf %368, %372 : vector<8x128xf32>
    %c3 = arith.constant 3 : index
    %c0_106 = arith.constant 0 : index
    %c0_107 = arith.constant 0 : index
    %374 = vector.load %arg9[%c3, %c0_106, %c0_107] : memref<6x8x128xf32, #tpu.memory_space<vmem>>, vector<1x8x128xf32>
    %375 = vector.shape_cast %374 : vector<1x8x128xf32> to vector<8x128xf32>
    %376 = vector.shape_cast %373 : vector<8x128xf32> to vector<1x8x128xf32>
    tpu.vector_store %arg9[%c3, %c0_106, %c0_107], %376 {strides = array<i32>} : memref<6x8x128xf32, #tpu.memory_space<vmem>>, vector<1x8x128xf32>,
    %377 = arith.truncf %373 : vector<8x128xf32> to vector<8x128xbf16>
    %c0_108 = arith.constant 0 : index
    %c0_109 = arith.constant 0 : index
    %378 = vector.load %arg6[%c0_108, %c0_109] : memref<128x640xbf16, #tpu.memory_space<vmem>>, vector<128x640xbf16>
    %cst_110 = arith.constant dense<0.000000e+00> : vector<8x640xf32>
    %379 = tpu.matmul %377, %378, %cst_110 {dimension_numbers = #tpu.dot_dimension_numbers<[1], [0], [0], [1], [0, 0, 1, 1], [], []>} : vector<8x128xbf16>, vector<128x640xbf16>, vector<8x640xf32> -> vector<8x640xf32>
    %380 = vector.extract_strided_slice %379 {offsets = [0, 128], sizes = [8, 512], strides = [1, 1]} : vector<8x640xf32> to vector<8x512xf32>
    %381 = vector.extract_strided_slice %379 {offsets = [0, 0], sizes = [8, 128], strides = [1, 1]} : vector<8x640xf32> to vector<8x128xf32>
    %382 = arith.addf %362, %381 : vector<8x128xf32>
    %c3_111 = arith.constant 3 : index
    %c0_112 = arith.constant 0 : index
    %c0_113 = arith.constant 0 : index
    %383 = vector.load %arg8[%c3_111, %c0_112, %c0_113] : memref<6x8x128xf32, #tpu.memory_space<vmem>>, vector<1x8x128xf32>
    %384 = vector.shape_cast %383 : vector<1x8x128xf32> to vector<8x128xf32>
    %385 = vector.shape_cast %382 : vector<8x128xf32> to vector<1x8x128xf32>
    tpu.vector_store %arg8[%c3_111, %c0_112, %c0_113], %385 {strides = array<i32>} : memref<6x8x128xf32, #tpu.memory_space<vmem>>, vector<1x8x128xf32>,
    %c32 = arith.constant 32 : index
    %c0_114 = arith.constant 0 : index
    %386 = vector.load %arg10[%c32, %c0_114] : memref<48x512xf32, #tpu.memory_space<vmem>>, vector<8x512xf32>
    %387 = arith.addf %386, %380 : vector<8x512xf32>
    %388 = arith.addf %387, %328 : vector<8x512xf32>
    %389 = vector.extract_strided_slice %388 {offsets = [0, 0], sizes = [8, 128], strides = [1, 1]} : vector<8x512xf32> to vector<8x128xf32>
    %390 = arith.negf %389 : vector<8x128xf32>
    %391 = math.exp %390 : vector<8x128xf32>
    %cst_115 = arith.constant 1.000000e+00 : f32
    %392 = vector.broadcast %cst_115 : f32 to vector<8x128xf32>
    %393 = arith.addf %392, %391 : vector<8x128xf32>
    %394 = arith.divf %392, %393 : vector<8x128xf32>
    %395 = vector.extract_strided_slice %388 {offsets = [0, 128], sizes = [8, 128], strides = [1, 1]} : vector<8x512xf32> to vector<8x128xf32>
    %396 = arith.negf %395 : vector<8x128xf32>
    %397 = math.exp %396 : vector<8x128xf32>
    %cst_116 = arith.constant 1.000000e+00 : f32
    %398 = vector.broadcast %cst_116 : f32 to vector<8x128xf32>
    %399 = arith.addf %398, %397 : vector<8x128xf32>
    %400 = arith.divf %398, %399 : vector<8x128xf32>
    %401 = vector.extract_strided_slice %388 {offsets = [0, 256], sizes = [8, 128], strides = [1, 1]} : vector<8x512xf32> to vector<8x128xf32>
    %402 = math.tanh %401 : vector<8x128xf32>
    %403 = vector.extract_strided_slice %388 {offsets = [0, 384], sizes = [8, 128], strides = [1, 1]} : vector<8x512xf32> to vector<8x128xf32>
    %404 = arith.negf %403 : vector<8x128xf32>
    %405 = math.exp %404 : vector<8x128xf32>
    %cst_117 = arith.constant 1.000000e+00 : f32
    %406 = vector.broadcast %cst_117 : f32 to vector<8x128xf32>
    %407 = arith.addf %406, %405 : vector<8x128xf32>
    %408 = arith.divf %406, %407 : vector<8x128xf32>
    %409 = arith.mulf %400, %322 : vector<8x128xf32>
    %410 = arith.mulf %394, %402 : vector<8x128xf32>
    %411 = arith.addf %409, %410 : vector<8x128xf32>
    %412 = math.tanh %411 : vector<8x128xf32>
    %413 = arith.mulf %408, %412 : vector<8x128xf32>
    %414 = arith.truncf %413 : vector<8x128xf32> to vector<8x128xbf16>
    %c0_118 = arith.constant 0 : index
    %c0_119 = arith.constant 0 : index
    %415 = vector.load %arg4[%c0_118, %c0_119] : memref<128x1024xbf16, #tpu.memory_space<vmem>>, vector<128x1024xbf16>
    %cst_120 = arith.constant dense<0.000000e+00> : vector<8x1024xf32>
    %416 = tpu.matmul %414, %415, %cst_120 {dimension_numbers = #tpu.dot_dimension_numbers<[1], [0], [0], [1], [0, 0, 1, 1], [], []>} : vector<8x128xbf16>, vector<128x1024xbf16>, vector<8x1024xf32> -> vector<8x1024xf32>
    %417 = vector.extract_strided_slice %416 {offsets = [0, 512], sizes = [8, 512], strides = [1, 1]} : vector<8x1024xf32> to vector<8x512xf32>
    %418 = vector.extract_strided_slice %416 {offsets = [0, 0], sizes = [8, 512], strides = [1, 1]} : vector<8x1024xf32> to vector<8x512xf32>
    %419 = arith.addf %418, %363 : vector<8x512xf32>
    %420 = arith.addf %419, %3 : vector<8x512xf32>
    %421 = vector.extract_strided_slice %420 {offsets = [0, 0], sizes = [8, 128], strides = [1, 1]} : vector<8x512xf32> to vector<8x128xf32>
    %422 = arith.negf %421 : vector<8x128xf32>
    %423 = math.exp %422 : vector<8x128xf32>
    %cst_121 = arith.constant 1.000000e+00 : f32
    %424 = vector.broadcast %cst_121 : f32 to vector<8x128xf32>
    %425 = arith.addf %424, %423 : vector<8x128xf32>
    %426 = arith.divf %424, %425 : vector<8x128xf32>
    %427 = vector.extract_strided_slice %420 {offsets = [0, 128], sizes = [8, 128], strides = [1, 1]} : vector<8x512xf32> to vector<8x128xf32>
    %428 = arith.negf %427 : vector<8x128xf32>
    %429 = math.exp %428 : vector<8x128xf32>
    %cst_122 = arith.constant 1.000000e+00 : f32
    %430 = vector.broadcast %cst_122 : f32 to vector<8x128xf32>
    %431 = arith.addf %430, %429 : vector<8x128xf32>
    %432 = arith.divf %430, %431 : vector<8x128xf32>
    %433 = vector.extract_strided_slice %420 {offsets = [0, 256], sizes = [8, 128], strides = [1, 1]} : vector<8x512xf32> to vector<8x128xf32>
    %434 = math.tanh %433 : vector<8x128xf32>
    %435 = vector.extract_strided_slice %420 {offsets = [0, 384], sizes = [8, 128], strides = [1, 1]} : vector<8x512xf32> to vector<8x128xf32>
    %436 = arith.negf %435 : vector<8x128xf32>
    %437 = math.exp %436 : vector<8x128xf32>
    %cst_123 = arith.constant 1.000000e+00 : f32
    %438 = vector.broadcast %cst_123 : f32 to vector<8x128xf32>
    %439 = arith.addf %438, %437 : vector<8x128xf32>
    %440 = arith.divf %438, %439 : vector<8x128xf32>
    %441 = arith.mulf %432, %354 : vector<8x128xf32>
    %442 = arith.mulf %426, %434 : vector<8x128xf32>
    %443 = arith.addf %441, %442 : vector<8x128xf32>
    %444 = math.tanh %443 : vector<8x128xf32>
    %445 = arith.mulf %440, %444 : vector<8x128xf32>
    %446 = arith.truncf %445 : vector<8x128xf32> to vector<8x128xbf16>
    %c0_124 = arith.constant 0 : index
    %c0_125 = arith.constant 0 : index
    %447 = vector.load %arg5[%c0_124, %c0_125] : memref<128x768xbf16, #tpu.memory_space<vmem>>, vector<128x768xbf16>
    %cst_126 = arith.constant dense<0.000000e+00> : vector<8x768xf32>
    %448 = tpu.matmul %446, %447, %cst_126 {dimension_numbers = #tpu.dot_dimension_numbers<[1], [0], [0], [1], [0, 0, 1, 1], [], []>} : vector<8x128xbf16>, vector<128x768xbf16>, vector<8x768xf32> -> vector<8x768xf32>
    %449 = vector.extract_strided_slice %448 {offsets = [0, 0], sizes = [8, 128], strides = [1, 1]} : vector<8x768xf32> to vector<8x128xf32>
    %450 = arith.addf %449, %0 : vector<8x128xf32>
    %451 = vector.extract_strided_slice %448 {offsets = [0, 128], sizes = [8, 128], strides = [1, 1]} : vector<8x768xf32> to vector<8x128xf32>
    %452 = vector.extract_strided_slice %448 {offsets = [0, 256], sizes = [8, 512], strides = [1, 1]} : vector<8x768xf32> to vector<8x512xf32>
    %cst_127 = arith.constant dense<0xFF800000> : vector<8xf32>
    %453 = vector.multi_reduction <maximumf>, %450, %cst_127 [1] : vector<8x128xf32> to vector<8xf32>
    %454 = vector.shape_cast %453 : vector<8xf32> to vector<8x1xf32>
    %455 = vector.broadcast %454 : vector<8x1xf32> to vector<8x128xf32>
    %456 = arith.subf %450, %455 : vector<8x128xf32>
    %457 = math.exp %456 : vector<8x128xf32>
    %cst_128 = arith.constant dense<0.000000e+00> : vector<8xf32>
    %458 = vector.multi_reduction <add>, %457, %cst_128 [1] : vector<8x128xf32> to vector<8xf32>
    %459 = vector.shape_cast %458 : vector<8xf32> to vector<8x1xf32>
    %460 = tpu.reciprocal %459 {approx = true} : vector<8x1xf32> -> vector<8x1xf32>
    %461 = vector.broadcast %460 : vector<8x1xf32> to vector<8x128xf32>
    %462 = arith.mulf %457, %461 : vector<8x128xf32>
    %c4 = arith.constant 4 : index
    %c0_129 = arith.constant 0 : index
    %c0_130 = arith.constant 0 : index
    %463 = vector.load %arg9[%c4, %c0_129, %c0_130] : memref<6x8x128xf32, #tpu.memory_space<vmem>>, vector<1x8x128xf32>
    %464 = vector.shape_cast %463 : vector<1x8x128xf32> to vector<8x128xf32>
    %465 = vector.shape_cast %462 : vector<8x128xf32> to vector<1x8x128xf32>
    tpu.vector_store %arg9[%c4, %c0_129, %c0_130], %465 {strides = array<i32>} : memref<6x8x128xf32, #tpu.memory_space<vmem>>, vector<1x8x128xf32>,
    %466 = arith.truncf %462 : vector<8x128xf32> to vector<8x128xbf16>
    %c0_131 = arith.constant 0 : index
    %c0_132 = arith.constant 0 : index
    %467 = vector.load %arg6[%c0_131, %c0_132] : memref<128x640xbf16, #tpu.memory_space<vmem>>, vector<128x640xbf16>
    %cst_133 = arith.constant dense<0.000000e+00> : vector<8x640xf32>
    %468 = tpu.matmul %466, %467, %cst_133 {dimension_numbers = #tpu.dot_dimension_numbers<[1], [0], [0], [1], [0, 0, 1, 1], [], []>} : vector<8x128xbf16>, vector<128x640xbf16>, vector<8x640xf32> -> vector<8x640xf32>
    %469 = vector.extract_strided_slice %468 {offsets = [0, 128], sizes = [8, 512], strides = [1, 1]} : vector<8x640xf32> to vector<8x512xf32>
    %470 = vector.extract_strided_slice %468 {offsets = [0, 0], sizes = [8, 128], strides = [1, 1]} : vector<8x640xf32> to vector<8x128xf32>
    %471 = arith.addf %451, %470 : vector<8x128xf32>
    %c4_134 = arith.constant 4 : index
    %c0_135 = arith.constant 0 : index
    %c0_136 = arith.constant 0 : index
    %472 = vector.load %arg8[%c4_134, %c0_135, %c0_136] : memref<6x8x128xf32, #tpu.memory_space<vmem>>, vector<1x8x128xf32>
    %473 = vector.shape_cast %472 : vector<1x8x128xf32> to vector<8x128xf32>
    %474 = vector.shape_cast %471 : vector<8x128xf32> to vector<1x8x128xf32>
    tpu.vector_store %arg8[%c4_134, %c0_135, %c0_136], %474 {strides = array<i32>} : memref<6x8x128xf32, #tpu.memory_space<vmem>>, vector<1x8x128xf32>,
    %c40 = arith.constant 40 : index
    %c0_137 = arith.constant 0 : index
    %475 = vector.load %arg10[%c40, %c0_137] : memref<48x512xf32, #tpu.memory_space<vmem>>, vector<8x512xf32>
    %476 = arith.addf %475, %469 : vector<8x512xf32>
    %477 = arith.addf %476, %417 : vector<8x512xf32>
    %478 = vector.extract_strided_slice %477 {offsets = [0, 0], sizes = [8, 128], strides = [1, 1]} : vector<8x512xf32> to vector<8x128xf32>
    %479 = arith.negf %478 : vector<8x128xf32>
    %480 = math.exp %479 : vector<8x128xf32>
    %cst_138 = arith.constant 1.000000e+00 : f32
    %481 = vector.broadcast %cst_138 : f32 to vector<8x128xf32>
    %482 = arith.addf %481, %480 : vector<8x128xf32>
    %483 = arith.divf %481, %482 : vector<8x128xf32>
    %484 = vector.extract_strided_slice %477 {offsets = [0, 128], sizes = [8, 128], strides = [1, 1]} : vector<8x512xf32> to vector<8x128xf32>
    %485 = arith.negf %484 : vector<8x128xf32>
    %486 = math.exp %485 : vector<8x128xf32>
    %cst_139 = arith.constant 1.000000e+00 : f32
    %487 = vector.broadcast %cst_139 : f32 to vector<8x128xf32>
    %488 = arith.addf %487, %486 : vector<8x128xf32>
    %489 = arith.divf %487, %488 : vector<8x128xf32>
    %490 = vector.extract_strided_slice %477 {offsets = [0, 256], sizes = [8, 128], strides = [1, 1]} : vector<8x512xf32> to vector<8x128xf32>
    %491 = math.tanh %490 : vector<8x128xf32>
    %492 = vector.extract_strided_slice %477 {offsets = [0, 384], sizes = [8, 128], strides = [1, 1]} : vector<8x512xf32> to vector<8x128xf32>
    %493 = arith.negf %492 : vector<8x128xf32>
    %494 = math.exp %493 : vector<8x128xf32>
    %cst_140 = arith.constant 1.000000e+00 : f32
    %495 = vector.broadcast %cst_140 : f32 to vector<8x128xf32>
    %496 = arith.addf %495, %494 : vector<8x128xf32>
    %497 = arith.divf %495, %496 : vector<8x128xf32>
    %498 = arith.mulf %489, %411 : vector<8x128xf32>
    %499 = arith.mulf %483, %491 : vector<8x128xf32>
    %500 = arith.addf %498, %499 : vector<8x128xf32>
    %501 = math.tanh %500 : vector<8x128xf32>
    %502 = arith.mulf %497, %501 : vector<8x128xf32>
    %503 = arith.truncf %502 : vector<8x128xf32> to vector<8x128xbf16>
    %c0_141 = arith.constant 0 : index
    %c0_142 = arith.constant 0 : index
    %504 = vector.load %arg4[%c0_141, %c0_142] : memref<128x1024xbf16, #tpu.memory_space<vmem>>, vector<128x1024xbf16>
    %cst_143 = arith.constant dense<0.000000e+00> : vector<8x1024xf32>
    %505 = tpu.matmul %503, %504, %cst_143 {dimension_numbers = #tpu.dot_dimension_numbers<[1], [0], [0], [1], [0, 0, 1, 1], [], []>} : vector<8x128xbf16>, vector<128x1024xbf16>, vector<8x1024xf32> -> vector<8x1024xf32>
    %506 = vector.extract_strided_slice %505 {offsets = [0, 0], sizes = [8, 512], strides = [1, 1]} : vector<8x1024xf32> to vector<8x512xf32>
    %507 = arith.addf %506, %452 : vector<8x512xf32>
    %508 = arith.addf %507, %3 : vector<8x512xf32>
    %509 = vector.extract_strided_slice %508 {offsets = [0, 0], sizes = [8, 128], strides = [1, 1]} : vector<8x512xf32> to vector<8x128xf32>
    %510 = arith.negf %509 : vector<8x128xf32>
    %511 = math.exp %510 : vector<8x128xf32>
    %cst_144 = arith.constant 1.000000e+00 : f32
    %512 = vector.broadcast %cst_144 : f32 to vector<8x128xf32>
    %513 = arith.addf %512, %511 : vector<8x128xf32>
    %514 = arith.divf %512, %513 : vector<8x128xf32>
    %515 = vector.extract_strided_slice %508 {offsets = [0, 128], sizes = [8, 128], strides = [1, 1]} : vector<8x512xf32> to vector<8x128xf32>
    %516 = arith.negf %515 : vector<8x128xf32>
    %517 = math.exp %516 : vector<8x128xf32>
    %cst_145 = arith.constant 1.000000e+00 : f32
    %518 = vector.broadcast %cst_145 : f32 to vector<8x128xf32>
    %519 = arith.addf %518, %517 : vector<8x128xf32>
    %520 = arith.divf %518, %519 : vector<8x128xf32>
    %521 = vector.extract_strided_slice %508 {offsets = [0, 256], sizes = [8, 128], strides = [1, 1]} : vector<8x512xf32> to vector<8x128xf32>
    %522 = math.tanh %521 : vector<8x128xf32>
    %523 = vector.extract_strided_slice %508 {offsets = [0, 384], sizes = [8, 128], strides = [1, 1]} : vector<8x512xf32> to vector<8x128xf32>
    %524 = arith.negf %523 : vector<8x128xf32>
    %525 = math.exp %524 : vector<8x128xf32>
    %cst_146 = arith.constant 1.000000e+00 : f32
    %526 = vector.broadcast %cst_146 : f32 to vector<8x128xf32>
    %527 = arith.addf %526, %525 : vector<8x128xf32>
    %528 = arith.divf %526, %527 : vector<8x128xf32>
    %529 = arith.mulf %520, %443 : vector<8x128xf32>
    %530 = arith.mulf %514, %522 : vector<8x128xf32>
    %531 = arith.addf %529, %530 : vector<8x128xf32>
    %532 = math.tanh %531 : vector<8x128xf32>
    %533 = arith.mulf %528, %532 : vector<8x128xf32>
    %534 = arith.truncf %533 : vector<8x128xf32> to vector<8x128xbf16>
    %c0_147 = arith.constant 0 : index
    %c0_148 = arith.constant 0 : index
    %535 = vector.load %arg5[%c0_147, %c0_148] : memref<128x768xbf16, #tpu.memory_space<vmem>>, vector<128x768xbf16>
    %cst_149 = arith.constant dense<0.000000e+00> : vector<8x768xf32>
    %536 = tpu.matmul %534, %535, %cst_149 {dimension_numbers = #tpu.dot_dimension_numbers<[1], [0], [0], [1], [0, 0, 1, 1], [], []>} : vector<8x128xbf16>, vector<128x768xbf16>, vector<8x768xf32> -> vector<8x768xf32>
    %537 = vector.extract_strided_slice %536 {offsets = [0, 0], sizes = [8, 128], strides = [1, 1]} : vector<8x768xf32> to vector<8x128xf32>
    %538 = arith.addf %537, %0 : vector<8x128xf32>
    %539 = vector.extract_strided_slice %536 {offsets = [0, 128], sizes = [8, 128], strides = [1, 1]} : vector<8x768xf32> to vector<8x128xf32>
    %cst_150 = arith.constant dense<0xFF800000> : vector<8xf32>
    %540 = vector.multi_reduction <maximumf>, %538, %cst_150 [1] : vector<8x128xf32> to vector<8xf32>
    %541 = vector.shape_cast %540 : vector<8xf32> to vector<8x1xf32>
    %542 = vector.broadcast %541 : vector<8x1xf32> to vector<8x128xf32>
    %543 = arith.subf %538, %542 : vector<8x128xf32>
    %544 = math.exp %543 : vector<8x128xf32>
    %cst_151 = arith.constant dense<0.000000e+00> : vector<8xf32>
    %545 = vector.multi_reduction <add>, %544, %cst_151 [1] : vector<8x128xf32> to vector<8xf32>
    %546 = vector.shape_cast %545 : vector<8xf32> to vector<8x1xf32>
    %547 = tpu.reciprocal %546 {approx = true} : vector<8x1xf32> -> vector<8x1xf32>
    %548 = vector.broadcast %547 : vector<8x1xf32> to vector<8x128xf32>
    %549 = arith.mulf %544, %548 : vector<8x128xf32>
    %c5 = arith.constant 5 : index
    %c0_152 = arith.constant 0 : index
    %c0_153 = arith.constant 0 : index
    %550 = vector.load %arg9[%c5, %c0_152, %c0_153] : memref<6x8x128xf32, #tpu.memory_space<vmem>>, vector<1x8x128xf32>
    %551 = vector.shape_cast %550 : vector<1x8x128xf32> to vector<8x128xf32>
    %552 = vector.shape_cast %549 : vector<8x128xf32> to vector<1x8x128xf32>
    tpu.vector_store %arg9[%c5, %c0_152, %c0_153], %552 {strides = array<i32>} : memref<6x8x128xf32, #tpu.memory_space<vmem>>, vector<1x8x128xf32>,
    %553 = arith.truncf %549 : vector<8x128xf32> to vector<8x128xbf16>
    %c0_154 = arith.constant 0 : index
    %c0_155 = arith.constant 0 : index
    %554 = vector.load %arg6[%c0_154, %c0_155] : memref<128x640xbf16, #tpu.memory_space<vmem>>, vector<128x640xbf16>
    %cst_156 = arith.constant dense<0.000000e+00> : vector<8x640xf32>
    %555 = tpu.matmul %553, %554, %cst_156 {dimension_numbers = #tpu.dot_dimension_numbers<[1], [0], [0], [1], [0, 0, 1, 1], [], []>} : vector<8x128xbf16>, vector<128x640xbf16>, vector<8x640xf32> -> vector<8x640xf32>
    %556 = vector.extract_strided_slice %555 {offsets = [0, 0], sizes = [8, 128], strides = [1, 1]} : vector<8x640xf32> to vector<8x128xf32>
    %557 = arith.addf %539, %556 : vector<8x128xf32>
    %c5_157 = arith.constant 5 : index
    %c0_158 = arith.constant 0 : index
    %c0_159 = arith.constant 0 : index
    %558 = vector.load %arg8[%c5_157, %c0_158, %c0_159] : memref<6x8x128xf32, #tpu.memory_space<vmem>>, vector<1x8x128xf32>
    %559 = vector.shape_cast %558 : vector<1x8x128xf32> to vector<8x128xf32>
    %560 = vector.shape_cast %557 : vector<8x128xf32> to vector<1x8x128xf32>
    tpu.vector_store %arg8[%c5_157, %c0_158, %c0_159], %560 {strides = array<i32>} : memref<6x8x128xf32, #tpu.memory_space<vmem>>, vector<1x8x128xf32>,
    return
  }
}

</mosaic_0001>

<llo_original>
// kernel: tpu_custom_call.1
$region0: #{tpu_custom_call.1}
  #allocation0 [shape = 'u32[]', space=smem, size = 0x4, offset = 0x4, fixed_abs, tag = 'smem constant byte address 0x4 - core index']
  #allocation1 [shape = 'u32[144,128]{1,0:T(1,128)}', space=vmem, size = 0x12000, scoped, tag = 'internal scratch']
  #allocation2 [shape = 'f32[48,512]{1,0:T(8,128)}', space=vmem, size = 0x18000, scoped, tag = 'scratch operand']
  %s0 = inlined_call_operand.hbm [shape: bf16[48,256], index: 0, kind: input, shape index: {}]
  %s1 = inlined_call_operand.hbm [shape: bf16[256,512], index: 1, kind: input, shape index: {}]
  %s2 = inlined_call_operand.hbm [shape: f32[1,512], index: 2, kind: input, shape index: {}]
  %s3 = inlined_call_operand.vmem [shape: f32[1,512], index: 3, kind: input, shape index: {}]
  %s4 = inlined_call_operand.hbm [shape: bf16[128,1024], index: 4, kind: input, shape index: {}]
  %s5 = inlined_call_operand.hbm [shape: bf16[128,768], index: 5, kind: input, shape index: {}]
  %s6 = inlined_call_operand.hbm [shape: bf16[128,640], index: 6, kind: input, shape index: {}]
  %s7 = inlined_call_operand.vmem [shape: f32[8,128], index: 7, kind: input, shape index: {}]
  %s8 = inlined_call_operand.hbm [shape: f32[6,8,128], index: 8, kind: output, shape index: {0}]
  %s9 = inlined_call_operand.hbm [shape: f32[6,8,128], index: 9, kind: output, shape index: {1}]
  %10 = xla_tuple %s8, %s9
  %s11 = sld [smem:[#allocation0]]
  $region74: #{tpu_custom_call.1} parent=0
    _
  %s13 = ssub.s32 1, %s11
  %s14 = scalar_select 0, %s13, %s11
  $region1: #{tpu_custom_call.1} parent=0
    #allocation3 [shape = 'u8[24576]{0}', space=vmem, size = 0x6000, scoped, tag = 'input window, operand 0, single buffered']
    #allocation4 [shape = 's32[1]{0}', space=sflag, size = 0x4, scoped, tag = 'scoped memory for tpu_custom_call.1']
    #allocation5 [shape = 's32[1]{0}', space=sflag, size = 0x4, scoped, tag = 'scoped memory for tpu_custom_call.1']
    #allocation6 [shape = 'u8[262144]{0}', space=vmem, size = 0x40000, scoped, tag = 'input window, operand 1, single buffered']
    #allocation7 [shape = 's32[1]{0}', space=sflag, size = 0x4, scoped, tag = 'scoped memory for tpu_custom_call.1']
    #allocation8 [shape = 'u8[2048]{0}', space=vmem, size = 0x800, scoped, tag = 'input window, operand 2, single buffered']
    #allocation9 [shape = 'u8[262144]{0}', space=vmem, size = 0x40000, scoped, tag = 'input window, operand 4, single buffered']
    #allocation10 [shape = 's32[1]{0}', space=sflag, size = 0x4, scoped, tag = 'scoped memory for tpu_custom_call.1']
    #allocation11 [shape = 'u8[196608]{0}', space=vmem, size = 0x30000, scoped, tag = 'input window, operand 5, single buffered']
    #allocation12 [shape = 'u8[163840]{0}', space=vmem, size = 0x28000, scoped, tag = 'input window, operand 6, single buffered']
    #allocation13 [shape = 's32[1]{0}', space=sflag, size = 0x4, scoped, tag = 'scoped memory for tpu_custom_call.1']
    #allocation14 [shape = 'u8[24576]{0}', space=vmem, size = 0x6000, scoped, tag = 'output window, operand 0, single buffered']
    #allocation15 [shape = 'u8[24576]{0}', space=vmem, size = 0x6000, scoped, tag = 'output window, operand 1, single buffered']
    #allocation16 [shape = 's32[1]{0}', space=sflag, size = 0x4, scoped, tag = 'scoped memory for tpu_custom_call.1']
    %15 = vsyncpa [#allocation4], 0
    %16 = vsyncpa [#allocation7], 0
    %17 = vsyncpa [#allocation10], 0
    %18 = vsyncpa [#allocation13], 0
    %19 = vsyncpa [#allocation5], 0
    %20 = vsyncpa [#allocation16], 0
    // Predicated region
    $region2: #{tpu_custom_call.1} parent=1 // pred_check
      _
    $region3: #{tpu_custom_call.1} parent=1 // pred_check_branch
      %22 = sbr.rel (0) target = $region5
    $region4: #{tpu_custom_call.1} parent=1 // pred_region
      %s24 = ssub.s32 768, 768
      %25 = vsyncadd [#allocation4], %s24
      %s26 = sshll.u32 [#allocation3], 4
      %s27 = int_to_ptr.vmem [resolvable:$true] %s26
      %32 = dma.hbm_to_vmem [thread:$0]  %s0, 768, %s27, [#allocation4], 128, 128, 8
    $region5: #{tpu_custom_call.1} parent=1 // pred_fallthru
      _
    // Predicated region
    $region6: #{tpu_custom_call.1} parent=1 // pred_check
      _
    $region7: #{tpu_custom_call.1} parent=1 // pred_check_branch
      %34 = sbr.rel (0) target = $region9
    $region8: #{tpu_custom_call.1} parent=1 // pred_region
      %s36 = ssub.s32 8192, 8192
      %37 = vsyncadd [#allocation7], %s36
      %s38 = sshll.u32 [#allocation6], 4
      %s39 = int_to_ptr.vmem [resolvable:$true] %s38
      %44 = dma.hbm_to_vmem [thread:$0]  %s1, 8192, %s39, [#allocation7], 256, 256, 16
    $region9: #{tpu_custom_call.1} parent=1 // pred_fallthru
      _
    // Predicated region
    $region10: #{tpu_custom_call.1} parent=1 // pred_check
      _
    $region11: #{tpu_custom_call.1} parent=1 // pred_check_branch
      %46 = sbr.rel (0) target = $region13
    $region12: #{tpu_custom_call.1} parent=1 // pred_region
      %s48 = ssub.s32 64, 64
      %49 = vsyncadd [#allocation7], %s48
      %s51 = sshll.u32 [#allocation8], 4
      %s52 = int_to_ptr.vmem [resolvable:$true] %s51
      %54 = dma.hbm_to_vmem [thread:$0]  %s2, 64, %s52, [#allocation7]
    $region13: #{tpu_custom_call.1} parent=1 // pred_fallthru
      _
    // Predicated region
    $region14: #{tpu_custom_call.1} parent=1 // pred_check
      _
    $region15: #{tpu_custom_call.1} parent=1 // pred_check_branch
      %56 = sbr.rel (0) target = $region17
    $region16: #{tpu_custom_call.1} parent=1 // pred_region
      _
    $region17: #{tpu_custom_call.1} parent=1 // pred_fallthru
      _
    // Predicated region
    $region18: #{tpu_custom_call.1} parent=1 // pred_check
      _
    $region19: #{tpu_custom_call.1} parent=1 // pred_check_branch
      %58 = sbr.rel (0) target = $region21
    $region20: #{tpu_custom_call.1} parent=1 // pred_region
      %s60 = ssub.s32 8192, 8192
      %61 = vsyncadd [#allocation10], %s60
      %s62 = sshll.u32 [#allocation9], 4
      %s63 = int_to_ptr.vmem [resolvable:$true] %s62
      %68 = dma.hbm_to_vmem [thread:$0]  %s4, 8192, %s63, [#allocation10], 512, 512, 32
    $region21: #{tpu_custom_call.1} parent=1 // pred_fallthru
      _
    // Predicated region
    $region22: #{tpu_custom_call.1} parent=1 // pred_check
      _
    $region23: #{tpu_custom_call.1} parent=1 // pred_check_branch
      %70 = sbr.rel (0) target = $region25
    $region24: #{tpu_custom_call.1} parent=1 // pred_region
      %s72 = ssub.s32 6144, 6144
      %73 = vsyncadd [#allocation10], %s72
      %s74 = sshll.u32 [#allocation11], 4
      %s75 = int_to_ptr.vmem [resolvable:$true] %s74
      %80 = dma.hbm_to_vmem [thread:$0]  %s5, 6144, %s75, [#allocation10], 384, 384, 24
    $region25: #{tpu_custom_call.1} parent=1 // pred_fallthru
      _
    // Predicated region
    $region26: #{tpu_custom_call.1} parent=1 // pred_check
      _
    $region27: #{tpu_custom_call.1} parent=1 // pred_check_branch
      %82 = sbr.rel (0) target = $region29
    $region28: #{tpu_custom_call.1} parent=1 // pred_region
      %s84 = ssub.s32 5120, 5120
      %85 = vsyncadd [#allocation13], %s84
      %s86 = sshll.u32 [#allocation12], 4
      %s87 = int_to_ptr.vmem [resolvable:$true] %s86
      %92 = dma.hbm_to_vmem [thread:$0]  %s6, 5120, %s87, [#allocation13], 320, 320, 20
    $region29: #{tpu_custom_call.1} parent=1 // pred_fallthru
      _
    // Predicated region
    $region30: #{tpu_custom_call.1} parent=1 // pred_check
      _
    $region31: #{tpu_custom_call.1} parent=1 // pred_check_branch
      %94 = sbr.rel (0) target = $region33
    $region32: #{tpu_custom_call.1} parent=1 // pred_region
      _
    $region33: #{tpu_custom_call.1} parent=1 // pred_fallthru
      _
    // Predicated region
    $region34: #{tpu_custom_call.1} parent=1 // pred_check
      _
    $region35: #{tpu_custom_call.1} parent=1 // pred_check_branch
      %96 = sbr.rel (0) target = $region37
    $region36: #{tpu_custom_call.1} parent=1 // pred_region
      %97 = dma.done [#allocation4], 768
    $region37: #{tpu_custom_call.1} parent=1 // pred_fallthru
      _
    // Predicated region
    $region38: #{tpu_custom_call.1} parent=1 // pred_check
      _
    $region39: #{tpu_custom_call.1} parent=1 // pred_check_branch
      %99 = sbr.rel (0) target = $region41
    $region40: #{tpu_custom_call.1} parent=1 // pred_region
      %100 = dma.done [#allocation7], 8192
    $region41: #{tpu_custom_call.1} parent=1 // pred_fallthru
      _
    // Predicated region
    $region42: #{tpu_custom_call.1} parent=1 // pred_check
      _
    $region43: #{tpu_custom_call.1} parent=1 // pred_check_branch
      %102 = sbr.rel (0) target = $region45
    $region44: #{tpu_custom_call.1} parent=1 // pred_region
      %103 = dma.done [#allocation7], 64
    $region45: #{tpu_custom_call.1} parent=1 // pred_fallthru
      _
    // Predicated region
    $region46: #{tpu_custom_call.1} parent=1 // pred_check
      _
    $region47: #{tpu_custom_call.1} parent=1 // pred_check_branch
      %105 = sbr.rel (0) target = $region49
    $region48: #{tpu_custom_call.1} parent=1 // pred_region
      %106 = dma.done [#allocation10], 8192
    $region49: #{tpu_custom_call.1} parent=1 // pred_fallthru
      _
    // Predicated region
    $region50: #{tpu_custom_call.1} parent=1 // pred_check
      _
    $region51: #{tpu_custom_call.1} parent=1 // pred_check_branch
      %108 = sbr.rel (0) target = $region53
    $region52: #{tpu_custom_call.1} parent=1 // pred_region
      %109 = dma.done [#allocation10], 6144
    $region53: #{tpu_custom_call.1} parent=1 // pred_fallthru
      _
    // Predicated region
    $region54: #{tpu_custom_call.1} parent=1 // pred_check
      _
    $region55: #{tpu_custom_call.1} parent=1 // pred_check_branch
      %111 = sbr.rel (0) target = $region57
    $region56: #{tpu_custom_call.1} parent=1 // pred_region
      %112 = dma.done [#allocation13], 5120
    $region57: #{tpu_custom_call.1} parent=1 // pred_fallthru
      _
    %v114 = vld [vmem:[%s7] sm:$0xff]
    %v115 = vld [vmem:[%s3] sm:$0xf]
    %v117 = vlaneseq
    %v118 = vshrl.u32 %v117, 7
    %v119 = vsub.s32 0, %v118
    %v120 = vrot.slane %v115, %v119
    %v121 = vlaneseq
    %v122 = vshrl.u32 %v121, 7
    %v123 = vsub.s32 1, %v122
    %v124 = vrot.slane %v115, %v123
    %v125 = vlaneseq
    %v126 = vshrl.u32 %v125, 7
    %v127 = vsub.s32 2, %v126
    %v128 = vrot.slane %v115, %v127
    %v129 = vlaneseq
    %v130 = vshrl.u32 %v129, 7
    %v131 = vsub.s32 3, %v130
    %v132 = vrot.slane %v115, %v131
    %v137 = vld [vmem:[#allocation3] sm:$0xff]
    %v138 = vld [vmem:[#allocation3 + $0x8] sm:$0xff]
    %v139 = vld [vmem:[#allocation3 + $0x10] sm:$0xff]
    %v140 = vld [vmem:[#allocation3 + $0x18] sm:$0xff]
    %v141 = vld [vmem:[#allocation3 + $0x20] sm:$0xff]
    %v142 = vld [vmem:[#allocation3 + $0x28] sm:$0xff]
    %v143 = vld [vmem:[#allocation6] sm:$0xff]
    %v144 = vld [vmem:[#allocation6 + $0x8] sm:$0xff]
    %v145 = vld [vmem:[#allocation6 + $0x10] sm:$0xff]
    %v146 = vld [vmem:[#allocation6 + $0x18] sm:$0xff]
    %v147 = vld [vmem:[#allocation6 + $0x20] sm:$0xff]
    %v148 = vld [vmem:[#allocation6 + $0x28] sm:$0xff]
    %v149 = vld [vmem:[#allocation6 + $0x30] sm:$0xff]
    %v150 = vld [vmem:[#allocation6 + $0x38] sm:$0xff]
    %v151 = vld [vmem:[#allocation6 + $0x40] sm:$0xff]
    %v152 = vld [vmem:[#allocation6 + $0x48] sm:$0xff]
    %v153 = vld [vmem:[#allocation6 + $0x50] sm:$0xff]
    %v154 = vld [vmem:[#allocation6 + $0x58] sm:$0xff]
    %v155 = vld [vmem:[#allocation6 + $0x60] sm:$0xff]
    %v156 = vld [vmem:[#allocation6 + $0x68] sm:$0xff]
    %v157 = vld [vmem:[#allocation6 + $0x70] sm:$0xff]
    %v158 = vld [vmem:[#allocation6 + $0x78] sm:$0xff]
    %v159 = vld [vmem:[#allocation6 + $0x80] sm:$0xff]
    %v160 = vld [vmem:[#allocation6 + $0x88] sm:$0xff]
    %v161 = vld [vmem:[#allocation6 + $0x90] sm:$0xff]
    %v162 = vld [vmem:[#allocation6 + $0x98] sm:$0xff]
    %v163 = vld [vmem:[#allocation6 + $0xa0] sm:$0xff]
    %v164 = vld [vmem:[#allocation6 + $0xa8] sm:$0xff]
    %v165 = vld [vmem:[#allocation6 + $0xb0] sm:$0xff]
    %v166 = vld [vmem:[#allocation6 + $0xb8] sm:$0xff]
    %v167 = vld [vmem:[#allocation6 + $0xc0] sm:$0xff]
    %v168 = vld [vmem:[#allocation6 + $0xc8] sm:$0xff]
    %v169 = vld [vmem:[#allocation6 + $0xd0] sm:$0xff]
    %v170 = vld [vmem:[#allocation6 + $0xd8] sm:$0xff]
    %v171 = vld [vmem:[#allocation6 + $0xe0] sm:$0xff]
    %v172 = vld [vmem:[#allocation6 + $0xe8] sm:$0xff]
    %v173 = vld [vmem:[#allocation6 + $0xf0] sm:$0xff]
    %v174 = vld [vmem:[#allocation6 + $0xf8] sm:$0xff]
    %v175 = vld [vmem:[#allocation6 + $0x100] sm:$0xff]
    %v176 = vld [vmem:[#allocation6 + $0x108] sm:$0xff]
    %v177 = vld [vmem:[#allocation6 + $0x110] sm:$0xff]
    %v178 = vld [vmem:[#allocation6 + $0x118] sm:$0xff]
    %v179 = vld [vmem:[#allocation6 + $0x120] sm:$0xff]
    %v180 = vld [vmem:[#allocation6 + $0x128] sm:$0xff]
    %v181 = vld [vmem:[#allocation6 + $0x130] sm:$0xff]
    %v182 = vld [vmem:[#allocation6 + $0x138] sm:$0xff]
    %v183 = vld [vmem:[#allocation6 + $0x140] sm:$0xff]
    %v184 = vld [vmem:[#allocation6 + $0x148] sm:$0xff]
    %v185 = vld [vmem:[#allocation6 + $0x150] sm:$0xff]
    %v186 = vld [vmem:[#allocation6 + $0x158] sm:$0xff]
    %v187 = vld [vmem:[#allocation6 + $0x160] sm:$0xff]
    %v188 = vld [vmem:[#allocation6 + $0x168] sm:$0xff]
    %v189 = vld [vmem:[#allocation6 + $0x170] sm:$0xff]
    %v190 = vld [vmem:[#allocation6 + $0x178] sm:$0xff]
    %v191 = vld [vmem:[#allocation6 + $0x180] sm:$0xff]
    %v192 = vld [vmem:[#allocation6 + $0x188] sm:$0xff]
    %v193 = vld [vmem:[#allocation6 + $0x190] sm:$0xff]
    %v194 = vld [vmem:[#allocation6 + $0x198] sm:$0xff]
    %v195 = vld [vmem:[#allocation6 + $0x1a0] sm:$0xff]
    %v196 = vld [vmem:[#allocation6 + $0x1a8] sm:$0xff]
    %v197 = vld [vmem:[#allocation6 + $0x1b0] sm:$0xff]
    %v198 = vld [vmem:[#allocation6 + $0x1b8] sm:$0xff]
    %v199 = vld [vmem:[#allocation6 + $0x1c0] sm:$0xff]
    %v200 = vld [vmem:[#allocation6 + $0x1c8] sm:$0xff]
    %v201 = vld [vmem:[#allocation6 + $0x1d0] sm:$0xff]
    %v202 = vld [vmem:[#allocation6 + $0x1d8] sm:$0xff]
    %v203 = vld [vmem:[#allocation6 + $0x1e0] sm:$0xff]
    %v204 = vld [vmem:[#allocation6 + $0x1e8] sm:$0xff]
    %v205 = vld [vmem:[#allocation6 + $0x1f0] sm:$0xff]
    %v206 = vld [vmem:[#allocation6 + $0x1f8] sm:$0xff]
    %v207 = vld [vmem:[#allocation8] sm:$0xf]
    %v209 = vlaneseq
    %v210 = vshrl.u32 %v209, 7
    %v211 = vsub.s32 0, %v210
    %v212 = vrot.slane %v207, %v211
    %v213 = vlaneseq
    %v214 = vshrl.u32 %v213, 7
    %v215 = vsub.s32 1, %v214
    %v216 = vrot.slane %v207, %v215
    %v217 = vlaneseq
    %v218 = vshrl.u32 %v217, 7
    %v219 = vsub.s32 2, %v218
    %v220 = vrot.slane %v207, %v219
    %v221 = vlaneseq
    %v222 = vshrl.u32 %v221, 7
    %v223 = vsub.s32 3, %v222
    %v224 = vrot.slane %v207, %v223
    %v235 = vunpack.c.l.b16 %v137
    %v236 = vunpack.c.h.b16 %v137
    %v237 = vunpack.c.l.b16 %v138
    %v238 = vunpack.c.h.b16 %v138
    %v239 = vunpack.c.l.b16 %v139
    %v240 = vunpack.c.h.b16 %v139
    %v241 = vunpack.c.l.b16 %v140
    %v242 = vunpack.c.h.b16 %v140
    %v243 = vunpack.c.l.b16 %v141
    %v244 = vunpack.c.h.b16 %v141
    %v245 = vunpack.c.l.b16 %v142
    %v246 = vunpack.c.h.b16 %v142
    %v247 = vpack.c.b16 %v237, %v235
    %v248 = vpack.c.b16 %v238, %v236
    %v249 = vpack.c.b16 %v241, %v239
    %v250 = vpack.c.b16 %v242, %v240
    %v251 = vpack.c.b16 %v245, %v243
    %v252 = vpack.c.b16 %v246, %v244
    %v323 = vunpack.c.l.b16 %v143
    %v324 = vunpack.c.h.b16 %v143
    %v325 = vunpack.c.l.b16 %v144
    %v326 = vunpack.c.h.b16 %v144
    %v327 = vunpack.c.l.b16 %v145
    %v328 = vunpack.c.h.b16 %v145
    %v329 = vunpack.c.l.b16 %v146
    %v330 = vunpack.c.h.b16 %v146
    %v331 = vunpack.c.l.b16 %v147
    %v332 = vunpack.c.h.b16 %v147
    %v333 = vunpack.c.l.b16 %v148
    %v334 = vunpack.c.h.b16 %v148
    %v335 = vunpack.c.l.b16 %v149
    %v336 = vunpack.c.h.b16 %v149
    %v337 = vunpack.c.l.b16 %v150
    %v338 = vunpack.c.h.b16 %v150
    %v339 = vunpack.c.l.b16 %v151
    %v340 = vunpack.c.h.b16 %v151
    %v341 = vunpack.c.l.b16 %v152
    %v342 = vunpack.c.h.b16 %v152
    %v343 = vunpack.c.l.b16 %v153
    %v344 = vunpack.c.h.b16 %v153
    %v345 = vunpack.c.l.b16 %v154
    %v346 = vunpack.c.h.b16 %v154
    %v347 = vunpack.c.l.b16 %v155
    %v348 = vunpack.c.h.b16 %v155
    %v349 = vunpack.c.l.b16 %v156
    %v350 = vunpack.c.h.b16 %v156
    %v351 = vunpack.c.l.b16 %v157
    %v352 = vunpack.c.h.b16 %v157
    %v353 = vunpack.c.l.b16 %v158
    %v354 = vunpack.c.h.b16 %v158
    %v355 = vunpack.c.l.b16 %v159
    %v356 = vunpack.c.h.b16 %v159
    %v357 = vunpack.c.l.b16 %v160
    %v358 = vunpack.c.h.b16 %v160
    %v359 = vunpack.c.l.b16 %v161
    %v360 = vunpack.c.h.b16 %v161
    %v361 = vunpack.c.l.b16 %v162
    %v362 = vunpack.c.h.b16 %v162
    %v363 = vunpack.c.l.b16 %v163
    %v364 = vunpack.c.h.b16 %v163
    %v365 = vunpack.c.l.b16 %v164
    %v366 = vunpack.c.h.b16 %v164
    %v367 = vunpack.c.l.b16 %v165
    %v368 = vunpack.c.h.b16 %v165
    %v369 = vunpack.c.l.b16 %v166
    %v370 = vunpack.c.h.b16 %v166
    %v371 = vunpack.c.l.b16 %v167
    %v372 = vunpack.c.h.b16 %v167
    %v373 = vunpack.c.l.b16 %v168
    %v374 = vunpack.c.h.b16 %v168
    %v375 = vunpack.c.l.b16 %v169
    %v376 = vunpack.c.h.b16 %v169
    %v377 = vunpack.c.l.b16 %v170
    %v378 = vunpack.c.h.b16 %v170
    %v379 = vunpack.c.l.b16 %v171
    %v380 = vunpack.c.h.b16 %v171
    %v381 = vunpack.c.l.b16 %v172
    %v382 = vunpack.c.h.b16 %v172
    %v383 = vunpack.c.l.b16 %v173
    %v384 = vunpack.c.h.b16 %v173
    %v385 = vunpack.c.l.b16 %v174
    %v386 = vunpack.c.h.b16 %v174
    %v387 = vunpack.c.l.b16 %v175
    %v388 = vunpack.c.h.b16 %v175
    %v389 = vunpack.c.l.b16 %v176
    %v390 = vunpack.c.h.b16 %v176
    %v391 = vunpack.c.l.b16 %v177
    %v392 = vunpack.c.h.b16 %v177
    %v393 = vunpack.c.l.b16 %v178
    %v394 = vunpack.c.h.b16 %v178
    %v395 = vunpack.c.l.b16 %v179
    %v396 = vunpack.c.h.b16 %v179
    %v397 = vunpack.c.l.b16 %v180
    %v398 = vunpack.c.h.b16 %v180
    %v399 = vunpack.c.l.b16 %v181
    %v400 = vunpack.c.h.b16 %v181
    %v401 = vunpack.c.l.b16 %v182
    %v402 = vunpack.c.h.b16 %v182
    %v403 = vunpack.c.l.b16 %v183
    %v404 = vunpack.c.h.b16 %v183
    %v405 = vunpack.c.l.b16 %v184
    %v406 = vunpack.c.h.b16 %v184
    %v407 = vunpack.c.l.b16 %v185
    %v408 = vunpack.c.h.b16 %v185
    %v409 = vunpack.c.l.b16 %v186
    %v410 = vunpack.c.h.b16 %v186
    %v411 = vunpack.c.l.b16 %v187
    %v412 = vunpack.c.h.b16 %v187
    %v413 = vunpack.c.l.b16 %v188
    %v414 = vunpack.c.h.b16 %v188
    %v415 = vunpack.c.l.b16 %v189
    %v416 = vunpack.c.h.b16 %v189
    %v417 = vunpack.c.l.b16 %v190
    %v418 = vunpack.c.h.b16 %v190
    %v419 = vunpack.c.l.b16 %v191
    %v420 = vunpack.c.h.b16 %v191
    %v421 = vunpack.c.l.b16 %v192
    %v422 = vunpack.c.h.b16 %v192
    %v423 = vunpack.c.l.b16 %v193
    %v424 = vunpack.c.h.b16 %v193
    %v425 = vunpack.c.l.b16 %v194
    %v426 = vunpack.c.h.b16 %v194
    %v427 = vunpack.c.l.b16 %v195
    %v428 = vunpack.c.h.b16 %v195
    %v429 = vunpack.c.l.b16 %v196
    %v430 = vunpack.c.h.b16 %v196
    %v431 = vunpack.c.l.b16 %v197
    %v432 = vunpack.c.h.b16 %v197
    %v433 = vunpack.c.l.b16 %v198
    %v434 = vunpack.c.h.b16 %v198
    %v435 = vunpack.c.l.b16 %v199
    %v436 = vunpack.c.h.b16 %v199
    %v437 = vunpack.c.l.b16 %v200
    %v438 = vunpack.c.h.b16 %v200
    %v439 = vunpack.c.l.b16 %v201
    %v440 = vunpack.c.h.b16 %v201
    %v441 = vunpack.c.l.b16 %v202
    %v442 = vunpack.c.h.b16 %v202
    %v443 = vunpack.c.l.b16 %v203
    %v444 = vunpack.c.h.b16 %v203
    %v445 = vunpack.c.l.b16 %v204
    %v446 = vunpack.c.h.b16 %v204
    %v447 = vunpack.c.l.b16 %v205
    %v448 = vunpack.c.h.b16 %v205
    %v449 = vunpack.c.l.b16 %v206
    %v450 = vunpack.c.h.b16 %v206
    %v451 = vpack.c.b16 %v327, %v323
    %v452 = vpack.c.b16 %v328, %v324
    %v453 = vpack.c.b16 %v329, %v325
    %v454 = vpack.c.b16 %v330, %v326
    %v455 = vpack.c.b16 %v335, %v331
    %v456 = vpack.c.b16 %v336, %v332
    %v457 = vpack.c.b16 %v337, %v333
    %v458 = vpack.c.b16 %v338, %v334
    %v459 = vpack.c.b16 %v343, %v339
    %v460 = vpack.c.b16 %v344, %v340
    %v461 = vpack.c.b16 %v345, %v341
    %v462 = vpack.c.b16 %v346, %v342
    %v463 = vpack.c.b16 %v351, %v347
    %v464 = vpack.c.b16 %v352, %v348
    %v465 = vpack.c.b16 %v353, %v349
    %v466 = vpack.c.b16 %v354, %v350
    %v467 = vpack.c.b16 %v359, %v355
    %v468 = vpack.c.b16 %v360, %v356
    %v469 = vpack.c.b16 %v361, %v357
    %v470 = vpack.c.b16 %v362, %v358
    %v471 = vpack.c.b16 %v367, %v363
    %v472 = vpack.c.b16 %v368, %v364
    %v473 = vpack.c.b16 %v369, %v365
    %v474 = vpack.c.b16 %v370, %v366
    %v475 = vpack.c.b16 %v375, %v371
    %v476 = vpack.c.b16 %v376, %v372
    %v477 = vpack.c.b16 %v377, %v373
    %v478 = vpack.c.b16 %v378, %v374
    %v479 = vpack.c.b16 %v383, %v379
    %v480 = vpack.c.b16 %v384, %v380
    %v481 = vpack.c.b16 %v385, %v381
    %v482 = vpack.c.b16 %v386, %v382
    %v483 = vpack.c.b16 %v391, %v387
    %v484 = vpack.c.b16 %v392, %v388
    %v485 = vpack.c.b16 %v393, %v389
    %v486 = vpack.c.b16 %v394, %v390
    %v487 = vpack.c.b16 %v399, %v395
    %v488 = vpack.c.b16 %v400, %v396
    %v489 = vpack.c.b16 %v401, %v397
    %v490 = vpack.c.b16 %v402, %v398
    %v491 = vpack.c.b16 %v407, %v403
    %v492 = vpack.c.b16 %v408, %v404
    %v493 = vpack.c.b16 %v409, %v405
    %v494 = vpack.c.b16 %v410, %v406
    %v495 = vpack.c.b16 %v415, %v411
    %v496 = vpack.c.b16 %v416, %v412
    %v497 = vpack.c.b16 %v417, %v413
    %v498 = vpack.c.b16 %v418, %v414
    %v499 = vpack.c.b16 %v423, %v419
    %v500 = vpack.c.b16 %v424, %v420
    %v501 = vpack.c.b16 %v425, %v421
    %v502 = vpack.c.b16 %v426, %v422
    %v503 = vpack.c.b16 %v431, %v427
    %v504 = vpack.c.b16 %v432, %v428
    %v505 = vpack.c.b16 %v433, %v429
    %v506 = vpack.c.b16 %v434, %v430
    %v507 = vpack.c.b16 %v439, %v435
    %v508 = vpack.c.b16 %v440, %v436
    %v509 = vpack.c.b16 %v441, %v437
    %v510 = vpack.c.b16 %v442, %v438
    %v511 = vpack.c.b16 %v447, %v443
    %v512 = vpack.c.b16 %v448, %v444
    %v513 = vpack.c.b16 %v449, %v445
    %v514 = vpack.c.b16 %v450, %v446
    %579 = vmatprep.subr.bf16.mxu0 %v480
    %580 = vmatpush1.bf16.msra.mxu0 %v479
    %581 = vmatprep.subr.bf16.mxu0 %v476
    %582 = vmatpush1.bf16.msra.mxu0 %v475
    %583 = vmatprep.subr.bf16.mxu0 %v472
    %584 = vmatpush1.bf16.msra.mxu0 %v471
    %585 = vmatprep.subr.bf16.mxu0 %v468
    %586 = vmatpush1.bf16.msra.mxu0 %v467
    %587 = vmatprep.subr.bf16.mxu0 %v464
    %588 = vmatpush1.bf16.msra.mxu0 %v463
    %589 = vmatprep.subr.bf16.mxu0 %v460
    %590 = vmatpush1.bf16.msra.mxu0 %v459
    %591 = vmatprep.subr.bf16.mxu0 %v456
    %592 = vmatpush1.bf16.msra.mxu0 %v455
    %593 = vmatprep.subr.bf16.mxu0 %v452
    %594 = vmatpush1.bf16.msra.mxu0 %v451
    %595 = vmatprep.subr.bf16.mxu0 %v512
    %596 = vmatpush2.bf16.msra.mxu0 %v511
    %597 = vmatprep.subr.bf16.mxu0 %v508
    %598 = vmatpush2.bf16.msra.mxu0 %v507
    %599 = vmatprep.subr.bf16.mxu0 %v504
    %600 = vmatpush2.bf16.msra.mxu0 %v503
    %601 = vmatprep.subr.bf16.mxu0 %v500
    %602 = vmatpush2.bf16.msra.mxu0 %v499
    %603 = vmatprep.subr.bf16.mxu0 %v496
    %604 = vmatpush2.bf16.msra.mxu0 %v495
    %605 = vmatprep.subr.bf16.mxu0 %v492
    %606 = vmatpush2.bf16.msra.mxu0 %v491
    %607 = vmatprep.subr.bf16.mxu0 %v488
    %608 = vmatpush2.bf16.msra.mxu0 %v487
    %609 = vmatprep.subr.bf16.mxu0 %v484
    %610 = vmatpush2.bf16.msra.mxu0 %v483
    %611 = vmatprep.mubr.bf16.mxu0 %v248
    %612 = vmatmul.mubr.bf16.gmra.mxu0 %v247
    %v613 = vpop.f32.mrf.mxu0
    %v614 = vadd.f32 %v212, %v613
    %v615 = vpop.f32.mrf.mxu0
    %v616 = vadd.f32 %v216, %v615
    %v617 = vpop.f32.mrf.mxu0
    %v618 = vadd.f32 %v212, %v617
    %v619 = vpop.f32.mrf.mxu0
    %v620 = vadd.f32 %v216, %v619
    %621 = vmatprep.mubr.bf16.mxu0 %v250
    %622 = vmatmul.mubr.bf16.gmra.mxu0 %v249
    %v623 = vpop.f32.mrf.mxu0
    %v624 = vadd.f32 %v212, %v623
    %v625 = vpop.f32.mrf.mxu0
    %v626 = vadd.f32 %v216, %v625
    %v627 = vpop.f32.mrf.mxu0
    %v628 = vadd.f32 %v212, %v627
    %v629 = vpop.f32.mrf.mxu0
    %v630 = vadd.f32 %v216, %v629
    %631 = vmatprep.mubr.bf16.mxu0 %v252
    %632 = vmatmul.mubr.bf16.gmra.mxu0 %v251
    %v633 = vpop.f32.mrf.mxu0
    %v634 = vadd.f32 %v212, %v633
    %v635 = vpop.f32.mrf.mxu0
    %v636 = vadd.f32 %v216, %v635
    %v637 = vpop.f32.mrf.mxu0
    %v638 = vadd.f32 %v212, %v637
    %v639 = vpop.f32.mrf.mxu0
    %v640 = vadd.f32 %v216, %v639
    %641 = vdwg.mxu0
    %642 = vmatprep.subr.bf16.mxu0 %v482
    %643 = vmatpush1.bf16.msra.mxu0 %v481
    %644 = vmatprep.subr.bf16.mxu0 %v478
    %645 = vmatpush1.bf16.msra.mxu0 %v477
    %646 = vmatprep.subr.bf16.mxu0 %v474
    %647 = vmatpush1.bf16.msra.mxu0 %v473
    %648 = vmatprep.subr.bf16.mxu0 %v470
    %649 = vmatpush1.bf16.msra.mxu0 %v469
    %650 = vmatprep.subr.bf16.mxu0 %v466
    %651 = vmatpush1.bf16.msra.mxu0 %v465
    %652 = vmatprep.subr.bf16.mxu0 %v462
    %653 = vmatpush1.bf16.msra.mxu0 %v461
    %654 = vmatprep.subr.bf16.mxu0 %v458
    %655 = vmatpush1.bf16.msra.mxu0 %v457
    %656 = vmatprep.subr.bf16.mxu0 %v454
    %657 = vmatpush1.bf16.msra.mxu0 %v453
    %658 = vmatprep.subr.bf16.mxu0 %v514
    %659 = vmatpush2.bf16.msra.mxu0 %v513
    %660 = vmatprep.subr.bf16.mxu0 %v510
    %661 = vmatpush2.bf16.msra.mxu0 %v509
    %662 = vmatprep.subr.bf16.mxu0 %v506
    %663 = vmatpush2.bf16.msra.mxu0 %v505
    %664 = vmatprep.subr.bf16.mxu0 %v502
    %665 = vmatpush2.bf16.msra.mxu0 %v501
    %666 = vmatprep.subr.bf16.mxu0 %v498
    %667 = vmatpush2.bf16.msra.mxu0 %v497
    %668 = vmatprep.subr.bf16.mxu0 %v494
    %669 = vmatpush2.bf16.msra.mxu0 %v493
    %670 = vmatprep.subr.bf16.mxu0 %v490
    %671 = vmatpush2.bf16.msra.mxu0 %v489
    %672 = vmatprep.subr.bf16.mxu0 %v486
    %673 = vmatpush2.bf16.msra.mxu0 %v485
    %674 = vmatprep.mubr.bf16.mxu0 %v248
    %675 = vmatmul.mubr.bf16.gmra.mxu0 %v247
    %v676 = vpop.f32.mrf.mxu0
    %v677 = vadd.f32 %v220, %v676
    %v678 = vpop.f32.mrf.mxu0
    %v679 = vadd.f32 %v224, %v678
    %v680 = vpop.f32.mrf.mxu0
    %v681 = vadd.f32 %v220, %v680
    %v682 = vpop.f32.mrf.mxu0
    %v683 = vadd.f32 %v224, %v682
    %684 = vmatprep.mubr.bf16.mxu0 %v250
    %685 = vmatmul.mubr.bf16.gmra.mxu0 %v249
    %v686 = vpop.f32.mrf.mxu0
    %v687 = vadd.f32 %v220, %v686
    %v688 = vpop.f32.mrf.mxu0
    %v689 = vadd.f32 %v224, %v688
    %v690 = vpop.f32.mrf.mxu0
    %v691 = vadd.f32 %v220, %v690
    %v692 = vpop.f32.mrf.mxu0
    %v693 = vadd.f32 %v224, %v692
    %694 = vmatprep.mubr.bf16.mxu0 %v252
    %695 = vmatmul.mubr.bf16.gmra.mxu0 %v251
    %v696 = vpop.f32.mrf.mxu0
    %v697 = vadd.f32 %v220, %v696
    %v698 = vpop.f32.mrf.mxu0
    %v699 = vadd.f32 %v224, %v698
    %v700 = vpop.f32.mrf.mxu0
    %v701 = vadd.f32 %v220, %v700
    %v702 = vpop.f32.mrf.mxu0
    %v703 = vadd.f32 %v224, %v702
    %704 = vdwg.mxu0
    %705 = vst [vmem:[#allocation2] sm:$0xff] %v614
    %706 = vst [vmem:[#allocation2 + $0x8] sm:$0xff] %v616
    %707 = vst [vmem:[#allocation2 + $0x10] sm:$0xff] %v677
    %708 = vst [vmem:[#allocation2 + $0x18] sm:$0xff] %v679
    %709 = vst [vmem:[#allocation2 + $0x20] sm:$0xff] %v618
    %710 = vst [vmem:[#allocation2 + $0x28] sm:$0xff] %v620
    %711 = vst [vmem:[#allocation2 + $0x30] sm:$0xff] %v681
    %712 = vst [vmem:[#allocation2 + $0x38] sm:$0xff] %v683
    %713 = vst [vmem:[#allocation2 + $0x40] sm:$0xff] %v624
    %714 = vst [vmem:[#allocation2 + $0x48] sm:$0xff] %v626
    %715 = vst [vmem:[#allocation2 + $0x50] sm:$0xff] %v687
    %716 = vst [vmem:[#allocation2 + $0x58] sm:$0xff] %v689
    %717 = vst [vmem:[#allocation2 + $0x60] sm:$0xff] %v628
    %718 = vst [vmem:[#allocation2 + $0x68] sm:$0xff] %v630
    %719 = vst [vmem:[#allocation2 + $0x70] sm:$0xff] %v691
    %720 = vst [vmem:[#allocation2 + $0x78] sm:$0xff] %v693
    %721 = vst [vmem:[#allocation2 + $0x80] sm:$0xff] %v634
    %722 = vst [vmem:[#allocation2 + $0x88] sm:$0xff] %v636
    %723 = vst [vmem:[#allocation2 + $0x90] sm:$0xff] %v697
    %724 = vst [vmem:[#allocation2 + $0x98] sm:$0xff] %v699
    %725 = vst [vmem:[#allocation2 + $0xa0] sm:$0xff] %v638
    %726 = vst [vmem:[#allocation2 + $0xa8] sm:$0xff] %v640
    %727 = vst [vmem:[#allocation2 + $0xb0] sm:$0xff] %v701
    %728 = vst [vmem:[#allocation2 + $0xb8] sm:$0xff] %v703
    %729 = vmax.xlane.f32.xlu0 %v114
    %v730 = vpop.xlane.xlu0 %729
    %v731 = vsub.f32 %v114, %v730
    %v732 = vmul.f32 %v731, 1.442695
    %v733 = vpow.pop %v732
    %734 = vadd.xlane.f32.xlu0 %v733
    %v735 = vpop.xlane.xlu0 %734
    %v736 = vrcp.pop %v735
    %v737 = vmul.f32 %v733, %v736
    %v738 = vpack.c.bf16 %v737, %v737
    %v739 = vld [vmem:[#allocation12] sm:$0xff]
    %v740 = vld [vmem:[#allocation12 + $0x8] sm:$0xff]
    %v741 = vld [vmem:[#allocation12 + $0x10] sm:$0xf]
    %v742 = vld [vmem:[#allocation12 + $0x14] sm:$0xff]
    %v743 = vld [vmem:[#allocation12 + $0x1c] sm:$0xff]
    %v744 = vld [vmem:[#allocation12 + $0x24] sm:$0xf]
    %v745 = vld [vmem:[#allocation12 + $0x28] sm:$0xff]
    %v746 = vld [vmem:[#allocation12 + $0x30] sm:$0xff]
    %v747 = vld [vmem:[#allocation12 + $0x38] sm:$0xf]
    %v748 = vld [vmem:[#allocation12 + $0x3c] sm:$0xff]
    %v749 = vld [vmem:[#allocation12 + $0x44] sm:$0xff]
    %v750 = vld [vmem:[#allocation12 + $0x4c] sm:$0xf]
    %v751 = vld [vmem:[#allocation12 + $0x50] sm:$0xff]
    %v752 = vld [vmem:[#allocation12 + $0x58] sm:$0xff]
    %v753 = vld [vmem:[#allocation12 + $0x60] sm:$0xf]
    %v754 = vld [vmem:[#allocation12 + $0x64] sm:$0xff]
    %v755 = vld [vmem:[#allocation12 + $0x6c] sm:$0xff]
    %v756 = vld [vmem:[#allocation12 + $0x74] sm:$0xf]
    %v757 = vld [vmem:[#allocation12 + $0x78] sm:$0xff]
    %v758 = vld [vmem:[#allocation12 + $0x80] sm:$0xff]
    %v759 = vld [vmem:[#allocation12 + $0x88] sm:$0xf]
    %v760 = vld [vmem:[#allocation12 + $0x8c] sm:$0xff]
    %v761 = vld [vmem:[#allocation12 + $0x94] sm:$0xff]
    %v762 = vld [vmem:[#allocation12 + $0x9c] sm:$0xf]
    %v763 = vld [vmem:[#allocation12 + $0xa0] sm:$0xff]
    %v764 = vld [vmem:[#allocation12 + $0xa8] sm:$0xff]
    %v765 = vld [vmem:[#allocation12 + $0xb0] sm:$0xf]
    %v766 = vld [vmem:[#allocation12 + $0xb4] sm:$0xff]
    %v767 = vld [vmem:[#allocation12 + $0xbc] sm:$0xff]
    %v768 = vld [vmem:[#allocation12 + $0xc4] sm:$0xf]
    %v769 = vld [vmem:[#allocation12 + $0xc8] sm:$0xff]
    %v770 = vld [vmem:[#allocation12 + $0xd0] sm:$0xff]
    %v771 = vld [vmem:[#allocation12 + $0xd8] sm:$0xf]
    %v772 = vld [vmem:[#allocation12 + $0xdc] sm:$0xff]
    %v773 = vld [vmem:[#allocation12 + $0xe4] sm:$0xff]
    %v774 = vld [vmem:[#allocation12 + $0xec] sm:$0xf]
    %v775 = vld [vmem:[#allocation12 + $0xf0] sm:$0xff]
    %v776 = vld [vmem:[#allocation12 + $0xf8] sm:$0xff]
    %v777 = vld [vmem:[#allocation12 + $0x100] sm:$0xf]
    %v778 = vld [vmem:[#allocation12 + $0x104] sm:$0xff]
    %v779 = vld [vmem:[#allocation12 + $0x10c] sm:$0xff]
    %v780 = vld [vmem:[#allocation12 + $0x114] sm:$0xf]
    %v781 = vld [vmem:[#allocation12 + $0x118] sm:$0xff]
    %v782 = vld [vmem:[#allocation12 + $0x120] sm:$0xff]
    %v783 = vld [vmem:[#allocation12 + $0x128] sm:$0xf]
    %v784 = vld [vmem:[#allocation12 + $0x12c] sm:$0xff]
    %v785 = vld [vmem:[#allocation12 + $0x134] sm:$0xff]
    %v786 = vld [vmem:[#allocation12 + $0x13c] sm:$0xf]
    %v835 = vunpack.c.l.b16 %v739
    %v836 = vunpack.c.h.b16 %v739
    %v837 = vunpack.c.l.b16 %v740
    %v838 = vunpack.c.h.b16 %v740
    %v839 = vunpack.c.l.b16 %v741
    %v840 = vunpack.c.l.b16 %v742
    %v841 = vunpack.c.h.b16 %v742
    %v842 = vunpack.c.l.b16 %v743
    %v843 = vunpack.c.h.b16 %v743
    %v844 = vunpack.c.l.b16 %v744
    %v845 = vunpack.c.l.b16 %v745
    %v846 = vunpack.c.h.b16 %v745
    %v847 = vunpack.c.l.b16 %v746
    %v848 = vunpack.c.h.b16 %v746
    %v849 = vunpack.c.l.b16 %v747
    %v850 = vunpack.c.l.b16 %v748
    %v851 = vunpack.c.h.b16 %v748
    %v852 = vunpack.c.l.b16 %v749
    %v853 = vunpack.c.h.b16 %v749
    %v854 = vunpack.c.l.b16 %v750
    %v855 = vunpack.c.l.b16 %v751
    %v856 = vunpack.c.h.b16 %v751
    %v857 = vunpack.c.l.b16 %v752
    %v858 = vunpack.c.h.b16 %v752
    %v859 = vunpack.c.l.b16 %v753
    %v860 = vunpack.c.l.b16 %v754
    %v861 = vunpack.c.h.b16 %v754
    %v862 = vunpack.c.l.b16 %v755
    %v863 = vunpack.c.h.b16 %v755
    %v864 = vunpack.c.l.b16 %v756
    %v865 = vunpack.c.l.b16 %v757
    %v866 = vunpack.c.h.b16 %v757
    %v867 = vunpack.c.l.b16 %v758
    %v868 = vunpack.c.h.b16 %v758
    %v869 = vunpack.c.l.b16 %v759
    %v870 = vunpack.c.l.b16 %v760
    %v871 = vunpack.c.h.b16 %v760
    %v872 = vunpack.c.l.b16 %v761
    %v873 = vunpack.c.h.b16 %v761
    %v874 = vunpack.c.l.b16 %v762
    %v875 = vunpack.c.l.b16 %v763
    %v876 = vunpack.c.h.b16 %v763
    %v877 = vunpack.c.l.b16 %v764
    %v878 = vunpack.c.h.b16 %v764
    %v879 = vunpack.c.l.b16 %v765
    %v880 = vunpack.c.l.b16 %v766
    %v881 = vunpack.c.h.b16 %v766
    %v882 = vunpack.c.l.b16 %v767
    %v883 = vunpack.c.h.b16 %v767
    %v884 = vunpack.c.l.b16 %v768
    %v885 = vunpack.c.l.b16 %v769
    %v886 = vunpack.c.h.b16 %v769
    %v887 = vunpack.c.l.b16 %v770
    %v888 = vunpack.c.h.b16 %v770
    %v889 = vunpack.c.l.b16 %v771
    %v890 = vunpack.c.l.b16 %v772
    %v891 = vunpack.c.h.b16 %v772
    %v892 = vunpack.c.l.b16 %v773
    %v893 = vunpack.c.h.b16 %v773
    %v894 = vunpack.c.l.b16 %v774
    %v895 = vunpack.c.l.b16 %v775
    %v896 = vunpack.c.h.b16 %v775
    %v897 = vunpack.c.l.b16 %v776
    %v898 = vunpack.c.h.b16 %v776
    %v899 = vunpack.c.l.b16 %v777
    %v900 = vunpack.c.l.b16 %v778
    %v901 = vunpack.c.h.b16 %v778
    %v902 = vunpack.c.l.b16 %v779
    %v903 = vunpack.c.h.b16 %v779
    %v904 = vunpack.c.l.b16 %v780
    %v905 = vunpack.c.l.b16 %v781
    %v906 = vunpack.c.h.b16 %v781
    %v907 = vunpack.c.l.b16 %v782
    %v908 = vunpack.c.h.b16 %v782
    %v909 = vunpack.c.l.b16 %v783
    %v910 = vunpack.c.l.b16 %v784
    %v911 = vunpack.c.h.b16 %v784
    %v912 = vunpack.c.l.b16 %v785
    %v913 = vunpack.c.h.b16 %v785
    %v914 = vunpack.c.l.b16 %v786
    %v915 = vpack.c.b16 %v840, %v835
    %v916 = vpack.c.b16 %v841, %v836
    %v917 = vpack.c.b16 %v842, %v837
    %v918 = vpack.c.b16 %v843, %v838
    %v919 = vpack.c.b16 %v844, %v839
    %v920 = vpack.c.b16 %v850, %v845
    %v921 = vpack.c.b16 %v851, %v846
    %v922 = vpack.c.b16 %v852, %v847
    %v923 = vpack.c.b16 %v853, %v848
    %v924 = vpack.c.b16 %v854, %v849
    %v925 = vpack.c.b16 %v860, %v855
    %v926 = vpack.c.b16 %v861, %v856
    %v927 = vpack.c.b16 %v862, %v857
    %v928 = vpack.c.b16 %v863, %v858
    %v929 = vpack.c.b16 %v864, %v859
    %v930 = vpack.c.b16 %v870, %v865
    %v931 = vpack.c.b16 %v871, %v866
    %v932 = vpack.c.b16 %v872, %v867
    %v933 = vpack.c.b16 %v873, %v868
    %v934 = vpack.c.b16 %v874, %v869
    %v935 = vpack.c.b16 %v880, %v875
    %v936 = vpack.c.b16 %v881, %v876
    %v937 = vpack.c.b16 %v882, %v877
    %v938 = vpack.c.b16 %v883, %v878
    %v939 = vpack.c.b16 %v884, %v879
    %v940 = vpack.c.b16 %v890, %v885
    %v941 = vpack.c.b16 %v891, %v886
    %v942 = vpack.c.b16 %v892, %v887
    %v943 = vpack.c.b16 %v893, %v888
    %v944 = vpack.c.b16 %v894, %v889
    %v945 = vpack.c.b16 %v900, %v895
    %v946 = vpack.c.b16 %v901, %v896
    %v947 = vpack.c.b16 %v902, %v897
    %v948 = vpack.c.b16 %v903, %v898
    %v949 = vpack.c.b16 %v904, %v899
    %v950 = vpack.c.b16 %v910, %v905
    %v951 = vpack.c.b16 %v911, %v906
    %v952 = vpack.c.b16 %v912, %v907
    %v953 = vpack.c.b16 %v913, %v908
    %v954 = vpack.c.b16 %v914, %v909
    %995 = vmatprep.subr.bf16.mxu0 %v951
    %996 = vmatpush1.bf16.msra.mxu0 %v950
    %997 = vmatprep.subr.bf16.mxu0 %v946
    %998 = vmatpush1.bf16.msra.mxu0 %v945
    %999 = vmatprep.subr.bf16.mxu0 %v941
    %1000 = vmatpush1.bf16.msra.mxu0 %v940
    %1001 = vmatprep.subr.bf16.mxu0 %v936
    %1002 = vmatpush1.bf16.msra.mxu0 %v935
    %1003 = vmatprep.subr.bf16.mxu0 %v931
    %1004 = vmatpush1.bf16.msra.mxu0 %v930
    %1005 = vmatprep.subr.bf16.mxu0 %v926
    %1006 = vmatpush1.bf16.msra.mxu0 %v925
    %1007 = vmatprep.subr.bf16.mxu0 %v921
    %1008 = vmatpush1.bf16.msra.mxu0 %v920
    %1009 = vmatprep.subr.bf16.mxu0 %v916
    %1010 = vmatpush1.bf16.msra.mxu0 %v915
    %1011 = vmatprep.subr.bf16.mxu0 0
    %1012 = vmatpush2.bf16.msra.mxu0 0
    %1013 = vmatprep.subr.bf16.mxu0 0
    %1014 = vmatpush2.bf16.msra.mxu0 0
    %1015 = vmatprep.subr.bf16.mxu0 0
    %1016 = vmatpush2.bf16.msra.mxu0 0
    %1017 = vmatprep.subr.bf16.mxu0 0
    %1018 = vmatpush2.bf16.msra.mxu0 0
    %1019 = vmatprep.subr.bf16.mxu0 0
    %1020 = vmatpush2.bf16.msra.mxu0 0
    %1021 = vmatprep.subr.bf16.mxu0 0
    %1022 = vmatpush2.bf16.msra.mxu0 0
    %1023 = vmatprep.subr.bf16.mxu0 0
    %1024 = vmatpush2.bf16.msra.mxu0 0
    %1025 = vmatprep.subr.bf16.mxu0 0
    %1026 = vmatpush2.bf16.msra.mxu0 0
    %1027 = vmatprep.mubr.bf16.mxu0 0
    %1028 = vmatmul.mubr.bf16.gmra.mxu0 %v738
    %v1029 = vpop.f32.mrf.mxu0
    %v1030 = vpop.f32.mrf.mxu0
    %v1031 = vadd.f32 0.0, %v1030
    %v1032 = vpop.f32.mrf.mxu0
    %v1033 = vpop.f32.mrf.mxu0
    %1034 = vdwg.mxu0
    %1035 = vmatprep.subr.bf16.mxu0 %v953
    %1036 = vmatpush1.bf16.msra.mxu0 %v952
    %1037 = vmatprep.subr.bf16.mxu0 %v948
    %1038 = vmatpush1.bf16.msra.mxu0 %v947
    %1039 = vmatprep.subr.bf16.mxu0 %v943
    %1040 = vmatpush1.bf16.msra.mxu0 %v942
    %1041 = vmatprep.subr.bf16.mxu0 %v938
    %1042 = vmatpush1.bf16.msra.mxu0 %v937
    %1043 = vmatprep.subr.bf16.mxu0 %v933
    %1044 = vmatpush1.bf16.msra.mxu0 %v932
    %1045 = vmatprep.subr.bf16.mxu0 %v928
    %1046 = vmatpush1.bf16.msra.mxu0 %v927
    %1047 = vmatprep.subr.bf16.mxu0 %v923
    %1048 = vmatpush1.bf16.msra.mxu0 %v922
    %1049 = vmatprep.subr.bf16.mxu0 %v918
    %1050 = vmatpush1.bf16.msra.mxu0 %v917
    %1051 = vmatprep.subr.bf16.mxu0 0
    %1052 = vmatpush2.bf16.msra.mxu0 0
    %1053 = vmatprep.subr.bf16.mxu0 0
    %1054 = vmatpush2.bf16.msra.mxu0 0
    %1055 = vmatprep.subr.bf16.mxu0 0
    %1056 = vmatpush2.bf16.msra.mxu0 0
    %1057 = vmatprep.subr.bf16.mxu0 0
    %1058 = vmatpush2.bf16.msra.mxu0 0
    %1059 = vmatprep.subr.bf16.mxu0 0
    %1060 = vmatpush2.bf16.msra.mxu0 0
    %1061 = vmatprep.subr.bf16.mxu0 0
    %1062 = vmatpush2.bf16.msra.mxu0 0
    %1063 = vmatprep.subr.bf16.mxu0 0
    %1064 = vmatpush2.bf16.msra.mxu0 0
    %1065 = vmatprep.subr.bf16.mxu0 0
    %1066 = vmatpush2.bf16.msra.mxu0 0
    %1067 = vmatprep.mubr.bf16.mxu0 0
    %1068 = vmatmul.mubr.bf16.gmra.mxu0 %v738
    %v1069 = vpop.f32.mrf.mxu0
    %v1070 = vadd.f32 0.0, %v1069
    %v1071 = vpop.f32.mrf.mxu0
    %v1072 = vadd.f32 0.0, %v1071
    %v1073 = vpop.f32.mrf.mxu0
    %v1074 = vpop.f32.mrf.mxu0
    %1075 = vdwg.mxu0
    %1076 = vmatprep.subr.bf16.mxu0 0
    %1077 = vmatpush1.bf16.msra.mxu0 %v954
    %1078 = vmatprep.subr.bf16.mxu0 0
    %1079 = vmatpush1.bf16.msra.mxu0 %v949
    %1080 = vmatprep.subr.bf16.mxu0 0
    %1081 = vmatpush1.bf16.msra.mxu0 %v944
    %1082 = vmatprep.subr.bf16.mxu0 0
    %1083 = vmatpush1.bf16.msra.mxu0 %v939
    %1084 = vmatprep.subr.bf16.mxu0 0
    %1085 = vmatpush1.bf16.msra.mxu0 %v934
    %1086 = vmatprep.subr.bf16.mxu0 0
    %1087 = vmatpush1.bf16.msra.mxu0 %v929
    %1088 = vmatprep.subr.bf16.mxu0 0
    %1089 = vmatpush1.bf16.msra.mxu0 %v924
    %1090 = vmatprep.subr.bf16.mxu0 0
    %1091 = vmatpush1.bf16.msra.mxu0 %v919
    %1092 = vmatprep.subr.bf16.mxu0 0
    %1093 = vmatpush2.bf16.msra.mxu0 0
    %1094 = vmatprep.subr.bf16.mxu0 0
    %1095 = vmatpush2.bf16.msra.mxu0 0
    %1096 = vmatprep.subr.bf16.mxu0 0
    %1097 = vmatpush2.bf16.msra.mxu0 0
    %1098 = vmatprep.subr.bf16.mxu0 0
    %1099 = vmatpush2.bf16.msra.mxu0 0
    %1100 = vmatprep.subr.bf16.mxu0 0
    %1101 = vmatpush2.bf16.msra.mxu0 0
    %1102 = vmatprep.subr.bf16.mxu0 0
    %1103 = vmatpush2.bf16.msra.mxu0 0
    %1104 = vmatprep.subr.bf16.mxu0 0
    %1105 = vmatpush2.bf16.msra.mxu0 0
    %1106 = vmatprep.subr.bf16.mxu0 0
    %1107 = vmatpush2.bf16.msra.mxu0 0
    %1108 = vmatprep.mubr.bf16.mxu0 0
    %1109 = vmatmul.mubr.bf16.gmra.mxu0 %v738
    %v1110 = vpop.f32.mrf.mxu0
    %v1111 = vadd.f32 0.0, %v1110
    %v1112 = vpop.f32.mrf.mxu0
    %v1113 = vpop.f32.mrf.mxu0
    %v1114 = vpop.f32.mrf.mxu0
    %1115 = vdwg.mxu0
    %v1116 = vld [vmem:[#allocation2] sm:$0xff]
    %v1117 = vld [vmem:[#allocation2 + $0x8] sm:$0xff]
    %v1118 = vld [vmem:[#allocation2 + $0x10] sm:$0xff]
    %v1119 = vld [vmem:[#allocation2 + $0x18] sm:$0xff]
    %v1120 = vadd.f32 %v1116, %v1031
    %v1121 = vadd.f32 %v1117, %v1070
    %v1122 = vadd.f32 %v1118, %v1072
    %v1123 = vadd.f32 %v1119, %v1111
    %v1124 = vadd.f32 %v1120, 0.0
    %v1125 = vadd.f32 %v1121, 0.0
    %v1126 = vadd.f32 %v1122, 0.0
    %v1127 = vadd.f32 %v1123, 0.0
    %v1128 = vxor.u32 %v1124, 2147483648
    %v1129 = vmul.f32 %v1128, 1.442695
    %v1130 = vpow.pop %v1129
    %v1131 = vadd.f32 %v1130, 1.0
    %v1132 = vrcp.pop %v1131
    %v1133 = vmul.f32 1.0, %v1132
    %v1134 = vxor.u32 %v1125, 2147483648
    %v1135 = vmul.f32 %v1134, 1.442695
    %v1136 = vpow.pop %v1135
    %v1137 = vadd.f32 %v1136, 1.0
    %v1138 = vrcp.pop %v1137
    %v1139 = vmul.f32 1.0, %v1138
    %v1140 = vtanh.pop %v1126
    %v1141 = vxor.u32 %v1127, 2147483648
    %v1142 = vmul.f32 %v1141, 1.442695
    %v1143 = vpow.pop %v1142
    %v1144 = vadd.f32 %v1143, 1.0
    %v1145 = vrcp.pop %v1144
    %v1146 = vmul.f32 1.0, %v1145
    %v1147 = vmul.f32 %v1139, 0.0
    %v1148 = vmul.f32 %v1133, %v1140
    %v1149 = vadd.f32 %v1147, %v1148
    %v1150 = vtanh.pop %v1149
    %v1151 = vmul.f32 %v1146, %v1150
    %v1152 = vpack.c.bf16 %v1151, %v1151
    %v1153 = vld [vmem:[#allocation9] sm:$0xff]
    %v1154 = vld [vmem:[#allocation9 + $0x8] sm:$0xff]
    %v1155 = vld [vmem:[#allocation9 + $0x10] sm:$0xff]
    %v1156 = vld [vmem:[#allocation9 + $0x18] sm:$0xff]
    %v1157 = vld [vmem:[#allocation9 + $0x20] sm:$0xff]
    %v1158 = vld [vmem:[#allocation9 + $0x28] sm:$0xff]
    %v1159 = vld [vmem:[#allocation9 + $0x30] sm:$0xff]
    %v1160 = vld [vmem:[#allocation9 + $0x38] sm:$0xff]
    %v1161 = vld [vmem:[#allocation9 + $0x40] sm:$0xff]
    %v1162 = vld [vmem:[#allocation9 + $0x48] sm:$0xff]
    %v1163 = vld [vmem:[#allocation9 + $0x50] sm:$0xff]
    %v1164 = vld [vmem:[#allocation9 + $0x58] sm:$0xff]
    %v1165 = vld [vmem:[#allocation9 + $0x60] sm:$0xff]
    %v1166 = vld [vmem:[#allocation9 + $0x68] sm:$0xff]
    %v1167 = vld [vmem:[#allocation9 + $0x70] sm:$0xff]
    %v1168 = vld [vmem:[#allocation9 + $0x78] sm:$0xff]
    %v1169 = vld [vmem:[#allocation9 + $0x80] sm:$0xff]
    %v1170 = vld [vmem:[#allocation9 + $0x88] sm:$0xff]
    %v1171 = vld [vmem:[#allocation9 + $0x90] sm:$0xff]
    %v1172 = vld [vmem:[#allocation9 + $0x98] sm:$0xff]
    %v1173 = vld [vmem:[#allocation9 + $0xa0] sm:$0xff]
    %v1174 = vld [vmem:[#allocation9 + $0xa8] sm:$0xff]
    %v1175 = vld [vmem:[#allocation9 + $0xb0] sm:$0xff]
    %v1176 = vld [vmem:[#allocation9 + $0xb8] sm:$0xff]
    %v1177 = vld [vmem:[#allocation9 + $0xc0] sm:$0xff]
    %v1178 = vld [vmem:[#allocation9 + $0xc8] sm:$0xff]
    %v1179 = vld [vmem:[#allocation9 + $0xd0] sm:$0xff]
    %v1180 = vld [vmem:[#allocation9 + $0xd8] sm:$0xff]
    %v1181 = vld [vmem:[#allocation9 + $0xe0] sm:$0xff]
    %v1182 = vld [vmem:[#allocation9 + $0xe8] sm:$0xff]
    %v1183 = vld [vmem:[#allocation9 + $0xf0] sm:$0xff]
    %v1184 = vld [vmem:[#allocation9 + $0xf8] sm:$0xff]
    %v1185 = vld [vmem:[#allocation9 + $0x100] sm:$0xff]
    %v1186 = vld [vmem:[#allocation9 + $0x108] sm:$0xff]
    %v1187 = vld [vmem:[#allocation9 + $0x110] sm:$0xff]
    %v1188 = vld [vmem:[#allocation9 + $0x118] sm:$0xff]
    %v1189 = vld [vmem:[#allocation9 + $0x120] sm:$0xff]
    %v1190 = vld [vmem:[#allocation9 + $0x128] sm:$0xff]
    %v1191 = vld [vmem:[#allocation9 + $0x130] sm:$0xff]
    %v1192 = vld [vmem:[#allocation9 + $0x138] sm:$0xff]
    %v1193 = vld [vmem:[#allocation9 + $0x140] sm:$0xff]
    %v1194 = vld [vmem:[#allocation9 + $0x148] sm:$0xff]
    %v1195 = vld [vmem:[#allocation9 + $0x150] sm:$0xff]
    %v1196 = vld [vmem:[#allocation9 + $0x158] sm:$0xff]
    %v1197 = vld [vmem:[#allocation9 + $0x160] sm:$0xff]
    %v1198 = vld [vmem:[#allocation9 + $0x168] sm:$0xff]
    %v1199 = vld [vmem:[#allocation9 + $0x170] sm:$0xff]
    %v1200 = vld [vmem:[#allocation9 + $0x178] sm:$0xff]
    %v1201 = vld [vmem:[#allocation9 + $0x180] sm:$0xff]
    %v1202 = vld [vmem:[#allocation9 + $0x188] sm:$0xff]
    %v1203 = vld [vmem:[#allocation9 + $0x190] sm:$0xff]
    %v1204 = vld [vmem:[#allocation9 + $0x198] sm:$0xff]
    %v1205 = vld [vmem:[#allocation9 + $0x1a0] sm:$0xff]
    %v1206 = vld [vmem:[#allocation9 + $0x1a8] sm:$0xff]
    %v1207 = vld [vmem:[#allocation9 + $0x1b0] sm:$0xff]
    %v1208 = vld [vmem:[#allocation9 + $0x1b8] sm:$0xff]
    %v1209 = vld [vmem:[#allocation9 + $0x1c0] sm:$0xff]
    %v1210 = vld [vmem:[#allocation9 + $0x1c8] sm:$0xff]
    %v1211 = vld [vmem:[#allocation9 + $0x1d0] sm:$0xff]
    %v1212 = vld [vmem:[#allocation9 + $0x1d8] sm:$0xff]
    %v1213 = vld [vmem:[#allocation9 + $0x1e0] sm:$0xff]
    %v1214 = vld [vmem:[#allocation9 + $0x1e8] sm:$0xff]
    %v1215 = vld [vmem:[#allocation9 + $0x1f0] sm:$0xff]
    %v1216 = vld [vmem:[#allocation9 + $0x1f8] sm:$0xff]
    %v1281 = vunpack.c.l.b16 %v1153
    %v1282 = vunpack.c.h.b16 %v1153
    %v1283 = vunpack.c.l.b16 %v1154
    %v1284 = vunpack.c.h.b16 %v1154
    %v1285 = vunpack.c.l.b16 %v1155
    %v1286 = vunpack.c.h.b16 %v1155
    %v1287 = vunpack.c.l.b16 %v1156
    %v1288 = vunpack.c.h.b16 %v1156
    %v1289 = vunpack.c.l.b16 %v1157
    %v1290 = vunpack.c.h.b16 %v1157
    %v1291 = vunpack.c.l.b16 %v1158
    %v1292 = vunpack.c.h.b16 %v1158
    %v1293 = vunpack.c.l.b16 %v1159
    %v1294 = vunpack.c.h.b16 %v1159
    %v1295 = vunpack.c.l.b16 %v1160
    %v1296 = vunpack.c.h.b16 %v1160
    %v1297 = vunpack.c.l.b16 %v1161
    %v1298 = vunpack.c.h.b16 %v1161
    %v1299 = vunpack.c.l.b16 %v1162
    %v1300 = vunpack.c.h.b16 %v1162
    %v1301 = vunpack.c.l.b16 %v1163
    %v1302 = vunpack.c.h.b16 %v1163
    %v1303 = vunpack.c.l.b16 %v1164
    %v1304 = vunpack.c.h.b16 %v1164
    %v1305 = vunpack.c.l.b16 %v1165
    %v1306 = vunpack.c.h.b16 %v1165
    %v1307 = vunpack.c.l.b16 %v1166
    %v1308 = vunpack.c.h.b16 %v1166
    %v1309 = vunpack.c.l.b16 %v1167
    %v1310 = vunpack.c.h.b16 %v1167
    %v1311 = vunpack.c.l.b16 %v1168
    %v1312 = vunpack.c.h.b16 %v1168
    %v1313 = vunpack.c.l.b16 %v1169
    %v1314 = vunpack.c.h.b16 %v1169
    %v1315 = vunpack.c.l.b16 %v1170
    %v1316 = vunpack.c.h.b16 %v1170
    %v1317 = vunpack.c.l.b16 %v1171
    %v1318 = vunpack.c.h.b16 %v1171
    %v1319 = vunpack.c.l.b16 %v1172
    %v1320 = vunpack.c.h.b16 %v1172
    %v1321 = vunpack.c.l.b16 %v1173
    %v1322 = vunpack.c.h.b16 %v1173
    %v1323 = vunpack.c.l.b16 %v1174
    %v1324 = vunpack.c.h.b16 %v1174
    %v1325 = vunpack.c.l.b16 %v1175
    %v1326 = vunpack.c.h.b16 %v1175
    %v1327 = vunpack.c.l.b16 %v1176
    %v1328 = vunpack.c.h.b16 %v1176
    %v1329 = vunpack.c.l.b16 %v1177
    %v1330 = vunpack.c.h.b16 %v1177
    %v1331 = vunpack.c.l.b16 %v1178
    %v1332 = vunpack.c.h.b16 %v1178
    %v1333 = vunpack.c.l.b16 %v1179
    %v1334 = vunpack.c.h.b16 %v1179
    %v1335 = vunpack.c.l.b16 %v1180
    %v1336 = vunpack.c.h.b16 %v1180
    %v1337 = vunpack.c.l.b16 %v1181
    %v1338 = vunpack.c.h.b16 %v1181
    %v1339 = vunpack.c.l.b16 %v1182
    %v1340 = vunpack.c.h.b16 %v1182
    %v1341 = vunpack.c.l.b16 %v1183
    %v1342 = vunpack.c.h.b16 %v1183
    %v1343 = vunpack.c.l.b16 %v1184
    %v1344 = vunpack.c.h.b16 %v1184
    %v1345 = vunpack.c.l.b16 %v1185
    %v1346 = vunpack.c.h.b16 %v1185
    %v1347 = vunpack.c.l.b16 %v1186
    %v1348 = vunpack.c.h.b16 %v1186
    %v1349 = vunpack.c.l.b16 %v1187
    %v1350 = vunpack.c.h.b16 %v1187
    %v1351 = vunpack.c.l.b16 %v1188
    %v1352 = vunpack.c.h.b16 %v1188
    %v1353 = vunpack.c.l.b16 %v1189
    %v1354 = vunpack.c.h.b16 %v1189
    %v1355 = vunpack.c.l.b16 %v1190
    %v1356 = vunpack.c.h.b16 %v1190
    %v1357 = vunpack.c.l.b16 %v1191
    %v1358 = vunpack.c.h.b16 %v1191
    %v1359 = vunpack.c.l.b16 %v1192
    %v1360 = vunpack.c.h.b16 %v1192
    %v1361 = vunpack.c.l.b16 %v1193
    %v1362 = vunpack.c.h.b16 %v1193
    %v1363 = vunpack.c.l.b16 %v1194
    %v1364 = vunpack.c.h.b16 %v1194
    %v1365 = vunpack.c.l.b16 %v1195
    %v1366 = vunpack.c.h.b16 %v1195
    %v1367 = vunpack.c.l.b16 %v1196
    %v1368 = vunpack.c.h.b16 %v1196
    %v1369 = vunpack.c.l.b16 %v1197
    %v1370 = vunpack.c.h.b16 %v1197
    %v1371 = vunpack.c.l.b16 %v1198
    %v1372 = vunpack.c.h.b16 %v1198
    %v1373 = vunpack.c.l.b16 %v1199
    %v1374 = vunpack.c.h.b16 %v1199
    %v1375 = vunpack.c.l.b16 %v1200
    %v1376 = vunpack.c.h.b16 %v1200
    %v1377 = vunpack.c.l.b16 %v1201
    %v1378 = vunpack.c.h.b16 %v1201
    %v1379 = vunpack.c.l.b16 %v1202
    %v1380 = vunpack.c.h.b16 %v1202
    %v1381 = vunpack.c.l.b16 %v1203
    %v1382 = vunpack.c.h.b16 %v1203
    %v1383 = vunpack.c.l.b16 %v1204
    %v1384 = vunpack.c.h.b16 %v1204
    %v1385 = vunpack.c.l.b16 %v1205
    %v1386 = vunpack.c.h.b16 %v1205
    %v1387 = vunpack.c.l.b16 %v1206
    %v1388 = vunpack.c.h.b16 %v1206
    %v1389 = vunpack.c.l.b16 %v1207
    %v1390 = vunpack.c.h.b16 %v1207
    %v1391 = vunpack.c.l.b16 %v1208
    %v1392 = vunpack.c.h.b16 %v1208
    %v1393 = vunpack.c.l.b16 %v1209
    %v1394 = vunpack.c.h.b16 %v1209
    %v1395 = vunpack.c.l.b16 %v1210
    %v1396 = vunpack.c.h.b16 %v1210
    %v1397 = vunpack.c.l.b16 %v1211
    %v1398 = vunpack.c.h.b16 %v1211
    %v1399 = vunpack.c.l.b16 %v1212
    %v1400 = vunpack.c.h.b16 %v1212
    %v1401 = vunpack.c.l.b16 %v1213
    %v1402 = vunpack.c.h.b16 %v1213
    %v1403 = vunpack.c.l.b16 %v1214
    %v1404 = vunpack.c.h.b16 %v1214
    %v1405 = vunpack.c.l.b16 %v1215
    %v1406 = vunpack.c.h.b16 %v1215
    %v1407 = vunpack.c.l.b16 %v1216
    %v1408 = vunpack.c.h.b16 %v1216
    %v1409 = vpack.c.b16 %v1289, %v1281
    %v1410 = vpack.c.b16 %v1290, %v1282
    %v1411 = vpack.c.b16 %v1291, %v1283
    %v1412 = vpack.c.b16 %v1292, %v1284
    %v1413 = vpack.c.b16 %v1293, %v1285
    %v1414 = vpack.c.b16 %v1294, %v1286
    %v1415 = vpack.c.b16 %v1295, %v1287
    %v1416 = vpack.c.b16 %v1296, %v1288
    %v1417 = vpack.c.b16 %v1305, %v1297
    %v1418 = vpack.c.b16 %v1306, %v1298
    %v1419 = vpack.c.b16 %v1307, %v1299
    %v1420 = vpack.c.b16 %v1308, %v1300
    %v1421 = vpack.c.b16 %v1309, %v1301
    %v1422 = vpack.c.b16 %v1310, %v1302
    %v1423 = vpack.c.b16 %v1311, %v1303
    %v1424 = vpack.c.b16 %v1312, %v1304
    %v1425 = vpack.c.b16 %v1321, %v1313
    %v1426 = vpack.c.b16 %v1322, %v1314
    %v1427 = vpack.c.b16 %v1323, %v1315
    %v1428 = vpack.c.b16 %v1324, %v1316
    %v1429 = vpack.c.b16 %v1325, %v1317
    %v1430 = vpack.c.b16 %v1326, %v1318
    %v1431 = vpack.c.b16 %v1327, %v1319
    %v1432 = vpack.c.b16 %v1328, %v1320
    %v1433 = vpack.c.b16 %v1337, %v1329
    %v1434 = vpack.c.b16 %v1338, %v1330
    %v1435 = vpack.c.b16 %v1339, %v1331
    %v1436 = vpack.c.b16 %v1340, %v1332
    %v1437 = vpack.c.b16 %v1341, %v1333
    %v1438 = vpack.c.b16 %v1342, %v1334
    %v1439 = vpack.c.b16 %v1343, %v1335
    %v1440 = vpack.c.b16 %v1344, %v1336
    %v1441 = vpack.c.b16 %v1353, %v1345
    %v1442 = vpack.c.b16 %v1354, %v1346
    %v1443 = vpack.c.b16 %v1355, %v1347
    %v1444 = vpack.c.b16 %v1356, %v1348
    %v1445 = vpack.c.b16 %v1357, %v1349
    %v1446 = vpack.c.b16 %v1358, %v1350
    %v1447 = vpack.c.b16 %v1359, %v1351
    %v1448 = vpack.c.b16 %v1360, %v1352
    %v1449 = vpack.c.b16 %v1369, %v1361
    %v1450 = vpack.c.b16 %v1370, %v1362
    %v1451 = vpack.c.b16 %v1371, %v1363
    %v1452 = vpack.c.b16 %v1372, %v1364
    %v1453 = vpack.c.b16 %v1373, %v1365
    %v1454 = vpack.c.b16 %v1374, %v1366
    %v1455 = vpack.c.b16 %v1375, %v1367
    %v1456 = vpack.c.b16 %v1376, %v1368
    %v1457 = vpack.c.b16 %v1385, %v1377
    %v1458 = vpack.c.b16 %v1386, %v1378
    %v1459 = vpack.c.b16 %v1387, %v1379
    %v1460 = vpack.c.b16 %v1388, %v1380
    %v1461 = vpack.c.b16 %v1389, %v1381
    %v1462 = vpack.c.b16 %v1390, %v1382
    %v1463 = vpack.c.b16 %v1391, %v1383
    %v1464 = vpack.c.b16 %v1392, %v1384
    %v1465 = vpack.c.b16 %v1401, %v1393
    %v1466 = vpack.c.b16 %v1402, %v1394
    %v1467 = vpack.c.b16 %v1403, %v1395
    %v1468 = vpack.c.b16 %v1404, %v1396
    %v1469 = vpack.c.b16 %v1405, %v1397
    %v1470 = vpack.c.b16 %v1406, %v1398
    %v1471 = vpack.c.b16 %v1407, %v1399
    %v1472 = vpack.c.b16 %v1408, %v1400
    %1537 = vmatprep.subr.bf16.mxu0 %v1466
    %1538 = vmatpush1.bf16.msra.mxu0 %v1465
    %1539 = vmatprep.subr.bf16.mxu0 %v1458
    %1540 = vmatpush1.bf16.msra.mxu0 %v1457
    %1541 = vmatprep.subr.bf16.mxu0 %v1450
    %1542 = vmatpush1.bf16.msra.mxu0 %v1449
    %1543 = vmatprep.subr.bf16.mxu0 %v1442
    %1544 = vmatpush1.bf16.msra.mxu0 %v1441
    %1545 = vmatprep.subr.bf16.mxu0 %v1434
    %1546 = vmatpush1.bf16.msra.mxu0 %v1433
    %1547 = vmatprep.subr.bf16.mxu0 %v1426
    %1548 = vmatpush1.bf16.msra.mxu0 %v1425
    %1549 = vmatprep.subr.bf16.mxu0 %v1418
    %1550 = vmatpush1.bf16.msra.mxu0 %v1417
    %1551 = vmatprep.subr.bf16.mxu0 %v1410
    %1552 = vmatpush1.bf16.msra.mxu0 %v1409
    %1553 = vmatprep.subr.bf16.mxu0 0
    %1554 = vmatpush2.bf16.msra.mxu0 0
    %1555 = vmatprep.subr.bf16.mxu0 0
    %1556 = vmatpush2.bf16.msra.mxu0 0
    %1557 = vmatprep.subr.bf16.mxu0 0
    %1558 = vmatpush2.bf16.msra.mxu0 0
    %1559 = vmatprep.subr.bf16.mxu0 0
    %1560 = vmatpush2.bf16.msra.mxu0 0
    %1561 = vmatprep.subr.bf16.mxu0 0
    %1562 = vmatpush2.bf16.msra.mxu0 0
    %1563 = vmatprep.subr.bf16.mxu0 0
    %1564 = vmatpush2.bf16.msra.mxu0 0
    %1565 = vmatprep.subr.bf16.mxu0 0
    %1566 = vmatpush2.bf16.msra.mxu0 0
    %1567 = vmatprep.subr.bf16.mxu0 0
    %1568 = vmatpush2.bf16.msra.mxu0 0
    %1569 = vmatprep.mubr.bf16.mxu0 0
    %1570 = vmatmul.mubr.bf16.gmra.mxu0 %v1152
    %v1571 = vpop.f32.mrf.mxu0
    %v1572 = vadd.f32 0.0, %v1571
    %v1573 = vpop.f32.mrf.mxu0
    %v1574 = vadd.f32 0.0, %v1573
    %v1575 = vpop.f32.mrf.mxu0
    %v1576 = vpop.f32.mrf.mxu0
    %1577 = vdwg.mxu0
    %1578 = vmatprep.subr.bf16.mxu0 %v1468
    %1579 = vmatpush1.bf16.msra.mxu0 %v1467
    %1580 = vmatprep.subr.bf16.mxu0 %v1460
    %1581 = vmatpush1.bf16.msra.mxu0 %v1459
    %1582 = vmatprep.subr.bf16.mxu0 %v1452
    %1583 = vmatpush1.bf16.msra.mxu0 %v1451
    %1584 = vmatprep.subr.bf16.mxu0 %v1444
    %1585 = vmatpush1.bf16.msra.mxu0 %v1443
    %1586 = vmatprep.subr.bf16.mxu0 %v1436
    %1587 = vmatpush1.bf16.msra.mxu0 %v1435
    %1588 = vmatprep.subr.bf16.mxu0 %v1428
    %1589 = vmatpush1.bf16.msra.mxu0 %v1427
    %1590 = vmatprep.subr.bf16.mxu0 %v1420
    %1591 = vmatpush1.bf16.msra.mxu0 %v1419
    %1592 = vmatprep.subr.bf16.mxu0 %v1412
    %1593 = vmatpush1.bf16.msra.mxu0 %v1411
    %1594 = vmatprep.subr.bf16.mxu0 0
    %1595 = vmatpush2.bf16.msra.mxu0 0
    %1596 = vmatprep.subr.bf16.mxu0 0
    %1597 = vmatpush2.bf16.msra.mxu0 0
    %1598 = vmatprep.subr.bf16.mxu0 0
    %1599 = vmatpush2.bf16.msra.mxu0 0
    %1600 = vmatprep.subr.bf16.mxu0 0
    %1601 = vmatpush2.bf16.msra.mxu0 0
    %1602 = vmatprep.subr.bf16.mxu0 0
    %1603 = vmatpush2.bf16.msra.mxu0 0
    %1604 = vmatprep.subr.bf16.mxu0 0
    %1605 = vmatpush2.bf16.msra.mxu0 0
    %1606 = vmatprep.subr.bf16.mxu0 0
    %1607 = vmatpush2.bf16.msra.mxu0 0
    %1608 = vmatprep.subr.bf16.mxu0 0
    %1609 = vmatpush2.bf16.msra.mxu0 0
    %1610 = vmatprep.mubr.bf16.mxu0 0
    %1611 = vmatmul.mubr.bf16.gmra.mxu0 %v1152
    %v1612 = vpop.f32.mrf.mxu0
    %v1613 = vadd.f32 0.0, %v1612
    %v1614 = vpop.f32.mrf.mxu0
    %v1615 = vadd.f32 0.0, %v1614
    %v1616 = vpop.f32.mrf.mxu0
    %v1617 = vpop.f32.mrf.mxu0
    %1618 = vdwg.mxu0
    %1619 = vmatprep.subr.bf16.mxu0 %v1470
    %1620 = vmatpush1.bf16.msra.mxu0 %v1469
    %1621 = vmatprep.subr.bf16.mxu0 %v1462
    %1622 = vmatpush1.bf16.msra.mxu0 %v1461
    %1623 = vmatprep.subr.bf16.mxu0 %v1454
    %1624 = vmatpush1.bf16.msra.mxu0 %v1453
    %1625 = vmatprep.subr.bf16.mxu0 %v1446
    %1626 = vmatpush1.bf16.msra.mxu0 %v1445
    %1627 = vmatprep.subr.bf16.mxu0 %v1438
    %1628 = vmatpush1.bf16.msra.mxu0 %v1437
    %1629 = vmatprep.subr.bf16.mxu0 %v1430
    %1630 = vmatpush1.bf16.msra.mxu0 %v1429
    %1631 = vmatprep.subr.bf16.mxu0 %v1422
    %1632 = vmatpush1.bf16.msra.mxu0 %v1421
    %1633 = vmatprep.subr.bf16.mxu0 %v1414
    %1634 = vmatpush1.bf16.msra.mxu0 %v1413
    %1635 = vmatprep.subr.bf16.mxu0 0
    %1636 = vmatpush2.bf16.msra.mxu0 0
    %1637 = vmatprep.subr.bf16.mxu0 0
    %1638 = vmatpush2.bf16.msra.mxu0 0
    %1639 = vmatprep.subr.bf16.mxu0 0
    %1640 = vmatpush2.bf16.msra.mxu0 0
    %1641 = vmatprep.subr.bf16.mxu0 0
    %1642 = vmatpush2.bf16.msra.mxu0 0
    %1643 = vmatprep.subr.bf16.mxu0 0
    %1644 = vmatpush2.bf16.msra.mxu0 0
    %1645 = vmatprep.subr.bf16.mxu0 0
    %1646 = vmatpush2.bf16.msra.mxu0 0
    %1647 = vmatprep.subr.bf16.mxu0 0
    %1648 = vmatpush2.bf16.msra.mxu0 0
    %1649 = vmatprep.subr.bf16.mxu0 0
    %1650 = vmatpush2.bf16.msra.mxu0 0
    %1651 = vmatprep.mubr.bf16.mxu0 0
    %1652 = vmatmul.mubr.bf16.gmra.mxu0 %v1152
    %v1653 = vpop.f32.mrf.mxu0
    %v1654 = vadd.f32 0.0, %v1653
    %v1655 = vpop.f32.mrf.mxu0
    %v1656 = vadd.f32 0.0, %v1655
    %v1657 = vpop.f32.mrf.mxu0
    %v1658 = vpop.f32.mrf.mxu0
    %1659 = vdwg.mxu0
    %1660 = vmatprep.subr.bf16.mxu0 %v1472
    %1661 = vmatpush1.bf16.msra.mxu0 %v1471
    %1662 = vmatprep.subr.bf16.mxu0 %v1464
    %1663 = vmatpush1.bf16.msra.mxu0 %v1463
    %1664 = vmatprep.subr.bf16.mxu0 %v1456
    %1665 = vmatpush1.bf16.msra.mxu0 %v1455
    %1666 = vmatprep.subr.bf16.mxu0 %v1448
    %1667 = vmatpush1.bf16.msra.mxu0 %v1447
    %1668 = vmatprep.subr.bf16.mxu0 %v1440
    %1669 = vmatpush1.bf16.msra.mxu0 %v1439
    %1670 = vmatprep.subr.bf16.mxu0 %v1432
    %1671 = vmatpush1.bf16.msra.mxu0 %v1431
    %1672 = vmatprep.subr.bf16.mxu0 %v1424
    %1673 = vmatpush1.bf16.msra.mxu0 %v1423
    %1674 = vmatprep.subr.bf16.mxu0 %v1416
    %1675 = vmatpush1.bf16.msra.mxu0 %v1415
    %1676 = vmatprep.subr.bf16.mxu0 0
    %1677 = vmatpush2.bf16.msra.mxu0 0
    %1678 = vmatprep.subr.bf16.mxu0 0
    %1679 = vmatpush2.bf16.msra.mxu0 0
    %1680 = vmatprep.subr.bf16.mxu0 0
    %1681 = vmatpush2.bf16.msra.mxu0 0
    %1682 = vmatprep.subr.bf16.mxu0 0
    %1683 = vmatpush2.bf16.msra.mxu0 0
    %1684 = vmatprep.subr.bf16.mxu0 0
    %1685 = vmatpush2.bf16.msra.mxu0 0
    %1686 = vmatprep.subr.bf16.mxu0 0
    %1687 = vmatpush2.bf16.msra.mxu0 0
    %1688 = vmatprep.subr.bf16.mxu0 0
    %1689 = vmatpush2.bf16.msra.mxu0 0
    %1690 = vmatprep.subr.bf16.mxu0 0
    %1691 = vmatpush2.bf16.msra.mxu0 0
    %1692 = vmatprep.mubr.bf16.mxu0 0
    %1693 = vmatmul.mubr.bf16.gmra.mxu0 %v1152
    %v1694 = vpop.f32.mrf.mxu0
    %v1695 = vadd.f32 0.0, %v1694
    %v1696 = vpop.f32.mrf.mxu0
    %v1697 = vadd.f32 0.0, %v1696
    %v1698 = vpop.f32.mrf.mxu0
    %v1699 = vpop.f32.mrf.mxu0
    %1700 = vdwg.mxu0
    %v1701 = vadd.f32 %v1572, 0.0
    %v1702 = vadd.f32 %v1574, 0.0
    %v1703 = vadd.f32 %v1613, 0.0
    %v1704 = vadd.f32 %v1615, 0.0
    %v1705 = vadd.f32 %v1701, %v120
    %v1706 = vadd.f32 %v1702, %v124
    %v1707 = vadd.f32 %v1703, %v128
    %v1708 = vadd.f32 %v1704, %v132
    %v1709 = vxor.u32 %v1705, 2147483648
    %v1710 = vmul.f32 %v1709, 1.442695
    %v1711 = vpow.pop %v1710
    %v1712 = vadd.f32 %v1711, 1.0
    %v1713 = vrcp.pop %v1712
    %v1714 = vmul.f32 1.0, %v1713
    %v1715 = vxor.u32 %v1706, 2147483648
    %v1716 = vmul.f32 %v1715, 1.442695
    %v1717 = vpow.pop %v1716
    %v1718 = vadd.f32 %v1717, 1.0
    %v1719 = vrcp.pop %v1718
    %v1720 = vmul.f32 1.0, %v1719
    %v1721 = vtanh.pop %v1707
    %v1722 = vxor.u32 %v1708, 2147483648
    %v1723 = vmul.f32 %v1722, 1.442695
    %v1724 = vpow.pop %v1723
    %v1725 = vadd.f32 %v1724, 1.0
    %v1726 = vrcp.pop %v1725
    %v1727 = vmul.f32 1.0, %v1726
    %v1728 = vmul.f32 %v1720, 0.0
    %v1729 = vmul.f32 %v1714, %v1721
    %v1730 = vadd.f32 %v1728, %v1729
    %v1731 = vtanh.pop %v1730
    %v1732 = vmul.f32 %v1727, %v1731
    %v1733 = vpack.c.bf16 %v1732, %v1732
    %v1734 = vld [vmem:[#allocation11] sm:$0xff]
    %v1735 = vld [vmem:[#allocation11 + $0x8] sm:$0xff]
    %v1736 = vld [vmem:[#allocation11 + $0x10] sm:$0xff]
    %v1737 = vld [vmem:[#allocation11 + $0x18] sm:$0xff]
    %v1738 = vld [vmem:[#allocation11 + $0x20] sm:$0xff]
    %v1739 = vld [vmem:[#allocation11 + $0x28] sm:$0xff]
    %v1740 = vld [vmem:[#allocation11 + $0x30] sm:$0xff]
    %v1741 = vld [vmem:[#allocation11 + $0x38] sm:$0xff]
    %v1742 = vld [vmem:[#allocation11 + $0x40] sm:$0xff]
    %v1743 = vld [vmem:[#allocation11 + $0x48] sm:$0xff]
    %v1744 = vld [vmem:[#allocation11 + $0x50] sm:$0xff]
    %v1745 = vld [vmem:[#allocation11 + $0x58] sm:$0xff]
    %v1746 = vld [vmem:[#allocation11 + $0x60] sm:$0xff]
    %v1747 = vld [vmem:[#allocation11 + $0x68] sm:$0xff]
    %v1748 = vld [vmem:[#allocation11 + $0x70] sm:$0xff]
    %v1749 = vld [vmem:[#allocation11 + $0x78] sm:$0xff]
    %v1750 = vld [vmem:[#allocation11 + $0x80] sm:$0xff]
    %v1751 = vld [vmem:[#allocation11 + $0x88] sm:$0xff]
    %v1752 = vld [vmem:[#allocation11 + $0x90] sm:$0xff]
    %v1753 = vld [vmem:[#allocation11 + $0x98] sm:$0xff]
    %v1754 = vld [vmem:[#allocation11 + $0xa0] sm:$0xff]
    %v1755 = vld [vmem:[#allocation11 + $0xa8] sm:$0xff]
    %v1756 = vld [vmem:[#allocation11 + $0xb0] sm:$0xff]
    %v1757 = vld [vmem:[#allocation11 + $0xb8] sm:$0xff]
    %v1758 = vld [vmem:[#allocation11 + $0xc0] sm:$0xff]
    %v1759 = vld [vmem:[#allocation11 + $0xc8] sm:$0xff]
    %v1760 = vld [vmem:[#allocation11 + $0xd0] sm:$0xff]
    %v1761 = vld [vmem:[#allocation11 + $0xd8] sm:$0xff]
    %v1762 = vld [vmem:[#allocation11 + $0xe0] sm:$0xff]
    %v1763 = vld [vmem:[#allocation11 + $0xe8] sm:$0xff]
    %v1764 = vld [vmem:[#allocation11 + $0xf0] sm:$0xff]
    %v1765 = vld [vmem:[#allocation11 + $0xf8] sm:$0xff]
    %v1766 = vld [vmem:[#allocation11 + $0x100] sm:$0xff]
    %v1767 = vld [vmem:[#allocation11 + $0x108] sm:$0xff]
    %v1768 = vld [vmem:[#allocation11 + $0x110] sm:$0xff]
    %v1769 = vld [vmem:[#allocation11 + $0x118] sm:$0xff]
    %v1770 = vld [vmem:[#allocation11 + $0x120] sm:$0xff]
    %v1771 = vld [vmem:[#allocation11 + $0x128] sm:$0xff]
    %v1772 = vld [vmem:[#allocation11 + $0x130] sm:$0xff]
    %v1773 = vld [vmem:[#allocation11 + $0x138] sm:$0xff]
    %v1774 = vld [vmem:[#allocation11 + $0x140] sm:$0xff]
    %v1775 = vld [vmem:[#allocation11 + $0x148] sm:$0xff]
    %v1776 = vld [vmem:[#allocation11 + $0x150] sm:$0xff]
    %v1777 = vld [vmem:[#allocation11 + $0x158] sm:$0xff]
    %v1778 = vld [vmem:[#allocation11 + $0x160] sm:$0xff]
    %v1779 = vld [vmem:[#allocation11 + $0x168] sm:$0xff]
    %v1780 = vld [vmem:[#allocation11 + $0x170] sm:$0xff]
    %v1781 = vld [vmem:[#allocation11 + $0x178] sm:$0xff]
    %v1830 = vunpack.c.l.b16 %v1734
    %v1831 = vunpack.c.h.b16 %v1734
    %v1832 = vunpack.c.l.b16 %v1735
    %v1833 = vunpack.c.h.b16 %v1735
    %v1834 = vunpack.c.l.b16 %v1736
    %v1835 = vunpack.c.h.b16 %v1736
    %v1836 = vunpack.c.l.b16 %v1737
    %v1837 = vunpack.c.h.b16 %v1737
    %v1838 = vunpack.c.l.b16 %v1738
    %v1839 = vunpack.c.h.b16 %v1738
    %v1840 = vunpack.c.l.b16 %v1739
    %v1841 = vunpack.c.h.b16 %v1739
    %v1842 = vunpack.c.l.b16 %v1740
    %v1843 = vunpack.c.h.b16 %v1740
    %v1844 = vunpack.c.l.b16 %v1741
    %v1845 = vunpack.c.h.b16 %v1741
    %v1846 = vunpack.c.l.b16 %v1742
    %v1847 = vunpack.c.h.b16 %v1742
    %v1848 = vunpack.c.l.b16 %v1743
    %v1849 = vunpack.c.h.b16 %v1743
    %v1850 = vunpack.c.l.b16 %v1744
    %v1851 = vunpack.c.h.b16 %v1744
    %v1852 = vunpack.c.l.b16 %v1745
    %v1853 = vunpack.c.h.b16 %v1745
    %v1854 = vunpack.c.l.b16 %v1746
    %v1855 = vunpack.c.h.b16 %v1746
    %v1856 = vunpack.c.l.b16 %v1747
    %v1857 = vunpack.c.h.b16 %v1747
    %v1858 = vunpack.c.l.b16 %v1748
    %v1859 = vunpack.c.h.b16 %v1748
    %v1860 = vunpack.c.l.b16 %v1749
    %v1861 = vunpack.c.h.b16 %v1749
    %v1862 = vunpack.c.l.b16 %v1750
    %v1863 = vunpack.c.h.b16 %v1750
    %v1864 = vunpack.c.l.b16 %v1751
    %v1865 = vunpack.c.h.b16 %v1751
    %v1866 = vunpack.c.l.b16 %v1752
    %v1867 = vunpack.c.h.b16 %v1752
    %v1868 = vunpack.c.l.b16 %v1753
    %v1869 = vunpack.c.h.b16 %v1753
    %v1870 = vunpack.c.l.b16 %v1754
    %v1871 = vunpack.c.h.b16 %v1754
    %v1872 = vunpack.c.l.b16 %v1755
    %v1873 = vunpack.c.h.b16 %v1755
    %v1874 = vunpack.c.l.b16 %v1756
    %v1875 = vunpack.c.h.b16 %v1756
    %v1876 = vunpack.c.l.b16 %v1757
    %v1877 = vunpack.c.h.b16 %v1757
    %v1878 = vunpack.c.l.b16 %v1758
    %v1879 = vunpack.c.h.b16 %v1758
    %v1880 = vunpack.c.l.b16 %v1759
    %v1881 = vunpack.c.h.b16 %v1759
    %v1882 = vunpack.c.l.b16 %v1760
    %v1883 = vunpack.c.h.b16 %v1760
    %v1884 = vunpack.c.l.b16 %v1761
    %v1885 = vunpack.c.h.b16 %v1761
    %v1886 = vunpack.c.l.b16 %v1762
    %v1887 = vunpack.c.h.b16 %v1762
    %v1888 = vunpack.c.l.b16 %v1763
    %v1889 = vunpack.c.h.b16 %v1763
    %v1890 = vunpack.c.l.b16 %v1764
    %v1891 = vunpack.c.h.b16 %v1764
    %v1892 = vunpack.c.l.b16 %v1765
    %v1893 = vunpack.c.h.b16 %v1765
    %v1894 = vunpack.c.l.b16 %v1766
    %v1895 = vunpack.c.h.b16 %v1766
    %v1896 = vunpack.c.l.b16 %v1767
    %v1897 = vunpack.c.h.b16 %v1767
    %v1898 = vunpack.c.l.b16 %v1768
    %v1899 = vunpack.c.h.b16 %v1768
    %v1900 = vunpack.c.l.b16 %v1769
    %v1901 = vunpack.c.h.b16 %v1769
    %v1902 = vunpack.c.l.b16 %v1770
    %v1903 = vunpack.c.h.b16 %v1770
    %v1904 = vunpack.c.l.b16 %v1771
    %v1905 = vunpack.c.h.b16 %v1771
    %v1906 = vunpack.c.l.b16 %v1772
    %v1907 = vunpack.c.h.b16 %v1772
    %v1908 = vunpack.c.l.b16 %v1773
    %v1909 = vunpack.c.h.b16 %v1773
    %v1910 = vunpack.c.l.b16 %v1774
    %v1911 = vunpack.c.h.b16 %v1774
    %v1912 = vunpack.c.l.b16 %v1775
    %v1913 = vunpack.c.h.b16 %v1775
    %v1914 = vunpack.c.l.b16 %v1776
    %v1915 = vunpack.c.h.b16 %v1776
    %v1916 = vunpack.c.l.b16 %v1777
    %v1917 = vunpack.c.h.b16 %v1777
    %v1918 = vunpack.c.l.b16 %v1778
    %v1919 = vunpack.c.h.b16 %v1778
    %v1920 = vunpack.c.l.b16 %v1779
    %v1921 = vunpack.c.h.b16 %v1779
    %v1922 = vunpack.c.l.b16 %v1780
    %v1923 = vunpack.c.h.b16 %v1780
    %v1924 = vunpack.c.l.b16 %v1781
    %v1925 = vunpack.c.h.b16 %v1781
    %v1926 = vpack.c.b16 %v1836, %v1830
    %v1927 = vpack.c.b16 %v1837, %v1831
    %v1928 = vpack.c.b16 %v1838, %v1832
    %v1929 = vpack.c.b16 %v1839, %v1833
    %v1930 = vpack.c.b16 %v1840, %v1834
    %v1931 = vpack.c.b16 %v1841, %v1835
    %v1932 = vpack.c.b16 %v1848, %v1842
    %v1933 = vpack.c.b16 %v1849, %v1843
    %v1934 = vpack.c.b16 %v1850, %v1844
    %v1935 = vpack.c.b16 %v1851, %v1845
    %v1936 = vpack.c.b16 %v1852, %v1846
    %v1937 = vpack.c.b16 %v1853, %v1847
    %v1938 = vpack.c.b16 %v1860, %v1854
    %v1939 = vpack.c.b16 %v1861, %v1855
    %v1940 = vpack.c.b16 %v1862, %v1856
    %v1941 = vpack.c.b16 %v1863, %v1857
    %v1942 = vpack.c.b16 %v1864, %v1858
    %v1943 = vpack.c.b16 %v1865, %v1859
    %v1944 = vpack.c.b16 %v1872, %v1866
    %v1945 = vpack.c.b16 %v1873, %v1867
    %v1946 = vpack.c.b16 %v1874, %v1868
    %v1947 = vpack.c.b16 %v1875, %v1869
    %v1948 = vpack.c.b16 %v1876, %v1870
    %v1949 = vpack.c.b16 %v1877, %v1871
    %v1950 = vpack.c.b16 %v1884, %v1878
    %v1951 = vpack.c.b16 %v1885, %v1879
    %v1952 = vpack.c.b16 %v1886, %v1880
    %v1953 = vpack.c.b16 %v1887, %v1881
    %v1954 = vpack.c.b16 %v1888, %v1882
    %v1955 = vpack.c.b16 %v1889, %v1883
    %v1956 = vpack.c.b16 %v1896, %v1890
    %v1957 = vpack.c.b16 %v1897, %v1891
    %v1958 = vpack.c.b16 %v1898, %v1892
    %v1959 = vpack.c.b16 %v1899, %v1893
    %v1960 = vpack.c.b16 %v1900, %v1894
    %v1961 = vpack.c.b16 %v1901, %v1895
    %v1962 = vpack.c.b16 %v1908, %v1902
    %v1963 = vpack.c.b16 %v1909, %v1903
    %v1964 = vpack.c.b16 %v1910, %v1904
    %v1965 = vpack.c.b16 %v1911, %v1905
    %v1966 = vpack.c.b16 %v1912, %v1906
    %v1967 = vpack.c.b16 %v1913, %v1907
    %v1968 = vpack.c.b16 %v1920, %v1914
    %v1969 = vpack.c.b16 %v1921, %v1915
    %v1970 = vpack.c.b16 %v1922, %v1916
    %v1971 = vpack.c.b16 %v1923, %v1917
    %v1972 = vpack.c.b16 %v1924, %v1918
    %v1973 = vpack.c.b16 %v1925, %v1919
    %2022 = vmatprep.subr.bf16.mxu0 %v1969
    %2023 = vmatpush1.bf16.msra.mxu0 %v1968
    %2024 = vmatprep.subr.bf16.mxu0 %v1963
    %2025 = vmatpush1.bf16.msra.mxu0 %v1962
    %2026 = vmatprep.subr.bf16.mxu0 %v1957
    %2027 = vmatpush1.bf16.msra.mxu0 %v1956
    %2028 = vmatprep.subr.bf16.mxu0 %v1951
    %2029 = vmatpush1.bf16.msra.mxu0 %v1950
    %2030 = vmatprep.subr.bf16.mxu0 %v1945
    %2031 = vmatpush1.bf16.msra.mxu0 %v1944
    %2032 = vmatprep.subr.bf16.mxu0 %v1939
    %2033 = vmatpush1.bf16.msra.mxu0 %v1938
    %2034 = vmatprep.subr.bf16.mxu0 %v1933
    %2035 = vmatpush1.bf16.msra.mxu0 %v1932
    %2036 = vmatprep.subr.bf16.mxu0 %v1927
    %2037 = vmatpush1.bf16.msra.mxu0 %v1926
    %2038 = vmatprep.subr.bf16.mxu0 0
    %2039 = vmatpush2.bf16.msra.mxu0 0
    %2040 = vmatprep.subr.bf16.mxu0 0
    %2041 = vmatpush2.bf16.msra.mxu0 0
    %2042 = vmatprep.subr.bf16.mxu0 0
    %2043 = vmatpush2.bf16.msra.mxu0 0
    %2044 = vmatprep.subr.bf16.mxu0 0
    %2045 = vmatpush2.bf16.msra.mxu0 0
    %2046 = vmatprep.subr.bf16.mxu0 0
    %2047 = vmatpush2.bf16.msra.mxu0 0
    %2048 = vmatprep.subr.bf16.mxu0 0
    %2049 = vmatpush2.bf16.msra.mxu0 0
    %2050 = vmatprep.subr.bf16.mxu0 0
    %2051 = vmatpush2.bf16.msra.mxu0 0
    %2052 = vmatprep.subr.bf16.mxu0 0
    %2053 = vmatpush2.bf16.msra.mxu0 0
    %2054 = vmatprep.mubr.bf16.mxu0 0
    %2055 = vmatmul.mubr.bf16.gmra.mxu0 %v1733
    %v2056 = vpop.f32.mrf.mxu0
    %v2057 = vadd.f32 0.0, %v2056
    %v2058 = vpop.f32.mrf.mxu0
    %v2059 = vadd.f32 0.0, %v2058
    %v2060 = vpop.f32.mrf.mxu0
    %v2061 = vpop.f32.mrf.mxu0
    %2062 = vdwg.mxu0
    %2063 = vmatprep.subr.bf16.mxu0 %v1971
    %2064 = vmatpush1.bf16.msra.mxu0 %v1970
    %2065 = vmatprep.subr.bf16.mxu0 %v1965
    %2066 = vmatpush1.bf16.msra.mxu0 %v1964
    %2067 = vmatprep.subr.bf16.mxu0 %v1959
    %2068 = vmatpush1.bf16.msra.mxu0 %v1958
    %2069 = vmatprep.subr.bf16.mxu0 %v1953
    %2070 = vmatpush1.bf16.msra.mxu0 %v1952
    %2071 = vmatprep.subr.bf16.mxu0 %v1947
    %2072 = vmatpush1.bf16.msra.mxu0 %v1946
    %2073 = vmatprep.subr.bf16.mxu0 %v1941
    %2074 = vmatpush1.bf16.msra.mxu0 %v1940
    %2075 = vmatprep.subr.bf16.mxu0 %v1935
    %2076 = vmatpush1.bf16.msra.mxu0 %v1934
    %2077 = vmatprep.subr.bf16.mxu0 %v1929
    %2078 = vmatpush1.bf16.msra.mxu0 %v1928
    %2079 = vmatprep.subr.bf16.mxu0 0
    %2080 = vmatpush2.bf16.msra.mxu0 0
    %2081 = vmatprep.subr.bf16.mxu0 0
    %2082 = vmatpush2.bf16.msra.mxu0 0
    %2083 = vmatprep.subr.bf16.mxu0 0
    %2084 = vmatpush2.bf16.msra.mxu0 0
    %2085 = vmatprep.subr.bf16.mxu0 0
    %2086 = vmatpush2.bf16.msra.mxu0 0
    %2087 = vmatprep.subr.bf16.mxu0 0
    %2088 = vmatpush2.bf16.msra.mxu0 0
    %2089 = vmatprep.subr.bf16.mxu0 0
    %2090 = vmatpush2.bf16.msra.mxu0 0
    %2091 = vmatprep.subr.bf16.mxu0 0
    %2092 = vmatpush2.bf16.msra.mxu0 0
    %2093 = vmatprep.subr.bf16.mxu0 0
    %2094 = vmatpush2.bf16.msra.mxu0 0
    %2095 = vmatprep.mubr.bf16.mxu0 0
    %2096 = vmatmul.mubr.bf16.gmra.mxu0 %v1733
    %v2097 = vpop.f32.mrf.mxu0
    %v2098 = vadd.f32 0.0, %v2097
    %v2099 = vpop.f32.mrf.mxu0
    %v2100 = vadd.f32 0.0, %v2099
    %v2101 = vpop.f32.mrf.mxu0
    %v2102 = vpop.f32.mrf.mxu0
    %2103 = vdwg.mxu0
    %2104 = vmatprep.subr.bf16.mxu0 %v1973
    %2105 = vmatpush1.bf16.msra.mxu0 %v1972
    %2106 = vmatprep.subr.bf16.mxu0 %v1967
    %2107 = vmatpush1.bf16.msra.mxu0 %v1966
    %2108 = vmatprep.subr.bf16.mxu0 %v1961
    %2109 = vmatpush1.bf16.msra.mxu0 %v1960
    %2110 = vmatprep.subr.bf16.mxu0 %v1955
    %2111 = vmatpush1.bf16.msra.mxu0 %v1954
    %2112 = vmatprep.subr.bf16.mxu0 %v1949
    %2113 = vmatpush1.bf16.msra.mxu0 %v1948
    %2114 = vmatprep.subr.bf16.mxu0 %v1943
    %2115 = vmatpush1.bf16.msra.mxu0 %v1942
    %2116 = vmatprep.subr.bf16.mxu0 %v1937
    %2117 = vmatpush1.bf16.msra.mxu0 %v1936
    %2118 = vmatprep.subr.bf16.mxu0 %v1931
    %2119 = vmatpush1.bf16.msra.mxu0 %v1930
    %2120 = vmatprep.subr.bf16.mxu0 0
    %2121 = vmatpush2.bf16.msra.mxu0 0
    %2122 = vmatprep.subr.bf16.mxu0 0
    %2123 = vmatpush2.bf16.msra.mxu0 0
    %2124 = vmatprep.subr.bf16.mxu0 0
    %2125 = vmatpush2.bf16.msra.mxu0 0
    %2126 = vmatprep.subr.bf16.mxu0 0
    %2127 = vmatpush2.bf16.msra.mxu0 0
    %2128 = vmatprep.subr.bf16.mxu0 0
    %2129 = vmatpush2.bf16.msra.mxu0 0
    %2130 = vmatprep.subr.bf16.mxu0 0
    %2131 = vmatpush2.bf16.msra.mxu0 0
    %2132 = vmatprep.subr.bf16.mxu0 0
    %2133 = vmatpush2.bf16.msra.mxu0 0
    %2134 = vmatprep.subr.bf16.mxu0 0
    %2135 = vmatpush2.bf16.msra.mxu0 0
    %2136 = vmatprep.mubr.bf16.mxu0 0
    %2137 = vmatmul.mubr.bf16.gmra.mxu0 %v1733
    %v2138 = vpop.f32.mrf.mxu0
    %v2139 = vadd.f32 0.0, %v2138
    %v2140 = vpop.f32.mrf.mxu0
    %v2141 = vadd.f32 0.0, %v2140
    %v2142 = vpop.f32.mrf.mxu0
    %v2143 = vpop.f32.mrf.mxu0
    %2144 = vdwg.mxu0
    %v2145 = vadd.f32 %v2057, %v114
    %2146 = vmax.xlane.f32.xlu0 %v2145
    %v2147 = vpop.xlane.xlu0 %2146
    %v2148 = vsub.f32 %v2145, %v2147
    %v2149 = vmul.f32 %v2148, 1.442695
    %v2150 = vpow.pop %v2149
    %2151 = vadd.xlane.f32.xlu0 %v2150
    %v2152 = vpop.xlane.xlu0 %2151
    %v2153 = vrcp.pop %v2152
    %v2154 = vmul.f32 %v2150, %v2153
    %2155 = vst [vmem:[#allocation15] sm:$0xff] %v2154
    %v2156 = vpack.c.bf16 %v2154, %v2154
    %v2157 = vld [vmem:[#allocation12] sm:$0xff]
    %v2158 = vld [vmem:[#allocation12 + $0x8] sm:$0xff]
    %v2159 = vld [vmem:[#allocation12 + $0x10] sm:$0xf]
    %v2160 = vld [vmem:[#allocation12 + $0x14] sm:$0xff]
    %v2161 = vld [vmem:[#allocation12 + $0x1c] sm:$0xff]
    %v2162 = vld [vmem:[#allocation12 + $0x24] sm:$0xf]
    %v2163 = vld [vmem:[#allocation12 + $0x28] sm:$0xff]
    %v2164 = vld [vmem:[#allocation12 + $0x30] sm:$0xff]
    %v2165 = vld [vmem:[#allocation12 + $0x38] sm:$0xf]
    %v2166 = vld [vmem:[#allocation12 + $0x3c] sm:$0xff]
    %v2167 = vld [vmem:[#allocation12 + $0x44] sm:$0xff]
    %v2168 = vld [vmem:[#allocation12 + $0x4c] sm:$0xf]
    %v2169 = vld [vmem:[#allocation12 + $0x50] sm:$0xff]
    %v2170 = vld [vmem:[#allocation12 + $0x58] sm:$0xff]
    %v2171 = vld [vmem:[#allocation12 + $0x60] sm:$0xf]
    %v2172 = vld [vmem:[#allocation12 + $0x64] sm:$0xff]
    %v2173 = vld [vmem:[#allocation12 + $0x6c] sm:$0xff]
    %v2174 = vld [vmem:[#allocation12 + $0x74] sm:$0xf]
    %v2175 = vld [vmem:[#allocation12 + $0x78] sm:$0xff]
    %v2176 = vld [vmem:[#allocation12 + $0x80] sm:$0xff]
    %v2177 = vld [vmem:[#allocation12 + $0x88] sm:$0xf]
    %v2178 = vld [vmem:[#allocation12 + $0x8c] sm:$0xff]
    %v2179 = vld [vmem:[#allocation12 + $0x94] sm:$0xff]
    %v2180 = vld [vmem:[#allocation12 + $0x9c] sm:$0xf]
    %v2181 = vld [vmem:[#allocation12 + $0xa0] sm:$0xff]
    %v2182 = vld [vmem:[#allocation12 + $0xa8] sm:$0xff]
    %v2183 = vld [vmem:[#allocation12 + $0xb0] sm:$0xf]
    %v2184 = vld [vmem:[#allocation12 + $0xb4] sm:$0xff]
    %v2185 = vld [vmem:[#allocation12 + $0xbc] sm:$0xff]
    %v2186 = vld [vmem:[#allocation12 + $0xc4] sm:$0xf]
    %v2187 = vld [vmem:[#allocation12 + $0xc8] sm:$0xff]
    %v2188 = vld [vmem:[#allocation12 + $0xd0] sm:$0xff]
    %v2189 = vld [vmem:[#allocation12 + $0xd8] sm:$0xf]
    %v2190 = vld [vmem:[#allocation12 + $0xdc] sm:$0xff]
    %v2191 = vld [vmem:[#allocation12 + $0xe4] sm:$0xff]
    %v2192 = vld [vmem:[#allocation12 + $0xec] sm:$0xf]
    %v2193 = vld [vmem:[#allocation12 + $0xf0] sm:$0xff]
    %v2194 = vld [vmem:[#allocation12 + $0xf8] sm:$0xff]
    %v2195 = vld [vmem:[#allocation12 + $0x100] sm:$0xf]
    %v2196 = vld [vmem:[#allocation12 + $0x104] sm:$0xff]
    %v2197 = vld [vmem:[#allocation12 + $0x10c] sm:$0xff]
    %v2198 = vld [vmem:[#allocation12 + $0x114] sm:$0xf]
    %v2199 = vld [vmem:[#allocation12 + $0x118] sm:$0xff]
    %v2200 = vld [vmem:[#allocation12 + $0x120] sm:$0xff]
    %v2201 = vld [vmem:[#allocation12 + $0x128] sm:$0xf]
    %v2202 = vld [vmem:[#allocation12 + $0x12c] sm:$0xff]
    %v2203 = vld [vmem:[#allocation12 + $0x134] sm:$0xff]
    %v2204 = vld [vmem:[#allocation12 + $0x13c] sm:$0xf]
    %v2253 = vunpack.c.l.b16 %v2157
    %v2254 = vunpack.c.h.b16 %v2157
    %v2255 = vunpack.c.l.b16 %v2158
    %v2256 = vunpack.c.h.b16 %v2158
    %v2257 = vunpack.c.l.b16 %v2159
    %v2258 = vunpack.c.l.b16 %v2160
    %v2259 = vunpack.c.h.b16 %v2160
    %v2260 = vunpack.c.l.b16 %v2161
    %v2261 = vunpack.c.h.b16 %v2161
    %v2262 = vunpack.c.l.b16 %v2162
    %v2263 = vunpack.c.l.b16 %v2163
    %v2264 = vunpack.c.h.b16 %v2163
    %v2265 = vunpack.c.l.b16 %v2164
    %v2266 = vunpack.c.h.b16 %v2164
    %v2267 = vunpack.c.l.b16 %v2165
    %v2268 = vunpack.c.l.b16 %v2166
    %v2269 = vunpack.c.h.b16 %v2166
    %v2270 = vunpack.c.l.b16 %v2167
    %v2271 = vunpack.c.h.b16 %v2167
    %v2272 = vunpack.c.l.b16 %v2168
    %v2273 = vunpack.c.l.b16 %v2169
    %v2274 = vunpack.c.h.b16 %v2169
    %v2275 = vunpack.c.l.b16 %v2170
    %v2276 = vunpack.c.h.b16 %v2170
    %v2277 = vunpack.c.l.b16 %v2171
    %v2278 = vunpack.c.l.b16 %v2172
    %v2279 = vunpack.c.h.b16 %v2172
    %v2280 = vunpack.c.l.b16 %v2173
    %v2281 = vunpack.c.h.b16 %v2173
    %v2282 = vunpack.c.l.b16 %v2174
    %v2283 = vunpack.c.l.b16 %v2175
    %v2284 = vunpack.c.h.b16 %v2175
    %v2285 = vunpack.c.l.b16 %v2176
    %v2286 = vunpack.c.h.b16 %v2176
    %v2287 = vunpack.c.l.b16 %v2177
    %v2288 = vunpack.c.l.b16 %v2178
    %v2289 = vunpack.c.h.b16 %v2178
    %v2290 = vunpack.c.l.b16 %v2179
    %v2291 = vunpack.c.h.b16 %v2179
    %v2292 = vunpack.c.l.b16 %v2180
    %v2293 = vunpack.c.l.b16 %v2181
    %v2294 = vunpack.c.h.b16 %v2181
    %v2295 = vunpack.c.l.b16 %v2182
    %v2296 = vunpack.c.h.b16 %v2182
    %v2297 = vunpack.c.l.b16 %v2183
    %v2298 = vunpack.c.l.b16 %v2184
    %v2299 = vunpack.c.h.b16 %v2184
    %v2300 = vunpack.c.l.b16 %v2185
    %v2301 = vunpack.c.h.b16 %v2185
    %v2302 = vunpack.c.l.b16 %v2186
    %v2303 = vunpack.c.l.b16 %v2187
    %v2304 = vunpack.c.h.b16 %v2187
    %v2305 = vunpack.c.l.b16 %v2188
    %v2306 = vunpack.c.h.b16 %v2188
    %v2307 = vunpack.c.l.b16 %v2189
    %v2308 = vunpack.c.l.b16 %v2190
    %v2309 = vunpack.c.h.b16 %v2190
    %v2310 = vunpack.c.l.b16 %v2191
    %v2311 = vunpack.c.h.b16 %v2191
    %v2312 = vunpack.c.l.b16 %v2192
    %v2313 = vunpack.c.l.b16 %v2193
    %v2314 = vunpack.c.h.b16 %v2193
    %v2315 = vunpack.c.l.b16 %v2194
    %v2316 = vunpack.c.h.b16 %v2194
    %v2317 = vunpack.c.l.b16 %v2195
    %v2318 = vunpack.c.l.b16 %v2196
    %v2319 = vunpack.c.h.b16 %v2196
    %v2320 = vunpack.c.l.b16 %v2197
    %v2321 = vunpack.c.h.b16 %v2197
    %v2322 = vunpack.c.l.b16 %v2198
    %v2323 = vunpack.c.l.b16 %v2199
    %v2324 = vunpack.c.h.b16 %v2199
    %v2325 = vunpack.c.l.b16 %v2200
    %v2326 = vunpack.c.h.b16 %v2200
    %v2327 = vunpack.c.l.b16 %v2201
    %v2328 = vunpack.c.l.b16 %v2202
    %v2329 = vunpack.c.h.b16 %v2202
    %v2330 = vunpack.c.l.b16 %v2203
    %v2331 = vunpack.c.h.b16 %v2203
    %v2332 = vunpack.c.l.b16 %v2204
    %v2333 = vpack.c.b16 %v2258, %v2253
    %v2334 = vpack.c.b16 %v2259, %v2254
    %v2335 = vpack.c.b16 %v2260, %v2255
    %v2336 = vpack.c.b16 %v2261, %v2256
    %v2337 = vpack.c.b16 %v2262, %v2257
    %v2338 = vpack.c.b16 %v2268, %v2263
    %v2339 = vpack.c.b16 %v2269, %v2264
    %v2340 = vpack.c.b16 %v2270, %v2265
    %v2341 = vpack.c.b16 %v2271, %v2266
    %v2342 = vpack.c.b16 %v2272, %v2267
    %v2343 = vpack.c.b16 %v2278, %v2273
    %v2344 = vpack.c.b16 %v2279, %v2274
    %v2345 = vpack.c.b16 %v2280, %v2275
    %v2346 = vpack.c.b16 %v2281, %v2276
    %v2347 = vpack.c.b16 %v2282, %v2277
    %v2348 = vpack.c.b16 %v2288, %v2283
    %v2349 = vpack.c.b16 %v2289, %v2284
    %v2350 = vpack.c.b16 %v2290, %v2285
    %v2351 = vpack.c.b16 %v2291, %v2286
    %v2352 = vpack.c.b16 %v2292, %v2287
    %v2353 = vpack.c.b16 %v2298, %v2293
    %v2354 = vpack.c.b16 %v2299, %v2294
    %v2355 = vpack.c.b16 %v2300, %v2295
    %v2356 = vpack.c.b16 %v2301, %v2296
    %v2357 = vpack.c.b16 %v2302, %v2297
    %v2358 = vpack.c.b16 %v2308, %v2303
    %v2359 = vpack.c.b16 %v2309, %v2304
    %v2360 = vpack.c.b16 %v2310, %v2305
    %v2361 = vpack.c.b16 %v2311, %v2306
    %v2362 = vpack.c.b16 %v2312, %v2307
    %v2363 = vpack.c.b16 %v2318, %v2313
    %v2364 = vpack.c.b16 %v2319, %v2314
    %v2365 = vpack.c.b16 %v2320, %v2315
    %v2366 = vpack.c.b16 %v2321, %v2316
    %v2367 = vpack.c.b16 %v2322, %v2317
    %v2368 = vpack.c.b16 %v2328, %v2323
    %v2369 = vpack.c.b16 %v2329, %v2324
    %v2370 = vpack.c.b16 %v2330, %v2325
    %v2371 = vpack.c.b16 %v2331, %v2326
    %v2372 = vpack.c.b16 %v2332, %v2327
    %2413 = vmatprep.subr.bf16.mxu0 %v2369
    %2414 = vmatpush1.bf16.msra.mxu0 %v2368
    %2415 = vmatprep.subr.bf16.mxu0 %v2364
    %2416 = vmatpush1.bf16.msra.mxu0 %v2363
    %2417 = vmatprep.subr.bf16.mxu0 %v2359
    %2418 = vmatpush1.bf16.msra.mxu0 %v2358
    %2419 = vmatprep.subr.bf16.mxu0 %v2354
    %2420 = vmatpush1.bf16.msra.mxu0 %v2353
    %2421 = vmatprep.subr.bf16.mxu0 %v2349
    %2422 = vmatpush1.bf16.msra.mxu0 %v2348
    %2423 = vmatprep.subr.bf16.mxu0 %v2344
    %2424 = vmatpush1.bf16.msra.mxu0 %v2343
    %2425 = vmatprep.subr.bf16.mxu0 %v2339
    %2426 = vmatpush1.bf16.msra.mxu0 %v2338
    %2427 = vmatprep.subr.bf16.mxu0 %v2334
    %2428 = vmatpush1.bf16.msra.mxu0 %v2333
    %2429 = vmatprep.subr.bf16.mxu0 0
    %2430 = vmatpush2.bf16.msra.mxu0 0
    %2431 = vmatprep.subr.bf16.mxu0 0
    %2432 = vmatpush2.bf16.msra.mxu0 0
    %2433 = vmatprep.subr.bf16.mxu0 0
    %2434 = vmatpush2.bf16.msra.mxu0 0
    %2435 = vmatprep.subr.bf16.mxu0 0
    %2436 = vmatpush2.bf16.msra.mxu0 0
    %2437 = vmatprep.subr.bf16.mxu0 0
    %2438 = vmatpush2.bf16.msra.mxu0 0
    %2439 = vmatprep.subr.bf16.mxu0 0
    %2440 = vmatpush2.bf16.msra.mxu0 0
    %2441 = vmatprep.subr.bf16.mxu0 0
    %2442 = vmatpush2.bf16.msra.mxu0 0
    %2443 = vmatprep.subr.bf16.mxu0 0
    %2444 = vmatpush2.bf16.msra.mxu0 0
    %2445 = vmatprep.mubr.bf16.mxu0 0
    %2446 = vmatmul.mubr.bf16.gmra.mxu0 %v2156
    %v2447 = vpop.f32.mrf.mxu0
    %v2448 = vadd.f32 0.0, %v2447
    %v2449 = vpop.f32.mrf.mxu0
    %v2450 = vadd.f32 0.0, %v2449
    %v2451 = vpop.f32.mrf.mxu0
    %v2452 = vpop.f32.mrf.mxu0
    %2453 = vdwg.mxu0
    %2454 = vmatprep.subr.bf16.mxu0 %v2371
    %2455 = vmatpush1.bf16.msra.mxu0 %v2370
    %2456 = vmatprep.subr.bf16.mxu0 %v2366
    %2457 = vmatpush1.bf16.msra.mxu0 %v2365
    %2458 = vmatprep.subr.bf16.mxu0 %v2361
    %2459 = vmatpush1.bf16.msra.mxu0 %v2360
    %2460 = vmatprep.subr.bf16.mxu0 %v2356
    %2461 = vmatpush1.bf16.msra.mxu0 %v2355
    %2462 = vmatprep.subr.bf16.mxu0 %v2351
    %2463 = vmatpush1.bf16.msra.mxu0 %v2350
    %2464 = vmatprep.subr.bf16.mxu0 %v2346
    %2465 = vmatpush1.bf16.msra.mxu0 %v2345
    %2466 = vmatprep.subr.bf16.mxu0 %v2341
    %2467 = vmatpush1.bf16.msra.mxu0 %v2340
    %2468 = vmatprep.subr.bf16.mxu0 %v2336
    %2469 = vmatpush1.bf16.msra.mxu0 %v2335
    %2470 = vmatprep.subr.bf16.mxu0 0
    %2471 = vmatpush2.bf16.msra.mxu0 0
    %2472 = vmatprep.subr.bf16.mxu0 0
    %2473 = vmatpush2.bf16.msra.mxu0 0
    %2474 = vmatprep.subr.bf16.mxu0 0
    %2475 = vmatpush2.bf16.msra.mxu0 0
    %2476 = vmatprep.subr.bf16.mxu0 0
    %2477 = vmatpush2.bf16.msra.mxu0 0
    %2478 = vmatprep.subr.bf16.mxu0 0
    %2479 = vmatpush2.bf16.msra.mxu0 0
    %2480 = vmatprep.subr.bf16.mxu0 0
    %2481 = vmatpush2.bf16.msra.mxu0 0
    %2482 = vmatprep.subr.bf16.mxu0 0
    %2483 = vmatpush2.bf16.msra.mxu0 0
    %2484 = vmatprep.subr.bf16.mxu0 0
    %2485 = vmatpush2.bf16.msra.mxu0 0
    %2486 = vmatprep.mubr.bf16.mxu0 0
    %2487 = vmatmul.mubr.bf16.gmra.mxu0 %v2156
    %v2488 = vpop.f32.mrf.mxu0
    %v2489 = vadd.f32 0.0, %v2488
    %v2490 = vpop.f32.mrf.mxu0
    %v2491 = vadd.f32 0.0, %v2490
    %v2492 = vpop.f32.mrf.mxu0
    %v2493 = vpop.f32.mrf.mxu0
    %2494 = vdwg.mxu0
    %2495 = vmatprep.subr.bf16.mxu0 0
    %2496 = vmatpush1.bf16.msra.mxu0 %v2372
    %2497 = vmatprep.subr.bf16.mxu0 0
    %2498 = vmatpush1.bf16.msra.mxu0 %v2367
    %2499 = vmatprep.subr.bf16.mxu0 0
    %2500 = vmatpush1.bf16.msra.mxu0 %v2362
    %2501 = vmatprep.subr.bf16.mxu0 0
    %2502 = vmatpush1.bf16.msra.mxu0 %v2357
    %2503 = vmatprep.subr.bf16.mxu0 0
    %2504 = vmatpush1.bf16.msra.mxu0 %v2352
    %2505 = vmatprep.subr.bf16.mxu0 0
    %2506 = vmatpush1.bf16.msra.mxu0 %v2347
    %2507 = vmatprep.subr.bf16.mxu0 0
    %2508 = vmatpush1.bf16.msra.mxu0 %v2342
    %2509 = vmatprep.subr.bf16.mxu0 0
    %2510 = vmatpush1.bf16.msra.mxu0 %v2337
    %2511 = vmatprep.subr.bf16.mxu0 0
    %2512 = vmatpush2.bf16.msra.mxu0 0
    %2513 = vmatprep.subr.bf16.mxu0 0
    %2514 = vmatpush2.bf16.msra.mxu0 0
    %2515 = vmatprep.subr.bf16.mxu0 0
    %2516 = vmatpush2.bf16.msra.mxu0 0
    %2517 = vmatprep.subr.bf16.mxu0 0
    %2518 = vmatpush2.bf16.msra.mxu0 0
    %2519 = vmatprep.subr.bf16.mxu0 0
    %2520 = vmatpush2.bf16.msra.mxu0 0
    %2521 = vmatprep.subr.bf16.mxu0 0
    %2522 = vmatpush2.bf16.msra.mxu0 0
    %2523 = vmatprep.subr.bf16.mxu0 0
    %2524 = vmatpush2.bf16.msra.mxu0 0
    %2525 = vmatprep.subr.bf16.mxu0 0
    %2526 = vmatpush2.bf16.msra.mxu0 0
    %2527 = vmatprep.mubr.bf16.mxu0 0
    %2528 = vmatmul.mubr.bf16.gmra.mxu0 %v2156
    %v2529 = vpop.f32.mrf.mxu0
    %v2530 = vadd.f32 0.0, %v2529
    %v2531 = vpop.f32.mrf.mxu0
    %v2532 = vpop.f32.mrf.mxu0
    %v2533 = vpop.f32.mrf.mxu0
    %2534 = vdwg.mxu0
    %v2535 = vadd.f32 %v2059, %v2448
    %2536 = vst [vmem:[#allocation14] sm:$0xff] %v2535
    %v2537 = vld [vmem:[#allocation2 + $0x20] sm:$0xff]
    %v2538 = vld [vmem:[#allocation2 + $0x28] sm:$0xff]
    %v2539 = vld [vmem:[#allocation2 + $0x30] sm:$0xff]
    %v2540 = vld [vmem:[#allocation2 + $0x38] sm:$0xff]
    %v2541 = vadd.f32 %v2537, %v2450
    %v2542 = vadd.f32 %v2538, %v2489
    %v2543 = vadd.f32 %v2539, %v2491
    %v2544 = vadd.f32 %v2540, %v2530
    %v2545 = vadd.f32 %v2541, %v1654
    %v2546 = vadd.f32 %v2542, %v1656
    %v2547 = vadd.f32 %v2543, %v1695
    %v2548 = vadd.f32 %v2544, %v1697
    %v2549 = vxor.u32 %v2545, 2147483648
    %v2550 = vmul.f32 %v2549, 1.442695
    %v2551 = vpow.pop %v2550
    %v2552 = vadd.f32 %v2551, 1.0
    %v2553 = vrcp.pop %v2552
    %v2554 = vmul.f32 1.0, %v2553
    %v2555 = vxor.u32 %v2546, 2147483648
    %v2556 = vmul.f32 %v2555, 1.442695
    %v2557 = vpow.pop %v2556
    %v2558 = vadd.f32 %v2557, 1.0
    %v2559 = vrcp.pop %v2558
    %v2560 = vmul.f32 1.0, %v2559
    %v2561 = vtanh.pop %v2547
    %v2562 = vxor.u32 %v2548, 2147483648
    %v2563 = vmul.f32 %v2562, 1.442695
    %v2564 = vpow.pop %v2563
    %v2565 = vadd.f32 %v2564, 1.0
    %v2566 = vrcp.pop %v2565
    %v2567 = vmul.f32 1.0, %v2566
    %v2568 = vmul.f32 %v2560, %v1149
    %v2569 = vmul.f32 %v2554, %v2561
    %v2570 = vadd.f32 %v2568, %v2569
    %v2571 = vtanh.pop %v2570
    %v2572 = vmul.f32 %v2567, %v2571
    %v2573 = vpack.c.bf16 %v2572, %v2572
    %v2574 = vld [vmem:[#allocation9] sm:$0xff]
    %v2575 = vld [vmem:[#allocation9 + $0x8] sm:$0xff]
    %v2576 = vld [vmem:[#allocation9 + $0x10] sm:$0xff]
    %v2577 = vld [vmem:[#allocation9 + $0x18] sm:$0xff]
    %v2578 = vld [vmem:[#allocation9 + $0x20] sm:$0xff]
    %v2579 = vld [vmem:[#allocation9 + $0x28] sm:$0xff]
    %v2580 = vld [vmem:[#allocation9 + $0x30] sm:$0xff]
    %v2581 = vld [vmem:[#allocation9 + $0x38] sm:$0xff]
    %v2582 = vld [vmem:[#allocation9 + $0x40] sm:$0xff]
    %v2583 = vld [vmem:[#allocation9 + $0x48] sm:$0xff]
    %v2584 = vld [vmem:[#allocation9 + $0x50] sm:$0xff]
    %v2585 = vld [vmem:[#allocation9 + $0x58] sm:$0xff]
    %v2586 = vld [vmem:[#allocation9 + $0x60] sm:$0xff]
    %v2587 = vld [vmem:[#allocation9 + $0x68] sm:$0xff]
    %v2588 = vld [vmem:[#allocation9 + $0x70] sm:$0xff]
    %v2589 = vld [vmem:[#allocation9 + $0x78] sm:$0xff]
    %v2590 = vld [vmem:[#allocation9 + $0x80] sm:$0xff]
    %v2591 = vld [vmem:[#allocation9 + $0x88] sm:$0xff]
    %v2592 = vld [vmem:[#allocation9 + $0x90] sm:$0xff]
    %v2593 = vld [vmem:[#allocation9 + $0x98] sm:$0xff]
    %v2594 = vld [vmem:[#allocation9 + $0xa0] sm:$0xff]
    %v2595 = vld [vmem:[#allocation9 + $0xa8] sm:$0xff]
    %v2596 = vld [vmem:[#allocation9 + $0xb0] sm:$0xff]
    %v2597 = vld [vmem:[#allocation9 + $0xb8] sm:$0xff]
    %v2598 = vld [vmem:[#allocation9 + $0xc0] sm:$0xff]
    %v2599 = vld [vmem:[#allocation9 + $0xc8] sm:$0xff]
    %v2600 = vld [vmem:[#allocation9 + $0xd0] sm:$0xff]
    %v2601 = vld [vmem:[#allocation9 + $0xd8] sm:$0xff]
    %v2602 = vld [vmem:[#allocation9 + $0xe0] sm:$0xff]
    %v2603 = vld [vmem:[#allocation9 + $0xe8] sm:$0xff]
    %v2604 = vld [vmem:[#allocation9 + $0xf0] sm:$0xff]
    %v2605 = vld [vmem:[#allocation9 + $0xf8] sm:$0xff]
    %v2606 = vld [vmem:[#allocation9 + $0x100] sm:$0xff]
    %v2607 = vld [vmem:[#allocation9 + $0x108] sm:$0xff]
    %v2608 = vld [vmem:[#allocation9 + $0x110] sm:$0xff]
    %v2609 = vld [vmem:[#allocation9 + $0x118] sm:$0xff]
    %v2610 = vld [vmem:[#allocation9 + $0x120] sm:$0xff]
    %v2611 = vld [vmem:[#allocation9 + $0x128] sm:$0xff]
    %v2612 = vld [vmem:[#allocation9 + $0x130] sm:$0xff]
    %v2613 = vld [vmem:[#allocation9 + $0x138] sm:$0xff]
    %v2614 = vld [vmem:[#allocation9 + $0x140] sm:$0xff]
    %v2615 = vld [vmem:[#allocation9 + $0x148] sm:$0xff]
    %v2616 = vld [vmem:[#allocation9 + $0x150] sm:$0xff]
    %v2617 = vld [vmem:[#allocation9 + $0x158] sm:$0xff]
    %v2618 = vld [vmem:[#allocation9 + $0x160] sm:$0xff]
    %v2619 = vld [vmem:[#allocation9 + $0x168] sm:$0xff]
    %v2620 = vld [vmem:[#allocation9 + $0x170] sm:$0xff]
    %v2621 = vld [vmem:[#allocation9 + $0x178] sm:$0xff]
    %v2622 = vld [vmem:[#allocation9 + $0x180] sm:$0xff]
    %v2623 = vld [vmem:[#allocation9 + $0x188] sm:$0xff]
    %v2624 = vld [vmem:[#allocation9 + $0x190] sm:$0xff]
    %v2625 = vld [vmem:[#allocation9 + $0x198] sm:$0xff]
    %v2626 = vld [vmem:[#allocation9 + $0x1a0] sm:$0xff]
    %v2627 = vld [vmem:[#allocation9 + $0x1a8] sm:$0xff]
    %v2628 = vld [vmem:[#allocation9 + $0x1b0] sm:$0xff]
    %v2629 = vld [vmem:[#allocation9 + $0x1b8] sm:$0xff]
    %v2630 = vld [vmem:[#allocation9 + $0x1c0] sm:$0xff]
    %v2631 = vld [vmem:[#allocation9 + $0x1c8] sm:$0xff]
    %v2632 = vld [vmem:[#allocation9 + $0x1d0] sm:$0xff]
    %v2633 = vld [vmem:[#allocation9 + $0x1d8] sm:$0xff]
    %v2634 = vld [vmem:[#allocation9 + $0x1e0] sm:$0xff]
    %v2635 = vld [vmem:[#allocation9 + $0x1e8] sm:$0xff]
    %v2636 = vld [vmem:[#allocation9 + $0x1f0] sm:$0xff]
    %v2637 = vld [vmem:[#allocation9 + $0x1f8] sm:$0xff]
    %v2702 = vunpack.c.l.b16 %v2574
    %v2703 = vunpack.c.h.b16 %v2574
    %v2704 = vunpack.c.l.b16 %v2575
    %v2705 = vunpack.c.h.b16 %v2575
    %v2706 = vunpack.c.l.b16 %v2576
    %v2707 = vunpack.c.h.b16 %v2576
    %v2708 = vunpack.c.l.b16 %v2577
    %v2709 = vunpack.c.h.b16 %v2577
    %v2710 = vunpack.c.l.b16 %v2578
    %v2711 = vunpack.c.h.b16 %v2578
    %v2712 = vunpack.c.l.b16 %v2579
    %v2713 = vunpack.c.h.b16 %v2579
    %v2714 = vunpack.c.l.b16 %v2580
    %v2715 = vunpack.c.h.b16 %v2580
    %v2716 = vunpack.c.l.b16 %v2581
    %v2717 = vunpack.c.h.b16 %v2581
    %v2718 = vunpack.c.l.b16 %v2582
    %v2719 = vunpack.c.h.b16 %v2582
    %v2720 = vunpack.c.l.b16 %v2583
    %v2721 = vunpack.c.h.b16 %v2583
    %v2722 = vunpack.c.l.b16 %v2584
    %v2723 = vunpack.c.h.b16 %v2584
    %v2724 = vunpack.c.l.b16 %v2585
    %v2725 = vunpack.c.h.b16 %v2585
    %v2726 = vunpack.c.l.b16 %v2586
    %v2727 = vunpack.c.h.b16 %v2586
    %v2728 = vunpack.c.l.b16 %v2587
    %v2729 = vunpack.c.h.b16 %v2587
    %v2730 = vunpack.c.l.b16 %v2588
    %v2731 = vunpack.c.h.b16 %v2588
    %v2732 = vunpack.c.l.b16 %v2589
    %v2733 = vunpack.c.h.b16 %v2589
    %v2734 = vunpack.c.l.b16 %v2590
    %v2735 = vunpack.c.h.b16 %v2590
    %v2736 = vunpack.c.l.b16 %v2591
    %v2737 = vunpack.c.h.b16 %v2591
    %v2738 = vunpack.c.l.b16 %v2592
    %v2739 = vunpack.c.h.b16 %v2592
    %v2740 = vunpack.c.l.b16 %v2593
    %v2741 = vunpack.c.h.b16 %v2593
    %v2742 = vunpack.c.l.b16 %v2594
    %v2743 = vunpack.c.h.b16 %v2594
    %v2744 = vunpack.c.l.b16 %v2595
    %v2745 = vunpack.c.h.b16 %v2595
    %v2746 = vunpack.c.l.b16 %v2596
    %v2747 = vunpack.c.h.b16 %v2596
    %v2748 = vunpack.c.l.b16 %v2597
    %v2749 = vunpack.c.h.b16 %v2597
    %v2750 = vunpack.c.l.b16 %v2598
    %v2751 = vunpack.c.h.b16 %v2598
    %v2752 = vunpack.c.l.b16 %v2599
    %v2753 = vunpack.c.h.b16 %v2599
    %v2754 = vunpack.c.l.b16 %v2600
    %v2755 = vunpack.c.h.b16 %v2600
    %v2756 = vunpack.c.l.b16 %v2601
    %v2757 = vunpack.c.h.b16 %v2601
    %v2758 = vunpack.c.l.b16 %v2602
    %v2759 = vunpack.c.h.b16 %v2602
    %v2760 = vunpack.c.l.b16 %v2603
    %v2761 = vunpack.c.h.b16 %v2603
    %v2762 = vunpack.c.l.b16 %v2604
    %v2763 = vunpack.c.h.b16 %v2604
    %v2764 = vunpack.c.l.b16 %v2605
    %v2765 = vunpack.c.h.b16 %v2605
    %v2766 = vunpack.c.l.b16 %v2606
    %v2767 = vunpack.c.h.b16 %v2606
    %v2768 = vunpack.c.l.b16 %v2607
    %v2769 = vunpack.c.h.b16 %v2607
    %v2770 = vunpack.c.l.b16 %v2608
    %v2771 = vunpack.c.h.b16 %v2608
    %v2772 = vunpack.c.l.b16 %v2609
    %v2773 = vunpack.c.h.b16 %v2609
    %v2774 = vunpack.c.l.b16 %v2610
    %v2775 = vunpack.c.h.b16 %v2610
    %v2776 = vunpack.c.l.b16 %v2611
    %v2777 = vunpack.c.h.b16 %v2611
    %v2778 = vunpack.c.l.b16 %v2612
    %v2779 = vunpack.c.h.b16 %v2612
    %v2780 = vunpack.c.l.b16 %v2613
    %v2781 = vunpack.c.h.b16 %v2613
    %v2782 = vunpack.c.l.b16 %v2614
    %v2783 = vunpack.c.h.b16 %v2614
    %v2784 = vunpack.c.l.b16 %v2615
    %v2785 = vunpack.c.h.b16 %v2615
    %v2786 = vunpack.c.l.b16 %v2616
    %v2787 = vunpack.c.h.b16 %v2616
    %v2788 = vunpack.c.l.b16 %v2617
    %v2789 = vunpack.c.h.b16 %v2617
    %v2790 = vunpack.c.l.b16 %v2618
    %v2791 = vunpack.c.h.b16 %v2618
    %v2792 = vunpack.c.l.b16 %v2619
    %v2793 = vunpack.c.h.b16 %v2619
    %v2794 = vunpack.c.l.b16 %v2620
    %v2795 = vunpack.c.h.b16 %v2620
    %v2796 = vunpack.c.l.b16 %v2621
    %v2797 = vunpack.c.h.b16 %v2621
    %v2798 = vunpack.c.l.b16 %v2622
    %v2799 = vunpack.c.h.b16 %v2622
    %v2800 = vunpack.c.l.b16 %v2623
    %v2801 = vunpack.c.h.b16 %v2623
    %v2802 = vunpack.c.l.b16 %v2624
    %v2803 = vunpack.c.h.b16 %v2624
    %v2804 = vunpack.c.l.b16 %v2625
    %v2805 = vunpack.c.h.b16 %v2625
    %v2806 = vunpack.c.l.b16 %v2626
    %v2807 = vunpack.c.h.b16 %v2626
    %v2808 = vunpack.c.l.b16 %v2627
    %v2809 = vunpack.c.h.b16 %v2627
    %v2810 = vunpack.c.l.b16 %v2628
    %v2811 = vunpack.c.h.b16 %v2628
    %v2812 = vunpack.c.l.b16 %v2629
    %v2813 = vunpack.c.h.b16 %v2629
    %v2814 = vunpack.c.l.b16 %v2630
    %v2815 = vunpack.c.h.b16 %v2630
    %v2816 = vunpack.c.l.b16 %v2631
    %v2817 = vunpack.c.h.b16 %v2631
    %v2818 = vunpack.c.l.b16 %v2632
    %v2819 = vunpack.c.h.b16 %v2632
    %v2820 = vunpack.c.l.b16 %v2633
    %v2821 = vunpack.c.h.b16 %v2633
    %v2822 = vunpack.c.l.b16 %v2634
    %v2823 = vunpack.c.h.b16 %v2634
    %v2824 = vunpack.c.l.b16 %v2635
    %v2825 = vunpack.c.h.b16 %v2635
    %v2826 = vunpack.c.l.b16 %v2636
    %v2827 = vunpack.c.h.b16 %v2636
    %v2828 = vunpack.c.l.b16 %v2637
    %v2829 = vunpack.c.h.b16 %v2637
    %v2830 = vpack.c.b16 %v2710, %v2702
    %v2831 = vpack.c.b16 %v2711, %v2703
    %v2832 = vpack.c.b16 %v2712, %v2704
    %v2833 = vpack.c.b16 %v2713, %v2705
    %v2834 = vpack.c.b16 %v2714, %v2706
    %v2835 = vpack.c.b16 %v2715, %v2707
    %v2836 = vpack.c.b16 %v2716, %v2708
    %v2837 = vpack.c.b16 %v2717, %v2709
    %v2838 = vpack.c.b16 %v2726, %v2718
    %v2839 = vpack.c.b16 %v2727, %v2719
    %v2840 = vpack.c.b16 %v2728, %v2720
    %v2841 = vpack.c.b16 %v2729, %v2721
    %v2842 = vpack.c.b16 %v2730, %v2722
    %v2843 = vpack.c.b16 %v2731, %v2723
    %v2844 = vpack.c.b16 %v2732, %v2724
    %v2845 = vpack.c.b16 %v2733, %v2725
    %v2846 = vpack.c.b16 %v2742, %v2734
    %v2847 = vpack.c.b16 %v2743, %v2735
    %v2848 = vpack.c.b16 %v2744, %v2736
    %v2849 = vpack.c.b16 %v2745, %v2737
    %v2850 = vpack.c.b16 %v2746, %v2738
    %v2851 = vpack.c.b16 %v2747, %v2739
    %v2852 = vpack.c.b16 %v2748, %v2740
    %v2853 = vpack.c.b16 %v2749, %v2741
    %v2854 = vpack.c.b16 %v2758, %v2750
    %v2855 = vpack.c.b16 %v2759, %v2751
    %v2856 = vpack.c.b16 %v2760, %v2752
    %v2857 = vpack.c.b16 %v2761, %v2753
    %v2858 = vpack.c.b16 %v2762, %v2754
    %v2859 = vpack.c.b16 %v2763, %v2755
    %v2860 = vpack.c.b16 %v2764, %v2756
    %v2861 = vpack.c.b16 %v2765, %v2757
    %v2862 = vpack.c.b16 %v2774, %v2766
    %v2863 = vpack.c.b16 %v2775, %v2767
    %v2864 = vpack.c.b16 %v2776, %v2768
    %v2865 = vpack.c.b16 %v2777, %v2769
    %v2866 = vpack.c.b16 %v2778, %v2770
    %v2867 = vpack.c.b16 %v2779, %v2771
    %v2868 = vpack.c.b16 %v2780, %v2772
    %v2869 = vpack.c.b16 %v2781, %v2773
    %v2870 = vpack.c.b16 %v2790, %v2782
    %v2871 = vpack.c.b16 %v2791, %v2783
    %v2872 = vpack.c.b16 %v2792, %v2784
    %v2873 = vpack.c.b16 %v2793, %v2785
    %v2874 = vpack.c.b16 %v2794, %v2786
    %v2875 = vpack.c.b16 %v2795, %v2787
    %v2876 = vpack.c.b16 %v2796, %v2788
    %v2877 = vpack.c.b16 %v2797, %v2789
    %v2878 = vpack.c.b16 %v2806, %v2798
    %v2879 = vpack.c.b16 %v2807, %v2799
    %v2880 = vpack.c.b16 %v2808, %v2800
    %v2881 = vpack.c.b16 %v2809, %v2801
    %v2882 = vpack.c.b16 %v2810, %v2802
    %v2883 = vpack.c.b16 %v2811, %v2803
    %v2884 = vpack.c.b16 %v2812, %v2804
    %v2885 = vpack.c.b16 %v2813, %v2805
    %v2886 = vpack.c.b16 %v2822, %v2814
    %v2887 = vpack.c.b16 %v2823, %v2815
    %v2888 = vpack.c.b16 %v2824, %v2816
    %v2889 = vpack.c.b16 %v2825, %v2817
    %v2890 = vpack.c.b16 %v2826, %v2818
    %v2891 = vpack.c.b16 %v2827, %v2819
    %v2892 = vpack.c.b16 %v2828, %v2820
    %v2893 = vpack.c.b16 %v2829, %v2821
    %2958 = vmatprep.subr.bf16.mxu0 %v2887
    %2959 = vmatpush1.bf16.msra.mxu0 %v2886
    %2960 = vmatprep.subr.bf16.mxu0 %v2879
    %2961 = vmatpush1.bf16.msra.mxu0 %v2878
    %2962 = vmatprep.subr.bf16.mxu0 %v2871
    %2963 = vmatpush1.bf16.msra.mxu0 %v2870
    %2964 = vmatprep.subr.bf16.mxu0 %v2863
    %2965 = vmatpush1.bf16.msra.mxu0 %v2862
    %2966 = vmatprep.subr.bf16.mxu0 %v2855
    %2967 = vmatpush1.bf16.msra.mxu0 %v2854
    %2968 = vmatprep.subr.bf16.mxu0 %v2847
    %2969 = vmatpush1.bf16.msra.mxu0 %v2846
    %2970 = vmatprep.subr.bf16.mxu0 %v2839
    %2971 = vmatpush1.bf16.msra.mxu0 %v2838
    %2972 = vmatprep.subr.bf16.mxu0 %v2831
    %2973 = vmatpush1.bf16.msra.mxu0 %v2830
    %2974 = vmatprep.subr.bf16.mxu0 0
    %2975 = vmatpush2.bf16.msra.mxu0 0
    %2976 = vmatprep.subr.bf16.mxu0 0
    %2977 = vmatpush2.bf16.msra.mxu0 0
    %2978 = vmatprep.subr.bf16.mxu0 0
    %2979 = vmatpush2.bf16.msra.mxu0 0
    %2980 = vmatprep.subr.bf16.mxu0 0
    %2981 = vmatpush2.bf16.msra.mxu0 0
    %2982 = vmatprep.subr.bf16.mxu0 0
    %2983 = vmatpush2.bf16.msra.mxu0 0
    %2984 = vmatprep.subr.bf16.mxu0 0
    %2985 = vmatpush2.bf16.msra.mxu0 0
    %2986 = vmatprep.subr.bf16.mxu0 0
    %2987 = vmatpush2.bf16.msra.mxu0 0
    %2988 = vmatprep.subr.bf16.mxu0 0
    %2989 = vmatpush2.bf16.msra.mxu0 0
    %2990 = vmatprep.mubr.bf16.mxu0 0
    %2991 = vmatmul.mubr.bf16.gmra.mxu0 %v2573
    %v2992 = vpop.f32.mrf.mxu0
    %v2993 = vadd.f32 0.0, %v2992
    %v2994 = vpop.f32.mrf.mxu0
    %v2995 = vadd.f32 0.0, %v2994
    %v2996 = vpop.f32.mrf.mxu0
    %v2997 = vpop.f32.mrf.mxu0
    %2998 = vdwg.mxu0
    %2999 = vmatprep.subr.bf16.mxu0 %v2889
    %3000 = vmatpush1.bf16.msra.mxu0 %v2888
    %3001 = vmatprep.subr.bf16.mxu0 %v2881
    %3002 = vmatpush1.bf16.msra.mxu0 %v2880
    %3003 = vmatprep.subr.bf16.mxu0 %v2873
    %3004 = vmatpush1.bf16.msra.mxu0 %v2872
    %3005 = vmatprep.subr.bf16.mxu0 %v2865
    %3006 = vmatpush1.bf16.msra.mxu0 %v2864
    %3007 = vmatprep.subr.bf16.mxu0 %v2857
    %3008 = vmatpush1.bf16.msra.mxu0 %v2856
    %3009 = vmatprep.subr.bf16.mxu0 %v2849
    %3010 = vmatpush1.bf16.msra.mxu0 %v2848
    %3011 = vmatprep.subr.bf16.mxu0 %v2841
    %3012 = vmatpush1.bf16.msra.mxu0 %v2840
    %3013 = vmatprep.subr.bf16.mxu0 %v2833
    %3014 = vmatpush1.bf16.msra.mxu0 %v2832
    %3015 = vmatprep.subr.bf16.mxu0 0
    %3016 = vmatpush2.bf16.msra.mxu0 0
    %3017 = vmatprep.subr.bf16.mxu0 0
    %3018 = vmatpush2.bf16.msra.mxu0 0
    %3019 = vmatprep.subr.bf16.mxu0 0
    %3020 = vmatpush2.bf16.msra.mxu0 0
    %3021 = vmatprep.subr.bf16.mxu0 0
    %3022 = vmatpush2.bf16.msra.mxu0 0
    %3023 = vmatprep.subr.bf16.mxu0 0
    %3024 = vmatpush2.bf16.msra.mxu0 0
    %3025 = vmatprep.subr.bf16.mxu0 0
    %3026 = vmatpush2.bf16.msra.mxu0 0
    %3027 = vmatprep.subr.bf16.mxu0 0
    %3028 = vmatpush2.bf16.msra.mxu0 0
    %3029 = vmatprep.subr.bf16.mxu0 0
    %3030 = vmatpush2.bf16.msra.mxu0 0
    %3031 = vmatprep.mubr.bf16.mxu0 0
    %3032 = vmatmul.mubr.bf16.gmra.mxu0 %v2573
    %v3033 = vpop.f32.mrf.mxu0
    %v3034 = vadd.f32 0.0, %v3033
    %v3035 = vpop.f32.mrf.mxu0
    %v3036 = vadd.f32 0.0, %v3035
    %v3037 = vpop.f32.mrf.mxu0
    %v3038 = vpop.f32.mrf.mxu0
    %3039 = vdwg.mxu0
    %3040 = vmatprep.subr.bf16.mxu0 %v2891
    %3041 = vmatpush1.bf16.msra.mxu0 %v2890
    %3042 = vmatprep.subr.bf16.mxu0 %v2883
    %3043 = vmatpush1.bf16.msra.mxu0 %v2882
    %3044 = vmatprep.subr.bf16.mxu0 %v2875
    %3045 = vmatpush1.bf16.msra.mxu0 %v2874
    %3046 = vmatprep.subr.bf16.mxu0 %v2867
    %3047 = vmatpush1.bf16.msra.mxu0 %v2866
    %3048 = vmatprep.subr.bf16.mxu0 %v2859
    %3049 = vmatpush1.bf16.msra.mxu0 %v2858
    %3050 = vmatprep.subr.bf16.mxu0 %v2851
    %3051 = vmatpush1.bf16.msra.mxu0 %v2850
    %3052 = vmatprep.subr.bf16.mxu0 %v2843
    %3053 = vmatpush1.bf16.msra.mxu0 %v2842
    %3054 = vmatprep.subr.bf16.mxu0 %v2835
    %3055 = vmatpush1.bf16.msra.mxu0 %v2834
    %3056 = vmatprep.subr.bf16.mxu0 0
    %3057 = vmatpush2.bf16.msra.mxu0 0
    %3058 = vmatprep.subr.bf16.mxu0 0
    %3059 = vmatpush2.bf16.msra.mxu0 0
    %3060 = vmatprep.subr.bf16.mxu0 0
    %3061 = vmatpush2.bf16.msra.mxu0 0
    %3062 = vmatprep.subr.bf16.mxu0 0
    %3063 = vmatpush2.bf16.msra.mxu0 0
    %3064 = vmatprep.subr.bf16.mxu0 0
    %3065 = vmatpush2.bf16.msra.mxu0 0
    %3066 = vmatprep.subr.bf16.mxu0 0
    %3067 = vmatpush2.bf16.msra.mxu0 0
    %3068 = vmatprep.subr.bf16.mxu0 0
    %3069 = vmatpush2.bf16.msra.mxu0 0
    %3070 = vmatprep.subr.bf16.mxu0 0
    %3071 = vmatpush2.bf16.msra.mxu0 0
    %3072 = vmatprep.mubr.bf16.mxu0 0
    %3073 = vmatmul.mubr.bf16.gmra.mxu0 %v2573
    %v3074 = vpop.f32.mrf.mxu0
    %v3075 = vadd.f32 0.0, %v3074
    %v3076 = vpop.f32.mrf.mxu0
    %v3077 = vadd.f32 0.0, %v3076
    %v3078 = vpop.f32.mrf.mxu0
    %v3079 = vpop.f32.mrf.mxu0
    %3080 = vdwg.mxu0
    %3081 = vmatprep.subr.bf16.mxu0 %v2893
    %3082 = vmatpush1.bf16.msra.mxu0 %v2892
    %3083 = vmatprep.subr.bf16.mxu0 %v2885
    %3084 = vmatpush1.bf16.msra.mxu0 %v2884
    %3085 = vmatprep.subr.bf16.mxu0 %v2877
    %3086 = vmatpush1.bf16.msra.mxu0 %v2876
    %3087 = vmatprep.subr.bf16.mxu0 %v2869
    %3088 = vmatpush1.bf16.msra.mxu0 %v2868
    %3089 = vmatprep.subr.bf16.mxu0 %v2861
    %3090 = vmatpush1.bf16.msra.mxu0 %v2860
    %3091 = vmatprep.subr.bf16.mxu0 %v2853
    %3092 = vmatpush1.bf16.msra.mxu0 %v2852
    %3093 = vmatprep.subr.bf16.mxu0 %v2845
    %3094 = vmatpush1.bf16.msra.mxu0 %v2844
    %3095 = vmatprep.subr.bf16.mxu0 %v2837
    %3096 = vmatpush1.bf16.msra.mxu0 %v2836
    %3097 = vmatprep.subr.bf16.mxu0 0
    %3098 = vmatpush2.bf16.msra.mxu0 0
    %3099 = vmatprep.subr.bf16.mxu0 0
    %3100 = vmatpush2.bf16.msra.mxu0 0
    %3101 = vmatprep.subr.bf16.mxu0 0
    %3102 = vmatpush2.bf16.msra.mxu0 0
    %3103 = vmatprep.subr.bf16.mxu0 0
    %3104 = vmatpush2.bf16.msra.mxu0 0
    %3105 = vmatprep.subr.bf16.mxu0 0
    %3106 = vmatpush2.bf16.msra.mxu0 0
    %3107 = vmatprep.subr.bf16.mxu0 0
    %3108 = vmatpush2.bf16.msra.mxu0 0
    %3109 = vmatprep.subr.bf16.mxu0 0
    %3110 = vmatpush2.bf16.msra.mxu0 0
    %3111 = vmatprep.subr.bf16.mxu0 0
    %3112 = vmatpush2.bf16.msra.mxu0 0
    %3113 = vmatprep.mubr.bf16.mxu0 0
    %3114 = vmatmul.mubr.bf16.gmra.mxu0 %v2573
    %v3115 = vpop.f32.mrf.mxu0
    %v3116 = vadd.f32 0.0, %v3115
    %v3117 = vpop.f32.mrf.mxu0
    %v3118 = vadd.f32 0.0, %v3117
    %v3119 = vpop.f32.mrf.mxu0
    %v3120 = vpop.f32.mrf.mxu0
    %3121 = vdwg.mxu0
    %v3122 = vadd.f32 %v2993, %v2098
    %v3123 = vadd.f32 %v2995, %v2100
    %v3124 = vadd.f32 %v3034, %v2139
    %v3125 = vadd.f32 %v3036, %v2141
    %v3126 = vadd.f32 %v3122, %v120
    %v3127 = vadd.f32 %v3123, %v124
    %v3128 = vadd.f32 %v3124, %v128
    %v3129 = vadd.f32 %v3125, %v132
    %v3130 = vxor.u32 %v3126, 2147483648
    %v3131 = vmul.f32 %v3130, 1.442695
    %v3132 = vpow.pop %v3131
    %v3133 = vadd.f32 %v3132, 1.0
    %v3134 = vrcp.pop %v3133
    %v3135 = vmul.f32 1.0, %v3134
    %v3136 = vxor.u32 %v3127, 2147483648
    %v3137 = vmul.f32 %v3136, 1.442695
    %v3138 = vpow.pop %v3137
    %v3139 = vadd.f32 %v3138, 1.0
    %v3140 = vrcp.pop %v3139
    %v3141 = vmul.f32 1.0, %v3140
    %v3142 = vtanh.pop %v3128
    %v3143 = vxor.u32 %v3129, 2147483648
    %v3144 = vmul.f32 %v3143, 1.442695
    %v3145 = vpow.pop %v3144
    %v3146 = vadd.f32 %v3145, 1.0
    %v3147 = vrcp.pop %v3146
    %v3148 = vmul.f32 1.0, %v3147
    %v3149 = vmul.f32 %v3141, %v1730
    %v3150 = vmul.f32 %v3135, %v3142
    %v3151 = vadd.f32 %v3149, %v3150
    %v3152 = vtanh.pop %v3151
    %v3153 = vmul.f32 %v3148, %v3152
    %v3154 = vpack.c.bf16 %v3153, %v3153
    %v3155 = vld [vmem:[#allocation11] sm:$0xff]
    %v3156 = vld [vmem:[#allocation11 + $0x8] sm:$0xff]
    %v3157 = vld [vmem:[#allocation11 + $0x10] sm:$0xff]
    %v3158 = vld [vmem:[#allocation11 + $0x18] sm:$0xff]
    %v3159 = vld [vmem:[#allocation11 + $0x20] sm:$0xff]
    %v3160 = vld [vmem:[#allocation11 + $0x28] sm:$0xff]
    %v3161 = vld [vmem:[#allocation11 + $0x30] sm:$0xff]
    %v3162 = vld [vmem:[#allocation11 + $0x38] sm:$0xff]
    %v3163 = vld [vmem:[#allocation11 + $0x40] sm:$0xff]
    %v3164 = vld [vmem:[#allocation11 + $0x48] sm:$0xff]
    %v3165 = vld [vmem:[#allocation11 + $0x50] sm:$0xff]
    %v3166 = vld [vmem:[#allocation11 + $0x58] sm:$0xff]
    %v3167 = vld [vmem:[#allocation11 + $0x60] sm:$0xff]
    %v3168 = vld [vmem:[#allocation11 + $0x68] sm:$0xff]
    %v3169 = vld [vmem:[#allocation11 + $0x70] sm:$0xff]
    %v3170 = vld [vmem:[#allocation11 + $0x78] sm:$0xff]
    %v3171 = vld [vmem:[#allocation11 + $0x80] sm:$0xff]
    %v3172 = vld [vmem:[#allocation11 + $0x88] sm:$0xff]
    %v3173 = vld [vmem:[#allocation11 + $0x90] sm:$0xff]
    %v3174 = vld [vmem:[#allocation11 + $0x98] sm:$0xff]
    %v3175 = vld [vmem:[#allocation11 + $0xa0] sm:$0xff]
    %v3176 = vld [vmem:[#allocation11 + $0xa8] sm:$0xff]
    %v3177 = vld [vmem:[#allocation11 + $0xb0] sm:$0xff]
    %v3178 = vld [vmem:[#allocation11 + $0xb8] sm:$0xff]
    %v3179 = vld [vmem:[#allocation11 + $0xc0] sm:$0xff]
    %v3180 = vld [vmem:[#allocation11 + $0xc8] sm:$0xff]
    %v3181 = vld [vmem:[#allocation11 + $0xd0] sm:$0xff]
    %v3182 = vld [vmem:[#allocation11 + $0xd8] sm:$0xff]
    %v3183 = vld [vmem:[#allocation11 + $0xe0] sm:$0xff]
    %v3184 = vld [vmem:[#allocation11 + $0xe8] sm:$0xff]
    %v3185 = vld [vmem:[#allocation11 + $0xf0] sm:$0xff]
    %v3186 = vld [vmem:[#allocation11 + $0xf8] sm:$0xff]
    %v3187 = vld [vmem:[#allocation11 + $0x100] sm:$0xff]
    %v3188 = vld [vmem:[#allocation11 + $0x108] sm:$0xff]
    %v3189 = vld [vmem:[#allocation11 + $0x110] sm:$0xff]
    %v3190 = vld [vmem:[#allocation11 + $0x118] sm:$0xff]
    %v3191 = vld [vmem:[#allocation11 + $0x120] sm:$0xff]
    %v3192 = vld [vmem:[#allocation11 + $0x128] sm:$0xff]
    %v3193 = vld [vmem:[#allocation11 + $0x130] sm:$0xff]
    %v3194 = vld [vmem:[#allocation11 + $0x138] sm:$0xff]
    %v3195 = vld [vmem:[#allocation11 + $0x140] sm:$0xff]
    %v3196 = vld [vmem:[#allocation11 + $0x148] sm:$0xff]
    %v3197 = vld [vmem:[#allocation11 + $0x150] sm:$0xff]
    %v3198 = vld [vmem:[#allocation11 + $0x158] sm:$0xff]
    %v3199 = vld [vmem:[#allocation11 + $0x160] sm:$0xff]
    %v3200 = vld [vmem:[#allocation11 + $0x168] sm:$0xff]
    %v3201 = vld [vmem:[#allocation11 + $0x170] sm:$0xff]
    %v3202 = vld [vmem:[#allocation11 + $0x178] sm:$0xff]
    %v3251 = vunpack.c.l.b16 %v3155
    %v3252 = vunpack.c.h.b16 %v3155
    %v3253 = vunpack.c.l.b16 %v3156
    %v3254 = vunpack.c.h.b16 %v3156
    %v3255 = vunpack.c.l.b16 %v3157
    %v3256 = vunpack.c.h.b16 %v3157
    %v3257 = vunpack.c.l.b16 %v3158
    %v3258 = vunpack.c.h.b16 %v3158
    %v3259 = vunpack.c.l.b16 %v3159
    %v3260 = vunpack.c.h.b16 %v3159
    %v3261 = vunpack.c.l.b16 %v3160
    %v3262 = vunpack.c.h.b16 %v3160
    %v3263 = vunpack.c.l.b16 %v3161
    %v3264 = vunpack.c.h.b16 %v3161
    %v3265 = vunpack.c.l.b16 %v3162
    %v3266 = vunpack.c.h.b16 %v3162
    %v3267 = vunpack.c.l.b16 %v3163
    %v3268 = vunpack.c.h.b16 %v3163
    %v3269 = vunpack.c.l.b16 %v3164
    %v3270 = vunpack.c.h.b16 %v3164
    %v3271 = vunpack.c.l.b16 %v3165
    %v3272 = vunpack.c.h.b16 %v3165
    %v3273 = vunpack.c.l.b16 %v3166
    %v3274 = vunpack.c.h.b16 %v3166
    %v3275 = vunpack.c.l.b16 %v3167
    %v3276 = vunpack.c.h.b16 %v3167
    %v3277 = vunpack.c.l.b16 %v3168
    %v3278 = vunpack.c.h.b16 %v3168
    %v3279 = vunpack.c.l.b16 %v3169
    %v3280 = vunpack.c.h.b16 %v3169
    %v3281 = vunpack.c.l.b16 %v3170
    %v3282 = vunpack.c.h.b16 %v3170
    %v3283 = vunpack.c.l.b16 %v3171
    %v3284 = vunpack.c.h.b16 %v3171
    %v3285 = vunpack.c.l.b16 %v3172
    %v3286 = vunpack.c.h.b16 %v3172
    %v3287 = vunpack.c.l.b16 %v3173
    %v3288 = vunpack.c.h.b16 %v3173
    %v3289 = vunpack.c.l.b16 %v3174
    %v3290 = vunpack.c.h.b16 %v3174
    %v3291 = vunpack.c.l.b16 %v3175
    %v3292 = vunpack.c.h.b16 %v3175
    %v3293 = vunpack.c.l.b16 %v3176
    %v3294 = vunpack.c.h.b16 %v3176
    %v3295 = vunpack.c.l.b16 %v3177
    %v3296 = vunpack.c.h.b16 %v3177
    %v3297 = vunpack.c.l.b16 %v3178
    %v3298 = vunpack.c.h.b16 %v3178
    %v3299 = vunpack.c.l.b16 %v3179
    %v3300 = vunpack.c.h.b16 %v3179
    %v3301 = vunpack.c.l.b16 %v3180
    %v3302 = vunpack.c.h.b16 %v3180
    %v3303 = vunpack.c.l.b16 %v3181
    %v3304 = vunpack.c.h.b16 %v3181
    %v3305 = vunpack.c.l.b16 %v3182
    %v3306 = vunpack.c.h.b16 %v3182
    %v3307 = vunpack.c.l.b16 %v3183
    %v3308 = vunpack.c.h.b16 %v3183
    %v3309 = vunpack.c.l.b16 %v3184
    %v3310 = vunpack.c.h.b16 %v3184
    %v3311 = vunpack.c.l.b16 %v3185
    %v3312 = vunpack.c.h.b16 %v3185
    %v3313 = vunpack.c.l.b16 %v3186
    %v3314 = vunpack.c.h.b16 %v3186
    %v3315 = vunpack.c.l.b16 %v3187
    %v3316 = vunpack.c.h.b16 %v3187
    %v3317 = vunpack.c.l.b16 %v3188
    %v3318 = vunpack.c.h.b16 %v3188
    %v3319 = vunpack.c.l.b16 %v3189
    %v3320 = vunpack.c.h.b16 %v3189
    %v3321 = vunpack.c.l.b16 %v3190
    %v3322 = vunpack.c.h.b16 %v3190
    %v3323 = vunpack.c.l.b16 %v3191
    %v3324 = vunpack.c.h.b16 %v3191
    %v3325 = vunpack.c.l.b16 %v3192
    %v3326 = vunpack.c.h.b16 %v3192
    %v3327 = vunpack.c.l.b16 %v3193
    %v3328 = vunpack.c.h.b16 %v3193
    %v3329 = vunpack.c.l.b16 %v3194
    %v3330 = vunpack.c.h.b16 %v3194
    %v3331 = vunpack.c.l.b16 %v3195
    %v3332 = vunpack.c.h.b16 %v3195
    %v3333 = vunpack.c.l.b16 %v3196
    %v3334 = vunpack.c.h.b16 %v3196
    %v3335 = vunpack.c.l.b16 %v3197
    %v3336 = vunpack.c.h.b16 %v3197
    %v3337 = vunpack.c.l.b16 %v3198
    %v3338 = vunpack.c.h.b16 %v3198
    %v3339 = vunpack.c.l.b16 %v3199
    %v3340 = vunpack.c.h.b16 %v3199
    %v3341 = vunpack.c.l.b16 %v3200
    %v3342 = vunpack.c.h.b16 %v3200
    %v3343 = vunpack.c.l.b16 %v3201
    %v3344 = vunpack.c.h.b16 %v3201
    %v3345 = vunpack.c.l.b16 %v3202
    %v3346 = vunpack.c.h.b16 %v3202
    %v3347 = vpack.c.b16 %v3257, %v3251
    %v3348 = vpack.c.b16 %v3258, %v3252
    %v3349 = vpack.c.b16 %v3259, %v3253
    %v3350 = vpack.c.b16 %v3260, %v3254
    %v3351 = vpack.c.b16 %v3261, %v3255
    %v3352 = vpack.c.b16 %v3262, %v3256
    %v3353 = vpack.c.b16 %v3269, %v3263
    %v3354 = vpack.c.b16 %v3270, %v3264
    %v3355 = vpack.c.b16 %v3271, %v3265
    %v3356 = vpack.c.b16 %v3272, %v3266
    %v3357 = vpack.c.b16 %v3273, %v3267
    %v3358 = vpack.c.b16 %v3274, %v3268
    %v3359 = vpack.c.b16 %v3281, %v3275
    %v3360 = vpack.c.b16 %v3282, %v3276
    %v3361 = vpack.c.b16 %v3283, %v3277
    %v3362 = vpack.c.b16 %v3284, %v3278
    %v3363 = vpack.c.b16 %v3285, %v3279
    %v3364 = vpack.c.b16 %v3286, %v3280
    %v3365 = vpack.c.b16 %v3293, %v3287
    %v3366 = vpack.c.b16 %v3294, %v3288
    %v3367 = vpack.c.b16 %v3295, %v3289
    %v3368 = vpack.c.b16 %v3296, %v3290
    %v3369 = vpack.c.b16 %v3297, %v3291
    %v3370 = vpack.c.b16 %v3298, %v3292
    %v3371 = vpack.c.b16 %v3305, %v3299
    %v3372 = vpack.c.b16 %v3306, %v3300
    %v3373 = vpack.c.b16 %v3307, %v3301
    %v3374 = vpack.c.b16 %v3308, %v3302
    %v3375 = vpack.c.b16 %v3309, %v3303
    %v3376 = vpack.c.b16 %v3310, %v3304
    %v3377 = vpack.c.b16 %v3317, %v3311
    %v3378 = vpack.c.b16 %v3318, %v3312
    %v3379 = vpack.c.b16 %v3319, %v3313
    %v3380 = vpack.c.b16 %v3320, %v3314
    %v3381 = vpack.c.b16 %v3321, %v3315
    %v3382 = vpack.c.b16 %v3322, %v3316
    %v3383 = vpack.c.b16 %v3329, %v3323
    %v3384 = vpack.c.b16 %v3330, %v3324
    %v3385 = vpack.c.b16 %v3331, %v3325
    %v3386 = vpack.c.b16 %v3332, %v3326
    %v3387 = vpack.c.b16 %v3333, %v3327
    %v3388 = vpack.c.b16 %v3334, %v3328
    %v3389 = vpack.c.b16 %v3341, %v3335
    %v3390 = vpack.c.b16 %v3342, %v3336
    %v3391 = vpack.c.b16 %v3343, %v3337
    %v3392 = vpack.c.b16 %v3344, %v3338
    %v3393 = vpack.c.b16 %v3345, %v3339
    %v3394 = vpack.c.b16 %v3346, %v3340
    %3443 = vmatprep.subr.bf16.mxu0 %v3390
    %3444 = vmatpush1.bf16.msra.mxu0 %v3389
    %3445 = vmatprep.subr.bf16.mxu0 %v3384
    %3446 = vmatpush1.bf16.msra.mxu0 %v3383
    %3447 = vmatprep.subr.bf16.mxu0 %v3378
    %3448 = vmatpush1.bf16.msra.mxu0 %v3377
    %3449 = vmatprep.subr.bf16.mxu0 %v3372
    %3450 = vmatpush1.bf16.msra.mxu0 %v3371
    %3451 = vmatprep.subr.bf16.mxu0 %v3366
    %3452 = vmatpush1.bf16.msra.mxu0 %v3365
    %3453 = vmatprep.subr.bf16.mxu0 %v3360
    %3454 = vmatpush1.bf16.msra.mxu0 %v3359
    %3455 = vmatprep.subr.bf16.mxu0 %v3354
    %3456 = vmatpush1.bf16.msra.mxu0 %v3353
    %3457 = vmatprep.subr.bf16.mxu0 %v3348
    %3458 = vmatpush1.bf16.msra.mxu0 %v3347
    %3459 = vmatprep.subr.bf16.mxu0 0
    %3460 = vmatpush2.bf16.msra.mxu0 0
    %3461 = vmatprep.subr.bf16.mxu0 0
    %3462 = vmatpush2.bf16.msra.mxu0 0
    %3463 = vmatprep.subr.bf16.mxu0 0
    %3464 = vmatpush2.bf16.msra.mxu0 0
    %3465 = vmatprep.subr.bf16.mxu0 0
    %3466 = vmatpush2.bf16.msra.mxu0 0
    %3467 = vmatprep.subr.bf16.mxu0 0
    %3468 = vmatpush2.bf16.msra.mxu0 0
    %3469 = vmatprep.subr.bf16.mxu0 0
    %3470 = vmatpush2.bf16.msra.mxu0 0
    %3471 = vmatprep.subr.bf16.mxu0 0
    %3472 = vmatpush2.bf16.msra.mxu0 0
    %3473 = vmatprep.subr.bf16.mxu0 0
    %3474 = vmatpush2.bf16.msra.mxu0 0
    %3475 = vmatprep.mubr.bf16.mxu0 0
    %3476 = vmatmul.mubr.bf16.gmra.mxu0 %v3154
    %v3477 = vpop.f32.mrf.mxu0
    %v3478 = vadd.f32 0.0, %v3477
    %v3479 = vpop.f32.mrf.mxu0
    %v3480 = vadd.f32 0.0, %v3479
    %v3481 = vpop.f32.mrf.mxu0
    %v3482 = vpop.f32.mrf.mxu0
    %3483 = vdwg.mxu0
    %3484 = vmatprep.subr.bf16.mxu0 %v3392
    %3485 = vmatpush1.bf16.msra.mxu0 %v3391
    %3486 = vmatprep.subr.bf16.mxu0 %v3386
    %3487 = vmatpush1.bf16.msra.mxu0 %v3385
    %3488 = vmatprep.subr.bf16.mxu0 %v3380
    %3489 = vmatpush1.bf16.msra.mxu0 %v3379
    %3490 = vmatprep.subr.bf16.mxu0 %v3374
    %3491 = vmatpush1.bf16.msra.mxu0 %v3373
    %3492 = vmatprep.subr.bf16.mxu0 %v3368
    %3493 = vmatpush1.bf16.msra.mxu0 %v3367
    %3494 = vmatprep.subr.bf16.mxu0 %v3362
    %3495 = vmatpush1.bf16.msra.mxu0 %v3361
    %3496 = vmatprep.subr.bf16.mxu0 %v3356
    %3497 = vmatpush1.bf16.msra.mxu0 %v3355
    %3498 = vmatprep.subr.bf16.mxu0 %v3350
    %3499 = vmatpush1.bf16.msra.mxu0 %v3349
    %3500 = vmatprep.subr.bf16.mxu0 0
    %3501 = vmatpush2.bf16.msra.mxu0 0
    %3502 = vmatprep.subr.bf16.mxu0 0
    %3503 = vmatpush2.bf16.msra.mxu0 0
    %3504 = vmatprep.subr.bf16.mxu0 0
    %3505 = vmatpush2.bf16.msra.mxu0 0
    %3506 = vmatprep.subr.bf16.mxu0 0
    %3507 = vmatpush2.bf16.msra.mxu0 0
    %3508 = vmatprep.subr.bf16.mxu0 0
    %3509 = vmatpush2.bf16.msra.mxu0 0
    %3510 = vmatprep.subr.bf16.mxu0 0
    %3511 = vmatpush2.bf16.msra.mxu0 0
    %3512 = vmatprep.subr.bf16.mxu0 0
    %3513 = vmatpush2.bf16.msra.mxu0 0
    %3514 = vmatprep.subr.bf16.mxu0 0
    %3515 = vmatpush2.bf16.msra.mxu0 0
    %3516 = vmatprep.mubr.bf16.mxu0 0
    %3517 = vmatmul.mubr.bf16.gmra.mxu0 %v3154
    %v3518 = vpop.f32.mrf.mxu0
    %v3519 = vadd.f32 0.0, %v3518
    %v3520 = vpop.f32.mrf.mxu0
    %v3521 = vadd.f32 0.0, %v3520
    %v3522 = vpop.f32.mrf.mxu0
    %v3523 = vpop.f32.mrf.mxu0
    %3524 = vdwg.mxu0
    %3525 = vmatprep.subr.bf16.mxu0 %v3394
    %3526 = vmatpush1.bf16.msra.mxu0 %v3393
    %3527 = vmatprep.subr.bf16.mxu0 %v3388
    %3528 = vmatpush1.bf16.msra.mxu0 %v3387
    %3529 = vmatprep.subr.bf16.mxu0 %v3382
    %3530 = vmatpush1.bf16.msra.mxu0 %v3381
    %3531 = vmatprep.subr.bf16.mxu0 %v3376
    %3532 = vmatpush1.bf16.msra.mxu0 %v3375
    %3533 = vmatprep.subr.bf16.mxu0 %v3370
    %3534 = vmatpush1.bf16.msra.mxu0 %v3369
    %3535 = vmatprep.subr.bf16.mxu0 %v3364
    %3536 = vmatpush1.bf16.msra.mxu0 %v3363
    %3537 = vmatprep.subr.bf16.mxu0 %v3358
    %3538 = vmatpush1.bf16.msra.mxu0 %v3357
    %3539 = vmatprep.subr.bf16.mxu0 %v3352
    %3540 = vmatpush1.bf16.msra.mxu0 %v3351
    %3541 = vmatprep.subr.bf16.mxu0 0
    %3542 = vmatpush2.bf16.msra.mxu0 0
    %3543 = vmatprep.subr.bf16.mxu0 0
    %3544 = vmatpush2.bf16.msra.mxu0 0
    %3545 = vmatprep.subr.bf16.mxu0 0
    %3546 = vmatpush2.bf16.msra.mxu0 0
    %3547 = vmatprep.subr.bf16.mxu0 0
    %3548 = vmatpush2.bf16.msra.mxu0 0
    %3549 = vmatprep.subr.bf16.mxu0 0
    %3550 = vmatpush2.bf16.msra.mxu0 0
    %3551 = vmatprep.subr.bf16.mxu0 0
    %3552 = vmatpush2.bf16.msra.mxu0 0
    %3553 = vmatprep.subr.bf16.mxu0 0
    %3554 = vmatpush2.bf16.msra.mxu0 0
    %3555 = vmatprep.subr.bf16.mxu0 0
    %3556 = vmatpush2.bf16.msra.mxu0 0
    %3557 = vmatprep.mubr.bf16.mxu0 0
    %3558 = vmatmul.mubr.bf16.gmra.mxu0 %v3154
    %v3559 = vpop.f32.mrf.mxu0
    %v3560 = vadd.f32 0.0, %v3559
    %v3561 = vpop.f32.mrf.mxu0
    %v3562 = vadd.f32 0.0, %v3561
    %v3563 = vpop.f32.mrf.mxu0
    %v3564 = vpop.f32.mrf.mxu0
    %3565 = vdwg.mxu0
    %v3566 = vadd.f32 %v3478, %v114
    %3567 = vmax.xlane.f32.xlu0 %v3566
    %v3568 = vpop.xlane.xlu0 %3567
    %v3569 = vsub.f32 %v3566, %v3568
    %v3570 = vmul.f32 %v3569, 1.442695
    %v3571 = vpow.pop %v3570
    %3572 = vadd.xlane.f32.xlu0 %v3571
    %v3573 = vpop.xlane.xlu0 %3572
    %v3574 = vrcp.pop %v3573
    %v3575 = vmul.f32 %v3571, %v3574
    %s3576 = scalar_lea.vmem [#allocation15], 8
    %3577 = vst [vmem:[%s3576] sm:$0xff] %v3575
    %v3578 = vpack.c.bf16 %v3575, %v3575
    %v3579 = vld [vmem:[#allocation12] sm:$0xff]
    %v3580 = vld [vmem:[#allocation12 + $0x8] sm:$0xff]
    %v3581 = vld [vmem:[#allocation12 + $0x10] sm:$0xf]
    %v3582 = vld [vmem:[#allocation12 + $0x14] sm:$0xff]
    %v3583 = vld [vmem:[#allocation12 + $0x1c] sm:$0xff]
    %v3584 = vld [vmem:[#allocation12 + $0x24] sm:$0xf]
    %v3585 = vld [vmem:[#allocation12 + $0x28] sm:$0xff]
    %v3586 = vld [vmem:[#allocation12 + $0x30] sm:$0xff]
    %v3587 = vld [vmem:[#allocation12 + $0x38] sm:$0xf]
    %v3588 = vld [vmem:[#allocation12 + $0x3c] sm:$0xff]
    %v3589 = vld [vmem:[#allocation12 + $0x44] sm:$0xff]
    %v3590 = vld [vmem:[#allocation12 + $0x4c] sm:$0xf]
    %v3591 = vld [vmem:[#allocation12 + $0x50] sm:$0xff]
    %v3592 = vld [vmem:[#allocation12 + $0x58] sm:$0xff]
    %v3593 = vld [vmem:[#allocation12 + $0x60] sm:$0xf]
    %v3594 = vld [vmem:[#allocation12 + $0x64] sm:$0xff]
    %v3595 = vld [vmem:[#allocation12 + $0x6c] sm:$0xff]
    %v3596 = vld [vmem:[#allocation12 + $0x74] sm:$0xf]
    %v3597 = vld [vmem:[#allocation12 + $0x78] sm:$0xff]
    %v3598 = vld [vmem:[#allocation12 + $0x80] sm:$0xff]
    %v3599 = vld [vmem:[#allocation12 + $0x88] sm:$0xf]
    %v3600 = vld [vmem:[#allocation12 + $0x8c] sm:$0xff]
    %v3601 = vld [vmem:[#allocation12 + $0x94] sm:$0xff]
    %v3602 = vld [vmem:[#allocation12 + $0x9c] sm:$0xf]
    %v3603 = vld [vmem:[#allocation12 + $0xa0] sm:$0xff]
    %v3604 = vld [vmem:[#allocation12 + $0xa8] sm:$0xff]
    %v3605 = vld [vmem:[#allocation12 + $0xb0] sm:$0xf]
    %v3606 = vld [vmem:[#allocation12 + $0xb4] sm:$0xff]
    %v3607 = vld [vmem:[#allocation12 + $0xbc] sm:$0xff]
    %v3608 = vld [vmem:[#allocation12 + $0xc4] sm:$0xf]
    %v3609 = vld [vmem:[#allocation12 + $0xc8] sm:$0xff]
    %v3610 = vld [vmem:[#allocation12 + $0xd0] sm:$0xff]
    %v3611 = vld [vmem:[#allocation12 + $0xd8] sm:$0xf]
    %v3612 = vld [vmem:[#allocation12 + $0xdc] sm:$0xff]
    %v3613 = vld [vmem:[#allocation12 + $0xe4] sm:$0xff]
    %v3614 = vld [vmem:[#allocation12 + $0xec] sm:$0xf]
    %v3615 = vld [vmem:[#allocation12 + $0xf0] sm:$0xff]
    %v3616 = vld [vmem:[#allocation12 + $0xf8] sm:$0xff]
    %v3617 = vld [vmem:[#allocation12 + $0x100] sm:$0xf]
    %v3618 = vld [vmem:[#allocation12 + $0x104] sm:$0xff]
    %v3619 = vld [vmem:[#allocation12 + $0x10c] sm:$0xff]
    %v3620 = vld [vmem:[#allocation12 + $0x114] sm:$0xf]
    %v3621 = vld [vmem:[#allocation12 + $0x118] sm:$0xff]
    %v3622 = vld [vmem:[#allocation12 + $0x120] sm:$0xff]
    %v3623 = vld [vmem:[#allocation12 + $0x128] sm:$0xf]
    %v3624 = vld [vmem:[#allocation12 + $0x12c] sm:$0xff]
    %v3625 = vld [vmem:[#allocation12 + $0x134] sm:$0xff]
    %v3626 = vld [vmem:[#allocation12 + $0x13c] sm:$0xf]
    %v3675 = vunpack.c.l.b16 %v3579
    %v3676 = vunpack.c.h.b16 %v3579
    %v3677 = vunpack.c.l.b16 %v3580
    %v3678 = vunpack.c.h.b16 %v3580
    %v3679 = vunpack.c.l.b16 %v3581
    %v3680 = vunpack.c.l.b16 %v3582
    %v3681 = vunpack.c.h.b16 %v3582
    %v3682 = vunpack.c.l.b16 %v3583
    %v3683 = vunpack.c.h.b16 %v3583
    %v3684 = vunpack.c.l.b16 %v3584
    %v3685 = vunpack.c.l.b16 %v3585
    %v3686 = vunpack.c.h.b16 %v3585
    %v3687 = vunpack.c.l.b16 %v3586
    %v3688 = vunpack.c.h.b16 %v3586
    %v3689 = vunpack.c.l.b16 %v3587
    %v3690 = vunpack.c.l.b16 %v3588
    %v3691 = vunpack.c.h.b16 %v3588
    %v3692 = vunpack.c.l.b16 %v3589
    %v3693 = vunpack.c.h.b16 %v3589
    %v3694 = vunpack.c.l.b16 %v3590
    %v3695 = vunpack.c.l.b16 %v3591
    %v3696 = vunpack.c.h.b16 %v3591
    %v3697 = vunpack.c.l.b16 %v3592
    %v3698 = vunpack.c.h.b16 %v3592
    %v3699 = vunpack.c.l.b16 %v3593
    %v3700 = vunpack.c.l.b16 %v3594
    %v3701 = vunpack.c.h.b16 %v3594
    %v3702 = vunpack.c.l.b16 %v3595
    %v3703 = vunpack.c.h.b16 %v3595
    %v3704 = vunpack.c.l.b16 %v3596
    %v3705 = vunpack.c.l.b16 %v3597
    %v3706 = vunpack.c.h.b16 %v3597
    %v3707 = vunpack.c.l.b16 %v3598
    %v3708 = vunpack.c.h.b16 %v3598
    %v3709 = vunpack.c.l.b16 %v3599
    %v3710 = vunpack.c.l.b16 %v3600
    %v3711 = vunpack.c.h.b16 %v3600
    %v3712 = vunpack.c.l.b16 %v3601
    %v3713 = vunpack.c.h.b16 %v3601
    %v3714 = vunpack.c.l.b16 %v3602
    %v3715 = vunpack.c.l.b16 %v3603
    %v3716 = vunpack.c.h.b16 %v3603
    %v3717 = vunpack.c.l.b16 %v3604
    %v3718 = vunpack.c.h.b16 %v3604
    %v3719 = vunpack.c.l.b16 %v3605
    %v3720 = vunpack.c.l.b16 %v3606
    %v3721 = vunpack.c.h.b16 %v3606
    %v3722 = vunpack.c.l.b16 %v3607
    %v3723 = vunpack.c.h.b16 %v3607
    %v3724 = vunpack.c.l.b16 %v3608
    %v3725 = vunpack.c.l.b16 %v3609
    %v3726 = vunpack.c.h.b16 %v3609
    %v3727 = vunpack.c.l.b16 %v3610
    %v3728 = vunpack.c.h.b16 %v3610
    %v3729 = vunpack.c.l.b16 %v3611
    %v3730 = vunpack.c.l.b16 %v3612
    %v3731 = vunpack.c.h.b16 %v3612
    %v3732 = vunpack.c.l.b16 %v3613
    %v3733 = vunpack.c.h.b16 %v3613
    %v3734 = vunpack.c.l.b16 %v3614
    %v3735 = vunpack.c.l.b16 %v3615
    %v3736 = vunpack.c.h.b16 %v3615
    %v3737 = vunpack.c.l.b16 %v3616
    %v3738 = vunpack.c.h.b16 %v3616
    %v3739 = vunpack.c.l.b16 %v3617
    %v3740 = vunpack.c.l.b16 %v3618
    %v3741 = vunpack.c.h.b16 %v3618
    %v3742 = vunpack.c.l.b16 %v3619
    %v3743 = vunpack.c.h.b16 %v3619
    %v3744 = vunpack.c.l.b16 %v3620
    %v3745 = vunpack.c.l.b16 %v3621
    %v3746 = vunpack.c.h.b16 %v3621
    %v3747 = vunpack.c.l.b16 %v3622
    %v3748 = vunpack.c.h.b16 %v3622
    %v3749 = vunpack.c.l.b16 %v3623
    %v3750 = vunpack.c.l.b16 %v3624
    %v3751 = vunpack.c.h.b16 %v3624
    %v3752 = vunpack.c.l.b16 %v3625
    %v3753 = vunpack.c.h.b16 %v3625
    %v3754 = vunpack.c.l.b16 %v3626
    %v3755 = vpack.c.b16 %v3680, %v3675
    %v3756 = vpack.c.b16 %v3681, %v3676
    %v3757 = vpack.c.b16 %v3682, %v3677
    %v3758 = vpack.c.b16 %v3683, %v3678
    %v3759 = vpack.c.b16 %v3684, %v3679
    %v3760 = vpack.c.b16 %v3690, %v3685
    %v3761 = vpack.c.b16 %v3691, %v3686
    %v3762 = vpack.c.b16 %v3692, %v3687
    %v3763 = vpack.c.b16 %v3693, %v3688
    %v3764 = vpack.c.b16 %v3694, %v3689
    %v3765 = vpack.c.b16 %v3700, %v3695
    %v3766 = vpack.c.b16 %v3701, %v3696
    %v3767 = vpack.c.b16 %v3702, %v3697
    %v3768 = vpack.c.b16 %v3703, %v3698
    %v3769 = vpack.c.b16 %v3704, %v3699
    %v3770 = vpack.c.b16 %v3710, %v3705
    %v3771 = vpack.c.b16 %v3711, %v3706
    %v3772 = vpack.c.b16 %v3712, %v3707
    %v3773 = vpack.c.b16 %v3713, %v3708
    %v3774 = vpack.c.b16 %v3714, %v3709
    %v3775 = vpack.c.b16 %v3720, %v3715
    %v3776 = vpack.c.b16 %v3721, %v3716
    %v3777 = vpack.c.b16 %v3722, %v3717
    %v3778 = vpack.c.b16 %v3723, %v3718
    %v3779 = vpack.c.b16 %v3724, %v3719
    %v3780 = vpack.c.b16 %v3730, %v3725
    %v3781 = vpack.c.b16 %v3731, %v3726
    %v3782 = vpack.c.b16 %v3732, %v3727
    %v3783 = vpack.c.b16 %v3733, %v3728
    %v3784 = vpack.c.b16 %v3734, %v3729
    %v3785 = vpack.c.b16 %v3740, %v3735
    %v3786 = vpack.c.b16 %v3741, %v3736
    %v3787 = vpack.c.b16 %v3742, %v3737
    %v3788 = vpack.c.b16 %v3743, %v3738
    %v3789 = vpack.c.b16 %v3744, %v3739
    %v3790 = vpack.c.b16 %v3750, %v3745
    %v3791 = vpack.c.b16 %v3751, %v3746
    %v3792 = vpack.c.b16 %v3752, %v3747
    %v3793 = vpack.c.b16 %v3753, %v3748
    %v3794 = vpack.c.b16 %v3754, %v3749
    %3835 = vmatprep.subr.bf16.mxu0 %v3791
    %3836 = vmatpush1.bf16.msra.mxu0 %v3790
    %3837 = vmatprep.subr.bf16.mxu0 %v3786
    %3838 = vmatpush1.bf16.msra.mxu0 %v3785
    %3839 = vmatprep.subr.bf16.mxu0 %v3781
    %3840 = vmatpush1.bf16.msra.mxu0 %v3780
    %3841 = vmatprep.subr.bf16.mxu0 %v3776
    %3842 = vmatpush1.bf16.msra.mxu0 %v3775
    %3843 = vmatprep.subr.bf16.mxu0 %v3771
    %3844 = vmatpush1.bf16.msra.mxu0 %v3770
    %3845 = vmatprep.subr.bf16.mxu0 %v3766
    %3846 = vmatpush1.bf16.msra.mxu0 %v3765
    %3847 = vmatprep.subr.bf16.mxu0 %v3761
    %3848 = vmatpush1.bf16.msra.mxu0 %v3760
    %3849 = vmatprep.subr.bf16.mxu0 %v3756
    %3850 = vmatpush1.bf16.msra.mxu0 %v3755
    %3851 = vmatprep.subr.bf16.mxu0 0
    %3852 = vmatpush2.bf16.msra.mxu0 0
    %3853 = vmatprep.subr.bf16.mxu0 0
    %3854 = vmatpush2.bf16.msra.mxu0 0
    %3855 = vmatprep.subr.bf16.mxu0 0
    %3856 = vmatpush2.bf16.msra.mxu0 0
    %3857 = vmatprep.subr.bf16.mxu0 0
    %3858 = vmatpush2.bf16.msra.mxu0 0
    %3859 = vmatprep.subr.bf16.mxu0 0
    %3860 = vmatpush2.bf16.msra.mxu0 0
    %3861 = vmatprep.subr.bf16.mxu0 0
    %3862 = vmatpush2.bf16.msra.mxu0 0
    %3863 = vmatprep.subr.bf16.mxu0 0
    %3864 = vmatpush2.bf16.msra.mxu0 0
    %3865 = vmatprep.subr.bf16.mxu0 0
    %3866 = vmatpush2.bf16.msra.mxu0 0
    %3867 = vmatprep.mubr.bf16.mxu0 0
    %3868 = vmatmul.mubr.bf16.gmra.mxu0 %v3578
    %v3869 = vpop.f32.mrf.mxu0
    %v3870 = vadd.f32 0.0, %v3869
    %v3871 = vpop.f32.mrf.mxu0
    %v3872 = vadd.f32 0.0, %v3871
    %v3873 = vpop.f32.mrf.mxu0
    %v3874 = vpop.f32.mrf.mxu0
    %3875 = vdwg.mxu0
    %3876 = vmatprep.subr.bf16.mxu0 %v3793
    %3877 = vmatpush1.bf16.msra.mxu0 %v3792
    %3878 = vmatprep.subr.bf16.mxu0 %v3788
    %3879 = vmatpush1.bf16.msra.mxu0 %v3787
    %3880 = vmatprep.subr.bf16.mxu0 %v3783
    %3881 = vmatpush1.bf16.msra.mxu0 %v3782
    %3882 = vmatprep.subr.bf16.mxu0 %v3778
    %3883 = vmatpush1.bf16.msra.mxu0 %v3777
    %3884 = vmatprep.subr.bf16.mxu0 %v3773
    %3885 = vmatpush1.bf16.msra.mxu0 %v3772
    %3886 = vmatprep.subr.bf16.mxu0 %v3768
    %3887 = vmatpush1.bf16.msra.mxu0 %v3767
    %3888 = vmatprep.subr.bf16.mxu0 %v3763
    %3889 = vmatpush1.bf16.msra.mxu0 %v3762
    %3890 = vmatprep.subr.bf16.mxu0 %v3758
    %3891 = vmatpush1.bf16.msra.mxu0 %v3757
    %3892 = vmatprep.subr.bf16.mxu0 0
    %3893 = vmatpush2.bf16.msra.mxu0 0
    %3894 = vmatprep.subr.bf16.mxu0 0
    %3895 = vmatpush2.bf16.msra.mxu0 0
    %3896 = vmatprep.subr.bf16.mxu0 0
    %3897 = vmatpush2.bf16.msra.mxu0 0
    %3898 = vmatprep.subr.bf16.mxu0 0
    %3899 = vmatpush2.bf16.msra.mxu0 0
    %3900 = vmatprep.subr.bf16.mxu0 0
    %3901 = vmatpush2.bf16.msra.mxu0 0
    %3902 = vmatprep.subr.bf16.mxu0 0
    %3903 = vmatpush2.bf16.msra.mxu0 0
    %3904 = vmatprep.subr.bf16.mxu0 0
    %3905 = vmatpush2.bf16.msra.mxu0 0
    %3906 = vmatprep.subr.bf16.mxu0 0
    %3907 = vmatpush2.bf16.msra.mxu0 0
    %3908 = vmatprep.mubr.bf16.mxu0 0
    %3909 = vmatmul.mubr.bf16.gmra.mxu0 %v3578
    %v3910 = vpop.f32.mrf.mxu0
    %v3911 = vadd.f32 0.0, %v3910
    %v3912 = vpop.f32.mrf.mxu0
    %v3913 = vadd.f32 0.0, %v3912
    %v3914 = vpop.f32.mrf.mxu0
    %v3915 = vpop.f32.mrf.mxu0
    %3916 = vdwg.mxu0
    %3917 = vmatprep.subr.bf16.mxu0 0
    %3918 = vmatpush1.bf16.msra.mxu0 %v3794
    %3919 = vmatprep.subr.bf16.mxu0 0
    %3920 = vmatpush1.bf16.msra.mxu0 %v3789
    %3921 = vmatprep.subr.bf16.mxu0 0
    %3922 = vmatpush1.bf16.msra.mxu0 %v3784
    %3923 = vmatprep.subr.bf16.mxu0 0
    %3924 = vmatpush1.bf16.msra.mxu0 %v3779
    %3925 = vmatprep.subr.bf16.mxu0 0
    %3926 = vmatpush1.bf16.msra.mxu0 %v3774
    %3927 = vmatprep.subr.bf16.mxu0 0
    %3928 = vmatpush1.bf16.msra.mxu0 %v3769
    %3929 = vmatprep.subr.bf16.mxu0 0
    %3930 = vmatpush1.bf16.msra.mxu0 %v3764
    %3931 = vmatprep.subr.bf16.mxu0 0
    %3932 = vmatpush1.bf16.msra.mxu0 %v3759
    %3933 = vmatprep.subr.bf16.mxu0 0
    %3934 = vmatpush2.bf16.msra.mxu0 0
    %3935 = vmatprep.subr.bf16.mxu0 0
    %3936 = vmatpush2.bf16.msra.mxu0 0
    %3937 = vmatprep.subr.bf16.mxu0 0
    %3938 = vmatpush2.bf16.msra.mxu0 0
    %3939 = vmatprep.subr.bf16.mxu0 0
    %3940 = vmatpush2.bf16.msra.mxu0 0
    %3941 = vmatprep.subr.bf16.mxu0 0
    %3942 = vmatpush2.bf16.msra.mxu0 0
    %3943 = vmatprep.subr.bf16.mxu0 0
    %3944 = vmatpush2.bf16.msra.mxu0 0
    %3945 = vmatprep.subr.bf16.mxu0 0
    %3946 = vmatpush2.bf16.msra.mxu0 0
    %3947 = vmatprep.subr.bf16.mxu0 0
    %3948 = vmatpush2.bf16.msra.mxu0 0
    %3949 = vmatprep.mubr.bf16.mxu0 0
    %3950 = vmatmul.mubr.bf16.gmra.mxu0 %v3578
    %v3951 = vpop.f32.mrf.mxu0
    %v3952 = vadd.f32 0.0, %v3951
    %v3953 = vpop.f32.mrf.mxu0
    %v3954 = vpop.f32.mrf.mxu0
    %v3955 = vpop.f32.mrf.mxu0
    %3956 = vdwg.mxu0
    %v3957 = vadd.f32 %v3480, %v3870
    %s3958 = scalar_lea.vmem [#allocation14], 8
    %3959 = vst [vmem:[%s3958] sm:$0xff] %v3957
    %v3960 = vld [vmem:[#allocation2 + $0x40] sm:$0xff]
    %v3961 = vld [vmem:[#allocation2 + $0x48] sm:$0xff]
    %v3962 = vld [vmem:[#allocation2 + $0x50] sm:$0xff]
    %v3963 = vld [vmem:[#allocation2 + $0x58] sm:$0xff]
    %v3964 = vadd.f32 %v3960, %v3872
    %v3965 = vadd.f32 %v3961, %v3911
    %v3966 = vadd.f32 %v3962, %v3913
    %v3967 = vadd.f32 %v3963, %v3952
    %v3968 = vadd.f32 %v3964, %v3075
    %v3969 = vadd.f32 %v3965, %v3077
    %v3970 = vadd.f32 %v3966, %v3116
    %v3971 = vadd.f32 %v3967, %v3118
    %v3972 = vxor.u32 %v3968, 2147483648
    %v3973 = vmul.f32 %v3972, 1.442695
    %v3974 = vpow.pop %v3973
    %v3975 = vadd.f32 %v3974, 1.0
    %v3976 = vrcp.pop %v3975
    %v3977 = vmul.f32 1.0, %v3976
    %v3978 = vxor.u32 %v3969, 2147483648
    %v3979 = vmul.f32 %v3978, 1.442695
    %v3980 = vpow.pop %v3979
    %v3981 = vadd.f32 %v3980, 1.0
    %v3982 = vrcp.pop %v3981
    %v3983 = vmul.f32 1.0, %v3982
    %v3984 = vtanh.pop %v3970
    %v3985 = vxor.u32 %v3971, 2147483648
    %v3986 = vmul.f32 %v3985, 1.442695
    %v3987 = vpow.pop %v3986
    %v3988 = vadd.f32 %v3987, 1.0
    %v3989 = vrcp.pop %v3988
    %v3990 = vmul.f32 1.0, %v3989
    %v3991 = vmul.f32 %v3983, %v2570
    %v3992 = vmul.f32 %v3977, %v3984
    %v3993 = vadd.f32 %v3991, %v3992
    %v3994 = vtanh.pop %v3993
    %v3995 = vmul.f32 %v3990, %v3994
    %v3996 = vpack.c.bf16 %v3995, %v3995
    %v3997 = vld [vmem:[#allocation9] sm:$0xff]
    %v3998 = vld [vmem:[#allocation9 + $0x8] sm:$0xff]
    %v3999 = vld [vmem:[#allocation9 + $0x10] sm:$0xff]
    %v4000 = vld [vmem:[#allocation9 + $0x18] sm:$0xff]
    %v4001 = vld [vmem:[#allocation9 + $0x20] sm:$0xff]
    %v4002 = vld [vmem:[#allocation9 + $0x28] sm:$0xff]
    %v4003 = vld [vmem:[#allocation9 + $0x30] sm:$0xff]
    %v4004 = vld [vmem:[#allocation9 + $0x38] sm:$0xff]
    %v4005 = vld [vmem:[#allocation9 + $0x40] sm:$0xff]
    %v4006 = vld [vmem:[#allocation9 + $0x48] sm:$0xff]
    %v4007 = vld [vmem:[#allocation9 + $0x50] sm:$0xff]
    %v4008 = vld [vmem:[#allocation9 + $0x58] sm:$0xff]
    %v4009 = vld [vmem:[#allocation9 + $0x60] sm:$0xff]
    %v4010 = vld [vmem:[#allocation9 + $0x68] sm:$0xff]
    %v4011 = vld [vmem:[#allocation9 + $0x70] sm:$0xff]
    %v4012 = vld [vmem:[#allocation9 + $0x78] sm:$0xff]
    %v4013 = vld [vmem:[#allocation9 + $0x80] sm:$0xff]
    %v4014 = vld [vmem:[#allocation9 + $0x88] sm:$0xff]
    %v4015 = vld [vmem:[#allocation9 + $0x90] sm:$0xff]
    %v4016 = vld [vmem:[#allocation9 + $0x98] sm:$0xff]
    %v4017 = vld [vmem:[#allocation9 + $0xa0] sm:$0xff]
    %v4018 = vld [vmem:[#allocation9 + $0xa8] sm:$0xff]
    %v4019 = vld [vmem:[#allocation9 + $0xb0] sm:$0xff]
    %v4020 = vld [vmem:[#allocation9 + $0xb8] sm:$0xff]
    %v4021 = vld [vmem:[#allocation9 + $0xc0] sm:$0xff]
    %v4022 = vld [vmem:[#allocation9 + $0xc8] sm:$0xff]
    %v4023 = vld [vmem:[#allocation9 + $0xd0] sm:$0xff]
    %v4024 = vld [vmem:[#allocation9 + $0xd8] sm:$0xff]
    %v4025 = vld [vmem:[#allocation9 + $0xe0] sm:$0xff]
    %v4026 = vld [vmem:[#allocation9 + $0xe8] sm:$0xff]
    %v4027 = vld [vmem:[#allocation9 + $0xf0] sm:$0xff]
    %v4028 = vld [vmem:[#allocation9 + $0xf8] sm:$0xff]
    %v4029 = vld [vmem:[#allocation9 + $0x100] sm:$0xff]
    %v4030 = vld [vmem:[#allocation9 + $0x108] sm:$0xff]
    %v4031 = vld [vmem:[#allocation9 + $0x110] sm:$0xff]
    %v4032 = vld [vmem:[#allocation9 + $0x118] sm:$0xff]
    %v4033 = vld [vmem:[#allocation9 + $0x120] sm:$0xff]
    %v4034 = vld [vmem:[#allocation9 + $0x128] sm:$0xff]
    %v4035 = vld [vmem:[#allocation9 + $0x130] sm:$0xff]
    %v4036 = vld [vmem:[#allocation9 + $0x138] sm:$0xff]
    %v4037 = vld [vmem:[#allocation9 + $0x140] sm:$0xff]
    %v4038 = vld [vmem:[#allocation9 + $0x148] sm:$0xff]
    %v4039 = vld [vmem:[#allocation9 + $0x150] sm:$0xff]
    %v4040 = vld [vmem:[#allocation9 + $0x158] sm:$0xff]
    %v4041 = vld [vmem:[#allocation9 + $0x160] sm:$0xff]
    %v4042 = vld [vmem:[#allocation9 + $0x168] sm:$0xff]
    %v4043 = vld [vmem:[#allocation9 + $0x170] sm:$0xff]
    %v4044 = vld [vmem:[#allocation9 + $0x178] sm:$0xff]
    %v4045 = vld [vmem:[#allocation9 + $0x180] sm:$0xff]
    %v4046 = vld [vmem:[#allocation9 + $0x188] sm:$0xff]
    %v4047 = vld [vmem:[#allocation9 + $0x190] sm:$0xff]
    %v4048 = vld [vmem:[#allocation9 + $0x198] sm:$0xff]
    %v4049 = vld [vmem:[#allocation9 + $0x1a0] sm:$0xff]
    %v4050 = vld [vmem:[#allocation9 + $0x1a8] sm:$0xff]
    %v4051 = vld [vmem:[#allocation9 + $0x1b0] sm:$0xff]
    %v4052 = vld [vmem:[#allocation9 + $0x1b8] sm:$0xff]
    %v4053 = vld [vmem:[#allocation9 + $0x1c0] sm:$0xff]
    %v4054 = vld [vmem:[#allocation9 + $0x1c8] sm:$0xff]
    %v4055 = vld [vmem:[#allocation9 + $0x1d0] sm:$0xff]
    %v4056 = vld [vmem:[#allocation9 + $0x1d8] sm:$0xff]
    %v4057 = vld [vmem:[#allocation9 + $0x1e0] sm:$0xff]
    %v4058 = vld [vmem:[#allocation9 + $0x1e8] sm:$0xff]
    %v4059 = vld [vmem:[#allocation9 + $0x1f0] sm:$0xff]
    %v4060 = vld [vmem:[#allocation9 + $0x1f8] sm:$0xff]
    %v4125 = vunpack.c.l.b16 %v3997
    %v4126 = vunpack.c.h.b16 %v3997
    %v4127 = vunpack.c.l.b16 %v3998
    %v4128 = vunpack.c.h.b16 %v3998
    %v4129 = vunpack.c.l.b16 %v3999
    %v4130 = vunpack.c.h.b16 %v3999
    %v4131 = vunpack.c.l.b16 %v4000
    %v4132 = vunpack.c.h.b16 %v4000
    %v4133 = vunpack.c.l.b16 %v4001
    %v4134 = vunpack.c.h.b16 %v4001
    %v4135 = vunpack.c.l.b16 %v4002
    %v4136 = vunpack.c.h.b16 %v4002
    %v4137 = vunpack.c.l.b16 %v4003
    %v4138 = vunpack.c.h.b16 %v4003
    %v4139 = vunpack.c.l.b16 %v4004
    %v4140 = vunpack.c.h.b16 %v4004
    %v4141 = vunpack.c.l.b16 %v4005
    %v4142 = vunpack.c.h.b16 %v4005
    %v4143 = vunpack.c.l.b16 %v4006
    %v4144 = vunpack.c.h.b16 %v4006
    %v4145 = vunpack.c.l.b16 %v4007
    %v4146 = vunpack.c.h.b16 %v4007
    %v4147 = vunpack.c.l.b16 %v4008
    %v4148 = vunpack.c.h.b16 %v4008
    %v4149 = vunpack.c.l.b16 %v4009
    %v4150 = vunpack.c.h.b16 %v4009
    %v4151 = vunpack.c.l.b16 %v4010
    %v4152 = vunpack.c.h.b16 %v4010
    %v4153 = vunpack.c.l.b16 %v4011
    %v4154 = vunpack.c.h.b16 %v4011
    %v4155 = vunpack.c.l.b16 %v4012
    %v4156 = vunpack.c.h.b16 %v4012
    %v4157 = vunpack.c.l.b16 %v4013
    %v4158 = vunpack.c.h.b16 %v4013
    %v4159 = vunpack.c.l.b16 %v4014
    %v4160 = vunpack.c.h.b16 %v4014
    %v4161 = vunpack.c.l.b16 %v4015
    %v4162 = vunpack.c.h.b16 %v4015
    %v4163 = vunpack.c.l.b16 %v4016
    %v4164 = vunpack.c.h.b16 %v4016
    %v4165 = vunpack.c.l.b16 %v4017
    %v4166 = vunpack.c.h.b16 %v4017
    %v4167 = vunpack.c.l.b16 %v4018
    %v4168 = vunpack.c.h.b16 %v4018
    %v4169 = vunpack.c.l.b16 %v4019
    %v4170 = vunpack.c.h.b16 %v4019
    %v4171 = vunpack.c.l.b16 %v4020
    %v4172 = vunpack.c.h.b16 %v4020
    %v4173 = vunpack.c.l.b16 %v4021
    %v4174 = vunpack.c.h.b16 %v4021
    %v4175 = vunpack.c.l.b16 %v4022
    %v4176 = vunpack.c.h.b16 %v4022
    %v4177 = vunpack.c.l.b16 %v4023
    %v4178 = vunpack.c.h.b16 %v4023
    %v4179 = vunpack.c.l.b16 %v4024
    %v4180 = vunpack.c.h.b16 %v4024
    %v4181 = vunpack.c.l.b16 %v4025
    %v4182 = vunpack.c.h.b16 %v4025
    %v4183 = vunpack.c.l.b16 %v4026
    %v4184 = vunpack.c.h.b16 %v4026
    %v4185 = vunpack.c.l.b16 %v4027
    %v4186 = vunpack.c.h.b16 %v4027
    %v4187 = vunpack.c.l.b16 %v4028
    %v4188 = vunpack.c.h.b16 %v4028
    %v4189 = vunpack.c.l.b16 %v4029
    %v4190 = vunpack.c.h.b16 %v4029
    %v4191 = vunpack.c.l.b16 %v4030
    %v4192 = vunpack.c.h.b16 %v4030
    %v4193 = vunpack.c.l.b16 %v4031
    %v4194 = vunpack.c.h.b16 %v4031
    %v4195 = vunpack.c.l.b16 %v4032
    %v4196 = vunpack.c.h.b16 %v4032
    %v4197 = vunpack.c.l.b16 %v4033
    %v4198 = vunpack.c.h.b16 %v4033
    %v4199 = vunpack.c.l.b16 %v4034
    %v4200 = vunpack.c.h.b16 %v4034
    %v4201 = vunpack.c.l.b16 %v4035
    %v4202 = vunpack.c.h.b16 %v4035
    %v4203 = vunpack.c.l.b16 %v4036
    %v4204 = vunpack.c.h.b16 %v4036
    %v4205 = vunpack.c.l.b16 %v4037
    %v4206 = vunpack.c.h.b16 %v4037
    %v4207 = vunpack.c.l.b16 %v4038
    %v4208 = vunpack.c.h.b16 %v4038
    %v4209 = vunpack.c.l.b16 %v4039
    %v4210 = vunpack.c.h.b16 %v4039
    %v4211 = vunpack.c.l.b16 %v4040
    %v4212 = vunpack.c.h.b16 %v4040
    %v4213 = vunpack.c.l.b16 %v4041
    %v4214 = vunpack.c.h.b16 %v4041
    %v4215 = vunpack.c.l.b16 %v4042
    %v4216 = vunpack.c.h.b16 %v4042
    %v4217 = vunpack.c.l.b16 %v4043
    %v4218 = vunpack.c.h.b16 %v4043
    %v4219 = vunpack.c.l.b16 %v4044
    %v4220 = vunpack.c.h.b16 %v4044
    %v4221 = vunpack.c.l.b16 %v4045
    %v4222 = vunpack.c.h.b16 %v4045
    %v4223 = vunpack.c.l.b16 %v4046
    %v4224 = vunpack.c.h.b16 %v4046
    %v4225 = vunpack.c.l.b16 %v4047
    %v4226 = vunpack.c.h.b16 %v4047
    %v4227 = vunpack.c.l.b16 %v4048
    %v4228 = vunpack.c.h.b16 %v4048
    %v4229 = vunpack.c.l.b16 %v4049
    %v4230 = vunpack.c.h.b16 %v4049
    %v4231 = vunpack.c.l.b16 %v4050
    %v4232 = vunpack.c.h.b16 %v4050
    %v4233 = vunpack.c.l.b16 %v4051
    %v4234 = vunpack.c.h.b16 %v4051
    %v4235 = vunpack.c.l.b16 %v4052
    %v4236 = vunpack.c.h.b16 %v4052
    %v4237 = vunpack.c.l.b16 %v4053
    %v4238 = vunpack.c.h.b16 %v4053
    %v4239 = vunpack.c.l.b16 %v4054
    %v4240 = vunpack.c.h.b16 %v4054
    %v4241 = vunpack.c.l.b16 %v4055
    %v4242 = vunpack.c.h.b16 %v4055
    %v4243 = vunpack.c.l.b16 %v4056
    %v4244 = vunpack.c.h.b16 %v4056
    %v4245 = vunpack.c.l.b16 %v4057
    %v4246 = vunpack.c.h.b16 %v4057
    %v4247 = vunpack.c.l.b16 %v4058
    %v4248 = vunpack.c.h.b16 %v4058
    %v4249 = vunpack.c.l.b16 %v4059
    %v4250 = vunpack.c.h.b16 %v4059
    %v4251 = vunpack.c.l.b16 %v4060
    %v4252 = vunpack.c.h.b16 %v4060
    %v4253 = vpack.c.b16 %v4133, %v4125
    %v4254 = vpack.c.b16 %v4134, %v4126
    %v4255 = vpack.c.b16 %v4135, %v4127
    %v4256 = vpack.c.b16 %v4136, %v4128
    %v4257 = vpack.c.b16 %v4137, %v4129
    %v4258 = vpack.c.b16 %v4138, %v4130
    %v4259 = vpack.c.b16 %v4139, %v4131
    %v4260 = vpack.c.b16 %v4140, %v4132
    %v4261 = vpack.c.b16 %v4149, %v4141
    %v4262 = vpack.c.b16 %v4150, %v4142
    %v4263 = vpack.c.b16 %v4151, %v4143
    %v4264 = vpack.c.b16 %v4152, %v4144
    %v4265 = vpack.c.b16 %v4153, %v4145
    %v4266 = vpack.c.b16 %v4154, %v4146
    %v4267 = vpack.c.b16 %v4155, %v4147
    %v4268 = vpack.c.b16 %v4156, %v4148
    %v4269 = vpack.c.b16 %v4165, %v4157
    %v4270 = vpack.c.b16 %v4166, %v4158
    %v4271 = vpack.c.b16 %v4167, %v4159
    %v4272 = vpack.c.b16 %v4168, %v4160
    %v4273 = vpack.c.b16 %v4169, %v4161
    %v4274 = vpack.c.b16 %v4170, %v4162
    %v4275 = vpack.c.b16 %v4171, %v4163
    %v4276 = vpack.c.b16 %v4172, %v4164
    %v4277 = vpack.c.b16 %v4181, %v4173
    %v4278 = vpack.c.b16 %v4182, %v4174
    %v4279 = vpack.c.b16 %v4183, %v4175
    %v4280 = vpack.c.b16 %v4184, %v4176
    %v4281 = vpack.c.b16 %v4185, %v4177
    %v4282 = vpack.c.b16 %v4186, %v4178
    %v4283 = vpack.c.b16 %v4187, %v4179
    %v4284 = vpack.c.b16 %v4188, %v4180
    %v4285 = vpack.c.b16 %v4197, %v4189
    %v4286 = vpack.c.b16 %v4198, %v4190
    %v4287 = vpack.c.b16 %v4199, %v4191
    %v4288 = vpack.c.b16 %v4200, %v4192
    %v4289 = vpack.c.b16 %v4201, %v4193
    %v4290 = vpack.c.b16 %v4202, %v4194
    %v4291 = vpack.c.b16 %v4203, %v4195
    %v4292 = vpack.c.b16 %v4204, %v4196
    %v4293 = vpack.c.b16 %v4213, %v4205
    %v4294 = vpack.c.b16 %v4214, %v4206
    %v4295 = vpack.c.b16 %v4215, %v4207
    %v4296 = vpack.c.b16 %v4216, %v4208
    %v4297 = vpack.c.b16 %v4217, %v4209
    %v4298 = vpack.c.b16 %v4218, %v4210
    %v4299 = vpack.c.b16 %v4219, %v4211
    %v4300 = vpack.c.b16 %v4220, %v4212
    %v4301 = vpack.c.b16 %v4229, %v4221
    %v4302 = vpack.c.b16 %v4230, %v4222
    %v4303 = vpack.c.b16 %v4231, %v4223
    %v4304 = vpack.c.b16 %v4232, %v4224
    %v4305 = vpack.c.b16 %v4233, %v4225
    %v4306 = vpack.c.b16 %v4234, %v4226
    %v4307 = vpack.c.b16 %v4235, %v4227
    %v4308 = vpack.c.b16 %v4236, %v4228
    %v4309 = vpack.c.b16 %v4245, %v4237
    %v4310 = vpack.c.b16 %v4246, %v4238
    %v4311 = vpack.c.b16 %v4247, %v4239
    %v4312 = vpack.c.b16 %v4248, %v4240
    %v4313 = vpack.c.b16 %v4249, %v4241
    %v4314 = vpack.c.b16 %v4250, %v4242
    %v4315 = vpack.c.b16 %v4251, %v4243
    %v4316 = vpack.c.b16 %v4252, %v4244
    %4381 = vmatprep.subr.bf16.mxu0 %v4310
    %4382 = vmatpush1.bf16.msra.mxu0 %v4309
    %4383 = vmatprep.subr.bf16.mxu0 %v4302
    %4384 = vmatpush1.bf16.msra.mxu0 %v4301
    %4385 = vmatprep.subr.bf16.mxu0 %v4294
    %4386 = vmatpush1.bf16.msra.mxu0 %v4293
    %4387 = vmatprep.subr.bf16.mxu0 %v4286
    %4388 = vmatpush1.bf16.msra.mxu0 %v4285
    %4389 = vmatprep.subr.bf16.mxu0 %v4278
    %4390 = vmatpush1.bf16.msra.mxu0 %v4277
    %4391 = vmatprep.subr.bf16.mxu0 %v4270
    %4392 = vmatpush1.bf16.msra.mxu0 %v4269
    %4393 = vmatprep.subr.bf16.mxu0 %v4262
    %4394 = vmatpush1.bf16.msra.mxu0 %v4261
    %4395 = vmatprep.subr.bf16.mxu0 %v4254
    %4396 = vmatpush1.bf16.msra.mxu0 %v4253
    %4397 = vmatprep.subr.bf16.mxu0 0
    %4398 = vmatpush2.bf16.msra.mxu0 0
    %4399 = vmatprep.subr.bf16.mxu0 0
    %4400 = vmatpush2.bf16.msra.mxu0 0
    %4401 = vmatprep.subr.bf16.mxu0 0
    %4402 = vmatpush2.bf16.msra.mxu0 0
    %4403 = vmatprep.subr.bf16.mxu0 0
    %4404 = vmatpush2.bf16.msra.mxu0 0
    %4405 = vmatprep.subr.bf16.mxu0 0
    %4406 = vmatpush2.bf16.msra.mxu0 0
    %4407 = vmatprep.subr.bf16.mxu0 0
    %4408 = vmatpush2.bf16.msra.mxu0 0
    %4409 = vmatprep.subr.bf16.mxu0 0
    %4410 = vmatpush2.bf16.msra.mxu0 0
    %4411 = vmatprep.subr.bf16.mxu0 0
    %4412 = vmatpush2.bf16.msra.mxu0 0
    %4413 = vmatprep.mubr.bf16.mxu0 0
    %4414 = vmatmul.mubr.bf16.gmra.mxu0 %v3996
    %v4415 = vpop.f32.mrf.mxu0
    %v4416 = vadd.f32 0.0, %v4415
    %v4417 = vpop.f32.mrf.mxu0
    %v4418 = vadd.f32 0.0, %v4417
    %v4419 = vpop.f32.mrf.mxu0
    %v4420 = vpop.f32.mrf.mxu0
    %4421 = vdwg.mxu0
    %4422 = vmatprep.subr.bf16.mxu0 %v4312
    %4423 = vmatpush1.bf16.msra.mxu0 %v4311
    %4424 = vmatprep.subr.bf16.mxu0 %v4304
    %4425 = vmatpush1.bf16.msra.mxu0 %v4303
    %4426 = vmatprep.subr.bf16.mxu0 %v4296
    %4427 = vmatpush1.bf16.msra.mxu0 %v4295
    %4428 = vmatprep.subr.bf16.mxu0 %v4288
    %4429 = vmatpush1.bf16.msra.mxu0 %v4287
    %4430 = vmatprep.subr.bf16.mxu0 %v4280
    %4431 = vmatpush1.bf16.msra.mxu0 %v4279
    %4432 = vmatprep.subr.bf16.mxu0 %v4272
    %4433 = vmatpush1.bf16.msra.mxu0 %v4271
    %4434 = vmatprep.subr.bf16.mxu0 %v4264
    %4435 = vmatpush1.bf16.msra.mxu0 %v4263
    %4436 = vmatprep.subr.bf16.mxu0 %v4256
    %4437 = vmatpush1.bf16.msra.mxu0 %v4255
    %4438 = vmatprep.subr.bf16.mxu0 0
    %4439 = vmatpush2.bf16.msra.mxu0 0
    %4440 = vmatprep.subr.bf16.mxu0 0
    %4441 = vmatpush2.bf16.msra.mxu0 0
    %4442 = vmatprep.subr.bf16.mxu0 0
    %4443 = vmatpush2.bf16.msra.mxu0 0
    %4444 = vmatprep.subr.bf16.mxu0 0
    %4445 = vmatpush2.bf16.msra.mxu0 0
    %4446 = vmatprep.subr.bf16.mxu0 0
    %4447 = vmatpush2.bf16.msra.mxu0 0
    %4448 = vmatprep.subr.bf16.mxu0 0
    %4449 = vmatpush2.bf16.msra.mxu0 0
    %4450 = vmatprep.subr.bf16.mxu0 0
    %4451 = vmatpush2.bf16.msra.mxu0 0
    %4452 = vmatprep.subr.bf16.mxu0 0
    %4453 = vmatpush2.bf16.msra.mxu0 0
    %4454 = vmatprep.mubr.bf16.mxu0 0
    %4455 = vmatmul.mubr.bf16.gmra.mxu0 %v3996
    %v4456 = vpop.f32.mrf.mxu0
    %v4457 = vadd.f32 0.0, %v4456
    %v4458 = vpop.f32.mrf.mxu0
    %v4459 = vadd.f32 0.0, %v4458
    %v4460 = vpop.f32.mrf.mxu0
    %v4461 = vpop.f32.mrf.mxu0
    %4462 = vdwg.mxu0
    %4463 = vmatprep.subr.bf16.mxu0 %v4314
    %4464 = vmatpush1.bf16.msra.mxu0 %v4313
    %4465 = vmatprep.subr.bf16.mxu0 %v4306
    %4466 = vmatpush1.bf16.msra.mxu0 %v4305
    %4467 = vmatprep.subr.bf16.mxu0 %v4298
    %4468 = vmatpush1.bf16.msra.mxu0 %v4297
    %4469 = vmatprep.subr.bf16.mxu0 %v4290
    %4470 = vmatpush1.bf16.msra.mxu0 %v4289
    %4471 = vmatprep.subr.bf16.mxu0 %v4282
    %4472 = vmatpush1.bf16.msra.mxu0 %v4281
    %4473 = vmatprep.subr.bf16.mxu0 %v4274
    %4474 = vmatpush1.bf16.msra.mxu0 %v4273
    %4475 = vmatprep.subr.bf16.mxu0 %v4266
    %4476 = vmatpush1.bf16.msra.mxu0 %v4265
    %4477 = vmatprep.subr.bf16.mxu0 %v4258
    %4478 = vmatpush1.bf16.msra.mxu0 %v4257
    %4479 = vmatprep.subr.bf16.mxu0 0
    %4480 = vmatpush2.bf16.msra.mxu0 0
    %4481 = vmatprep.subr.bf16.mxu0 0
    %4482 = vmatpush2.bf16.msra.mxu0 0
    %4483 = vmatprep.subr.bf16.mxu0 0
    %4484 = vmatpush2.bf16.msra.mxu0 0
    %4485 = vmatprep.subr.bf16.mxu0 0
    %4486 = vmatpush2.bf16.msra.mxu0 0
    %4487 = vmatprep.subr.bf16.mxu0 0
    %4488 = vmatpush2.bf16.msra.mxu0 0
    %4489 = vmatprep.subr.bf16.mxu0 0
    %4490 = vmatpush2.bf16.msra.mxu0 0
    %4491 = vmatprep.subr.bf16.mxu0 0
    %4492 = vmatpush2.bf16.msra.mxu0 0
    %4493 = vmatprep.subr.bf16.mxu0 0
    %4494 = vmatpush2.bf16.msra.mxu0 0
    %4495 = vmatprep.mubr.bf16.mxu0 0
    %4496 = vmatmul.mubr.bf16.gmra.mxu0 %v3996
    %v4497 = vpop.f32.mrf.mxu0
    %v4498 = vadd.f32 0.0, %v4497
    %v4499 = vpop.f32.mrf.mxu0
    %v4500 = vadd.f32 0.0, %v4499
    %v4501 = vpop.f32.mrf.mxu0
    %v4502 = vpop.f32.mrf.mxu0
    %4503 = vdwg.mxu0
    %4504 = vmatprep.subr.bf16.mxu0 %v4316
    %4505 = vmatpush1.bf16.msra.mxu0 %v4315
    %4506 = vmatprep.subr.bf16.mxu0 %v4308
    %4507 = vmatpush1.bf16.msra.mxu0 %v4307
    %4508 = vmatprep.subr.bf16.mxu0 %v4300
    %4509 = vmatpush1.bf16.msra.mxu0 %v4299
    %4510 = vmatprep.subr.bf16.mxu0 %v4292
    %4511 = vmatpush1.bf16.msra.mxu0 %v4291
    %4512 = vmatprep.subr.bf16.mxu0 %v4284
    %4513 = vmatpush1.bf16.msra.mxu0 %v4283
    %4514 = vmatprep.subr.bf16.mxu0 %v4276
    %4515 = vmatpush1.bf16.msra.mxu0 %v4275
    %4516 = vmatprep.subr.bf16.mxu0 %v4268
    %4517 = vmatpush1.bf16.msra.mxu0 %v4267
    %4518 = vmatprep.subr.bf16.mxu0 %v4260
    %4519 = vmatpush1.bf16.msra.mxu0 %v4259
    %4520 = vmatprep.subr.bf16.mxu0 0
    %4521 = vmatpush2.bf16.msra.mxu0 0
    %4522 = vmatprep.subr.bf16.mxu0 0
    %4523 = vmatpush2.bf16.msra.mxu0 0
    %4524 = vmatprep.subr.bf16.mxu0 0
    %4525 = vmatpush2.bf16.msra.mxu0 0
    %4526 = vmatprep.subr.bf16.mxu0 0
    %4527 = vmatpush2.bf16.msra.mxu0 0
    %4528 = vmatprep.subr.bf16.mxu0 0
    %4529 = vmatpush2.bf16.msra.mxu0 0
    %4530 = vmatprep.subr.bf16.mxu0 0
    %4531 = vmatpush2.bf16.msra.mxu0 0
    %4532 = vmatprep.subr.bf16.mxu0 0
    %4533 = vmatpush2.bf16.msra.mxu0 0
    %4534 = vmatprep.subr.bf16.mxu0 0
    %4535 = vmatpush2.bf16.msra.mxu0 0
    %4536 = vmatprep.mubr.bf16.mxu0 0
    %4537 = vmatmul.mubr.bf16.gmra.mxu0 %v3996
    %v4538 = vpop.f32.mrf.mxu0
    %v4539 = vadd.f32 0.0, %v4538
    %v4540 = vpop.f32.mrf.mxu0
    %v4541 = vadd.f32 0.0, %v4540
    %v4542 = vpop.f32.mrf.mxu0
    %v4543 = vpop.f32.mrf.mxu0
    %4544 = vdwg.mxu0
    %v4545 = vadd.f32 %v4416, %v3519
    %v4546 = vadd.f32 %v4418, %v3521
    %v4547 = vadd.f32 %v4457, %v3560
    %v4548 = vadd.f32 %v4459, %v3562
    %v4549 = vadd.f32 %v4545, %v120
    %v4550 = vadd.f32 %v4546, %v124
    %v4551 = vadd.f32 %v4547, %v128
    %v4552 = vadd.f32 %v4548, %v132
    %v4553 = vxor.u32 %v4549, 2147483648
    %v4554 = vmul.f32 %v4553, 1.442695
    %v4555 = vpow.pop %v4554
    %v4556 = vadd.f32 %v4555, 1.0
    %v4557 = vrcp.pop %v4556
    %v4558 = vmul.f32 1.0, %v4557
    %v4559 = vxor.u32 %v4550, 2147483648
    %v4560 = vmul.f32 %v4559, 1.442695
    %v4561 = vpow.pop %v4560
    %v4562 = vadd.f32 %v4561, 1.0
    %v4563 = vrcp.pop %v4562
    %v4564 = vmul.f32 1.0, %v4563
    %v4565 = vtanh.pop %v4551
    %v4566 = vxor.u32 %v4552, 2147483648
    %v4567 = vmul.f32 %v4566, 1.442695
    %v4568 = vpow.pop %v4567
    %v4569 = vadd.f32 %v4568, 1.0
    %v4570 = vrcp.pop %v4569
    %v4571 = vmul.f32 1.0, %v4570
    %v4572 = vmul.f32 %v4564, %v3151
    %v4573 = vmul.f32 %v4558, %v4565
    %v4574 = vadd.f32 %v4572, %v4573
    %v4575 = vtanh.pop %v4574
    %v4576 = vmul.f32 %v4571, %v4575
    %v4577 = vpack.c.bf16 %v4576, %v4576
    %v4578 = vld [vmem:[#allocation11] sm:$0xff]
    %v4579 = vld [vmem:[#allocation11 + $0x8] sm:$0xff]
    %v4580 = vld [vmem:[#allocation11 + $0x10] sm:$0xff]
    %v4581 = vld [vmem:[#allocation11 + $0x18] sm:$0xff]
    %v4582 = vld [vmem:[#allocation11 + $0x20] sm:$0xff]
    %v4583 = vld [vmem:[#allocation11 + $0x28] sm:$0xff]
    %v4584 = vld [vmem:[#allocation11 + $0x30] sm:$0xff]
    %v4585 = vld [vmem:[#allocation11 + $0x38] sm:$0xff]
    %v4586 = vld [vmem:[#allocation11 + $0x40] sm:$0xff]
    %v4587 = vld [vmem:[#allocation11 + $0x48] sm:$0xff]
    %v4588 = vld [vmem:[#allocation11 + $0x50] sm:$0xff]
    %v4589 = vld [vmem:[#allocation11 + $0x58] sm:$0xff]
    %v4590 = vld [vmem:[#allocation11 + $0x60] sm:$0xff]
    %v4591 = vld [vmem:[#allocation11 + $0x68] sm:$0xff]
    %v4592 = vld [vmem:[#allocation11 + $0x70] sm:$0xff]
    %v4593 = vld [vmem:[#allocation11 + $0x78] sm:$0xff]
    %v4594 = vld [vmem:[#allocation11 + $0x80] sm:$0xff]
    %v4595 = vld [vmem:[#allocation11 + $0x88] sm:$0xff]
    %v4596 = vld [vmem:[#allocation11 + $0x90] sm:$0xff]
    %v4597 = vld [vmem:[#allocation11 + $0x98] sm:$0xff]
    %v4598 = vld [vmem:[#allocation11 + $0xa0] sm:$0xff]
    %v4599 = vld [vmem:[#allocation11 + $0xa8] sm:$0xff]
    %v4600 = vld [vmem:[#allocation11 + $0xb0] sm:$0xff]
    %v4601 = vld [vmem:[#allocation11 + $0xb8] sm:$0xff]
    %v4602 = vld [vmem:[#allocation11 + $0xc0] sm:$0xff]
    %v4603 = vld [vmem:[#allocation11 + $0xc8] sm:$0xff]
    %v4604 = vld [vmem:[#allocation11 + $0xd0] sm:$0xff]
    %v4605 = vld [vmem:[#allocation11 + $0xd8] sm:$0xff]
    %v4606 = vld [vmem:[#allocation11 + $0xe0] sm:$0xff]
    %v4607 = vld [vmem:[#allocation11 + $0xe8] sm:$0xff]
    %v4608 = vld [vmem:[#allocation11 + $0xf0] sm:$0xff]
    %v4609 = vld [vmem:[#allocation11 + $0xf8] sm:$0xff]
    %v4610 = vld [vmem:[#allocation11 + $0x100] sm:$0xff]
    %v4611 = vld [vmem:[#allocation11 + $0x108] sm:$0xff]
    %v4612 = vld [vmem:[#allocation11 + $0x110] sm:$0xff]
    %v4613 = vld [vmem:[#allocation11 + $0x118] sm:$0xff]
    %v4614 = vld [vmem:[#allocation11 + $0x120] sm:$0xff]
    %v4615 = vld [vmem:[#allocation11 + $0x128] sm:$0xff]
    %v4616 = vld [vmem:[#allocation11 + $0x130] sm:$0xff]
    %v4617 = vld [vmem:[#allocation11 + $0x138] sm:$0xff]
    %v4618 = vld [vmem:[#allocation11 + $0x140] sm:$0xff]
    %v4619 = vld [vmem:[#allocation11 + $0x148] sm:$0xff]
    %v4620 = vld [vmem:[#allocation11 + $0x150] sm:$0xff]
    %v4621 = vld [vmem:[#allocation11 + $0x158] sm:$0xff]
    %v4622 = vld [vmem:[#allocation11 + $0x160] sm:$0xff]
    %v4623 = vld [vmem:[#allocation11 + $0x168] sm:$0xff]
    %v4624 = vld [vmem:[#allocation11 + $0x170] sm:$0xff]
    %v4625 = vld [vmem:[#allocation11 + $0x178] sm:$0xff]
    %v4674 = vunpack.c.l.b16 %v4578
    %v4675 = vunpack.c.h.b16 %v4578
    %v4676 = vunpack.c.l.b16 %v4579
    %v4677 = vunpack.c.h.b16 %v4579
    %v4678 = vunpack.c.l.b16 %v4580
    %v4679 = vunpack.c.h.b16 %v4580
    %v4680 = vunpack.c.l.b16 %v4581
    %v4681 = vunpack.c.h.b16 %v4581
    %v4682 = vunpack.c.l.b16 %v4582
    %v4683 = vunpack.c.h.b16 %v4582
    %v4684 = vunpack.c.l.b16 %v4583
    %v4685 = vunpack.c.h.b16 %v4583
    %v4686 = vunpack.c.l.b16 %v4584
    %v4687 = vunpack.c.h.b16 %v4584
    %v4688 = vunpack.c.l.b16 %v4585
    %v4689 = vunpack.c.h.b16 %v4585
    %v4690 = vunpack.c.l.b16 %v4586
    %v4691 = vunpack.c.h.b16 %v4586
    %v4692 = vunpack.c.l.b16 %v4587
    %v4693 = vunpack.c.h.b16 %v4587
    %v4694 = vunpack.c.l.b16 %v4588
    %v4695 = vunpack.c.h.b16 %v4588
    %v4696 = vunpack.c.l.b16 %v4589
    %v4697 = vunpack.c.h.b16 %v4589
    %v4698 = vunpack.c.l.b16 %v4590
    %v4699 = vunpack.c.h.b16 %v4590
    %v4700 = vunpack.c.l.b16 %v4591
    %v4701 = vunpack.c.h.b16 %v4591
    %v4702 = vunpack.c.l.b16 %v4592
    %v4703 = vunpack.c.h.b16 %v4592
    %v4704 = vunpack.c.l.b16 %v4593
    %v4705 = vunpack.c.h.b16 %v4593
    %v4706 = vunpack.c.l.b16 %v4594
    %v4707 = vunpack.c.h.b16 %v4594
    %v4708 = vunpack.c.l.b16 %v4595
    %v4709 = vunpack.c.h.b16 %v4595
    %v4710 = vunpack.c.l.b16 %v4596
    %v4711 = vunpack.c.h.b16 %v4596
    %v4712 = vunpack.c.l.b16 %v4597
    %v4713 = vunpack.c.h.b16 %v4597
    %v4714 = vunpack.c.l.b16 %v4598
    %v4715 = vunpack.c.h.b16 %v4598
    %v4716 = vunpack.c.l.b16 %v4599
    %v4717 = vunpack.c.h.b16 %v4599
    %v4718 = vunpack.c.l.b16 %v4600
    %v4719 = vunpack.c.h.b16 %v4600
    %v4720 = vunpack.c.l.b16 %v4601
    %v4721 = vunpack.c.h.b16 %v4601
    %v4722 = vunpack.c.l.b16 %v4602
    %v4723 = vunpack.c.h.b16 %v4602
    %v4724 = vunpack.c.l.b16 %v4603
    %v4725 = vunpack.c.h.b16 %v4603
    %v4726 = vunpack.c.l.b16 %v4604
    %v4727 = vunpack.c.h.b16 %v4604
    %v4728 = vunpack.c.l.b16 %v4605
    %v4729 = vunpack.c.h.b16 %v4605
    %v4730 = vunpack.c.l.b16 %v4606
    %v4731 = vunpack.c.h.b16 %v4606
    %v4732 = vunpack.c.l.b16 %v4607
    %v4733 = vunpack.c.h.b16 %v4607
    %v4734 = vunpack.c.l.b16 %v4608
    %v4735 = vunpack.c.h.b16 %v4608
    %v4736 = vunpack.c.l.b16 %v4609
    %v4737 = vunpack.c.h.b16 %v4609
    %v4738 = vunpack.c.l.b16 %v4610
    %v4739 = vunpack.c.h.b16 %v4610
    %v4740 = vunpack.c.l.b16 %v4611
    %v4741 = vunpack.c.h.b16 %v4611
    %v4742 = vunpack.c.l.b16 %v4612
    %v4743 = vunpack.c.h.b16 %v4612
    %v4744 = vunpack.c.l.b16 %v4613
    %v4745 = vunpack.c.h.b16 %v4613
    %v4746 = vunpack.c.l.b16 %v4614
    %v4747 = vunpack.c.h.b16 %v4614
    %v4748 = vunpack.c.l.b16 %v4615
    %v4749 = vunpack.c.h.b16 %v4615
    %v4750 = vunpack.c.l.b16 %v4616
    %v4751 = vunpack.c.h.b16 %v4616
    %v4752 = vunpack.c.l.b16 %v4617
    %v4753 = vunpack.c.h.b16 %v4617
    %v4754 = vunpack.c.l.b16 %v4618
    %v4755 = vunpack.c.h.b16 %v4618
    %v4756 = vunpack.c.l.b16 %v4619
    %v4757 = vunpack.c.h.b16 %v4619
    %v4758 = vunpack.c.l.b16 %v4620
    %v4759 = vunpack.c.h.b16 %v4620
    %v4760 = vunpack.c.l.b16 %v4621
    %v4761 = vunpack.c.h.b16 %v4621
    %v4762 = vunpack.c.l.b16 %v4622
    %v4763 = vunpack.c.h.b16 %v4622
    %v4764 = vunpack.c.l.b16 %v4623
    %v4765 = vunpack.c.h.b16 %v4623
    %v4766 = vunpack.c.l.b16 %v4624
    %v4767 = vunpack.c.h.b16 %v4624
    %v4768 = vunpack.c.l.b16 %v4625
    %v4769 = vunpack.c.h.b16 %v4625
    %v4770 = vpack.c.b16 %v4680, %v4674
    %v4771 = vpack.c.b16 %v4681, %v4675
    %v4772 = vpack.c.b16 %v4682, %v4676
    %v4773 = vpack.c.b16 %v4683, %v4677
    %v4774 = vpack.c.b16 %v4684, %v4678
    %v4775 = vpack.c.b16 %v4685, %v4679
    %v4776 = vpack.c.b16 %v4692, %v4686
    %v4777 = vpack.c.b16 %v4693, %v4687
    %v4778 = vpack.c.b16 %v4694, %v4688
    %v4779 = vpack.c.b16 %v4695, %v4689
    %v4780 = vpack.c.b16 %v4696, %v4690
    %v4781 = vpack.c.b16 %v4697, %v4691
    %v4782 = vpack.c.b16 %v4704, %v4698
    %v4783 = vpack.c.b16 %v4705, %v4699
    %v4784 = vpack.c.b16 %v4706, %v4700
    %v4785 = vpack.c.b16 %v4707, %v4701
    %v4786 = vpack.c.b16 %v4708, %v4702
    %v4787 = vpack.c.b16 %v4709, %v4703
    %v4788 = vpack.c.b16 %v4716, %v4710
    %v4789 = vpack.c.b16 %v4717, %v4711
    %v4790 = vpack.c.b16 %v4718, %v4712
    %v4791 = vpack.c.b16 %v4719, %v4713
    %v4792 = vpack.c.b16 %v4720, %v4714
    %v4793 = vpack.c.b16 %v4721, %v4715
    %v4794 = vpack.c.b16 %v4728, %v4722
    %v4795 = vpack.c.b16 %v4729, %v4723
    %v4796 = vpack.c.b16 %v4730, %v4724
    %v4797 = vpack.c.b16 %v4731, %v4725
    %v4798 = vpack.c.b16 %v4732, %v4726
    %v4799 = vpack.c.b16 %v4733, %v4727
    %v4800 = vpack.c.b16 %v4740, %v4734
    %v4801 = vpack.c.b16 %v4741, %v4735
    %v4802 = vpack.c.b16 %v4742, %v4736
    %v4803 = vpack.c.b16 %v4743, %v4737
    %v4804 = vpack.c.b16 %v4744, %v4738
    %v4805 = vpack.c.b16 %v4745, %v4739
    %v4806 = vpack.c.b16 %v4752, %v4746
    %v4807 = vpack.c.b16 %v4753, %v4747
    %v4808 = vpack.c.b16 %v4754, %v4748
    %v4809 = vpack.c.b16 %v4755, %v4749
    %v4810 = vpack.c.b16 %v4756, %v4750
    %v4811 = vpack.c.b16 %v4757, %v4751
    %v4812 = vpack.c.b16 %v4764, %v4758
    %v4813 = vpack.c.b16 %v4765, %v4759
    %v4814 = vpack.c.b16 %v4766, %v4760
    %v4815 = vpack.c.b16 %v4767, %v4761
    %v4816 = vpack.c.b16 %v4768, %v4762
    %v4817 = vpack.c.b16 %v4769, %v4763
    %4866 = vmatprep.subr.bf16.mxu0 %v4813
    %4867 = vmatpush1.bf16.msra.mxu0 %v4812
    %4868 = vmatprep.subr.bf16.mxu0 %v4807
    %4869 = vmatpush1.bf16.msra.mxu0 %v4806
    %4870 = vmatprep.subr.bf16.mxu0 %v4801
    %4871 = vmatpush1.bf16.msra.mxu0 %v4800
    %4872 = vmatprep.subr.bf16.mxu0 %v4795
    %4873 = vmatpush1.bf16.msra.mxu0 %v4794
    %4874 = vmatprep.subr.bf16.mxu0 %v4789
    %4875 = vmatpush1.bf16.msra.mxu0 %v4788
    %4876 = vmatprep.subr.bf16.mxu0 %v4783
    %4877 = vmatpush1.bf16.msra.mxu0 %v4782
    %4878 = vmatprep.subr.bf16.mxu0 %v4777
    %4879 = vmatpush1.bf16.msra.mxu0 %v4776
    %4880 = vmatprep.subr.bf16.mxu0 %v4771
    %4881 = vmatpush1.bf16.msra.mxu0 %v4770
    %4882 = vmatprep.subr.bf16.mxu0 0
    %4883 = vmatpush2.bf16.msra.mxu0 0
    %4884 = vmatprep.subr.bf16.mxu0 0
    %4885 = vmatpush2.bf16.msra.mxu0 0
    %4886 = vmatprep.subr.bf16.mxu0 0
    %4887 = vmatpush2.bf16.msra.mxu0 0
    %4888 = vmatprep.subr.bf16.mxu0 0
    %4889 = vmatpush2.bf16.msra.mxu0 0
    %4890 = vmatprep.subr.bf16.mxu0 0
    %4891 = vmatpush2.bf16.msra.mxu0 0
    %4892 = vmatprep.subr.bf16.mxu0 0
    %4893 = vmatpush2.bf16.msra.mxu0 0
    %4894 = vmatprep.subr.bf16.mxu0 0
    %4895 = vmatpush2.bf16.msra.mxu0 0
    %4896 = vmatprep.subr.bf16.mxu0 0
    %4897 = vmatpush2.bf16.msra.mxu0 0
    %4898 = vmatprep.mubr.bf16.mxu0 0
    %4899 = vmatmul.mubr.bf16.gmra.mxu0 %v4577
    %v4900 = vpop.f32.mrf.mxu0
    %v4901 = vadd.f32 0.0, %v4900
    %v4902 = vpop.f32.mrf.mxu0
    %v4903 = vadd.f32 0.0, %v4902
    %v4904 = vpop.f32.mrf.mxu0
    %v4905 = vpop.f32.mrf.mxu0
    %4906 = vdwg.mxu0
    %4907 = vmatprep.subr.bf16.mxu0 %v4815
    %4908 = vmatpush1.bf16.msra.mxu0 %v4814
    %4909 = vmatprep.subr.bf16.mxu0 %v4809
    %4910 = vmatpush1.bf16.msra.mxu0 %v4808
    %4911 = vmatprep.subr.bf16.mxu0 %v4803
    %4912 = vmatpush1.bf16.msra.mxu0 %v4802
    %4913 = vmatprep.subr.bf16.mxu0 %v4797
    %4914 = vmatpush1.bf16.msra.mxu0 %v4796
    %4915 = vmatprep.subr.bf16.mxu0 %v4791
    %4916 = vmatpush1.bf16.msra.mxu0 %v4790
    %4917 = vmatprep.subr.bf16.mxu0 %v4785
    %4918 = vmatpush1.bf16.msra.mxu0 %v4784
    %4919 = vmatprep.subr.bf16.mxu0 %v4779
    %4920 = vmatpush1.bf16.msra.mxu0 %v4778
    %4921 = vmatprep.subr.bf16.mxu0 %v4773
    %4922 = vmatpush1.bf16.msra.mxu0 %v4772
    %4923 = vmatprep.subr.bf16.mxu0 0
    %4924 = vmatpush2.bf16.msra.mxu0 0
    %4925 = vmatprep.subr.bf16.mxu0 0
    %4926 = vmatpush2.bf16.msra.mxu0 0
    %4927 = vmatprep.subr.bf16.mxu0 0
    %4928 = vmatpush2.bf16.msra.mxu0 0
    %4929 = vmatprep.subr.bf16.mxu0 0
    %4930 = vmatpush2.bf16.msra.mxu0 0
    %4931 = vmatprep.subr.bf16.mxu0 0
    %4932 = vmatpush2.bf16.msra.mxu0 0
    %4933 = vmatprep.subr.bf16.mxu0 0
    %4934 = vmatpush2.bf16.msra.mxu0 0
    %4935 = vmatprep.subr.bf16.mxu0 0
    %4936 = vmatpush2.bf16.msra.mxu0 0
    %4937 = vmatprep.subr.bf16.mxu0 0
    %4938 = vmatpush2.bf16.msra.mxu0 0
    %4939 = vmatprep.mubr.bf16.mxu0 0
    %4940 = vmatmul.mubr.bf16.gmra.mxu0 %v4577
    %v4941 = vpop.f32.mrf.mxu0
    %v4942 = vadd.f32 0.0, %v4941
    %v4943 = vpop.f32.mrf.mxu0
    %v4944 = vadd.f32 0.0, %v4943
    %v4945 = vpop.f32.mrf.mxu0
    %v4946 = vpop.f32.mrf.mxu0
    %4947 = vdwg.mxu0
    %4948 = vmatprep.subr.bf16.mxu0 %v4817
    %4949 = vmatpush1.bf16.msra.mxu0 %v4816
    %4950 = vmatprep.subr.bf16.mxu0 %v4811
    %4951 = vmatpush1.bf16.msra.mxu0 %v4810
    %4952 = vmatprep.subr.bf16.mxu0 %v4805
    %4953 = vmatpush1.bf16.msra.mxu0 %v4804
    %4954 = vmatprep.subr.bf16.mxu0 %v4799
    %4955 = vmatpush1.bf16.msra.mxu0 %v4798
    %4956 = vmatprep.subr.bf16.mxu0 %v4793
    %4957 = vmatpush1.bf16.msra.mxu0 %v4792
    %4958 = vmatprep.subr.bf16.mxu0 %v4787
    %4959 = vmatpush1.bf16.msra.mxu0 %v4786
    %4960 = vmatprep.subr.bf16.mxu0 %v4781
    %4961 = vmatpush1.bf16.msra.mxu0 %v4780
    %4962 = vmatprep.subr.bf16.mxu0 %v4775
    %4963 = vmatpush1.bf16.msra.mxu0 %v4774
    %4964 = vmatprep.subr.bf16.mxu0 0
    %4965 = vmatpush2.bf16.msra.mxu0 0
    %4966 = vmatprep.subr.bf16.mxu0 0
    %4967 = vmatpush2.bf16.msra.mxu0 0
    %4968 = vmatprep.subr.bf16.mxu0 0
    %4969 = vmatpush2.bf16.msra.mxu0 0
    %4970 = vmatprep.subr.bf16.mxu0 0
    %4971 = vmatpush2.bf16.msra.mxu0 0
    %4972 = vmatprep.subr.bf16.mxu0 0
    %4973 = vmatpush2.bf16.msra.mxu0 0
    %4974 = vmatprep.subr.bf16.mxu0 0
    %4975 = vmatpush2.bf16.msra.mxu0 0
    %4976 = vmatprep.subr.bf16.mxu0 0
    %4977 = vmatpush2.bf16.msra.mxu0 0
    %4978 = vmatprep.subr.bf16.mxu0 0
    %4979 = vmatpush2.bf16.msra.mxu0 0
    %4980 = vmatprep.mubr.bf16.mxu0 0
    %4981 = vmatmul.mubr.bf16.gmra.mxu0 %v4577
    %v4982 = vpop.f32.mrf.mxu0
    %v4983 = vadd.f32 0.0, %v4982
    %v4984 = vpop.f32.mrf.mxu0
    %v4985 = vadd.f32 0.0, %v4984
    %v4986 = vpop.f32.mrf.mxu0
    %v4987 = vpop.f32.mrf.mxu0
    %4988 = vdwg.mxu0
    %v4989 = vadd.f32 %v4901, %v114
    %4990 = vmax.xlane.f32.xlu0 %v4989
    %v4991 = vpop.xlane.xlu0 %4990
    %v4992 = vsub.f32 %v4989, %v4991
    %v4993 = vmul.f32 %v4992, 1.442695
    %v4994 = vpow.pop %v4993
    %4995 = vadd.xlane.f32.xlu0 %v4994
    %v4996 = vpop.xlane.xlu0 %4995
    %v4997 = vrcp.pop %v4996
    %v4998 = vmul.f32 %v4994, %v4997
    %s4999 = scalar_lea.vmem [#allocation15], 16
    %5000 = vst [vmem:[%s4999] sm:$0xff] %v4998
    %v5001 = vpack.c.bf16 %v4998, %v4998
    %v5002 = vld [vmem:[#allocation12] sm:$0xff]
    %v5003 = vld [vmem:[#allocation12 + $0x8] sm:$0xff]
    %v5004 = vld [vmem:[#allocation12 + $0x10] sm:$0xf]
    %v5005 = vld [vmem:[#allocation12 + $0x14] sm:$0xff]
    %v5006 = vld [vmem:[#allocation12 + $0x1c] sm:$0xff]
    %v5007 = vld [vmem:[#allocation12 + $0x24] sm:$0xf]
    %v5008 = vld [vmem:[#allocation12 + $0x28] sm:$0xff]
    %v5009 = vld [vmem:[#allocation12 + $0x30] sm:$0xff]
    %v5010 = vld [vmem:[#allocation12 + $0x38] sm:$0xf]
    %v5011 = vld [vmem:[#allocation12 + $0x3c] sm:$0xff]
    %v5012 = vld [vmem:[#allocation12 + $0x44] sm:$0xff]
    %v5013 = vld [vmem:[#allocation12 + $0x4c] sm:$0xf]
    %v5014 = vld [vmem:[#allocation12 + $0x50] sm:$0xff]
    %v5015 = vld [vmem:[#allocation12 + $0x58] sm:$0xff]
    %v5016 = vld [vmem:[#allocation12 + $0x60] sm:$0xf]
    %v5017 = vld [vmem:[#allocation12 + $0x64] sm:$0xff]
    %v5018 = vld [vmem:[#allocation12 + $0x6c] sm:$0xff]
    %v5019 = vld [vmem:[#allocation12 + $0x74] sm:$0xf]
    %v5020 = vld [vmem:[#allocation12 + $0x78] sm:$0xff]
    %v5021 = vld [vmem:[#allocation12 + $0x80] sm:$0xff]
    %v5022 = vld [vmem:[#allocation12 + $0x88] sm:$0xf]
    %v5023 = vld [vmem:[#allocation12 + $0x8c] sm:$0xff]
    %v5024 = vld [vmem:[#allocation12 + $0x94] sm:$0xff]
    %v5025 = vld [vmem:[#allocation12 + $0x9c] sm:$0xf]
    %v5026 = vld [vmem:[#allocation12 + $0xa0] sm:$0xff]
    %v5027 = vld [vmem:[#allocation12 + $0xa8] sm:$0xff]
    %v5028 = vld [vmem:[#allocation12 + $0xb0] sm:$0xf]
    %v5029 = vld [vmem:[#allocation12 + $0xb4] sm:$0xff]
    %v5030 = vld [vmem:[#allocation12 + $0xbc] sm:$0xff]
    %v5031 = vld [vmem:[#allocation12 + $0xc4] sm:$0xf]
    %v5032 = vld [vmem:[#allocation12 + $0xc8] sm:$0xff]
    %v5033 = vld [vmem:[#allocation12 + $0xd0] sm:$0xff]
    %v5034 = vld [vmem:[#allocation12 + $0xd8] sm:$0xf]
    %v5035 = vld [vmem:[#allocation12 + $0xdc] sm:$0xff]
    %v5036 = vld [vmem:[#allocation12 + $0xe4] sm:$0xff]
    %v5037 = vld [vmem:[#allocation12 + $0xec] sm:$0xf]
    %v5038 = vld [vmem:[#allocation12 + $0xf0] sm:$0xff]
    %v5039 = vld [vmem:[#allocation12 + $0xf8] sm:$0xff]
    %v5040 = vld [vmem:[#allocation12 + $0x100] sm:$0xf]
    %v5041 = vld [vmem:[#allocation12 + $0x104] sm:$0xff]
    %v5042 = vld [vmem:[#allocation12 + $0x10c] sm:$0xff]
    %v5043 = vld [vmem:[#allocation12 + $0x114] sm:$0xf]
    %v5044 = vld [vmem:[#allocation12 + $0x118] sm:$0xff]
    %v5045 = vld [vmem:[#allocation12 + $0x120] sm:$0xff]
    %v5046 = vld [vmem:[#allocation12 + $0x128] sm:$0xf]
    %v5047 = vld [vmem:[#allocation12 + $0x12c] sm:$0xff]
    %v5048 = vld [vmem:[#allocation12 + $0x134] sm:$0xff]
    %v5049 = vld [vmem:[#allocation12 + $0x13c] sm:$0xf]
    %v5098 = vunpack.c.l.b16 %v5002
    %v5099 = vunpack.c.h.b16 %v5002
    %v5100 = vunpack.c.l.b16 %v5003
    %v5101 = vunpack.c.h.b16 %v5003
    %v5102 = vunpack.c.l.b16 %v5004
    %v5103 = vunpack.c.l.b16 %v5005
    %v5104 = vunpack.c.h.b16 %v5005
    %v5105 = vunpack.c.l.b16 %v5006
    %v5106 = vunpack.c.h.b16 %v5006
    %v5107 = vunpack.c.l.b16 %v5007
    %v5108 = vunpack.c.l.b16 %v5008
    %v5109 = vunpack.c.h.b16 %v5008
    %v5110 = vunpack.c.l.b16 %v5009
    %v5111 = vunpack.c.h.b16 %v5009
    %v5112 = vunpack.c.l.b16 %v5010
    %v5113 = vunpack.c.l.b16 %v5011
    %v5114 = vunpack.c.h.b16 %v5011
    %v5115 = vunpack.c.l.b16 %v5012
    %v5116 = vunpack.c.h.b16 %v5012
    %v5117 = vunpack.c.l.b16 %v5013
    %v5118 = vunpack.c.l.b16 %v5014
    %v5119 = vunpack.c.h.b16 %v5014
    %v5120 = vunpack.c.l.b16 %v5015
    %v5121 = vunpack.c.h.b16 %v5015
    %v5122 = vunpack.c.l.b16 %v5016
    %v5123 = vunpack.c.l.b16 %v5017
    %v5124 = vunpack.c.h.b16 %v5017
    %v5125 = vunpack.c.l.b16 %v5018
    %v5126 = vunpack.c.h.b16 %v5018
    %v5127 = vunpack.c.l.b16 %v5019
    %v5128 = vunpack.c.l.b16 %v5020
    %v5129 = vunpack.c.h.b16 %v5020
    %v5130 = vunpack.c.l.b16 %v5021
    %v5131 = vunpack.c.h.b16 %v5021
    %v5132 = vunpack.c.l.b16 %v5022
    %v5133 = vunpack.c.l.b16 %v5023
    %v5134 = vunpack.c.h.b16 %v5023
    %v5135 = vunpack.c.l.b16 %v5024
    %v5136 = vunpack.c.h.b16 %v5024
    %v5137 = vunpack.c.l.b16 %v5025
    %v5138 = vunpack.c.l.b16 %v5026
    %v5139 = vunpack.c.h.b16 %v5026
    %v5140 = vunpack.c.l.b16 %v5027
    %v5141 = vunpack.c.h.b16 %v5027
    %v5142 = vunpack.c.l.b16 %v5028
    %v5143 = vunpack.c.l.b16 %v5029
    %v5144 = vunpack.c.h.b16 %v5029
    %v5145 = vunpack.c.l.b16 %v5030
    %v5146 = vunpack.c.h.b16 %v5030
    %v5147 = vunpack.c.l.b16 %v5031
    %v5148 = vunpack.c.l.b16 %v5032
    %v5149 = vunpack.c.h.b16 %v5032
    %v5150 = vunpack.c.l.b16 %v5033
    %v5151 = vunpack.c.h.b16 %v5033
    %v5152 = vunpack.c.l.b16 %v5034
    %v5153 = vunpack.c.l.b16 %v5035
    %v5154 = vunpack.c.h.b16 %v5035
    %v5155 = vunpack.c.l.b16 %v5036
    %v5156 = vunpack.c.h.b16 %v5036
    %v5157 = vunpack.c.l.b16 %v5037
    %v5158 = vunpack.c.l.b16 %v5038
    %v5159 = vunpack.c.h.b16 %v5038
    %v5160 = vunpack.c.l.b16 %v5039
    %v5161 = vunpack.c.h.b16 %v5039
    %v5162 = vunpack.c.l.b16 %v5040
    %v5163 = vunpack.c.l.b16 %v5041
    %v5164 = vunpack.c.h.b16 %v5041
    %v5165 = vunpack.c.l.b16 %v5042
    %v5166 = vunpack.c.h.b16 %v5042
    %v5167 = vunpack.c.l.b16 %v5043
    %v5168 = vunpack.c.l.b16 %v5044
    %v5169 = vunpack.c.h.b16 %v5044
    %v5170 = vunpack.c.l.b16 %v5045
    %v5171 = vunpack.c.h.b16 %v5045
    %v5172 = vunpack.c.l.b16 %v5046
    %v5173 = vunpack.c.l.b16 %v5047
    %v5174 = vunpack.c.h.b16 %v5047
    %v5175 = vunpack.c.l.b16 %v5048
    %v5176 = vunpack.c.h.b16 %v5048
    %v5177 = vunpack.c.l.b16 %v5049
    %v5178 = vpack.c.b16 %v5103, %v5098
    %v5179 = vpack.c.b16 %v5104, %v5099
    %v5180 = vpack.c.b16 %v5105, %v5100
    %v5181 = vpack.c.b16 %v5106, %v5101
    %v5182 = vpack.c.b16 %v5107, %v5102
    %v5183 = vpack.c.b16 %v5113, %v5108
    %v5184 = vpack.c.b16 %v5114, %v5109
    %v5185 = vpack.c.b16 %v5115, %v5110
    %v5186 = vpack.c.b16 %v5116, %v5111
    %v5187 = vpack.c.b16 %v5117, %v5112
    %v5188 = vpack.c.b16 %v5123, %v5118
    %v5189 = vpack.c.b16 %v5124, %v5119
    %v5190 = vpack.c.b16 %v5125, %v5120
    %v5191 = vpack.c.b16 %v5126, %v5121
    %v5192 = vpack.c.b16 %v5127, %v5122
    %v5193 = vpack.c.b16 %v5133, %v5128
    %v5194 = vpack.c.b16 %v5134, %v5129
    %v5195 = vpack.c.b16 %v5135, %v5130
    %v5196 = vpack.c.b16 %v5136, %v5131
    %v5197 = vpack.c.b16 %v5137, %v5132
    %v5198 = vpack.c.b16 %v5143, %v5138
    %v5199 = vpack.c.b16 %v5144, %v5139
    %v5200 = vpack.c.b16 %v5145, %v5140
    %v5201 = vpack.c.b16 %v5146, %v5141
    %v5202 = vpack.c.b16 %v5147, %v5142
    %v5203 = vpack.c.b16 %v5153, %v5148
    %v5204 = vpack.c.b16 %v5154, %v5149
    %v5205 = vpack.c.b16 %v5155, %v5150
    %v5206 = vpack.c.b16 %v5156, %v5151
    %v5207 = vpack.c.b16 %v5157, %v5152
    %v5208 = vpack.c.b16 %v5163, %v5158
    %v5209 = vpack.c.b16 %v5164, %v5159
    %v5210 = vpack.c.b16 %v5165, %v5160
    %v5211 = vpack.c.b16 %v5166, %v5161
    %v5212 = vpack.c.b16 %v5167, %v5162
    %v5213 = vpack.c.b16 %v5173, %v5168
    %v5214 = vpack.c.b16 %v5174, %v5169
    %v5215 = vpack.c.b16 %v5175, %v5170
    %v5216 = vpack.c.b16 %v5176, %v5171
    %v5217 = vpack.c.b16 %v5177, %v5172
    %5258 = vmatprep.subr.bf16.mxu0 %v5214
    %5259 = vmatpush1.bf16.msra.mxu0 %v5213
    %5260 = vmatprep.subr.bf16.mxu0 %v5209
    %5261 = vmatpush1.bf16.msra.mxu0 %v5208
    %5262 = vmatprep.subr.bf16.mxu0 %v5204
    %5263 = vmatpush1.bf16.msra.mxu0 %v5203
    %5264 = vmatprep.subr.bf16.mxu0 %v5199
    %5265 = vmatpush1.bf16.msra.mxu0 %v5198
    %5266 = vmatprep.subr.bf16.mxu0 %v5194
    %5267 = vmatpush1.bf16.msra.mxu0 %v5193
    %5268 = vmatprep.subr.bf16.mxu0 %v5189
    %5269 = vmatpush1.bf16.msra.mxu0 %v5188
    %5270 = vmatprep.subr.bf16.mxu0 %v5184
    %5271 = vmatpush1.bf16.msra.mxu0 %v5183
    %5272 = vmatprep.subr.bf16.mxu0 %v5179
    %5273 = vmatpush1.bf16.msra.mxu0 %v5178
    %5274 = vmatprep.subr.bf16.mxu0 0
    %5275 = vmatpush2.bf16.msra.mxu0 0
    %5276 = vmatprep.subr.bf16.mxu0 0
    %5277 = vmatpush2.bf16.msra.mxu0 0
    %5278 = vmatprep.subr.bf16.mxu0 0
    %5279 = vmatpush2.bf16.msra.mxu0 0
    %5280 = vmatprep.subr.bf16.mxu0 0
    %5281 = vmatpush2.bf16.msra.mxu0 0
    %5282 = vmatprep.subr.bf16.mxu0 0
    %5283 = vmatpush2.bf16.msra.mxu0 0
    %5284 = vmatprep.subr.bf16.mxu0 0
    %5285 = vmatpush2.bf16.msra.mxu0 0
    %5286 = vmatprep.subr.bf16.mxu0 0
    %5287 = vmatpush2.bf16.msra.mxu0 0
    %5288 = vmatprep.subr.bf16.mxu0 0
    %5289 = vmatpush2.bf16.msra.mxu0 0
    %5290 = vmatprep.mubr.bf16.mxu0 0
    %5291 = vmatmul.mubr.bf16.gmra.mxu0 %v5001
    %v5292 = vpop.f32.mrf.mxu0
    %v5293 = vadd.f32 0.0, %v5292
    %v5294 = vpop.f32.mrf.mxu0
    %v5295 = vadd.f32 0.0, %v5294
    %v5296 = vpop.f32.mrf.mxu0
    %v5297 = vpop.f32.mrf.mxu0
    %5298 = vdwg.mxu0
    %5299 = vmatprep.subr.bf16.mxu0 %v5216
    %5300 = vmatpush1.bf16.msra.mxu0 %v5215
    %5301 = vmatprep.subr.bf16.mxu0 %v5211
    %5302 = vmatpush1.bf16.msra.mxu0 %v5210
    %5303 = vmatprep.subr.bf16.mxu0 %v5206
    %5304 = vmatpush1.bf16.msra.mxu0 %v5205
    %5305 = vmatprep.subr.bf16.mxu0 %v5201
    %5306 = vmatpush1.bf16.msra.mxu0 %v5200
    %5307 = vmatprep.subr.bf16.mxu0 %v5196
    %5308 = vmatpush1.bf16.msra.mxu0 %v5195
    %5309 = vmatprep.subr.bf16.mxu0 %v5191
    %5310 = vmatpush1.bf16.msra.mxu0 %v5190
    %5311 = vmatprep.subr.bf16.mxu0 %v5186
    %5312 = vmatpush1.bf16.msra.mxu0 %v5185
    %5313 = vmatprep.subr.bf16.mxu0 %v5181
    %5314 = vmatpush1.bf16.msra.mxu0 %v5180
    %5315 = vmatprep.subr.bf16.mxu0 0
    %5316 = vmatpush2.bf16.msra.mxu0 0
    %5317 = vmatprep.subr.bf16.mxu0 0
    %5318 = vmatpush2.bf16.msra.mxu0 0
    %5319 = vmatprep.subr.bf16.mxu0 0
    %5320 = vmatpush2.bf16.msra.mxu0 0
    %5321 = vmatprep.subr.bf16.mxu0 0
    %5322 = vmatpush2.bf16.msra.mxu0 0
    %5323 = vmatprep.subr.bf16.mxu0 0
    %5324 = vmatpush2.bf16.msra.mxu0 0
    %5325 = vmatprep.subr.bf16.mxu0 0
    %5326 = vmatpush2.bf16.msra.mxu0 0
    %5327 = vmatprep.subr.bf16.mxu0 0
    %5328 = vmatpush2.bf16.msra.mxu0 0
    %5329 = vmatprep.subr.bf16.mxu0 0
    %5330 = vmatpush2.bf16.msra.mxu0 0
    %5331 = vmatprep.mubr.bf16.mxu0 0
    %5332 = vmatmul.mubr.bf16.gmra.mxu0 %v5001
    %v5333 = vpop.f32.mrf.mxu0
    %v5334 = vadd.f32 0.0, %v5333
    %v5335 = vpop.f32.mrf.mxu0
    %v5336 = vadd.f32 0.0, %v5335
    %v5337 = vpop.f32.mrf.mxu0
    %v5338 = vpop.f32.mrf.mxu0
    %5339 = vdwg.mxu0
    %5340 = vmatprep.subr.bf16.mxu0 0
    %5341 = vmatpush1.bf16.msra.mxu0 %v5217
    %5342 = vmatprep.subr.bf16.mxu0 0
    %5343 = vmatpush1.bf16.msra.mxu0 %v5212
    %5344 = vmatprep.subr.bf16.mxu0 0
    %5345 = vmatpush1.bf16.msra.mxu0 %v5207
    %5346 = vmatprep.subr.bf16.mxu0 0
    %5347 = vmatpush1.bf16.msra.mxu0 %v5202
    %5348 = vmatprep.subr.bf16.mxu0 0
    %5349 = vmatpush1.bf16.msra.mxu0 %v5197
    %5350 = vmatprep.subr.bf16.mxu0 0
    %5351 = vmatpush1.bf16.msra.mxu0 %v5192
    %5352 = vmatprep.subr.bf16.mxu0 0
    %5353 = vmatpush1.bf16.msra.mxu0 %v5187
    %5354 = vmatprep.subr.bf16.mxu0 0
    %5355 = vmatpush1.bf16.msra.mxu0 %v5182
    %5356 = vmatprep.subr.bf16.mxu0 0
    %5357 = vmatpush2.bf16.msra.mxu0 0
    %5358 = vmatprep.subr.bf16.mxu0 0
    %5359 = vmatpush2.bf16.msra.mxu0 0
    %5360 = vmatprep.subr.bf16.mxu0 0
    %5361 = vmatpush2.bf16.msra.mxu0 0
    %5362 = vmatprep.subr.bf16.mxu0 0
    %5363 = vmatpush2.bf16.msra.mxu0 0
    %5364 = vmatprep.subr.bf16.mxu0 0
    %5365 = vmatpush2.bf16.msra.mxu0 0
    %5366 = vmatprep.subr.bf16.mxu0 0
    %5367 = vmatpush2.bf16.msra.mxu0 0
    %5368 = vmatprep.subr.bf16.mxu0 0
    %5369 = vmatpush2.bf16.msra.mxu0 0
    %5370 = vmatprep.subr.bf16.mxu0 0
    %5371 = vmatpush2.bf16.msra.mxu0 0
    %5372 = vmatprep.mubr.bf16.mxu0 0
    %5373 = vmatmul.mubr.bf16.gmra.mxu0 %v5001
    %v5374 = vpop.f32.mrf.mxu0
    %v5375 = vadd.f32 0.0, %v5374
    %v5376 = vpop.f32.mrf.mxu0
    %v5377 = vpop.f32.mrf.mxu0
    %v5378 = vpop.f32.mrf.mxu0
    %5379 = vdwg.mxu0
    %v5380 = vadd.f32 %v4903, %v5293
    %s5381 = scalar_lea.vmem [#allocation14], 16
    %5382 = vst [vmem:[%s5381] sm:$0xff] %v5380
    %v5383 = vld [vmem:[#allocation2 + $0x60] sm:$0xff]
    %v5384 = vld [vmem:[#allocation2 + $0x68] sm:$0xff]
    %v5385 = vld [vmem:[#allocation2 + $0x70] sm:$0xff]
    %v5386 = vld [vmem:[#allocation2 + $0x78] sm:$0xff]
    %v5387 = vadd.f32 %v5383, %v5295
    %v5388 = vadd.f32 %v5384, %v5334
    %v5389 = vadd.f32 %v5385, %v5336
    %v5390 = vadd.f32 %v5386, %v5375
    %v5391 = vadd.f32 %v5387, %v4498
    %v5392 = vadd.f32 %v5388, %v4500
    %v5393 = vadd.f32 %v5389, %v4539
    %v5394 = vadd.f32 %v5390, %v4541
    %v5395 = vxor.u32 %v5391, 2147483648
    %v5396 = vmul.f32 %v5395, 1.442695
    %v5397 = vpow.pop %v5396
    %v5398 = vadd.f32 %v5397, 1.0
    %v5399 = vrcp.pop %v5398
    %v5400 = vmul.f32 1.0, %v5399
    %v5401 = vxor.u32 %v5392, 2147483648
    %v5402 = vmul.f32 %v5401, 1.442695
    %v5403 = vpow.pop %v5402
    %v5404 = vadd.f32 %v5403, 1.0
    %v5405 = vrcp.pop %v5404
    %v5406 = vmul.f32 1.0, %v5405
    %v5407 = vtanh.pop %v5393
    %v5408 = vxor.u32 %v5394, 2147483648
    %v5409 = vmul.f32 %v5408, 1.442695
    %v5410 = vpow.pop %v5409
    %v5411 = vadd.f32 %v5410, 1.0
    %v5412 = vrcp.pop %v5411
    %v5413 = vmul.f32 1.0, %v5412
    %v5414 = vmul.f32 %v5406, %v3993
    %v5415 = vmul.f32 %v5400, %v5407
    %v5416 = vadd.f32 %v5414, %v5415
    %v5417 = vtanh.pop %v5416
    %v5418 = vmul.f32 %v5413, %v5417
    %v5419 = vpack.c.bf16 %v5418, %v5418
    %v5420 = vld [vmem:[#allocation9] sm:$0xff]
    %v5421 = vld [vmem:[#allocation9 + $0x8] sm:$0xff]
    %v5422 = vld [vmem:[#allocation9 + $0x10] sm:$0xff]
    %v5423 = vld [vmem:[#allocation9 + $0x18] sm:$0xff]
    %v5424 = vld [vmem:[#allocation9 + $0x20] sm:$0xff]
    %v5425 = vld [vmem:[#allocation9 + $0x28] sm:$0xff]
    %v5426 = vld [vmem:[#allocation9 + $0x30] sm:$0xff]
    %v5427 = vld [vmem:[#allocation9 + $0x38] sm:$0xff]
    %v5428 = vld [vmem:[#allocation9 + $0x40] sm:$0xff]
    %v5429 = vld [vmem:[#allocation9 + $0x48] sm:$0xff]
    %v5430 = vld [vmem:[#allocation9 + $0x50] sm:$0xff]
    %v5431 = vld [vmem:[#allocation9 + $0x58] sm:$0xff]
    %v5432 = vld [vmem:[#allocation9 + $0x60] sm:$0xff]
    %v5433 = vld [vmem:[#allocation9 + $0x68] sm:$0xff]
    %v5434 = vld [vmem:[#allocation9 + $0x70] sm:$0xff]
    %v5435 = vld [vmem:[#allocation9 + $0x78] sm:$0xff]
    %v5436 = vld [vmem:[#allocation9 + $0x80] sm:$0xff]
    %v5437 = vld [vmem:[#allocation9 + $0x88] sm:$0xff]
    %v5438 = vld [vmem:[#allocation9 + $0x90] sm:$0xff]
    %v5439 = vld [vmem:[#allocation9 + $0x98] sm:$0xff]
    %v5440 = vld [vmem:[#allocation9 + $0xa0] sm:$0xff]
    %v5441 = vld [vmem:[#allocation9 + $0xa8] sm:$0xff]
    %v5442 = vld [vmem:[#allocation9 + $0xb0] sm:$0xff]
    %v5443 = vld [vmem:[#allocation9 + $0xb8] sm:$0xff]
    %v5444 = vld [vmem:[#allocation9 + $0xc0] sm:$0xff]
    %v5445 = vld [vmem:[#allocation9 + $0xc8] sm:$0xff]
    %v5446 = vld [vmem:[#allocation9 + $0xd0] sm:$0xff]
    %v5447 = vld [vmem:[#allocation9 + $0xd8] sm:$0xff]
    %v5448 = vld [vmem:[#allocation9 + $0xe0] sm:$0xff]
    %v5449 = vld [vmem:[#allocation9 + $0xe8] sm:$0xff]
    %v5450 = vld [vmem:[#allocation9 + $0xf0] sm:$0xff]
    %v5451 = vld [vmem:[#allocation9 + $0xf8] sm:$0xff]
    %v5452 = vld [vmem:[#allocation9 + $0x100] sm:$0xff]
    %v5453 = vld [vmem:[#allocation9 + $0x108] sm:$0xff]
    %v5454 = vld [vmem:[#allocation9 + $0x110] sm:$0xff]
    %v5455 = vld [vmem:[#allocation9 + $0x118] sm:$0xff]
    %v5456 = vld [vmem:[#allocation9 + $0x120] sm:$0xff]
    %v5457 = vld [vmem:[#allocation9 + $0x128] sm:$0xff]
    %v5458 = vld [vmem:[#allocation9 + $0x130] sm:$0xff]
    %v5459 = vld [vmem:[#allocation9 + $0x138] sm:$0xff]
    %v5460 = vld [vmem:[#allocation9 + $0x140] sm:$0xff]
    %v5461 = vld [vmem:[#allocation9 + $0x148] sm:$0xff]
    %v5462 = vld [vmem:[#allocation9 + $0x150] sm:$0xff]
    %v5463 = vld [vmem:[#allocation9 + $0x158] sm:$0xff]
    %v5464 = vld [vmem:[#allocation9 + $0x160] sm:$0xff]
    %v5465 = vld [vmem:[#allocation9 + $0x168] sm:$0xff]
    %v5466 = vld [vmem:[#allocation9 + $0x170] sm:$0xff]
    %v5467 = vld [vmem:[#allocation9 + $0x178] sm:$0xff]
    %v5468 = vld [vmem:[#allocation9 + $0x180] sm:$0xff]
    %v5469 = vld [vmem:[#allocation9 + $0x188] sm:$0xff]
    %v5470 = vld [vmem:[#allocation9 + $0x190] sm:$0xff]
    %v5471 = vld [vmem:[#allocation9 + $0x198] sm:$0xff]
    %v5472 = vld [vmem:[#allocation9 + $0x1a0] sm:$0xff]
    %v5473 = vld [vmem:[#allocation9 + $0x1a8] sm:$0xff]
    %v5474 = vld [vmem:[#allocation9 + $0x1b0] sm:$0xff]
    %v5475 = vld [vmem:[#allocation9 + $0x1b8] sm:$0xff]
    %v5476 = vld [vmem:[#allocation9 + $0x1c0] sm:$0xff]
    %v5477 = vld [vmem:[#allocation9 + $0x1c8] sm:$0xff]
    %v5478 = vld [vmem:[#allocation9 + $0x1d0] sm:$0xff]
    %v5479 = vld [vmem:[#allocation9 + $0x1d8] sm:$0xff]
    %v5480 = vld [vmem:[#allocation9 + $0x1e0] sm:$0xff]
    %v5481 = vld [vmem:[#allocation9 + $0x1e8] sm:$0xff]
    %v5482 = vld [vmem:[#allocation9 + $0x1f0] sm:$0xff]
    %v5483 = vld [vmem:[#allocation9 + $0x1f8] sm:$0xff]
    %v5548 = vunpack.c.l.b16 %v5420
    %v5549 = vunpack.c.h.b16 %v5420
    %v5550 = vunpack.c.l.b16 %v5421
    %v5551 = vunpack.c.h.b16 %v5421
    %v5552 = vunpack.c.l.b16 %v5422
    %v5553 = vunpack.c.h.b16 %v5422
    %v5554 = vunpack.c.l.b16 %v5423
    %v5555 = vunpack.c.h.b16 %v5423
    %v5556 = vunpack.c.l.b16 %v5424
    %v5557 = vunpack.c.h.b16 %v5424
    %v5558 = vunpack.c.l.b16 %v5425
    %v5559 = vunpack.c.h.b16 %v5425
    %v5560 = vunpack.c.l.b16 %v5426
    %v5561 = vunpack.c.h.b16 %v5426
    %v5562 = vunpack.c.l.b16 %v5427
    %v5563 = vunpack.c.h.b16 %v5427
    %v5564 = vunpack.c.l.b16 %v5428
    %v5565 = vunpack.c.h.b16 %v5428
    %v5566 = vunpack.c.l.b16 %v5429
    %v5567 = vunpack.c.h.b16 %v5429
    %v5568 = vunpack.c.l.b16 %v5430
    %v5569 = vunpack.c.h.b16 %v5430
    %v5570 = vunpack.c.l.b16 %v5431
    %v5571 = vunpack.c.h.b16 %v5431
    %v5572 = vunpack.c.l.b16 %v5432
    %v5573 = vunpack.c.h.b16 %v5432
    %v5574 = vunpack.c.l.b16 %v5433
    %v5575 = vunpack.c.h.b16 %v5433
    %v5576 = vunpack.c.l.b16 %v5434
    %v5577 = vunpack.c.h.b16 %v5434
    %v5578 = vunpack.c.l.b16 %v5435
    %v5579 = vunpack.c.h.b16 %v5435
    %v5580 = vunpack.c.l.b16 %v5436
    %v5581 = vunpack.c.h.b16 %v5436
    %v5582 = vunpack.c.l.b16 %v5437
    %v5583 = vunpack.c.h.b16 %v5437
    %v5584 = vunpack.c.l.b16 %v5438
    %v5585 = vunpack.c.h.b16 %v5438
    %v5586 = vunpack.c.l.b16 %v5439
    %v5587 = vunpack.c.h.b16 %v5439
    %v5588 = vunpack.c.l.b16 %v5440
    %v5589 = vunpack.c.h.b16 %v5440
    %v5590 = vunpack.c.l.b16 %v5441
    %v5591 = vunpack.c.h.b16 %v5441
    %v5592 = vunpack.c.l.b16 %v5442
    %v5593 = vunpack.c.h.b16 %v5442
    %v5594 = vunpack.c.l.b16 %v5443
    %v5595 = vunpack.c.h.b16 %v5443
    %v5596 = vunpack.c.l.b16 %v5444
    %v5597 = vunpack.c.h.b16 %v5444
    %v5598 = vunpack.c.l.b16 %v5445
    %v5599 = vunpack.c.h.b16 %v5445
    %v5600 = vunpack.c.l.b16 %v5446
    %v5601 = vunpack.c.h.b16 %v5446
    %v5602 = vunpack.c.l.b16 %v5447
    %v5603 = vunpack.c.h.b16 %v5447
    %v5604 = vunpack.c.l.b16 %v5448
    %v5605 = vunpack.c.h.b16 %v5448
    %v5606 = vunpack.c.l.b16 %v5449
    %v5607 = vunpack.c.h.b16 %v5449
    %v5608 = vunpack.c.l.b16 %v5450
    %v5609 = vunpack.c.h.b16 %v5450
    %v5610 = vunpack.c.l.b16 %v5451
    %v5611 = vunpack.c.h.b16 %v5451
    %v5612 = vunpack.c.l.b16 %v5452
    %v5613 = vunpack.c.h.b16 %v5452
    %v5614 = vunpack.c.l.b16 %v5453
    %v5615 = vunpack.c.h.b16 %v5453
    %v5616 = vunpack.c.l.b16 %v5454
    %v5617 = vunpack.c.h.b16 %v5454
    %v5618 = vunpack.c.l.b16 %v5455
    %v5619 = vunpack.c.h.b16 %v5455
    %v5620 = vunpack.c.l.b16 %v5456
    %v5621 = vunpack.c.h.b16 %v5456
    %v5622 = vunpack.c.l.b16 %v5457
    %v5623 = vunpack.c.h.b16 %v5457
    %v5624 = vunpack.c.l.b16 %v5458
    %v5625 = vunpack.c.h.b16 %v5458
    %v5626 = vunpack.c.l.b16 %v5459
    %v5627 = vunpack.c.h.b16 %v5459
    %v5628 = vunpack.c.l.b16 %v5460
    %v5629 = vunpack.c.h.b16 %v5460
    %v5630 = vunpack.c.l.b16 %v5461
    %v5631 = vunpack.c.h.b16 %v5461
    %v5632 = vunpack.c.l.b16 %v5462
    %v5633 = vunpack.c.h.b16 %v5462
    %v5634 = vunpack.c.l.b16 %v5463
    %v5635 = vunpack.c.h.b16 %v5463
    %v5636 = vunpack.c.l.b16 %v5464
    %v5637 = vunpack.c.h.b16 %v5464
    %v5638 = vunpack.c.l.b16 %v5465
    %v5639 = vunpack.c.h.b16 %v5465
    %v5640 = vunpack.c.l.b16 %v5466
    %v5641 = vunpack.c.h.b16 %v5466
    %v5642 = vunpack.c.l.b16 %v5467
    %v5643 = vunpack.c.h.b16 %v5467
    %v5644 = vunpack.c.l.b16 %v5468
    %v5645 = vunpack.c.h.b16 %v5468
    %v5646 = vunpack.c.l.b16 %v5469
    %v5647 = vunpack.c.h.b16 %v5469
    %v5648 = vunpack.c.l.b16 %v5470
    %v5649 = vunpack.c.h.b16 %v5470
    %v5650 = vunpack.c.l.b16 %v5471
    %v5651 = vunpack.c.h.b16 %v5471
    %v5652 = vunpack.c.l.b16 %v5472
    %v5653 = vunpack.c.h.b16 %v5472
    %v5654 = vunpack.c.l.b16 %v5473
    %v5655 = vunpack.c.h.b16 %v5473
    %v5656 = vunpack.c.l.b16 %v5474
    %v5657 = vunpack.c.h.b16 %v5474
    %v5658 = vunpack.c.l.b16 %v5475
    %v5659 = vunpack.c.h.b16 %v5475
    %v5660 = vunpack.c.l.b16 %v5476
    %v5661 = vunpack.c.h.b16 %v5476
    %v5662 = vunpack.c.l.b16 %v5477
    %v5663 = vunpack.c.h.b16 %v5477
    %v5664 = vunpack.c.l.b16 %v5478
    %v5665 = vunpack.c.h.b16 %v5478
    %v5666 = vunpack.c.l.b16 %v5479
    %v5667 = vunpack.c.h.b16 %v5479
    %v5668 = vunpack.c.l.b16 %v5480
    %v5669 = vunpack.c.h.b16 %v5480
    %v5670 = vunpack.c.l.b16 %v5481
    %v5671 = vunpack.c.h.b16 %v5481
    %v5672 = vunpack.c.l.b16 %v5482
    %v5673 = vunpack.c.h.b16 %v5482
    %v5674 = vunpack.c.l.b16 %v5483
    %v5675 = vunpack.c.h.b16 %v5483
    %v5676 = vpack.c.b16 %v5556, %v5548
    %v5677 = vpack.c.b16 %v5557, %v5549
    %v5678 = vpack.c.b16 %v5558, %v5550
    %v5679 = vpack.c.b16 %v5559, %v5551
    %v5680 = vpack.c.b16 %v5560, %v5552
    %v5681 = vpack.c.b16 %v5561, %v5553
    %v5682 = vpack.c.b16 %v5562, %v5554
    %v5683 = vpack.c.b16 %v5563, %v5555
    %v5684 = vpack.c.b16 %v5572, %v5564
    %v5685 = vpack.c.b16 %v5573, %v5565
    %v5686 = vpack.c.b16 %v5574, %v5566
    %v5687 = vpack.c.b16 %v5575, %v5567
    %v5688 = vpack.c.b16 %v5576, %v5568
    %v5689 = vpack.c.b16 %v5577, %v5569
    %v5690 = vpack.c.b16 %v5578, %v5570
    %v5691 = vpack.c.b16 %v5579, %v5571
    %v5692 = vpack.c.b16 %v5588, %v5580
    %v5693 = vpack.c.b16 %v5589, %v5581
    %v5694 = vpack.c.b16 %v5590, %v5582
    %v5695 = vpack.c.b16 %v5591, %v5583
    %v5696 = vpack.c.b16 %v5592, %v5584
    %v5697 = vpack.c.b16 %v5593, %v5585
    %v5698 = vpack.c.b16 %v5594, %v5586
    %v5699 = vpack.c.b16 %v5595, %v5587
    %v5700 = vpack.c.b16 %v5604, %v5596
    %v5701 = vpack.c.b16 %v5605, %v5597
    %v5702 = vpack.c.b16 %v5606, %v5598
    %v5703 = vpack.c.b16 %v5607, %v5599
    %v5704 = vpack.c.b16 %v5608, %v5600
    %v5705 = vpack.c.b16 %v5609, %v5601
    %v5706 = vpack.c.b16 %v5610, %v5602
    %v5707 = vpack.c.b16 %v5611, %v5603
    %v5708 = vpack.c.b16 %v5620, %v5612
    %v5709 = vpack.c.b16 %v5621, %v5613
    %v5710 = vpack.c.b16 %v5622, %v5614
    %v5711 = vpack.c.b16 %v5623, %v5615
    %v5712 = vpack.c.b16 %v5624, %v5616
    %v5713 = vpack.c.b16 %v5625, %v5617
    %v5714 = vpack.c.b16 %v5626, %v5618
    %v5715 = vpack.c.b16 %v5627, %v5619
    %v5716 = vpack.c.b16 %v5636, %v5628
    %v5717 = vpack.c.b16 %v5637, %v5629
    %v5718 = vpack.c.b16 %v5638, %v5630
    %v5719 = vpack.c.b16 %v5639, %v5631
    %v5720 = vpack.c.b16 %v5640, %v5632
    %v5721 = vpack.c.b16 %v5641, %v5633
    %v5722 = vpack.c.b16 %v5642, %v5634
    %v5723 = vpack.c.b16 %v5643, %v5635
    %v5724 = vpack.c.b16 %v5652, %v5644
    %v5725 = vpack.c.b16 %v5653, %v5645
    %v5726 = vpack.c.b16 %v5654, %v5646
    %v5727 = vpack.c.b16 %v5655, %v5647
    %v5728 = vpack.c.b16 %v5656, %v5648
    %v5729 = vpack.c.b16 %v5657, %v5649
    %v5730 = vpack.c.b16 %v5658, %v5650
    %v5731 = vpack.c.b16 %v5659, %v5651
    %v5732 = vpack.c.b16 %v5668, %v5660
    %v5733 = vpack.c.b16 %v5669, %v5661
    %v5734 = vpack.c.b16 %v5670, %v5662
    %v5735 = vpack.c.b16 %v5671, %v5663
    %v5736 = vpack.c.b16 %v5672, %v5664
    %v5737 = vpack.c.b16 %v5673, %v5665
    %v5738 = vpack.c.b16 %v5674, %v5666
    %v5739 = vpack.c.b16 %v5675, %v5667
    %5804 = vmatprep.subr.bf16.mxu0 %v5733
    %5805 = vmatpush1.bf16.msra.mxu0 %v5732
    %5806 = vmatprep.subr.bf16.mxu0 %v5725
    %5807 = vmatpush1.bf16.msra.mxu0 %v5724
    %5808 = vmatprep.subr.bf16.mxu0 %v5717
    %5809 = vmatpush1.bf16.msra.mxu0 %v5716
    %5810 = vmatprep.subr.bf16.mxu0 %v5709
    %5811 = vmatpush1.bf16.msra.mxu0 %v5708
    %5812 = vmatprep.subr.bf16.mxu0 %v5701
    %5813 = vmatpush1.bf16.msra.mxu0 %v5700
    %5814 = vmatprep.subr.bf16.mxu0 %v5693
    %5815 = vmatpush1.bf16.msra.mxu0 %v5692
    %5816 = vmatprep.subr.bf16.mxu0 %v5685
    %5817 = vmatpush1.bf16.msra.mxu0 %v5684
    %5818 = vmatprep.subr.bf16.mxu0 %v5677
    %5819 = vmatpush1.bf16.msra.mxu0 %v5676
    %5820 = vmatprep.subr.bf16.mxu0 0
    %5821 = vmatpush2.bf16.msra.mxu0 0
    %5822 = vmatprep.subr.bf16.mxu0 0
    %5823 = vmatpush2.bf16.msra.mxu0 0
    %5824 = vmatprep.subr.bf16.mxu0 0
    %5825 = vmatpush2.bf16.msra.mxu0 0
    %5826 = vmatprep.subr.bf16.mxu0 0
    %5827 = vmatpush2.bf16.msra.mxu0 0
    %5828 = vmatprep.subr.bf16.mxu0 0
    %5829 = vmatpush2.bf16.msra.mxu0 0
    %5830 = vmatprep.subr.bf16.mxu0 0
    %5831 = vmatpush2.bf16.msra.mxu0 0
    %5832 = vmatprep.subr.bf16.mxu0 0
    %5833 = vmatpush2.bf16.msra.mxu0 0
    %5834 = vmatprep.subr.bf16.mxu0 0
    %5835 = vmatpush2.bf16.msra.mxu0 0
    %5836 = vmatprep.mubr.bf16.mxu0 0
    %5837 = vmatmul.mubr.bf16.gmra.mxu0 %v5419
    %v5838 = vpop.f32.mrf.mxu0
    %v5839 = vadd.f32 0.0, %v5838
    %v5840 = vpop.f32.mrf.mxu0
    %v5841 = vadd.f32 0.0, %v5840
    %v5842 = vpop.f32.mrf.mxu0
    %v5843 = vpop.f32.mrf.mxu0
    %5844 = vdwg.mxu0
    %5845 = vmatprep.subr.bf16.mxu0 %v5735
    %5846 = vmatpush1.bf16.msra.mxu0 %v5734
    %5847 = vmatprep.subr.bf16.mxu0 %v5727
    %5848 = vmatpush1.bf16.msra.mxu0 %v5726
    %5849 = vmatprep.subr.bf16.mxu0 %v5719
    %5850 = vmatpush1.bf16.msra.mxu0 %v5718
    %5851 = vmatprep.subr.bf16.mxu0 %v5711
    %5852 = vmatpush1.bf16.msra.mxu0 %v5710
    %5853 = vmatprep.subr.bf16.mxu0 %v5703
    %5854 = vmatpush1.bf16.msra.mxu0 %v5702
    %5855 = vmatprep.subr.bf16.mxu0 %v5695
    %5856 = vmatpush1.bf16.msra.mxu0 %v5694
    %5857 = vmatprep.subr.bf16.mxu0 %v5687
    %5858 = vmatpush1.bf16.msra.mxu0 %v5686
    %5859 = vmatprep.subr.bf16.mxu0 %v5679
    %5860 = vmatpush1.bf16.msra.mxu0 %v5678
    %5861 = vmatprep.subr.bf16.mxu0 0
    %5862 = vmatpush2.bf16.msra.mxu0 0
    %5863 = vmatprep.subr.bf16.mxu0 0
    %5864 = vmatpush2.bf16.msra.mxu0 0
    %5865 = vmatprep.subr.bf16.mxu0 0
    %5866 = vmatpush2.bf16.msra.mxu0 0
    %5867 = vmatprep.subr.bf16.mxu0 0
    %5868 = vmatpush2.bf16.msra.mxu0 0
    %5869 = vmatprep.subr.bf16.mxu0 0
    %5870 = vmatpush2.bf16.msra.mxu0 0
    %5871 = vmatprep.subr.bf16.mxu0 0
    %5872 = vmatpush2.bf16.msra.mxu0 0
    %5873 = vmatprep.subr.bf16.mxu0 0
    %5874 = vmatpush2.bf16.msra.mxu0 0
    %5875 = vmatprep.subr.bf16.mxu0 0
    %5876 = vmatpush2.bf16.msra.mxu0 0
    %5877 = vmatprep.mubr.bf16.mxu0 0
    %5878 = vmatmul.mubr.bf16.gmra.mxu0 %v5419
    %v5879 = vpop.f32.mrf.mxu0
    %v5880 = vadd.f32 0.0, %v5879
    %v5881 = vpop.f32.mrf.mxu0
    %v5882 = vadd.f32 0.0, %v5881
    %v5883 = vpop.f32.mrf.mxu0
    %v5884 = vpop.f32.mrf.mxu0
    %5885 = vdwg.mxu0
    %5886 = vmatprep.subr.bf16.mxu0 %v5737
    %5887 = vmatpush1.bf16.msra.mxu0 %v5736
    %5888 = vmatprep.subr.bf16.mxu0 %v5729
    %5889 = vmatpush1.bf16.msra.mxu0 %v5728
    %5890 = vmatprep.subr.bf16.mxu0 %v5721
    %5891 = vmatpush1.bf16.msra.mxu0 %v5720
    %5892 = vmatprep.subr.bf16.mxu0 %v5713
    %5893 = vmatpush1.bf16.msra.mxu0 %v5712
    %5894 = vmatprep.subr.bf16.mxu0 %v5705
    %5895 = vmatpush1.bf16.msra.mxu0 %v5704
    %5896 = vmatprep.subr.bf16.mxu0 %v5697
    %5897 = vmatpush1.bf16.msra.mxu0 %v5696
    %5898 = vmatprep.subr.bf16.mxu0 %v5689
    %5899 = vmatpush1.bf16.msra.mxu0 %v5688
    %5900 = vmatprep.subr.bf16.mxu0 %v5681
    %5901 = vmatpush1.bf16.msra.mxu0 %v5680
    %5902 = vmatprep.subr.bf16.mxu0 0
    %5903 = vmatpush2.bf16.msra.mxu0 0
    %5904 = vmatprep.subr.bf16.mxu0 0
    %5905 = vmatpush2.bf16.msra.mxu0 0
    %5906 = vmatprep.subr.bf16.mxu0 0
    %5907 = vmatpush2.bf16.msra.mxu0 0
    %5908 = vmatprep.subr.bf16.mxu0 0
    %5909 = vmatpush2.bf16.msra.mxu0 0
    %5910 = vmatprep.subr.bf16.mxu0 0
    %5911 = vmatpush2.bf16.msra.mxu0 0
    %5912 = vmatprep.subr.bf16.mxu0 0
    %5913 = vmatpush2.bf16.msra.mxu0 0
    %5914 = vmatprep.subr.bf16.mxu0 0
    %5915 = vmatpush2.bf16.msra.mxu0 0
    %5916 = vmatprep.subr.bf16.mxu0 0
    %5917 = vmatpush2.bf16.msra.mxu0 0
    %5918 = vmatprep.mubr.bf16.mxu0 0
    %5919 = vmatmul.mubr.bf16.gmra.mxu0 %v5419
    %v5920 = vpop.f32.mrf.mxu0
    %v5921 = vadd.f32 0.0, %v5920
    %v5922 = vpop.f32.mrf.mxu0
    %v5923 = vadd.f32 0.0, %v5922
    %v5924 = vpop.f32.mrf.mxu0
    %v5925 = vpop.f32.mrf.mxu0
    %5926 = vdwg.mxu0
    %5927 = vmatprep.subr.bf16.mxu0 %v5739
    %5928 = vmatpush1.bf16.msra.mxu0 %v5738
    %5929 = vmatprep.subr.bf16.mxu0 %v5731
    %5930 = vmatpush1.bf16.msra.mxu0 %v5730
    %5931 = vmatprep.subr.bf16.mxu0 %v5723
    %5932 = vmatpush1.bf16.msra.mxu0 %v5722
    %5933 = vmatprep.subr.bf16.mxu0 %v5715
    %5934 = vmatpush1.bf16.msra.mxu0 %v5714
    %5935 = vmatprep.subr.bf16.mxu0 %v5707
    %5936 = vmatpush1.bf16.msra.mxu0 %v5706
    %5937 = vmatprep.subr.bf16.mxu0 %v5699
    %5938 = vmatpush1.bf16.msra.mxu0 %v5698
    %5939 = vmatprep.subr.bf16.mxu0 %v5691
    %5940 = vmatpush1.bf16.msra.mxu0 %v5690
    %5941 = vmatprep.subr.bf16.mxu0 %v5683
    %5942 = vmatpush1.bf16.msra.mxu0 %v5682
    %5943 = vmatprep.subr.bf16.mxu0 0
    %5944 = vmatpush2.bf16.msra.mxu0 0
    %5945 = vmatprep.subr.bf16.mxu0 0
    %5946 = vmatpush2.bf16.msra.mxu0 0
    %5947 = vmatprep.subr.bf16.mxu0 0
    %5948 = vmatpush2.bf16.msra.mxu0 0
    %5949 = vmatprep.subr.bf16.mxu0 0
    %5950 = vmatpush2.bf16.msra.mxu0 0
    %5951 = vmatprep.subr.bf16.mxu0 0
    %5952 = vmatpush2.bf16.msra.mxu0 0
    %5953 = vmatprep.subr.bf16.mxu0 0
    %5954 = vmatpush2.bf16.msra.mxu0 0
    %5955 = vmatprep.subr.bf16.mxu0 0
    %5956 = vmatpush2.bf16.msra.mxu0 0
    %5957 = vmatprep.subr.bf16.mxu0 0
    %5958 = vmatpush2.bf16.msra.mxu0 0
    %5959 = vmatprep.mubr.bf16.mxu0 0
    %5960 = vmatmul.mubr.bf16.gmra.mxu0 %v5419
    %v5961 = vpop.f32.mrf.mxu0
    %v5962 = vadd.f32 0.0, %v5961
    %v5963 = vpop.f32.mrf.mxu0
    %v5964 = vadd.f32 0.0, %v5963
    %v5965 = vpop.f32.mrf.mxu0
    %v5966 = vpop.f32.mrf.mxu0
    %5967 = vdwg.mxu0
    %v5968 = vadd.f32 %v5839, %v4942
    %v5969 = vadd.f32 %v5841, %v4944
    %v5970 = vadd.f32 %v5880, %v4983
    %v5971 = vadd.f32 %v5882, %v4985
    %v5972 = vadd.f32 %v5968, %v120
    %v5973 = vadd.f32 %v5969, %v124
    %v5974 = vadd.f32 %v5970, %v128
    %v5975 = vadd.f32 %v5971, %v132
    %v5976 = vxor.u32 %v5972, 2147483648
    %v5977 = vmul.f32 %v5976, 1.442695
    %v5978 = vpow.pop %v5977
    %v5979 = vadd.f32 %v5978, 1.0
    %v5980 = vrcp.pop %v5979
    %v5981 = vmul.f32 1.0, %v5980
    %v5982 = vxor.u32 %v5973, 2147483648
    %v5983 = vmul.f32 %v5982, 1.442695
    %v5984 = vpow.pop %v5983
    %v5985 = vadd.f32 %v5984, 1.0
    %v5986 = vrcp.pop %v5985
    %v5987 = vmul.f32 1.0, %v5986
    %v5988 = vtanh.pop %v5974
    %v5989 = vxor.u32 %v5975, 2147483648
    %v5990 = vmul.f32 %v5989, 1.442695
    %v5991 = vpow.pop %v5990
    %v5992 = vadd.f32 %v5991, 1.0
    %v5993 = vrcp.pop %v5992
    %v5994 = vmul.f32 1.0, %v5993
    %v5995 = vmul.f32 %v5987, %v4574
    %v5996 = vmul.f32 %v5981, %v5988
    %v5997 = vadd.f32 %v5995, %v5996
    %v5998 = vtanh.pop %v5997
    %v5999 = vmul.f32 %v5994, %v5998
    %v6000 = vpack.c.bf16 %v5999, %v5999
    %v6001 = vld [vmem:[#allocation11] sm:$0xff]
    %v6002 = vld [vmem:[#allocation11 + $0x8] sm:$0xff]
    %v6003 = vld [vmem:[#allocation11 + $0x10] sm:$0xff]
    %v6004 = vld [vmem:[#allocation11 + $0x18] sm:$0xff]
    %v6005 = vld [vmem:[#allocation11 + $0x20] sm:$0xff]
    %v6006 = vld [vmem:[#allocation11 + $0x28] sm:$0xff]
    %v6007 = vld [vmem:[#allocation11 + $0x30] sm:$0xff]
    %v6008 = vld [vmem:[#allocation11 + $0x38] sm:$0xff]
    %v6009 = vld [vmem:[#allocation11 + $0x40] sm:$0xff]
    %v6010 = vld [vmem:[#allocation11 + $0x48] sm:$0xff]
    %v6011 = vld [vmem:[#allocation11 + $0x50] sm:$0xff]
    %v6012 = vld [vmem:[#allocation11 + $0x58] sm:$0xff]
    %v6013 = vld [vmem:[#allocation11 + $0x60] sm:$0xff]
    %v6014 = vld [vmem:[#allocation11 + $0x68] sm:$0xff]
    %v6015 = vld [vmem:[#allocation11 + $0x70] sm:$0xff]
    %v6016 = vld [vmem:[#allocation11 + $0x78] sm:$0xff]
    %v6017 = vld [vmem:[#allocation11 + $0x80] sm:$0xff]
    %v6018 = vld [vmem:[#allocation11 + $0x88] sm:$0xff]
    %v6019 = vld [vmem:[#allocation11 + $0x90] sm:$0xff]
    %v6020 = vld [vmem:[#allocation11 + $0x98] sm:$0xff]
    %v6021 = vld [vmem:[#allocation11 + $0xa0] sm:$0xff]
    %v6022 = vld [vmem:[#allocation11 + $0xa8] sm:$0xff]
    %v6023 = vld [vmem:[#allocation11 + $0xb0] sm:$0xff]
    %v6024 = vld [vmem:[#allocation11 + $0xb8] sm:$0xff]
    %v6025 = vld [vmem:[#allocation11 + $0xc0] sm:$0xff]
    %v6026 = vld [vmem:[#allocation11 + $0xc8] sm:$0xff]
    %v6027 = vld [vmem:[#allocation11 + $0xd0] sm:$0xff]
    %v6028 = vld [vmem:[#allocation11 + $0xd8] sm:$0xff]
    %v6029 = vld [vmem:[#allocation11 + $0xe0] sm:$0xff]
    %v6030 = vld [vmem:[#allocation11 + $0xe8] sm:$0xff]
    %v6031 = vld [vmem:[#allocation11 + $0xf0] sm:$0xff]
    %v6032 = vld [vmem:[#allocation11 + $0xf8] sm:$0xff]
    %v6033 = vld [vmem:[#allocation11 + $0x100] sm:$0xff]
    %v6034 = vld [vmem:[#allocation11 + $0x108] sm:$0xff]
    %v6035 = vld [vmem:[#allocation11 + $0x110] sm:$0xff]
    %v6036 = vld [vmem:[#allocation11 + $0x118] sm:$0xff]
    %v6037 = vld [vmem:[#allocation11 + $0x120] sm:$0xff]
    %v6038 = vld [vmem:[#allocation11 + $0x128] sm:$0xff]
    %v6039 = vld [vmem:[#allocation11 + $0x130] sm:$0xff]
    %v6040 = vld [vmem:[#allocation11 + $0x138] sm:$0xff]
    %v6041 = vld [vmem:[#allocation11 + $0x140] sm:$0xff]
    %v6042 = vld [vmem:[#allocation11 + $0x148] sm:$0xff]
    %v6043 = vld [vmem:[#allocation11 + $0x150] sm:$0xff]
    %v6044 = vld [vmem:[#allocation11 + $0x158] sm:$0xff]
    %v6045 = vld [vmem:[#allocation11 + $0x160] sm:$0xff]
    %v6046 = vld [vmem:[#allocation11 + $0x168] sm:$0xff]
    %v6047 = vld [vmem:[#allocation11 + $0x170] sm:$0xff]
    %v6048 = vld [vmem:[#allocation11 + $0x178] sm:$0xff]
    %v6097 = vunpack.c.l.b16 %v6001
    %v6098 = vunpack.c.h.b16 %v6001
    %v6099 = vunpack.c.l.b16 %v6002
    %v6100 = vunpack.c.h.b16 %v6002
    %v6101 = vunpack.c.l.b16 %v6003
    %v6102 = vunpack.c.h.b16 %v6003
    %v6103 = vunpack.c.l.b16 %v6004
    %v6104 = vunpack.c.h.b16 %v6004
    %v6105 = vunpack.c.l.b16 %v6005
    %v6106 = vunpack.c.h.b16 %v6005
    %v6107 = vunpack.c.l.b16 %v6006
    %v6108 = vunpack.c.h.b16 %v6006
    %v6109 = vunpack.c.l.b16 %v6007
    %v6110 = vunpack.c.h.b16 %v6007
    %v6111 = vunpack.c.l.b16 %v6008
    %v6112 = vunpack.c.h.b16 %v6008
    %v6113 = vunpack.c.l.b16 %v6009
    %v6114 = vunpack.c.h.b16 %v6009
    %v6115 = vunpack.c.l.b16 %v6010
    %v6116 = vunpack.c.h.b16 %v6010
    %v6117 = vunpack.c.l.b16 %v6011
    %v6118 = vunpack.c.h.b16 %v6011
    %v6119 = vunpack.c.l.b16 %v6012
    %v6120 = vunpack.c.h.b16 %v6012
    %v6121 = vunpack.c.l.b16 %v6013
    %v6122 = vunpack.c.h.b16 %v6013
    %v6123 = vunpack.c.l.b16 %v6014
    %v6124 = vunpack.c.h.b16 %v6014
    %v6125 = vunpack.c.l.b16 %v6015
    %v6126 = vunpack.c.h.b16 %v6015
    %v6127 = vunpack.c.l.b16 %v6016
    %v6128 = vunpack.c.h.b16 %v6016
    %v6129 = vunpack.c.l.b16 %v6017
    %v6130 = vunpack.c.h.b16 %v6017
    %v6131 = vunpack.c.l.b16 %v6018
    %v6132 = vunpack.c.h.b16 %v6018
    %v6133 = vunpack.c.l.b16 %v6019
    %v6134 = vunpack.c.h.b16 %v6019
    %v6135 = vunpack.c.l.b16 %v6020
    %v6136 = vunpack.c.h.b16 %v6020
    %v6137 = vunpack.c.l.b16 %v6021
    %v6138 = vunpack.c.h.b16 %v6021
    %v6139 = vunpack.c.l.b16 %v6022
    %v6140 = vunpack.c.h.b16 %v6022
    %v6141 = vunpack.c.l.b16 %v6023
    %v6142 = vunpack.c.h.b16 %v6023
    %v6143 = vunpack.c.l.b16 %v6024
    %v6144 = vunpack.c.h.b16 %v6024
    %v6145 = vunpack.c.l.b16 %v6025
    %v6146 = vunpack.c.h.b16 %v6025
    %v6147 = vunpack.c.l.b16 %v6026
    %v6148 = vunpack.c.h.b16 %v6026
    %v6149 = vunpack.c.l.b16 %v6027
    %v6150 = vunpack.c.h.b16 %v6027
    %v6151 = vunpack.c.l.b16 %v6028
    %v6152 = vunpack.c.h.b16 %v6028
    %v6153 = vunpack.c.l.b16 %v6029
    %v6154 = vunpack.c.h.b16 %v6029
    %v6155 = vunpack.c.l.b16 %v6030
    %v6156 = vunpack.c.h.b16 %v6030
    %v6157 = vunpack.c.l.b16 %v6031
    %v6158 = vunpack.c.h.b16 %v6031
    %v6159 = vunpack.c.l.b16 %v6032
    %v6160 = vunpack.c.h.b16 %v6032
    %v6161 = vunpack.c.l.b16 %v6033
    %v6162 = vunpack.c.h.b16 %v6033
    %v6163 = vunpack.c.l.b16 %v6034
    %v6164 = vunpack.c.h.b16 %v6034
    %v6165 = vunpack.c.l.b16 %v6035
    %v6166 = vunpack.c.h.b16 %v6035
    %v6167 = vunpack.c.l.b16 %v6036
    %v6168 = vunpack.c.h.b16 %v6036
    %v6169 = vunpack.c.l.b16 %v6037
    %v6170 = vunpack.c.h.b16 %v6037
    %v6171 = vunpack.c.l.b16 %v6038
    %v6172 = vunpack.c.h.b16 %v6038
    %v6173 = vunpack.c.l.b16 %v6039
    %v6174 = vunpack.c.h.b16 %v6039
    %v6175 = vunpack.c.l.b16 %v6040
    %v6176 = vunpack.c.h.b16 %v6040
    %v6177 = vunpack.c.l.b16 %v6041
    %v6178 = vunpack.c.h.b16 %v6041
    %v6179 = vunpack.c.l.b16 %v6042
    %v6180 = vunpack.c.h.b16 %v6042
    %v6181 = vunpack.c.l.b16 %v6043
    %v6182 = vunpack.c.h.b16 %v6043
    %v6183 = vunpack.c.l.b16 %v6044
    %v6184 = vunpack.c.h.b16 %v6044
    %v6185 = vunpack.c.l.b16 %v6045
    %v6186 = vunpack.c.h.b16 %v6045
    %v6187 = vunpack.c.l.b16 %v6046
    %v6188 = vunpack.c.h.b16 %v6046
    %v6189 = vunpack.c.l.b16 %v6047
    %v6190 = vunpack.c.h.b16 %v6047
    %v6191 = vunpack.c.l.b16 %v6048
    %v6192 = vunpack.c.h.b16 %v6048
    %v6193 = vpack.c.b16 %v6103, %v6097
    %v6194 = vpack.c.b16 %v6104, %v6098
    %v6195 = vpack.c.b16 %v6105, %v6099
    %v6196 = vpack.c.b16 %v6106, %v6100
    %v6197 = vpack.c.b16 %v6107, %v6101
    %v6198 = vpack.c.b16 %v6108, %v6102
    %v6199 = vpack.c.b16 %v6115, %v6109
    %v6200 = vpack.c.b16 %v6116, %v6110
    %v6201 = vpack.c.b16 %v6117, %v6111
    %v6202 = vpack.c.b16 %v6118, %v6112
    %v6203 = vpack.c.b16 %v6119, %v6113
    %v6204 = vpack.c.b16 %v6120, %v6114
    %v6205 = vpack.c.b16 %v6127, %v6121
    %v6206 = vpack.c.b16 %v6128, %v6122
    %v6207 = vpack.c.b16 %v6129, %v6123
    %v6208 = vpack.c.b16 %v6130, %v6124
    %v6209 = vpack.c.b16 %v6131, %v6125
    %v6210 = vpack.c.b16 %v6132, %v6126
    %v6211 = vpack.c.b16 %v6139, %v6133
    %v6212 = vpack.c.b16 %v6140, %v6134
    %v6213 = vpack.c.b16 %v6141, %v6135
    %v6214 = vpack.c.b16 %v6142, %v6136
    %v6215 = vpack.c.b16 %v6143, %v6137
    %v6216 = vpack.c.b16 %v6144, %v6138
    %v6217 = vpack.c.b16 %v6151, %v6145
    %v6218 = vpack.c.b16 %v6152, %v6146
    %v6219 = vpack.c.b16 %v6153, %v6147
    %v6220 = vpack.c.b16 %v6154, %v6148
    %v6221 = vpack.c.b16 %v6155, %v6149
    %v6222 = vpack.c.b16 %v6156, %v6150
    %v6223 = vpack.c.b16 %v6163, %v6157
    %v6224 = vpack.c.b16 %v6164, %v6158
    %v6225 = vpack.c.b16 %v6165, %v6159
    %v6226 = vpack.c.b16 %v6166, %v6160
    %v6227 = vpack.c.b16 %v6167, %v6161
    %v6228 = vpack.c.b16 %v6168, %v6162
    %v6229 = vpack.c.b16 %v6175, %v6169
    %v6230 = vpack.c.b16 %v6176, %v6170
    %v6231 = vpack.c.b16 %v6177, %v6171
    %v6232 = vpack.c.b16 %v6178, %v6172
    %v6233 = vpack.c.b16 %v6179, %v6173
    %v6234 = vpack.c.b16 %v6180, %v6174
    %v6235 = vpack.c.b16 %v6187, %v6181
    %v6236 = vpack.c.b16 %v6188, %v6182
    %v6237 = vpack.c.b16 %v6189, %v6183
    %v6238 = vpack.c.b16 %v6190, %v6184
    %v6239 = vpack.c.b16 %v6191, %v6185
    %v6240 = vpack.c.b16 %v6192, %v6186
    %6289 = vmatprep.subr.bf16.mxu0 %v6236
    %6290 = vmatpush1.bf16.msra.mxu0 %v6235
    %6291 = vmatprep.subr.bf16.mxu0 %v6230
    %6292 = vmatpush1.bf16.msra.mxu0 %v6229
    %6293 = vmatprep.subr.bf16.mxu0 %v6224
    %6294 = vmatpush1.bf16.msra.mxu0 %v6223
    %6295 = vmatprep.subr.bf16.mxu0 %v6218
    %6296 = vmatpush1.bf16.msra.mxu0 %v6217
    %6297 = vmatprep.subr.bf16.mxu0 %v6212
    %6298 = vmatpush1.bf16.msra.mxu0 %v6211
    %6299 = vmatprep.subr.bf16.mxu0 %v6206
    %6300 = vmatpush1.bf16.msra.mxu0 %v6205
    %6301 = vmatprep.subr.bf16.mxu0 %v6200
    %6302 = vmatpush1.bf16.msra.mxu0 %v6199
    %6303 = vmatprep.subr.bf16.mxu0 %v6194
    %6304 = vmatpush1.bf16.msra.mxu0 %v6193
    %6305 = vmatprep.subr.bf16.mxu0 0
    %6306 = vmatpush2.bf16.msra.mxu0 0
    %6307 = vmatprep.subr.bf16.mxu0 0
    %6308 = vmatpush2.bf16.msra.mxu0 0
    %6309 = vmatprep.subr.bf16.mxu0 0
    %6310 = vmatpush2.bf16.msra.mxu0 0
    %6311 = vmatprep.subr.bf16.mxu0 0
    %6312 = vmatpush2.bf16.msra.mxu0 0
    %6313 = vmatprep.subr.bf16.mxu0 0
    %6314 = vmatpush2.bf16.msra.mxu0 0
    %6315 = vmatprep.subr.bf16.mxu0 0
    %6316 = vmatpush2.bf16.msra.mxu0 0
    %6317 = vmatprep.subr.bf16.mxu0 0
    %6318 = vmatpush2.bf16.msra.mxu0 0
    %6319 = vmatprep.subr.bf16.mxu0 0
    %6320 = vmatpush2.bf16.msra.mxu0 0
    %6321 = vmatprep.mubr.bf16.mxu0 0
    %6322 = vmatmul.mubr.bf16.gmra.mxu0 %v6000
    %v6323 = vpop.f32.mrf.mxu0
    %v6324 = vadd.f32 0.0, %v6323
    %v6325 = vpop.f32.mrf.mxu0
    %v6326 = vadd.f32 0.0, %v6325
    %v6327 = vpop.f32.mrf.mxu0
    %v6328 = vpop.f32.mrf.mxu0
    %6329 = vdwg.mxu0
    %6330 = vmatprep.subr.bf16.mxu0 %v6238
    %6331 = vmatpush1.bf16.msra.mxu0 %v6237
    %6332 = vmatprep.subr.bf16.mxu0 %v6232
    %6333 = vmatpush1.bf16.msra.mxu0 %v6231
    %6334 = vmatprep.subr.bf16.mxu0 %v6226
    %6335 = vmatpush1.bf16.msra.mxu0 %v6225
    %6336 = vmatprep.subr.bf16.mxu0 %v6220
    %6337 = vmatpush1.bf16.msra.mxu0 %v6219
    %6338 = vmatprep.subr.bf16.mxu0 %v6214
    %6339 = vmatpush1.bf16.msra.mxu0 %v6213
    %6340 = vmatprep.subr.bf16.mxu0 %v6208
    %6341 = vmatpush1.bf16.msra.mxu0 %v6207
    %6342 = vmatprep.subr.bf16.mxu0 %v6202
    %6343 = vmatpush1.bf16.msra.mxu0 %v6201
    %6344 = vmatprep.subr.bf16.mxu0 %v6196
    %6345 = vmatpush1.bf16.msra.mxu0 %v6195
    %6346 = vmatprep.subr.bf16.mxu0 0
    %6347 = vmatpush2.bf16.msra.mxu0 0
    %6348 = vmatprep.subr.bf16.mxu0 0
    %6349 = vmatpush2.bf16.msra.mxu0 0
    %6350 = vmatprep.subr.bf16.mxu0 0
    %6351 = vmatpush2.bf16.msra.mxu0 0
    %6352 = vmatprep.subr.bf16.mxu0 0
    %6353 = vmatpush2.bf16.msra.mxu0 0
    %6354 = vmatprep.subr.bf16.mxu0 0
    %6355 = vmatpush2.bf16.msra.mxu0 0
    %6356 = vmatprep.subr.bf16.mxu0 0
    %6357 = vmatpush2.bf16.msra.mxu0 0
    %6358 = vmatprep.subr.bf16.mxu0 0
    %6359 = vmatpush2.bf16.msra.mxu0 0
    %6360 = vmatprep.subr.bf16.mxu0 0
    %6361 = vmatpush2.bf16.msra.mxu0 0
    %6362 = vmatprep.mubr.bf16.mxu0 0
    %6363 = vmatmul.mubr.bf16.gmra.mxu0 %v6000
    %v6364 = vpop.f32.mrf.mxu0
    %v6365 = vadd.f32 0.0, %v6364
    %v6366 = vpop.f32.mrf.mxu0
    %v6367 = vadd.f32 0.0, %v6366
    %v6368 = vpop.f32.mrf.mxu0
    %v6369 = vpop.f32.mrf.mxu0
    %6370 = vdwg.mxu0
    %6371 = vmatprep.subr.bf16.mxu0 %v6240
    %6372 = vmatpush1.bf16.msra.mxu0 %v6239
    %6373 = vmatprep.subr.bf16.mxu0 %v6234
    %6374 = vmatpush1.bf16.msra.mxu0 %v6233
    %6375 = vmatprep.subr.bf16.mxu0 %v6228
    %6376 = vmatpush1.bf16.msra.mxu0 %v6227
    %6377 = vmatprep.subr.bf16.mxu0 %v6222
    %6378 = vmatpush1.bf16.msra.mxu0 %v6221
    %6379 = vmatprep.subr.bf16.mxu0 %v6216
    %6380 = vmatpush1.bf16.msra.mxu0 %v6215
    %6381 = vmatprep.subr.bf16.mxu0 %v6210
    %6382 = vmatpush1.bf16.msra.mxu0 %v6209
    %6383 = vmatprep.subr.bf16.mxu0 %v6204
    %6384 = vmatpush1.bf16.msra.mxu0 %v6203
    %6385 = vmatprep.subr.bf16.mxu0 %v6198
    %6386 = vmatpush1.bf16.msra.mxu0 %v6197
    %6387 = vmatprep.subr.bf16.mxu0 0
    %6388 = vmatpush2.bf16.msra.mxu0 0
    %6389 = vmatprep.subr.bf16.mxu0 0
    %6390 = vmatpush2.bf16.msra.mxu0 0
    %6391 = vmatprep.subr.bf16.mxu0 0
    %6392 = vmatpush2.bf16.msra.mxu0 0
    %6393 = vmatprep.subr.bf16.mxu0 0
    %6394 = vmatpush2.bf16.msra.mxu0 0
    %6395 = vmatprep.subr.bf16.mxu0 0
    %6396 = vmatpush2.bf16.msra.mxu0 0
    %6397 = vmatprep.subr.bf16.mxu0 0
    %6398 = vmatpush2.bf16.msra.mxu0 0
    %6399 = vmatprep.subr.bf16.mxu0 0
    %6400 = vmatpush2.bf16.msra.mxu0 0
    %6401 = vmatprep.subr.bf16.mxu0 0
    %6402 = vmatpush2.bf16.msra.mxu0 0
    %6403 = vmatprep.mubr.bf16.mxu0 0
    %6404 = vmatmul.mubr.bf16.gmra.mxu0 %v6000
    %v6405 = vpop.f32.mrf.mxu0
    %v6406 = vadd.f32 0.0, %v6405
    %v6407 = vpop.f32.mrf.mxu0
    %v6408 = vadd.f32 0.0, %v6407
    %v6409 = vpop.f32.mrf.mxu0
    %v6410 = vpop.f32.mrf.mxu0
    %6411 = vdwg.mxu0
    %v6412 = vadd.f32 %v6324, %v114
    %6413 = vmax.xlane.f32.xlu0 %v6412
    %v6414 = vpop.xlane.xlu0 %6413
    %v6415 = vsub.f32 %v6412, %v6414
    %v6416 = vmul.f32 %v6415, 1.442695
    %v6417 = vpow.pop %v6416
    %6418 = vadd.xlane.f32.xlu0 %v6417
    %v6419 = vpop.xlane.xlu0 %6418
    %v6420 = vrcp.pop %v6419
    %v6421 = vmul.f32 %v6417, %v6420
    %s6422 = scalar_lea.vmem [#allocation15], 24
    %6423 = vst [vmem:[%s6422] sm:$0xff] %v6421
    %v6424 = vpack.c.bf16 %v6421, %v6421
    %v6425 = vld [vmem:[#allocation12] sm:$0xff]
    %v6426 = vld [vmem:[#allocation12 + $0x8] sm:$0xff]
    %v6427 = vld [vmem:[#allocation12 + $0x10] sm:$0xf]
    %v6428 = vld [vmem:[#allocation12 + $0x14] sm:$0xff]
    %v6429 = vld [vmem:[#allocation12 + $0x1c] sm:$0xff]
    %v6430 = vld [vmem:[#allocation12 + $0x24] sm:$0xf]
    %v6431 = vld [vmem:[#allocation12 + $0x28] sm:$0xff]
    %v6432 = vld [vmem:[#allocation12 + $0x30] sm:$0xff]
    %v6433 = vld [vmem:[#allocation12 + $0x38] sm:$0xf]
    %v6434 = vld [vmem:[#allocation12 + $0x3c] sm:$0xff]
    %v6435 = vld [vmem:[#allocation12 + $0x44] sm:$0xff]
    %v6436 = vld [vmem:[#allocation12 + $0x4c] sm:$0xf]
    %v6437 = vld [vmem:[#allocation12 + $0x50] sm:$0xff]
    %v6438 = vld [vmem:[#allocation12 + $0x58] sm:$0xff]
    %v6439 = vld [vmem:[#allocation12 + $0x60] sm:$0xf]
    %v6440 = vld [vmem:[#allocation12 + $0x64] sm:$0xff]
    %v6441 = vld [vmem:[#allocation12 + $0x6c] sm:$0xff]
    %v6442 = vld [vmem:[#allocation12 + $0x74] sm:$0xf]
    %v6443 = vld [vmem:[#allocation12 + $0x78] sm:$0xff]
    %v6444 = vld [vmem:[#allocation12 + $0x80] sm:$0xff]
    %v6445 = vld [vmem:[#allocation12 + $0x88] sm:$0xf]
    %v6446 = vld [vmem:[#allocation12 + $0x8c] sm:$0xff]
    %v6447 = vld [vmem:[#allocation12 + $0x94] sm:$0xff]
    %v6448 = vld [vmem:[#allocation12 + $0x9c] sm:$0xf]
    %v6449 = vld [vmem:[#allocation12 + $0xa0] sm:$0xff]
    %v6450 = vld [vmem:[#allocation12 + $0xa8] sm:$0xff]
    %v6451 = vld [vmem:[#allocation12 + $0xb0] sm:$0xf]
    %v6452 = vld [vmem:[#allocation12 + $0xb4] sm:$0xff]
    %v6453 = vld [vmem:[#allocation12 + $0xbc] sm:$0xff]
    %v6454 = vld [vmem:[#allocation12 + $0xc4] sm:$0xf]
    %v6455 = vld [vmem:[#allocation12 + $0xc8] sm:$0xff]
    %v6456 = vld [vmem:[#allocation12 + $0xd0] sm:$0xff]
    %v6457 = vld [vmem:[#allocation12 + $0xd8] sm:$0xf]
    %v6458 = vld [vmem:[#allocation12 + $0xdc] sm:$0xff]
    %v6459 = vld [vmem:[#allocation12 + $0xe4] sm:$0xff]
    %v6460 = vld [vmem:[#allocation12 + $0xec] sm:$0xf]
    %v6461 = vld [vmem:[#allocation12 + $0xf0] sm:$0xff]
    %v6462 = vld [vmem:[#allocation12 + $0xf8] sm:$0xff]
    %v6463 = vld [vmem:[#allocation12 + $0x100] sm:$0xf]
    %v6464 = vld [vmem:[#allocation12 + $0x104] sm:$0xff]
    %v6465 = vld [vmem:[#allocation12 + $0x10c] sm:$0xff]
    %v6466 = vld [vmem:[#allocation12 + $0x114] sm:$0xf]
    %v6467 = vld [vmem:[#allocation12 + $0x118] sm:$0xff]
    %v6468 = vld [vmem:[#allocation12 + $0x120] sm:$0xff]
    %v6469 = vld [vmem:[#allocation12 + $0x128] sm:$0xf]
    %v6470 = vld [vmem:[#allocation12 + $0x12c] sm:$0xff]
    %v6471 = vld [vmem:[#allocation12 + $0x134] sm:$0xff]
    %v6472 = vld [vmem:[#allocation12 + $0x13c] sm:$0xf]
    %v6521 = vunpack.c.l.b16 %v6425
    %v6522 = vunpack.c.h.b16 %v6425
    %v6523 = vunpack.c.l.b16 %v6426
    %v6524 = vunpack.c.h.b16 %v6426
    %v6525 = vunpack.c.l.b16 %v6427
    %v6526 = vunpack.c.l.b16 %v6428
    %v6527 = vunpack.c.h.b16 %v6428
    %v6528 = vunpack.c.l.b16 %v6429
    %v6529 = vunpack.c.h.b16 %v6429
    %v6530 = vunpack.c.l.b16 %v6430
    %v6531 = vunpack.c.l.b16 %v6431
    %v6532 = vunpack.c.h.b16 %v6431
    %v6533 = vunpack.c.l.b16 %v6432
    %v6534 = vunpack.c.h.b16 %v6432
    %v6535 = vunpack.c.l.b16 %v6433
    %v6536 = vunpack.c.l.b16 %v6434
    %v6537 = vunpack.c.h.b16 %v6434
    %v6538 = vunpack.c.l.b16 %v6435
    %v6539 = vunpack.c.h.b16 %v6435
    %v6540 = vunpack.c.l.b16 %v6436
    %v6541 = vunpack.c.l.b16 %v6437
    %v6542 = vunpack.c.h.b16 %v6437
    %v6543 = vunpack.c.l.b16 %v6438
    %v6544 = vunpack.c.h.b16 %v6438
    %v6545 = vunpack.c.l.b16 %v6439
    %v6546 = vunpack.c.l.b16 %v6440
    %v6547 = vunpack.c.h.b16 %v6440
    %v6548 = vunpack.c.l.b16 %v6441
    %v6549 = vunpack.c.h.b16 %v6441
    %v6550 = vunpack.c.l.b16 %v6442
    %v6551 = vunpack.c.l.b16 %v6443
    %v6552 = vunpack.c.h.b16 %v6443
    %v6553 = vunpack.c.l.b16 %v6444
    %v6554 = vunpack.c.h.b16 %v6444
    %v6555 = vunpack.c.l.b16 %v6445
    %v6556 = vunpack.c.l.b16 %v6446
    %v6557 = vunpack.c.h.b16 %v6446
    %v6558 = vunpack.c.l.b16 %v6447
    %v6559 = vunpack.c.h.b16 %v6447
    %v6560 = vunpack.c.l.b16 %v6448
    %v6561 = vunpack.c.l.b16 %v6449
    %v6562 = vunpack.c.h.b16 %v6449
    %v6563 = vunpack.c.l.b16 %v6450
    %v6564 = vunpack.c.h.b16 %v6450
    %v6565 = vunpack.c.l.b16 %v6451
    %v6566 = vunpack.c.l.b16 %v6452
    %v6567 = vunpack.c.h.b16 %v6452
    %v6568 = vunpack.c.l.b16 %v6453
    %v6569 = vunpack.c.h.b16 %v6453
    %v6570 = vunpack.c.l.b16 %v6454
    %v6571 = vunpack.c.l.b16 %v6455
    %v6572 = vunpack.c.h.b16 %v6455
    %v6573 = vunpack.c.l.b16 %v6456
    %v6574 = vunpack.c.h.b16 %v6456
    %v6575 = vunpack.c.l.b16 %v6457
    %v6576 = vunpack.c.l.b16 %v6458
    %v6577 = vunpack.c.h.b16 %v6458
    %v6578 = vunpack.c.l.b16 %v6459
    %v6579 = vunpack.c.h.b16 %v6459
    %v6580 = vunpack.c.l.b16 %v6460
    %v6581 = vunpack.c.l.b16 %v6461
    %v6582 = vunpack.c.h.b16 %v6461
    %v6583 = vunpack.c.l.b16 %v6462
    %v6584 = vunpack.c.h.b16 %v6462
    %v6585 = vunpack.c.l.b16 %v6463
    %v6586 = vunpack.c.l.b16 %v6464
    %v6587 = vunpack.c.h.b16 %v6464
    %v6588 = vunpack.c.l.b16 %v6465
    %v6589 = vunpack.c.h.b16 %v6465
    %v6590 = vunpack.c.l.b16 %v6466
    %v6591 = vunpack.c.l.b16 %v6467
    %v6592 = vunpack.c.h.b16 %v6467
    %v6593 = vunpack.c.l.b16 %v6468
    %v6594 = vunpack.c.h.b16 %v6468
    %v6595 = vunpack.c.l.b16 %v6469
    %v6596 = vunpack.c.l.b16 %v6470
    %v6597 = vunpack.c.h.b16 %v6470
    %v6598 = vunpack.c.l.b16 %v6471
    %v6599 = vunpack.c.h.b16 %v6471
    %v6600 = vunpack.c.l.b16 %v6472
    %v6601 = vpack.c.b16 %v6526, %v6521
    %v6602 = vpack.c.b16 %v6527, %v6522
    %v6603 = vpack.c.b16 %v6528, %v6523
    %v6604 = vpack.c.b16 %v6529, %v6524
    %v6605 = vpack.c.b16 %v6530, %v6525
    %v6606 = vpack.c.b16 %v6536, %v6531
    %v6607 = vpack.c.b16 %v6537, %v6532
    %v6608 = vpack.c.b16 %v6538, %v6533
    %v6609 = vpack.c.b16 %v6539, %v6534
    %v6610 = vpack.c.b16 %v6540, %v6535
    %v6611 = vpack.c.b16 %v6546, %v6541
    %v6612 = vpack.c.b16 %v6547, %v6542
    %v6613 = vpack.c.b16 %v6548, %v6543
    %v6614 = vpack.c.b16 %v6549, %v6544
    %v6615 = vpack.c.b16 %v6550, %v6545
    %v6616 = vpack.c.b16 %v6556, %v6551
    %v6617 = vpack.c.b16 %v6557, %v6552
    %v6618 = vpack.c.b16 %v6558, %v6553
    %v6619 = vpack.c.b16 %v6559, %v6554
    %v6620 = vpack.c.b16 %v6560, %v6555
    %v6621 = vpack.c.b16 %v6566, %v6561
    %v6622 = vpack.c.b16 %v6567, %v6562
    %v6623 = vpack.c.b16 %v6568, %v6563
    %v6624 = vpack.c.b16 %v6569, %v6564
    %v6625 = vpack.c.b16 %v6570, %v6565
    %v6626 = vpack.c.b16 %v6576, %v6571
    %v6627 = vpack.c.b16 %v6577, %v6572
    %v6628 = vpack.c.b16 %v6578, %v6573
    %v6629 = vpack.c.b16 %v6579, %v6574
    %v6630 = vpack.c.b16 %v6580, %v6575
    %v6631 = vpack.c.b16 %v6586, %v6581
    %v6632 = vpack.c.b16 %v6587, %v6582
    %v6633 = vpack.c.b16 %v6588, %v6583
    %v6634 = vpack.c.b16 %v6589, %v6584
    %v6635 = vpack.c.b16 %v6590, %v6585
    %v6636 = vpack.c.b16 %v6596, %v6591
    %v6637 = vpack.c.b16 %v6597, %v6592
    %v6638 = vpack.c.b16 %v6598, %v6593
    %v6639 = vpack.c.b16 %v6599, %v6594
    %v6640 = vpack.c.b16 %v6600, %v6595
    %6681 = vmatprep.subr.bf16.mxu0 %v6637
    %6682 = vmatpush1.bf16.msra.mxu0 %v6636
    %6683 = vmatprep.subr.bf16.mxu0 %v6632
    %6684 = vmatpush1.bf16.msra.mxu0 %v6631
    %6685 = vmatprep.subr.bf16.mxu0 %v6627
    %6686 = vmatpush1.bf16.msra.mxu0 %v6626
    %6687 = vmatprep.subr.bf16.mxu0 %v6622
    %6688 = vmatpush1.bf16.msra.mxu0 %v6621
    %6689 = vmatprep.subr.bf16.mxu0 %v6617
    %6690 = vmatpush1.bf16.msra.mxu0 %v6616
    %6691 = vmatprep.subr.bf16.mxu0 %v6612
    %6692 = vmatpush1.bf16.msra.mxu0 %v6611
    %6693 = vmatprep.subr.bf16.mxu0 %v6607
    %6694 = vmatpush1.bf16.msra.mxu0 %v6606
    %6695 = vmatprep.subr.bf16.mxu0 %v6602
    %6696 = vmatpush1.bf16.msra.mxu0 %v6601
    %6697 = vmatprep.subr.bf16.mxu0 0
    %6698 = vmatpush2.bf16.msra.mxu0 0
    %6699 = vmatprep.subr.bf16.mxu0 0
    %6700 = vmatpush2.bf16.msra.mxu0 0
    %6701 = vmatprep.subr.bf16.mxu0 0
    %6702 = vmatpush2.bf16.msra.mxu0 0
    %6703 = vmatprep.subr.bf16.mxu0 0
    %6704 = vmatpush2.bf16.msra.mxu0 0
    %6705 = vmatprep.subr.bf16.mxu0 0
    %6706 = vmatpush2.bf16.msra.mxu0 0
    %6707 = vmatprep.subr.bf16.mxu0 0
    %6708 = vmatpush2.bf16.msra.mxu0 0
    %6709 = vmatprep.subr.bf16.mxu0 0
    %6710 = vmatpush2.bf16.msra.mxu0 0
    %6711 = vmatprep.subr.bf16.mxu0 0
    %6712 = vmatpush2.bf16.msra.mxu0 0
    %6713 = vmatprep.mubr.bf16.mxu0 0
    %6714 = vmatmul.mubr.bf16.gmra.mxu0 %v6424
    %v6715 = vpop.f32.mrf.mxu0
    %v6716 = vadd.f32 0.0, %v6715
    %v6717 = vpop.f32.mrf.mxu0
    %v6718 = vadd.f32 0.0, %v6717
    %v6719 = vpop.f32.mrf.mxu0
    %v6720 = vpop.f32.mrf.mxu0
    %6721 = vdwg.mxu0
    %6722 = vmatprep.subr.bf16.mxu0 %v6639
    %6723 = vmatpush1.bf16.msra.mxu0 %v6638
    %6724 = vmatprep.subr.bf16.mxu0 %v6634
    %6725 = vmatpush1.bf16.msra.mxu0 %v6633
    %6726 = vmatprep.subr.bf16.mxu0 %v6629
    %6727 = vmatpush1.bf16.msra.mxu0 %v6628
    %6728 = vmatprep.subr.bf16.mxu0 %v6624
    %6729 = vmatpush1.bf16.msra.mxu0 %v6623
    %6730 = vmatprep.subr.bf16.mxu0 %v6619
    %6731 = vmatpush1.bf16.msra.mxu0 %v6618
    %6732 = vmatprep.subr.bf16.mxu0 %v6614
    %6733 = vmatpush1.bf16.msra.mxu0 %v6613
    %6734 = vmatprep.subr.bf16.mxu0 %v6609
    %6735 = vmatpush1.bf16.msra.mxu0 %v6608
    %6736 = vmatprep.subr.bf16.mxu0 %v6604
    %6737 = vmatpush1.bf16.msra.mxu0 %v6603
    %6738 = vmatprep.subr.bf16.mxu0 0
    %6739 = vmatpush2.bf16.msra.mxu0 0
    %6740 = vmatprep.subr.bf16.mxu0 0
    %6741 = vmatpush2.bf16.msra.mxu0 0
    %6742 = vmatprep.subr.bf16.mxu0 0
    %6743 = vmatpush2.bf16.msra.mxu0 0
    %6744 = vmatprep.subr.bf16.mxu0 0
    %6745 = vmatpush2.bf16.msra.mxu0 0
    %6746 = vmatprep.subr.bf16.mxu0 0
    %6747 = vmatpush2.bf16.msra.mxu0 0
    %6748 = vmatprep.subr.bf16.mxu0 0
    %6749 = vmatpush2.bf16.msra.mxu0 0
    %6750 = vmatprep.subr.bf16.mxu0 0
    %6751 = vmatpush2.bf16.msra.mxu0 0
    %6752 = vmatprep.subr.bf16.mxu0 0
    %6753 = vmatpush2.bf16.msra.mxu0 0
    %6754 = vmatprep.mubr.bf16.mxu0 0
    %6755 = vmatmul.mubr.bf16.gmra.mxu0 %v6424
    %v6756 = vpop.f32.mrf.mxu0
    %v6757 = vadd.f32 0.0, %v6756
    %v6758 = vpop.f32.mrf.mxu0
    %v6759 = vadd.f32 0.0, %v6758
    %v6760 = vpop.f32.mrf.mxu0
    %v6761 = vpop.f32.mrf.mxu0
    %6762 = vdwg.mxu0
    %6763 = vmatprep.subr.bf16.mxu0 0
    %6764 = vmatpush1.bf16.msra.mxu0 %v6640
    %6765 = vmatprep.subr.bf16.mxu0 0
    %6766 = vmatpush1.bf16.msra.mxu0 %v6635
    %6767 = vmatprep.subr.bf16.mxu0 0
    %6768 = vmatpush1.bf16.msra.mxu0 %v6630
    %6769 = vmatprep.subr.bf16.mxu0 0
    %6770 = vmatpush1.bf16.msra.mxu0 %v6625
    %6771 = vmatprep.subr.bf16.mxu0 0
    %6772 = vmatpush1.bf16.msra.mxu0 %v6620
    %6773 = vmatprep.subr.bf16.mxu0 0
    %6774 = vmatpush1.bf16.msra.mxu0 %v6615
    %6775 = vmatprep.subr.bf16.mxu0 0
    %6776 = vmatpush1.bf16.msra.mxu0 %v6610
    %6777 = vmatprep.subr.bf16.mxu0 0
    %6778 = vmatpush1.bf16.msra.mxu0 %v6605
    %6779 = vmatprep.subr.bf16.mxu0 0
    %6780 = vmatpush2.bf16.msra.mxu0 0
    %6781 = vmatprep.subr.bf16.mxu0 0
    %6782 = vmatpush2.bf16.msra.mxu0 0
    %6783 = vmatprep.subr.bf16.mxu0 0
    %6784 = vmatpush2.bf16.msra.mxu0 0
    %6785 = vmatprep.subr.bf16.mxu0 0
    %6786 = vmatpush2.bf16.msra.mxu0 0
    %6787 = vmatprep.subr.bf16.mxu0 0
    %6788 = vmatpush2.bf16.msra.mxu0 0
    %6789 = vmatprep.subr.bf16.mxu0 0
    %6790 = vmatpush2.bf16.msra.mxu0 0
    %6791 = vmatprep.subr.bf16.mxu0 0
    %6792 = vmatpush2.bf16.msra.mxu0 0
    %6793 = vmatprep.subr.bf16.mxu0 0
    %6794 = vmatpush2.bf16.msra.mxu0 0
    %6795 = vmatprep.mubr.bf16.mxu0 0
    %6796 = vmatmul.mubr.bf16.gmra.mxu0 %v6424
    %v6797 = vpop.f32.mrf.mxu0
    %v6798 = vadd.f32 0.0, %v6797
    %v6799 = vpop.f32.mrf.mxu0
    %v6800 = vpop.f32.mrf.mxu0
    %v6801 = vpop.f32.mrf.mxu0
    %6802 = vdwg.mxu0
    %v6803 = vadd.f32 %v6326, %v6716
    %s6804 = scalar_lea.vmem [#allocation14], 24
    %6805 = vst [vmem:[%s6804] sm:$0xff] %v6803
    %v6806 = vld [vmem:[#allocation2 + $0x80] sm:$0xff]
    %v6807 = vld [vmem:[#allocation2 + $0x88] sm:$0xff]
    %v6808 = vld [vmem:[#allocation2 + $0x90] sm:$0xff]
    %v6809 = vld [vmem:[#allocation2 + $0x98] sm:$0xff]
    %v6810 = vadd.f32 %v6806, %v6718
    %v6811 = vadd.f32 %v6807, %v6757
    %v6812 = vadd.f32 %v6808, %v6759
    %v6813 = vadd.f32 %v6809, %v6798
    %v6814 = vadd.f32 %v6810, %v5921
    %v6815 = vadd.f32 %v6811, %v5923
    %v6816 = vadd.f32 %v6812, %v5962
    %v6817 = vadd.f32 %v6813, %v5964
    %v6818 = vxor.u32 %v6814, 2147483648
    %v6819 = vmul.f32 %v6818, 1.442695
    %v6820 = vpow.pop %v6819
    %v6821 = vadd.f32 %v6820, 1.0
    %v6822 = vrcp.pop %v6821
    %v6823 = vmul.f32 1.0, %v6822
    %v6824 = vxor.u32 %v6815, 2147483648
    %v6825 = vmul.f32 %v6824, 1.442695
    %v6826 = vpow.pop %v6825
    %v6827 = vadd.f32 %v6826, 1.0
    %v6828 = vrcp.pop %v6827
    %v6829 = vmul.f32 1.0, %v6828
    %v6830 = vtanh.pop %v6816
    %v6831 = vxor.u32 %v6817, 2147483648
    %v6832 = vmul.f32 %v6831, 1.442695
    %v6833 = vpow.pop %v6832
    %v6834 = vadd.f32 %v6833, 1.0
    %v6835 = vrcp.pop %v6834
    %v6836 = vmul.f32 1.0, %v6835
    %v6837 = vmul.f32 %v6829, %v5416
    %v6838 = vmul.f32 %v6823, %v6830
    %v6839 = vadd.f32 %v6837, %v6838
    %v6840 = vtanh.pop %v6839
    %v6841 = vmul.f32 %v6836, %v6840
    %v6842 = vpack.c.bf16 %v6841, %v6841
    %v6843 = vld [vmem:[#allocation9] sm:$0xff]
    %v6844 = vld [vmem:[#allocation9 + $0x8] sm:$0xff]
    %v6845 = vld [vmem:[#allocation9 + $0x10] sm:$0xff]
    %v6846 = vld [vmem:[#allocation9 + $0x18] sm:$0xff]
    %v6847 = vld [vmem:[#allocation9 + $0x20] sm:$0xff]
    %v6848 = vld [vmem:[#allocation9 + $0x28] sm:$0xff]
    %v6849 = vld [vmem:[#allocation9 + $0x30] sm:$0xff]
    %v6850 = vld [vmem:[#allocation9 + $0x38] sm:$0xff]
    %v6851 = vld [vmem:[#allocation9 + $0x40] sm:$0xff]
    %v6852 = vld [vmem:[#allocation9 + $0x48] sm:$0xff]
    %v6853 = vld [vmem:[#allocation9 + $0x50] sm:$0xff]
    %v6854 = vld [vmem:[#allocation9 + $0x58] sm:$0xff]
    %v6855 = vld [vmem:[#allocation9 + $0x60] sm:$0xff]
    %v6856 = vld [vmem:[#allocation9 + $0x68] sm:$0xff]
    %v6857 = vld [vmem:[#allocation9 + $0x70] sm:$0xff]
    %v6858 = vld [vmem:[#allocation9 + $0x78] sm:$0xff]
    %v6859 = vld [vmem:[#allocation9 + $0x80] sm:$0xff]
    %v6860 = vld [vmem:[#allocation9 + $0x88] sm:$0xff]
    %v6861 = vld [vmem:[#allocation9 + $0x90] sm:$0xff]
    %v6862 = vld [vmem:[#allocation9 + $0x98] sm:$0xff]
    %v6863 = vld [vmem:[#allocation9 + $0xa0] sm:$0xff]
    %v6864 = vld [vmem:[#allocation9 + $0xa8] sm:$0xff]
    %v6865 = vld [vmem:[#allocation9 + $0xb0] sm:$0xff]
    %v6866 = vld [vmem:[#allocation9 + $0xb8] sm:$0xff]
    %v6867 = vld [vmem:[#allocation9 + $0xc0] sm:$0xff]
    %v6868 = vld [vmem:[#allocation9 + $0xc8] sm:$0xff]
    %v6869 = vld [vmem:[#allocation9 + $0xd0] sm:$0xff]
    %v6870 = vld [vmem:[#allocation9 + $0xd8] sm:$0xff]
    %v6871 = vld [vmem:[#allocation9 + $0xe0] sm:$0xff]
    %v6872 = vld [vmem:[#allocation9 + $0xe8] sm:$0xff]
    %v6873 = vld [vmem:[#allocation9 + $0xf0] sm:$0xff]
    %v6874 = vld [vmem:[#allocation9 + $0xf8] sm:$0xff]
    %v6875 = vld [vmem:[#allocation9 + $0x100] sm:$0xff]
    %v6876 = vld [vmem:[#allocation9 + $0x108] sm:$0xff]
    %v6877 = vld [vmem:[#allocation9 + $0x110] sm:$0xff]
    %v6878 = vld [vmem:[#allocation9 + $0x118] sm:$0xff]
    %v6879 = vld [vmem:[#allocation9 + $0x120] sm:$0xff]
    %v6880 = vld [vmem:[#allocation9 + $0x128] sm:$0xff]
    %v6881 = vld [vmem:[#allocation9 + $0x130] sm:$0xff]
    %v6882 = vld [vmem:[#allocation9 + $0x138] sm:$0xff]
    %v6883 = vld [vmem:[#allocation9 + $0x140] sm:$0xff]
    %v6884 = vld [vmem:[#allocation9 + $0x148] sm:$0xff]
    %v6885 = vld [vmem:[#allocation9 + $0x150] sm:$0xff]
    %v6886 = vld [vmem:[#allocation9 + $0x158] sm:$0xff]
    %v6887 = vld [vmem:[#allocation9 + $0x160] sm:$0xff]
    %v6888 = vld [vmem:[#allocation9 + $0x168] sm:$0xff]
    %v6889 = vld [vmem:[#allocation9 + $0x170] sm:$0xff]
    %v6890 = vld [vmem:[#allocation9 + $0x178] sm:$0xff]
    %v6891 = vld [vmem:[#allocation9 + $0x180] sm:$0xff]
    %v6892 = vld [vmem:[#allocation9 + $0x188] sm:$0xff]
    %v6893 = vld [vmem:[#allocation9 + $0x190] sm:$0xff]
    %v6894 = vld [vmem:[#allocation9 + $0x198] sm:$0xff]
    %v6895 = vld [vmem:[#allocation9 + $0x1a0] sm:$0xff]
    %v6896 = vld [vmem:[#allocation9 + $0x1a8] sm:$0xff]
    %v6897 = vld [vmem:[#allocation9 + $0x1b0] sm:$0xff]
    %v6898 = vld [vmem:[#allocation9 + $0x1b8] sm:$0xff]
    %v6899 = vld [vmem:[#allocation9 + $0x1c0] sm:$0xff]
    %v6900 = vld [vmem:[#allocation9 + $0x1c8] sm:$0xff]
    %v6901 = vld [vmem:[#allocation9 + $0x1d0] sm:$0xff]
    %v6902 = vld [vmem:[#allocation9 + $0x1d8] sm:$0xff]
    %v6903 = vld [vmem:[#allocation9 + $0x1e0] sm:$0xff]
    %v6904 = vld [vmem:[#allocation9 + $0x1e8] sm:$0xff]
    %v6905 = vld [vmem:[#allocation9 + $0x1f0] sm:$0xff]
    %v6906 = vld [vmem:[#allocation9 + $0x1f8] sm:$0xff]
    %v6971 = vunpack.c.l.b16 %v6843
    %v6972 = vunpack.c.h.b16 %v6843
    %v6973 = vunpack.c.l.b16 %v6844
    %v6974 = vunpack.c.h.b16 %v6844
    %v6975 = vunpack.c.l.b16 %v6845
    %v6976 = vunpack.c.h.b16 %v6845
    %v6977 = vunpack.c.l.b16 %v6846
    %v6978 = vunpack.c.h.b16 %v6846
    %v6979 = vunpack.c.l.b16 %v6847
    %v6980 = vunpack.c.h.b16 %v6847
    %v6981 = vunpack.c.l.b16 %v6848
    %v6982 = vunpack.c.h.b16 %v6848
    %v6983 = vunpack.c.l.b16 %v6849
    %v6984 = vunpack.c.h.b16 %v6849
    %v6985 = vunpack.c.l.b16 %v6850
    %v6986 = vunpack.c.h.b16 %v6850
    %v6987 = vunpack.c.l.b16 %v6851
    %v6988 = vunpack.c.h.b16 %v6851
    %v6989 = vunpack.c.l.b16 %v6852
    %v6990 = vunpack.c.h.b16 %v6852
    %v6991 = vunpack.c.l.b16 %v6853
    %v6992 = vunpack.c.h.b16 %v6853
    %v6993 = vunpack.c.l.b16 %v6854
    %v6994 = vunpack.c.h.b16 %v6854
    %v6995 = vunpack.c.l.b16 %v6855
    %v6996 = vunpack.c.h.b16 %v6855
    %v6997 = vunpack.c.l.b16 %v6856
    %v6998 = vunpack.c.h.b16 %v6856
    %v6999 = vunpack.c.l.b16 %v6857
    %v7000 = vunpack.c.h.b16 %v6857
    %v7001 = vunpack.c.l.b16 %v6858
    %v7002 = vunpack.c.h.b16 %v6858
    %v7003 = vunpack.c.l.b16 %v6859
    %v7004 = vunpack.c.h.b16 %v6859
    %v7005 = vunpack.c.l.b16 %v6860
    %v7006 = vunpack.c.h.b16 %v6860
    %v7007 = vunpack.c.l.b16 %v6861
    %v7008 = vunpack.c.h.b16 %v6861
    %v7009 = vunpack.c.l.b16 %v6862
    %v7010 = vunpack.c.h.b16 %v6862
    %v7011 = vunpack.c.l.b16 %v6863
    %v7012 = vunpack.c.h.b16 %v6863
    %v7013 = vunpack.c.l.b16 %v6864
    %v7014 = vunpack.c.h.b16 %v6864
    %v7015 = vunpack.c.l.b16 %v6865
    %v7016 = vunpack.c.h.b16 %v6865
    %v7017 = vunpack.c.l.b16 %v6866
    %v7018 = vunpack.c.h.b16 %v6866
    %v7019 = vunpack.c.l.b16 %v6867
    %v7020 = vunpack.c.h.b16 %v6867
    %v7021 = vunpack.c.l.b16 %v6868
    %v7022 = vunpack.c.h.b16 %v6868
    %v7023 = vunpack.c.l.b16 %v6869
    %v7024 = vunpack.c.h.b16 %v6869
    %v7025 = vunpack.c.l.b16 %v6870
    %v7026 = vunpack.c.h.b16 %v6870
    %v7027 = vunpack.c.l.b16 %v6871
    %v7028 = vunpack.c.h.b16 %v6871
    %v7029 = vunpack.c.l.b16 %v6872
    %v7030 = vunpack.c.h.b16 %v6872
    %v7031 = vunpack.c.l.b16 %v6873
    %v7032 = vunpack.c.h.b16 %v6873
    %v7033 = vunpack.c.l.b16 %v6874
    %v7034 = vunpack.c.h.b16 %v6874
    %v7035 = vunpack.c.l.b16 %v6875
    %v7036 = vunpack.c.h.b16 %v6875
    %v7037 = vunpack.c.l.b16 %v6876
    %v7038 = vunpack.c.h.b16 %v6876
    %v7039 = vunpack.c.l.b16 %v6877
    %v7040 = vunpack.c.h.b16 %v6877
    %v7041 = vunpack.c.l.b16 %v6878
    %v7042 = vunpack.c.h.b16 %v6878
    %v7043 = vunpack.c.l.b16 %v6879
    %v7044 = vunpack.c.h.b16 %v6879
    %v7045 = vunpack.c.l.b16 %v6880
    %v7046 = vunpack.c.h.b16 %v6880
    %v7047 = vunpack.c.l.b16 %v6881
    %v7048 = vunpack.c.h.b16 %v6881
    %v7049 = vunpack.c.l.b16 %v6882
    %v7050 = vunpack.c.h.b16 %v6882
    %v7051 = vunpack.c.l.b16 %v6883
    %v7052 = vunpack.c.h.b16 %v6883
    %v7053 = vunpack.c.l.b16 %v6884
    %v7054 = vunpack.c.h.b16 %v6884
    %v7055 = vunpack.c.l.b16 %v6885
    %v7056 = vunpack.c.h.b16 %v6885
    %v7057 = vunpack.c.l.b16 %v6886
    %v7058 = vunpack.c.h.b16 %v6886
    %v7059 = vunpack.c.l.b16 %v6887
    %v7060 = vunpack.c.h.b16 %v6887
    %v7061 = vunpack.c.l.b16 %v6888
    %v7062 = vunpack.c.h.b16 %v6888
    %v7063 = vunpack.c.l.b16 %v6889
    %v7064 = vunpack.c.h.b16 %v6889
    %v7065 = vunpack.c.l.b16 %v6890
    %v7066 = vunpack.c.h.b16 %v6890
    %v7067 = vunpack.c.l.b16 %v6891
    %v7068 = vunpack.c.h.b16 %v6891
    %v7069 = vunpack.c.l.b16 %v6892
    %v7070 = vunpack.c.h.b16 %v6892
    %v7071 = vunpack.c.l.b16 %v6893
    %v7072 = vunpack.c.h.b16 %v6893
    %v7073 = vunpack.c.l.b16 %v6894
    %v7074 = vunpack.c.h.b16 %v6894
    %v7075 = vunpack.c.l.b16 %v6895
    %v7076 = vunpack.c.h.b16 %v6895
    %v7077 = vunpack.c.l.b16 %v6896
    %v7078 = vunpack.c.h.b16 %v6896
    %v7079 = vunpack.c.l.b16 %v6897
    %v7080 = vunpack.c.h.b16 %v6897
    %v7081 = vunpack.c.l.b16 %v6898
    %v7082 = vunpack.c.h.b16 %v6898
    %v7083 = vunpack.c.l.b16 %v6899
    %v7084 = vunpack.c.h.b16 %v6899
    %v7085 = vunpack.c.l.b16 %v6900
    %v7086 = vunpack.c.h.b16 %v6900
    %v7087 = vunpack.c.l.b16 %v6901
    %v7088 = vunpack.c.h.b16 %v6901
    %v7089 = vunpack.c.l.b16 %v6902
    %v7090 = vunpack.c.h.b16 %v6902
    %v7091 = vunpack.c.l.b16 %v6903
    %v7092 = vunpack.c.h.b16 %v6903
    %v7093 = vunpack.c.l.b16 %v6904
    %v7094 = vunpack.c.h.b16 %v6904
    %v7095 = vunpack.c.l.b16 %v6905
    %v7096 = vunpack.c.h.b16 %v6905
    %v7097 = vunpack.c.l.b16 %v6906
    %v7098 = vunpack.c.h.b16 %v6906
    %v7099 = vpack.c.b16 %v6979, %v6971
    %v7100 = vpack.c.b16 %v6980, %v6972
    %v7101 = vpack.c.b16 %v6981, %v6973
    %v7102 = vpack.c.b16 %v6982, %v6974
    %v7103 = vpack.c.b16 %v6983, %v6975
    %v7104 = vpack.c.b16 %v6984, %v6976
    %v7105 = vpack.c.b16 %v6985, %v6977
    %v7106 = vpack.c.b16 %v6986, %v6978
    %v7107 = vpack.c.b16 %v6995, %v6987
    %v7108 = vpack.c.b16 %v6996, %v6988
    %v7109 = vpack.c.b16 %v6997, %v6989
    %v7110 = vpack.c.b16 %v6998, %v6990
    %v7111 = vpack.c.b16 %v6999, %v6991
    %v7112 = vpack.c.b16 %v7000, %v6992
    %v7113 = vpack.c.b16 %v7001, %v6993
    %v7114 = vpack.c.b16 %v7002, %v6994
    %v7115 = vpack.c.b16 %v7011, %v7003
    %v7116 = vpack.c.b16 %v7012, %v7004
    %v7117 = vpack.c.b16 %v7013, %v7005
    %v7118 = vpack.c.b16 %v7014, %v7006
    %v7119 = vpack.c.b16 %v7015, %v7007
    %v7120 = vpack.c.b16 %v7016, %v7008
    %v7121 = vpack.c.b16 %v7017, %v7009
    %v7122 = vpack.c.b16 %v7018, %v7010
    %v7123 = vpack.c.b16 %v7027, %v7019
    %v7124 = vpack.c.b16 %v7028, %v7020
    %v7125 = vpack.c.b16 %v7029, %v7021
    %v7126 = vpack.c.b16 %v7030, %v7022
    %v7127 = vpack.c.b16 %v7031, %v7023
    %v7128 = vpack.c.b16 %v7032, %v7024
    %v7129 = vpack.c.b16 %v7033, %v7025
    %v7130 = vpack.c.b16 %v7034, %v7026
    %v7131 = vpack.c.b16 %v7043, %v7035
    %v7132 = vpack.c.b16 %v7044, %v7036
    %v7133 = vpack.c.b16 %v7045, %v7037
    %v7134 = vpack.c.b16 %v7046, %v7038
    %v7135 = vpack.c.b16 %v7047, %v7039
    %v7136 = vpack.c.b16 %v7048, %v7040
    %v7137 = vpack.c.b16 %v7049, %v7041
    %v7138 = vpack.c.b16 %v7050, %v7042
    %v7139 = vpack.c.b16 %v7059, %v7051
    %v7140 = vpack.c.b16 %v7060, %v7052
    %v7141 = vpack.c.b16 %v7061, %v7053
    %v7142 = vpack.c.b16 %v7062, %v7054
    %v7143 = vpack.c.b16 %v7063, %v7055
    %v7144 = vpack.c.b16 %v7064, %v7056
    %v7145 = vpack.c.b16 %v7065, %v7057
    %v7146 = vpack.c.b16 %v7066, %v7058
    %v7147 = vpack.c.b16 %v7075, %v7067
    %v7148 = vpack.c.b16 %v7076, %v7068
    %v7149 = vpack.c.b16 %v7077, %v7069
    %v7150 = vpack.c.b16 %v7078, %v7070
    %v7151 = vpack.c.b16 %v7079, %v7071
    %v7152 = vpack.c.b16 %v7080, %v7072
    %v7153 = vpack.c.b16 %v7081, %v7073
    %v7154 = vpack.c.b16 %v7082, %v7074
    %v7155 = vpack.c.b16 %v7091, %v7083
    %v7156 = vpack.c.b16 %v7092, %v7084
    %v7157 = vpack.c.b16 %v7093, %v7085
    %v7158 = vpack.c.b16 %v7094, %v7086
    %v7159 = vpack.c.b16 %v7095, %v7087
    %v7160 = vpack.c.b16 %v7096, %v7088
    %v7161 = vpack.c.b16 %v7097, %v7089
    %v7162 = vpack.c.b16 %v7098, %v7090
    %7227 = vmatprep.subr.bf16.mxu0 %v7156
    %7228 = vmatpush1.bf16.msra.mxu0 %v7155
    %7229 = vmatprep.subr.bf16.mxu0 %v7148
    %7230 = vmatpush1.bf16.msra.mxu0 %v7147
    %7231 = vmatprep.subr.bf16.mxu0 %v7140
    %7232 = vmatpush1.bf16.msra.mxu0 %v7139
    %7233 = vmatprep.subr.bf16.mxu0 %v7132
    %7234 = vmatpush1.bf16.msra.mxu0 %v7131
    %7235 = vmatprep.subr.bf16.mxu0 %v7124
    %7236 = vmatpush1.bf16.msra.mxu0 %v7123
    %7237 = vmatprep.subr.bf16.mxu0 %v7116
    %7238 = vmatpush1.bf16.msra.mxu0 %v7115
    %7239 = vmatprep.subr.bf16.mxu0 %v7108
    %7240 = vmatpush1.bf16.msra.mxu0 %v7107
    %7241 = vmatprep.subr.bf16.mxu0 %v7100
    %7242 = vmatpush1.bf16.msra.mxu0 %v7099
    %7243 = vmatprep.subr.bf16.mxu0 0
    %7244 = vmatpush2.bf16.msra.mxu0 0
    %7245 = vmatprep.subr.bf16.mxu0 0
    %7246 = vmatpush2.bf16.msra.mxu0 0
    %7247 = vmatprep.subr.bf16.mxu0 0
    %7248 = vmatpush2.bf16.msra.mxu0 0
    %7249 = vmatprep.subr.bf16.mxu0 0
    %7250 = vmatpush2.bf16.msra.mxu0 0
    %7251 = vmatprep.subr.bf16.mxu0 0
    %7252 = vmatpush2.bf16.msra.mxu0 0
    %7253 = vmatprep.subr.bf16.mxu0 0
    %7254 = vmatpush2.bf16.msra.mxu0 0
    %7255 = vmatprep.subr.bf16.mxu0 0
    %7256 = vmatpush2.bf16.msra.mxu0 0
    %7257 = vmatprep.subr.bf16.mxu0 0
    %7258 = vmatpush2.bf16.msra.mxu0 0
    %7259 = vmatprep.mubr.bf16.mxu0 0
    %7260 = vmatmul.mubr.bf16.gmra.mxu0 %v6842
    %v7261 = vpop.f32.mrf.mxu0
    %v7262 = vadd.f32 0.0, %v7261
    %v7263 = vpop.f32.mrf.mxu0
    %v7264 = vadd.f32 0.0, %v7263
    %v7265 = vpop.f32.mrf.mxu0
    %v7266 = vpop.f32.mrf.mxu0
    %7267 = vdwg.mxu0
    %7268 = vmatprep.subr.bf16.mxu0 %v7158
    %7269 = vmatpush1.bf16.msra.mxu0 %v7157
    %7270 = vmatprep.subr.bf16.mxu0 %v7150
    %7271 = vmatpush1.bf16.msra.mxu0 %v7149
    %7272 = vmatprep.subr.bf16.mxu0 %v7142
    %7273 = vmatpush1.bf16.msra.mxu0 %v7141
    %7274 = vmatprep.subr.bf16.mxu0 %v7134
    %7275 = vmatpush1.bf16.msra.mxu0 %v7133
    %7276 = vmatprep.subr.bf16.mxu0 %v7126
    %7277 = vmatpush1.bf16.msra.mxu0 %v7125
    %7278 = vmatprep.subr.bf16.mxu0 %v7118
    %7279 = vmatpush1.bf16.msra.mxu0 %v7117
    %7280 = vmatprep.subr.bf16.mxu0 %v7110
    %7281 = vmatpush1.bf16.msra.mxu0 %v7109
    %7282 = vmatprep.subr.bf16.mxu0 %v7102
    %7283 = vmatpush1.bf16.msra.mxu0 %v7101
    %7284 = vmatprep.subr.bf16.mxu0 0
    %7285 = vmatpush2.bf16.msra.mxu0 0
    %7286 = vmatprep.subr.bf16.mxu0 0
    %7287 = vmatpush2.bf16.msra.mxu0 0
    %7288 = vmatprep.subr.bf16.mxu0 0
    %7289 = vmatpush2.bf16.msra.mxu0 0
    %7290 = vmatprep.subr.bf16.mxu0 0
    %7291 = vmatpush2.bf16.msra.mxu0 0
    %7292 = vmatprep.subr.bf16.mxu0 0
    %7293 = vmatpush2.bf16.msra.mxu0 0
    %7294 = vmatprep.subr.bf16.mxu0 0
    %7295 = vmatpush2.bf16.msra.mxu0 0
    %7296 = vmatprep.subr.bf16.mxu0 0
    %7297 = vmatpush2.bf16.msra.mxu0 0
    %7298 = vmatprep.subr.bf16.mxu0 0
    %7299 = vmatpush2.bf16.msra.mxu0 0
    %7300 = vmatprep.mubr.bf16.mxu0 0
    %7301 = vmatmul.mubr.bf16.gmra.mxu0 %v6842
    %v7302 = vpop.f32.mrf.mxu0
    %v7303 = vadd.f32 0.0, %v7302
    %v7304 = vpop.f32.mrf.mxu0
    %v7305 = vadd.f32 0.0, %v7304
    %v7306 = vpop.f32.mrf.mxu0
    %v7307 = vpop.f32.mrf.mxu0
    %7308 = vdwg.mxu0
    %7309 = vmatprep.subr.bf16.mxu0 %v7160
    %7310 = vmatpush1.bf16.msra.mxu0 %v7159
    %7311 = vmatprep.subr.bf16.mxu0 %v7152
    %7312 = vmatpush1.bf16.msra.mxu0 %v7151
    %7313 = vmatprep.subr.bf16.mxu0 %v7144
    %7314 = vmatpush1.bf16.msra.mxu0 %v7143
    %7315 = vmatprep.subr.bf16.mxu0 %v7136
    %7316 = vmatpush1.bf16.msra.mxu0 %v7135
    %7317 = vmatprep.subr.bf16.mxu0 %v7128
    %7318 = vmatpush1.bf16.msra.mxu0 %v7127
    %7319 = vmatprep.subr.bf16.mxu0 %v7120
    %7320 = vmatpush1.bf16.msra.mxu0 %v7119
    %7321 = vmatprep.subr.bf16.mxu0 %v7112
    %7322 = vmatpush1.bf16.msra.mxu0 %v7111
    %7323 = vmatprep.subr.bf16.mxu0 %v7104
    %7324 = vmatpush1.bf16.msra.mxu0 %v7103
    %7325 = vmatprep.subr.bf16.mxu0 0
    %7326 = vmatpush2.bf16.msra.mxu0 0
    %7327 = vmatprep.subr.bf16.mxu0 0
    %7328 = vmatpush2.bf16.msra.mxu0 0
    %7329 = vmatprep.subr.bf16.mxu0 0
    %7330 = vmatpush2.bf16.msra.mxu0 0
    %7331 = vmatprep.subr.bf16.mxu0 0
    %7332 = vmatpush2.bf16.msra.mxu0 0
    %7333 = vmatprep.subr.bf16.mxu0 0
    %7334 = vmatpush2.bf16.msra.mxu0 0
    %7335 = vmatprep.subr.bf16.mxu0 0
    %7336 = vmatpush2.bf16.msra.mxu0 0
    %7337 = vmatprep.subr.bf16.mxu0 0
    %7338 = vmatpush2.bf16.msra.mxu0 0
    %7339 = vmatprep.subr.bf16.mxu0 0
    %7340 = vmatpush2.bf16.msra.mxu0 0
    %7341 = vmatprep.mubr.bf16.mxu0 0
    %7342 = vmatmul.mubr.bf16.gmra.mxu0 %v6842
    %v7343 = vpop.f32.mrf.mxu0
    %v7344 = vadd.f32 0.0, %v7343
    %v7345 = vpop.f32.mrf.mxu0
    %v7346 = vadd.f32 0.0, %v7345
    %v7347 = vpop.f32.mrf.mxu0
    %v7348 = vpop.f32.mrf.mxu0
    %7349 = vdwg.mxu0
    %7350 = vmatprep.subr.bf16.mxu0 %v7162
    %7351 = vmatpush1.bf16.msra.mxu0 %v7161
    %7352 = vmatprep.subr.bf16.mxu0 %v7154
    %7353 = vmatpush1.bf16.msra.mxu0 %v7153
    %7354 = vmatprep.subr.bf16.mxu0 %v7146
    %7355 = vmatpush1.bf16.msra.mxu0 %v7145
    %7356 = vmatprep.subr.bf16.mxu0 %v7138
    %7357 = vmatpush1.bf16.msra.mxu0 %v7137
    %7358 = vmatprep.subr.bf16.mxu0 %v7130
    %7359 = vmatpush1.bf16.msra.mxu0 %v7129
    %7360 = vmatprep.subr.bf16.mxu0 %v7122
    %7361 = vmatpush1.bf16.msra.mxu0 %v7121
    %7362 = vmatprep.subr.bf16.mxu0 %v7114
    %7363 = vmatpush1.bf16.msra.mxu0 %v7113
    %7364 = vmatprep.subr.bf16.mxu0 %v7106
    %7365 = vmatpush1.bf16.msra.mxu0 %v7105
    %7366 = vmatprep.subr.bf16.mxu0 0
    %7367 = vmatpush2.bf16.msra.mxu0 0
    %7368 = vmatprep.subr.bf16.mxu0 0
    %7369 = vmatpush2.bf16.msra.mxu0 0
    %7370 = vmatprep.subr.bf16.mxu0 0
    %7371 = vmatpush2.bf16.msra.mxu0 0
    %7372 = vmatprep.subr.bf16.mxu0 0
    %7373 = vmatpush2.bf16.msra.mxu0 0
    %7374 = vmatprep.subr.bf16.mxu0 0
    %7375 = vmatpush2.bf16.msra.mxu0 0
    %7376 = vmatprep.subr.bf16.mxu0 0
    %7377 = vmatpush2.bf16.msra.mxu0 0
    %7378 = vmatprep.subr.bf16.mxu0 0
    %7379 = vmatpush2.bf16.msra.mxu0 0
    %7380 = vmatprep.subr.bf16.mxu0 0
    %7381 = vmatpush2.bf16.msra.mxu0 0
    %7382 = vmatprep.mubr.bf16.mxu0 0
    %7383 = vmatmul.mubr.bf16.gmra.mxu0 %v6842
    %v7384 = vpop.f32.mrf.mxu0
    %v7385 = vadd.f32 0.0, %v7384
    %v7386 = vpop.f32.mrf.mxu0
    %v7387 = vadd.f32 0.0, %v7386
    %v7388 = vpop.f32.mrf.mxu0
    %v7389 = vpop.f32.mrf.mxu0
    %7390 = vdwg.mxu0
    %v7391 = vadd.f32 %v7262, %v6365
    %v7392 = vadd.f32 %v7264, %v6367
    %v7393 = vadd.f32 %v7303, %v6406
    %v7394 = vadd.f32 %v7305, %v6408
    %v7395 = vadd.f32 %v7391, %v120
    %v7396 = vadd.f32 %v7392, %v124
    %v7397 = vadd.f32 %v7393, %v128
    %v7398 = vadd.f32 %v7394, %v132
    %v7399 = vxor.u32 %v7395, 2147483648
    %v7400 = vmul.f32 %v7399, 1.442695
    %v7401 = vpow.pop %v7400
    %v7402 = vadd.f32 %v7401, 1.0
    %v7403 = vrcp.pop %v7402
    %v7404 = vmul.f32 1.0, %v7403
    %v7405 = vxor.u32 %v7396, 2147483648
    %v7406 = vmul.f32 %v7405, 1.442695
    %v7407 = vpow.pop %v7406
    %v7408 = vadd.f32 %v7407, 1.0
    %v7409 = vrcp.pop %v7408
    %v7410 = vmul.f32 1.0, %v7409
    %v7411 = vtanh.pop %v7397
    %v7412 = vxor.u32 %v7398, 2147483648
    %v7413 = vmul.f32 %v7412, 1.442695
    %v7414 = vpow.pop %v7413
    %v7415 = vadd.f32 %v7414, 1.0
    %v7416 = vrcp.pop %v7415
    %v7417 = vmul.f32 1.0, %v7416
    %v7418 = vmul.f32 %v7410, %v5997
    %v7419 = vmul.f32 %v7404, %v7411
    %v7420 = vadd.f32 %v7418, %v7419
    %v7421 = vtanh.pop %v7420
    %v7422 = vmul.f32 %v7417, %v7421
    %v7423 = vpack.c.bf16 %v7422, %v7422
    %v7424 = vld [vmem:[#allocation11] sm:$0xff]
    %v7425 = vld [vmem:[#allocation11 + $0x8] sm:$0xff]
    %v7426 = vld [vmem:[#allocation11 + $0x10] sm:$0xff]
    %v7427 = vld [vmem:[#allocation11 + $0x18] sm:$0xff]
    %v7428 = vld [vmem:[#allocation11 + $0x20] sm:$0xff]
    %v7429 = vld [vmem:[#allocation11 + $0x28] sm:$0xff]
    %v7430 = vld [vmem:[#allocation11 + $0x30] sm:$0xff]
    %v7431 = vld [vmem:[#allocation11 + $0x38] sm:$0xff]
    %v7432 = vld [vmem:[#allocation11 + $0x40] sm:$0xff]
    %v7433 = vld [vmem:[#allocation11 + $0x48] sm:$0xff]
    %v7434 = vld [vmem:[#allocation11 + $0x50] sm:$0xff]
    %v7435 = vld [vmem:[#allocation11 + $0x58] sm:$0xff]
    %v7436 = vld [vmem:[#allocation11 + $0x60] sm:$0xff]
    %v7437 = vld [vmem:[#allocation11 + $0x68] sm:$0xff]
    %v7438 = vld [vmem:[#allocation11 + $0x70] sm:$0xff]
    %v7439 = vld [vmem:[#allocation11 + $0x78] sm:$0xff]
    %v7440 = vld [vmem:[#allocation11 + $0x80] sm:$0xff]
    %v7441 = vld [vmem:[#allocation11 + $0x88] sm:$0xff]
    %v7442 = vld [vmem:[#allocation11 + $0x90] sm:$0xff]
    %v7443 = vld [vmem:[#allocation11 + $0x98] sm:$0xff]
    %v7444 = vld [vmem:[#allocation11 + $0xa0] sm:$0xff]
    %v7445 = vld [vmem:[#allocation11 + $0xa8] sm:$0xff]
    %v7446 = vld [vmem:[#allocation11 + $0xb0] sm:$0xff]
    %v7447 = vld [vmem:[#allocation11 + $0xb8] sm:$0xff]
    %v7448 = vld [vmem:[#allocation11 + $0xc0] sm:$0xff]
    %v7449 = vld [vmem:[#allocation11 + $0xc8] sm:$0xff]
    %v7450 = vld [vmem:[#allocation11 + $0xd0] sm:$0xff]
    %v7451 = vld [vmem:[#allocation11 + $0xd8] sm:$0xff]
    %v7452 = vld [vmem:[#allocation11 + $0xe0] sm:$0xff]
    %v7453 = vld [vmem:[#allocation11 + $0xe8] sm:$0xff]
    %v7454 = vld [vmem:[#allocation11 + $0xf0] sm:$0xff]
    %v7455 = vld [vmem:[#allocation11 + $0xf8] sm:$0xff]
    %v7456 = vld [vmem:[#allocation11 + $0x100] sm:$0xff]
    %v7457 = vld [vmem:[#allocation11 + $0x108] sm:$0xff]
    %v7458 = vld [vmem:[#allocation11 + $0x110] sm:$0xff]
    %v7459 = vld [vmem:[#allocation11 + $0x118] sm:$0xff]
    %v7460 = vld [vmem:[#allocation11 + $0x120] sm:$0xff]
    %v7461 = vld [vmem:[#allocation11 + $0x128] sm:$0xff]
    %v7462 = vld [vmem:[#allocation11 + $0x130] sm:$0xff]
    %v7463 = vld [vmem:[#allocation11 + $0x138] sm:$0xff]
    %v7464 = vld [vmem:[#allocation11 + $0x140] sm:$0xff]
    %v7465 = vld [vmem:[#allocation11 + $0x148] sm:$0xff]
    %v7466 = vld [vmem:[#allocation11 + $0x150] sm:$0xff]
    %v7467 = vld [vmem:[#allocation11 + $0x158] sm:$0xff]
    %v7468 = vld [vmem:[#allocation11 + $0x160] sm:$0xff]
    %v7469 = vld [vmem:[#allocation11 + $0x168] sm:$0xff]
    %v7470 = vld [vmem:[#allocation11 + $0x170] sm:$0xff]
    %v7471 = vld [vmem:[#allocation11 + $0x178] sm:$0xff]
    %v7520 = vunpack.c.l.b16 %v7424
    %v7521 = vunpack.c.h.b16 %v7424
    %v7522 = vunpack.c.l.b16 %v7425
    %v7523 = vunpack.c.h.b16 %v7425
    %v7524 = vunpack.c.l.b16 %v7426
    %v7525 = vunpack.c.h.b16 %v7426
    %v7526 = vunpack.c.l.b16 %v7427
    %v7527 = vunpack.c.h.b16 %v7427
    %v7528 = vunpack.c.l.b16 %v7428
    %v7529 = vunpack.c.h.b16 %v7428
    %v7530 = vunpack.c.l.b16 %v7429
    %v7531 = vunpack.c.h.b16 %v7429
    %v7532 = vunpack.c.l.b16 %v7430
    %v7533 = vunpack.c.h.b16 %v7430
    %v7534 = vunpack.c.l.b16 %v7431
    %v7535 = vunpack.c.h.b16 %v7431
    %v7536 = vunpack.c.l.b16 %v7432
    %v7537 = vunpack.c.h.b16 %v7432
    %v7538 = vunpack.c.l.b16 %v7433
    %v7539 = vunpack.c.h.b16 %v7433
    %v7540 = vunpack.c.l.b16 %v7434
    %v7541 = vunpack.c.h.b16 %v7434
    %v7542 = vunpack.c.l.b16 %v7435
    %v7543 = vunpack.c.h.b16 %v7435
    %v7544 = vunpack.c.l.b16 %v7436
    %v7545 = vunpack.c.h.b16 %v7436
    %v7546 = vunpack.c.l.b16 %v7437
    %v7547 = vunpack.c.h.b16 %v7437
    %v7548 = vunpack.c.l.b16 %v7438
    %v7549 = vunpack.c.h.b16 %v7438
    %v7550 = vunpack.c.l.b16 %v7439
    %v7551 = vunpack.c.h.b16 %v7439
    %v7552 = vunpack.c.l.b16 %v7440
    %v7553 = vunpack.c.h.b16 %v7440
    %v7554 = vunpack.c.l.b16 %v7441
    %v7555 = vunpack.c.h.b16 %v7441
    %v7556 = vunpack.c.l.b16 %v7442
    %v7557 = vunpack.c.h.b16 %v7442
    %v7558 = vunpack.c.l.b16 %v7443
    %v7559 = vunpack.c.h.b16 %v7443
    %v7560 = vunpack.c.l.b16 %v7444
    %v7561 = vunpack.c.h.b16 %v7444
    %v7562 = vunpack.c.l.b16 %v7445
    %v7563 = vunpack.c.h.b16 %v7445
    %v7564 = vunpack.c.l.b16 %v7446
    %v7565 = vunpack.c.h.b16 %v7446
    %v7566 = vunpack.c.l.b16 %v7447
    %v7567 = vunpack.c.h.b16 %v7447
    %v7568 = vunpack.c.l.b16 %v7448
    %v7569 = vunpack.c.h.b16 %v7448
    %v7570 = vunpack.c.l.b16 %v7449
    %v7571 = vunpack.c.h.b16 %v7449
    %v7572 = vunpack.c.l.b16 %v7450
    %v7573 = vunpack.c.h.b16 %v7450
    %v7574 = vunpack.c.l.b16 %v7451
    %v7575 = vunpack.c.h.b16 %v7451
    %v7576 = vunpack.c.l.b16 %v7452
    %v7577 = vunpack.c.h.b16 %v7452
    %v7578 = vunpack.c.l.b16 %v7453
    %v7579 = vunpack.c.h.b16 %v7453
    %v7580 = vunpack.c.l.b16 %v7454
    %v7581 = vunpack.c.h.b16 %v7454
    %v7582 = vunpack.c.l.b16 %v7455
    %v7583 = vunpack.c.h.b16 %v7455
    %v7584 = vunpack.c.l.b16 %v7456
    %v7585 = vunpack.c.h.b16 %v7456
    %v7586 = vunpack.c.l.b16 %v7457
    %v7587 = vunpack.c.h.b16 %v7457
    %v7588 = vunpack.c.l.b16 %v7458
    %v7589 = vunpack.c.h.b16 %v7458
    %v7590 = vunpack.c.l.b16 %v7459
    %v7591 = vunpack.c.h.b16 %v7459
    %v7592 = vunpack.c.l.b16 %v7460
    %v7593 = vunpack.c.h.b16 %v7460
    %v7594 = vunpack.c.l.b16 %v7461
    %v7595 = vunpack.c.h.b16 %v7461
    %v7596 = vunpack.c.l.b16 %v7462
    %v7597 = vunpack.c.h.b16 %v7462
    %v7598 = vunpack.c.l.b16 %v7463
    %v7599 = vunpack.c.h.b16 %v7463
    %v7600 = vunpack.c.l.b16 %v7464
    %v7601 = vunpack.c.h.b16 %v7464
    %v7602 = vunpack.c.l.b16 %v7465
    %v7603 = vunpack.c.h.b16 %v7465
    %v7604 = vunpack.c.l.b16 %v7466
    %v7605 = vunpack.c.h.b16 %v7466
    %v7606 = vunpack.c.l.b16 %v7467
    %v7607 = vunpack.c.h.b16 %v7467
    %v7608 = vunpack.c.l.b16 %v7468
    %v7609 = vunpack.c.h.b16 %v7468
    %v7610 = vunpack.c.l.b16 %v7469
    %v7611 = vunpack.c.h.b16 %v7469
    %v7612 = vunpack.c.l.b16 %v7470
    %v7613 = vunpack.c.h.b16 %v7470
    %v7614 = vunpack.c.l.b16 %v7471
    %v7615 = vunpack.c.h.b16 %v7471
    %v7616 = vpack.c.b16 %v7526, %v7520
    %v7617 = vpack.c.b16 %v7527, %v7521
    %v7618 = vpack.c.b16 %v7528, %v7522
    %v7619 = vpack.c.b16 %v7529, %v7523
    %v7620 = vpack.c.b16 %v7530, %v7524
    %v7621 = vpack.c.b16 %v7531, %v7525
    %v7622 = vpack.c.b16 %v7538, %v7532
    %v7623 = vpack.c.b16 %v7539, %v7533
    %v7624 = vpack.c.b16 %v7540, %v7534
    %v7625 = vpack.c.b16 %v7541, %v7535
    %v7626 = vpack.c.b16 %v7542, %v7536
    %v7627 = vpack.c.b16 %v7543, %v7537
    %v7628 = vpack.c.b16 %v7550, %v7544
    %v7629 = vpack.c.b16 %v7551, %v7545
    %v7630 = vpack.c.b16 %v7552, %v7546
    %v7631 = vpack.c.b16 %v7553, %v7547
    %v7632 = vpack.c.b16 %v7554, %v7548
    %v7633 = vpack.c.b16 %v7555, %v7549
    %v7634 = vpack.c.b16 %v7562, %v7556
    %v7635 = vpack.c.b16 %v7563, %v7557
    %v7636 = vpack.c.b16 %v7564, %v7558
    %v7637 = vpack.c.b16 %v7565, %v7559
    %v7638 = vpack.c.b16 %v7566, %v7560
    %v7639 = vpack.c.b16 %v7567, %v7561
    %v7640 = vpack.c.b16 %v7574, %v7568
    %v7641 = vpack.c.b16 %v7575, %v7569
    %v7642 = vpack.c.b16 %v7576, %v7570
    %v7643 = vpack.c.b16 %v7577, %v7571
    %v7644 = vpack.c.b16 %v7578, %v7572
    %v7645 = vpack.c.b16 %v7579, %v7573
    %v7646 = vpack.c.b16 %v7586, %v7580
    %v7647 = vpack.c.b16 %v7587, %v7581
    %v7648 = vpack.c.b16 %v7588, %v7582
    %v7649 = vpack.c.b16 %v7589, %v7583
    %v7650 = vpack.c.b16 %v7590, %v7584
    %v7651 = vpack.c.b16 %v7591, %v7585
    %v7652 = vpack.c.b16 %v7598, %v7592
    %v7653 = vpack.c.b16 %v7599, %v7593
    %v7654 = vpack.c.b16 %v7600, %v7594
    %v7655 = vpack.c.b16 %v7601, %v7595
    %v7656 = vpack.c.b16 %v7602, %v7596
    %v7657 = vpack.c.b16 %v7603, %v7597
    %v7658 = vpack.c.b16 %v7610, %v7604
    %v7659 = vpack.c.b16 %v7611, %v7605
    %v7660 = vpack.c.b16 %v7612, %v7606
    %v7661 = vpack.c.b16 %v7613, %v7607
    %v7662 = vpack.c.b16 %v7614, %v7608
    %v7663 = vpack.c.b16 %v7615, %v7609
    %7712 = vmatprep.subr.bf16.mxu0 %v7659
    %7713 = vmatpush1.bf16.msra.mxu0 %v7658
    %7714 = vmatprep.subr.bf16.mxu0 %v7653
    %7715 = vmatpush1.bf16.msra.mxu0 %v7652
    %7716 = vmatprep.subr.bf16.mxu0 %v7647
    %7717 = vmatpush1.bf16.msra.mxu0 %v7646
    %7718 = vmatprep.subr.bf16.mxu0 %v7641
    %7719 = vmatpush1.bf16.msra.mxu0 %v7640
    %7720 = vmatprep.subr.bf16.mxu0 %v7635
    %7721 = vmatpush1.bf16.msra.mxu0 %v7634
    %7722 = vmatprep.subr.bf16.mxu0 %v7629
    %7723 = vmatpush1.bf16.msra.mxu0 %v7628
    %7724 = vmatprep.subr.bf16.mxu0 %v7623
    %7725 = vmatpush1.bf16.msra.mxu0 %v7622
    %7726 = vmatprep.subr.bf16.mxu0 %v7617
    %7727 = vmatpush1.bf16.msra.mxu0 %v7616
    %7728 = vmatprep.subr.bf16.mxu0 0
    %7729 = vmatpush2.bf16.msra.mxu0 0
    %7730 = vmatprep.subr.bf16.mxu0 0
    %7731 = vmatpush2.bf16.msra.mxu0 0
    %7732 = vmatprep.subr.bf16.mxu0 0
    %7733 = vmatpush2.bf16.msra.mxu0 0
    %7734 = vmatprep.subr.bf16.mxu0 0
    %7735 = vmatpush2.bf16.msra.mxu0 0
    %7736 = vmatprep.subr.bf16.mxu0 0
    %7737 = vmatpush2.bf16.msra.mxu0 0
    %7738 = vmatprep.subr.bf16.mxu0 0
    %7739 = vmatpush2.bf16.msra.mxu0 0
    %7740 = vmatprep.subr.bf16.mxu0 0
    %7741 = vmatpush2.bf16.msra.mxu0 0
    %7742 = vmatprep.subr.bf16.mxu0 0
    %7743 = vmatpush2.bf16.msra.mxu0 0
    %7744 = vmatprep.mubr.bf16.mxu0 0
    %7745 = vmatmul.mubr.bf16.gmra.mxu0 %v7423
    %v7746 = vpop.f32.mrf.mxu0
    %v7747 = vadd.f32 0.0, %v7746
    %v7748 = vpop.f32.mrf.mxu0
    %v7749 = vadd.f32 0.0, %v7748
    %v7750 = vpop.f32.mrf.mxu0
    %v7751 = vpop.f32.mrf.mxu0
    %7752 = vdwg.mxu0
    %7753 = vmatprep.subr.bf16.mxu0 %v7661
    %7754 = vmatpush1.bf16.msra.mxu0 %v7660
    %7755 = vmatprep.subr.bf16.mxu0 %v7655
    %7756 = vmatpush1.bf16.msra.mxu0 %v7654
    %7757 = vmatprep.subr.bf16.mxu0 %v7649
    %7758 = vmatpush1.bf16.msra.mxu0 %v7648
    %7759 = vmatprep.subr.bf16.mxu0 %v7643
    %7760 = vmatpush1.bf16.msra.mxu0 %v7642
    %7761 = vmatprep.subr.bf16.mxu0 %v7637
    %7762 = vmatpush1.bf16.msra.mxu0 %v7636
    %7763 = vmatprep.subr.bf16.mxu0 %v7631
    %7764 = vmatpush1.bf16.msra.mxu0 %v7630
    %7765 = vmatprep.subr.bf16.mxu0 %v7625
    %7766 = vmatpush1.bf16.msra.mxu0 %v7624
    %7767 = vmatprep.subr.bf16.mxu0 %v7619
    %7768 = vmatpush1.bf16.msra.mxu0 %v7618
    %7769 = vmatprep.subr.bf16.mxu0 0
    %7770 = vmatpush2.bf16.msra.mxu0 0
    %7771 = vmatprep.subr.bf16.mxu0 0
    %7772 = vmatpush2.bf16.msra.mxu0 0
    %7773 = vmatprep.subr.bf16.mxu0 0
    %7774 = vmatpush2.bf16.msra.mxu0 0
    %7775 = vmatprep.subr.bf16.mxu0 0
    %7776 = vmatpush2.bf16.msra.mxu0 0
    %7777 = vmatprep.subr.bf16.mxu0 0
    %7778 = vmatpush2.bf16.msra.mxu0 0
    %7779 = vmatprep.subr.bf16.mxu0 0
    %7780 = vmatpush2.bf16.msra.mxu0 0
    %7781 = vmatprep.subr.bf16.mxu0 0
    %7782 = vmatpush2.bf16.msra.mxu0 0
    %7783 = vmatprep.subr.bf16.mxu0 0
    %7784 = vmatpush2.bf16.msra.mxu0 0
    %7785 = vmatprep.mubr.bf16.mxu0 0
    %7786 = vmatmul.mubr.bf16.gmra.mxu0 %v7423
    %v7787 = vpop.f32.mrf.mxu0
    %v7788 = vadd.f32 0.0, %v7787
    %v7789 = vpop.f32.mrf.mxu0
    %v7790 = vadd.f32 0.0, %v7789
    %v7791 = vpop.f32.mrf.mxu0
    %v7792 = vpop.f32.mrf.mxu0
    %7793 = vdwg.mxu0
    %7794 = vmatprep.subr.bf16.mxu0 %v7663
    %7795 = vmatpush1.bf16.msra.mxu0 %v7662
    %7796 = vmatprep.subr.bf16.mxu0 %v7657
    %7797 = vmatpush1.bf16.msra.mxu0 %v7656
    %7798 = vmatprep.subr.bf16.mxu0 %v7651
    %7799 = vmatpush1.bf16.msra.mxu0 %v7650
    %7800 = vmatprep.subr.bf16.mxu0 %v7645
    %7801 = vmatpush1.bf16.msra.mxu0 %v7644
    %7802 = vmatprep.subr.bf16.mxu0 %v7639
    %7803 = vmatpush1.bf16.msra.mxu0 %v7638
    %7804 = vmatprep.subr.bf16.mxu0 %v7633
    %7805 = vmatpush1.bf16.msra.mxu0 %v7632
    %7806 = vmatprep.subr.bf16.mxu0 %v7627
    %7807 = vmatpush1.bf16.msra.mxu0 %v7626
    %7808 = vmatprep.subr.bf16.mxu0 %v7621
    %7809 = vmatpush1.bf16.msra.mxu0 %v7620
    %7810 = vmatprep.subr.bf16.mxu0 0
    %7811 = vmatpush2.bf16.msra.mxu0 0
    %7812 = vmatprep.subr.bf16.mxu0 0
    %7813 = vmatpush2.bf16.msra.mxu0 0
    %7814 = vmatprep.subr.bf16.mxu0 0
    %7815 = vmatpush2.bf16.msra.mxu0 0
    %7816 = vmatprep.subr.bf16.mxu0 0
    %7817 = vmatpush2.bf16.msra.mxu0 0
    %7818 = vmatprep.subr.bf16.mxu0 0
    %7819 = vmatpush2.bf16.msra.mxu0 0
    %7820 = vmatprep.subr.bf16.mxu0 0
    %7821 = vmatpush2.bf16.msra.mxu0 0
    %7822 = vmatprep.subr.bf16.mxu0 0
    %7823 = vmatpush2.bf16.msra.mxu0 0
    %7824 = vmatprep.subr.bf16.mxu0 0
    %7825 = vmatpush2.bf16.msra.mxu0 0
    %7826 = vmatprep.mubr.bf16.mxu0 0
    %7827 = vmatmul.mubr.bf16.gmra.mxu0 %v7423
    %v7828 = vpop.f32.mrf.mxu0
    %v7829 = vadd.f32 0.0, %v7828
    %v7830 = vpop.f32.mrf.mxu0
    %v7831 = vadd.f32 0.0, %v7830
    %v7832 = vpop.f32.mrf.mxu0
    %v7833 = vpop.f32.mrf.mxu0
    %7834 = vdwg.mxu0
    %v7835 = vadd.f32 %v7747, %v114
    %7836 = vmax.xlane.f32.xlu0 %v7835
    %v7837 = vpop.xlane.xlu0 %7836
    %v7838 = vsub.f32 %v7835, %v7837
    %v7839 = vmul.f32 %v7838, 1.442695
    %v7840 = vpow.pop %v7839
    %7841 = vadd.xlane.f32.xlu0 %v7840
    %v7842 = vpop.xlane.xlu0 %7841
    %v7843 = vrcp.pop %v7842
    %v7844 = vmul.f32 %v7840, %v7843
    %s7845 = scalar_lea.vmem [#allocation15], 32
    %7846 = vst [vmem:[%s7845] sm:$0xff] %v7844
    %v7847 = vpack.c.bf16 %v7844, %v7844
    %v7848 = vld [vmem:[#allocation12] sm:$0xff]
    %v7849 = vld [vmem:[#allocation12 + $0x8] sm:$0xff]
    %v7850 = vld [vmem:[#allocation12 + $0x10] sm:$0xf]
    %v7851 = vld [vmem:[#allocation12 + $0x14] sm:$0xff]
    %v7852 = vld [vmem:[#allocation12 + $0x1c] sm:$0xff]
    %v7853 = vld [vmem:[#allocation12 + $0x24] sm:$0xf]
    %v7854 = vld [vmem:[#allocation12 + $0x28] sm:$0xff]
    %v7855 = vld [vmem:[#allocation12 + $0x30] sm:$0xff]
    %v7856 = vld [vmem:[#allocation12 + $0x38] sm:$0xf]
    %v7857 = vld [vmem:[#allocation12 + $0x3c] sm:$0xff]
    %v7858 = vld [vmem:[#allocation12 + $0x44] sm:$0xff]
    %v7859 = vld [vmem:[#allocation12 + $0x4c] sm:$0xf]
    %v7860 = vld [vmem:[#allocation12 + $0x50] sm:$0xff]
    %v7861 = vld [vmem:[#allocation12 + $0x58] sm:$0xff]
    %v7862 = vld [vmem:[#allocation12 + $0x60] sm:$0xf]
    %v7863 = vld [vmem:[#allocation12 + $0x64] sm:$0xff]
    %v7864 = vld [vmem:[#allocation12 + $0x6c] sm:$0xff]
    %v7865 = vld [vmem:[#allocation12 + $0x74] sm:$0xf]
    %v7866 = vld [vmem:[#allocation12 + $0x78] sm:$0xff]
    %v7867 = vld [vmem:[#allocation12 + $0x80] sm:$0xff]
    %v7868 = vld [vmem:[#allocation12 + $0x88] sm:$0xf]
    %v7869 = vld [vmem:[#allocation12 + $0x8c] sm:$0xff]
    %v7870 = vld [vmem:[#allocation12 + $0x94] sm:$0xff]
    %v7871 = vld [vmem:[#allocation12 + $0x9c] sm:$0xf]
    %v7872 = vld [vmem:[#allocation12 + $0xa0] sm:$0xff]
    %v7873 = vld [vmem:[#allocation12 + $0xa8] sm:$0xff]
    %v7874 = vld [vmem:[#allocation12 + $0xb0] sm:$0xf]
    %v7875 = vld [vmem:[#allocation12 + $0xb4] sm:$0xff]
    %v7876 = vld [vmem:[#allocation12 + $0xbc] sm:$0xff]
    %v7877 = vld [vmem:[#allocation12 + $0xc4] sm:$0xf]
    %v7878 = vld [vmem:[#allocation12 + $0xc8] sm:$0xff]
    %v7879 = vld [vmem:[#allocation12 + $0xd0] sm:$0xff]
    %v7880 = vld [vmem:[#allocation12 + $0xd8] sm:$0xf]
    %v7881 = vld [vmem:[#allocation12 + $0xdc] sm:$0xff]
    %v7882 = vld [vmem:[#allocation12 + $0xe4] sm:$0xff]
    %v7883 = vld [vmem:[#allocation12 + $0xec] sm:$0xf]
    %v7884 = vld [vmem:[#allocation12 + $0xf0] sm:$0xff]
    %v7885 = vld [vmem:[#allocation12 + $0xf8] sm:$0xff]
    %v7886 = vld [vmem:[#allocation12 + $0x100] sm:$0xf]
    %v7887 = vld [vmem:[#allocation12 + $0x104] sm:$0xff]
    %v7888 = vld [vmem:[#allocation12 + $0x10c] sm:$0xff]
    %v7889 = vld [vmem:[#allocation12 + $0x114] sm:$0xf]
    %v7890 = vld [vmem:[#allocation12 + $0x118] sm:$0xff]
    %v7891 = vld [vmem:[#allocation12 + $0x120] sm:$0xff]
    %v7892 = vld [vmem:[#allocation12 + $0x128] sm:$0xf]
    %v7893 = vld [vmem:[#allocation12 + $0x12c] sm:$0xff]
    %v7894 = vld [vmem:[#allocation12 + $0x134] sm:$0xff]
    %v7895 = vld [vmem:[#allocation12 + $0x13c] sm:$0xf]
    %v7944 = vunpack.c.l.b16 %v7848
    %v7945 = vunpack.c.h.b16 %v7848
    %v7946 = vunpack.c.l.b16 %v7849
    %v7947 = vunpack.c.h.b16 %v7849
    %v7948 = vunpack.c.l.b16 %v7850
    %v7949 = vunpack.c.l.b16 %v7851
    %v7950 = vunpack.c.h.b16 %v7851
    %v7951 = vunpack.c.l.b16 %v7852
    %v7952 = vunpack.c.h.b16 %v7852
    %v7953 = vunpack.c.l.b16 %v7853
    %v7954 = vunpack.c.l.b16 %v7854
    %v7955 = vunpack.c.h.b16 %v7854
    %v7956 = vunpack.c.l.b16 %v7855
    %v7957 = vunpack.c.h.b16 %v7855
    %v7958 = vunpack.c.l.b16 %v7856
    %v7959 = vunpack.c.l.b16 %v7857
    %v7960 = vunpack.c.h.b16 %v7857
    %v7961 = vunpack.c.l.b16 %v7858
    %v7962 = vunpack.c.h.b16 %v7858
    %v7963 = vunpack.c.l.b16 %v7859
    %v7964 = vunpack.c.l.b16 %v7860
    %v7965 = vunpack.c.h.b16 %v7860
    %v7966 = vunpack.c.l.b16 %v7861
    %v7967 = vunpack.c.h.b16 %v7861
    %v7968 = vunpack.c.l.b16 %v7862
    %v7969 = vunpack.c.l.b16 %v7863
    %v7970 = vunpack.c.h.b16 %v7863
    %v7971 = vunpack.c.l.b16 %v7864
    %v7972 = vunpack.c.h.b16 %v7864
    %v7973 = vunpack.c.l.b16 %v7865
    %v7974 = vunpack.c.l.b16 %v7866
    %v7975 = vunpack.c.h.b16 %v7866
    %v7976 = vunpack.c.l.b16 %v7867
    %v7977 = vunpack.c.h.b16 %v7867
    %v7978 = vunpack.c.l.b16 %v7868
    %v7979 = vunpack.c.l.b16 %v7869
    %v7980 = vunpack.c.h.b16 %v7869
    %v7981 = vunpack.c.l.b16 %v7870
    %v7982 = vunpack.c.h.b16 %v7870
    %v7983 = vunpack.c.l.b16 %v7871
    %v7984 = vunpack.c.l.b16 %v7872
    %v7985 = vunpack.c.h.b16 %v7872
    %v7986 = vunpack.c.l.b16 %v7873
    %v7987 = vunpack.c.h.b16 %v7873
    %v7988 = vunpack.c.l.b16 %v7874
    %v7989 = vunpack.c.l.b16 %v7875
    %v7990 = vunpack.c.h.b16 %v7875
    %v7991 = vunpack.c.l.b16 %v7876
    %v7992 = vunpack.c.h.b16 %v7876
    %v7993 = vunpack.c.l.b16 %v7877
    %v7994 = vunpack.c.l.b16 %v7878
    %v7995 = vunpack.c.h.b16 %v7878
    %v7996 = vunpack.c.l.b16 %v7879
    %v7997 = vunpack.c.h.b16 %v7879
    %v7998 = vunpack.c.l.b16 %v7880
    %v7999 = vunpack.c.l.b16 %v7881
    %v8000 = vunpack.c.h.b16 %v7881
    %v8001 = vunpack.c.l.b16 %v7882
    %v8002 = vunpack.c.h.b16 %v7882
    %v8003 = vunpack.c.l.b16 %v7883
    %v8004 = vunpack.c.l.b16 %v7884
    %v8005 = vunpack.c.h.b16 %v7884
    %v8006 = vunpack.c.l.b16 %v7885
    %v8007 = vunpack.c.h.b16 %v7885
    %v8008 = vunpack.c.l.b16 %v7886
    %v8009 = vunpack.c.l.b16 %v7887
    %v8010 = vunpack.c.h.b16 %v7887
    %v8011 = vunpack.c.l.b16 %v7888
    %v8012 = vunpack.c.h.b16 %v7888
    %v8013 = vunpack.c.l.b16 %v7889
    %v8014 = vunpack.c.l.b16 %v7890
    %v8015 = vunpack.c.h.b16 %v7890
    %v8016 = vunpack.c.l.b16 %v7891
    %v8017 = vunpack.c.h.b16 %v7891
    %v8018 = vunpack.c.l.b16 %v7892
    %v8019 = vunpack.c.l.b16 %v7893
    %v8020 = vunpack.c.h.b16 %v7893
    %v8021 = vunpack.c.l.b16 %v7894
    %v8022 = vunpack.c.h.b16 %v7894
    %v8023 = vunpack.c.l.b16 %v7895
    %v8024 = vpack.c.b16 %v7949, %v7944
    %v8025 = vpack.c.b16 %v7950, %v7945
    %v8026 = vpack.c.b16 %v7951, %v7946
    %v8027 = vpack.c.b16 %v7952, %v7947
    %v8028 = vpack.c.b16 %v7953, %v7948
    %v8029 = vpack.c.b16 %v7959, %v7954
    %v8030 = vpack.c.b16 %v7960, %v7955
    %v8031 = vpack.c.b16 %v7961, %v7956
    %v8032 = vpack.c.b16 %v7962, %v7957
    %v8033 = vpack.c.b16 %v7963, %v7958
    %v8034 = vpack.c.b16 %v7969, %v7964
    %v8035 = vpack.c.b16 %v7970, %v7965
    %v8036 = vpack.c.b16 %v7971, %v7966
    %v8037 = vpack.c.b16 %v7972, %v7967
    %v8038 = vpack.c.b16 %v7973, %v7968
    %v8039 = vpack.c.b16 %v7979, %v7974
    %v8040 = vpack.c.b16 %v7980, %v7975
    %v8041 = vpack.c.b16 %v7981, %v7976
    %v8042 = vpack.c.b16 %v7982, %v7977
    %v8043 = vpack.c.b16 %v7983, %v7978
    %v8044 = vpack.c.b16 %v7989, %v7984
    %v8045 = vpack.c.b16 %v7990, %v7985
    %v8046 = vpack.c.b16 %v7991, %v7986
    %v8047 = vpack.c.b16 %v7992, %v7987
    %v8048 = vpack.c.b16 %v7993, %v7988
    %v8049 = vpack.c.b16 %v7999, %v7994
    %v8050 = vpack.c.b16 %v8000, %v7995
    %v8051 = vpack.c.b16 %v8001, %v7996
    %v8052 = vpack.c.b16 %v8002, %v7997
    %v8053 = vpack.c.b16 %v8003, %v7998
    %v8054 = vpack.c.b16 %v8009, %v8004
    %v8055 = vpack.c.b16 %v8010, %v8005
    %v8056 = vpack.c.b16 %v8011, %v8006
    %v8057 = vpack.c.b16 %v8012, %v8007
    %v8058 = vpack.c.b16 %v8013, %v8008
    %v8059 = vpack.c.b16 %v8019, %v8014
    %v8060 = vpack.c.b16 %v8020, %v8015
    %v8061 = vpack.c.b16 %v8021, %v8016
    %v8062 = vpack.c.b16 %v8022, %v8017
    %v8063 = vpack.c.b16 %v8023, %v8018
    %8104 = vmatprep.subr.bf16.mxu0 %v8060
    %8105 = vmatpush1.bf16.msra.mxu0 %v8059
    %8106 = vmatprep.subr.bf16.mxu0 %v8055
    %8107 = vmatpush1.bf16.msra.mxu0 %v8054
    %8108 = vmatprep.subr.bf16.mxu0 %v8050
    %8109 = vmatpush1.bf16.msra.mxu0 %v8049
    %8110 = vmatprep.subr.bf16.mxu0 %v8045
    %8111 = vmatpush1.bf16.msra.mxu0 %v8044
    %8112 = vmatprep.subr.bf16.mxu0 %v8040
    %8113 = vmatpush1.bf16.msra.mxu0 %v8039
    %8114 = vmatprep.subr.bf16.mxu0 %v8035
    %8115 = vmatpush1.bf16.msra.mxu0 %v8034
    %8116 = vmatprep.subr.bf16.mxu0 %v8030
    %8117 = vmatpush1.bf16.msra.mxu0 %v8029
    %8118 = vmatprep.subr.bf16.mxu0 %v8025
    %8119 = vmatpush1.bf16.msra.mxu0 %v8024
    %8120 = vmatprep.subr.bf16.mxu0 0
    %8121 = vmatpush2.bf16.msra.mxu0 0
    %8122 = vmatprep.subr.bf16.mxu0 0
    %8123 = vmatpush2.bf16.msra.mxu0 0
    %8124 = vmatprep.subr.bf16.mxu0 0
    %8125 = vmatpush2.bf16.msra.mxu0 0
    %8126 = vmatprep.subr.bf16.mxu0 0
    %8127 = vmatpush2.bf16.msra.mxu0 0
    %8128 = vmatprep.subr.bf16.mxu0 0
    %8129 = vmatpush2.bf16.msra.mxu0 0
    %8130 = vmatprep.subr.bf16.mxu0 0
    %8131 = vmatpush2.bf16.msra.mxu0 0
    %8132 = vmatprep.subr.bf16.mxu0 0
    %8133 = vmatpush2.bf16.msra.mxu0 0
    %8134 = vmatprep.subr.bf16.mxu0 0
    %8135 = vmatpush2.bf16.msra.mxu0 0
    %8136 = vmatprep.mubr.bf16.mxu0 0
    %8137 = vmatmul.mubr.bf16.gmra.mxu0 %v7847
    %v8138 = vpop.f32.mrf.mxu0
    %v8139 = vadd.f32 0.0, %v8138
    %v8140 = vpop.f32.mrf.mxu0
    %v8141 = vadd.f32 0.0, %v8140
    %v8142 = vpop.f32.mrf.mxu0
    %v8143 = vpop.f32.mrf.mxu0
    %8144 = vdwg.mxu0
    %8145 = vmatprep.subr.bf16.mxu0 %v8062
    %8146 = vmatpush1.bf16.msra.mxu0 %v8061
    %8147 = vmatprep.subr.bf16.mxu0 %v8057
    %8148 = vmatpush1.bf16.msra.mxu0 %v8056
    %8149 = vmatprep.subr.bf16.mxu0 %v8052
    %8150 = vmatpush1.bf16.msra.mxu0 %v8051
    %8151 = vmatprep.subr.bf16.mxu0 %v8047
    %8152 = vmatpush1.bf16.msra.mxu0 %v8046
    %8153 = vmatprep.subr.bf16.mxu0 %v8042
    %8154 = vmatpush1.bf16.msra.mxu0 %v8041
    %8155 = vmatprep.subr.bf16.mxu0 %v8037
    %8156 = vmatpush1.bf16.msra.mxu0 %v8036
    %8157 = vmatprep.subr.bf16.mxu0 %v8032
    %8158 = vmatpush1.bf16.msra.mxu0 %v8031
    %8159 = vmatprep.subr.bf16.mxu0 %v8027
    %8160 = vmatpush1.bf16.msra.mxu0 %v8026
    %8161 = vmatprep.subr.bf16.mxu0 0
    %8162 = vmatpush2.bf16.msra.mxu0 0
    %8163 = vmatprep.subr.bf16.mxu0 0
    %8164 = vmatpush2.bf16.msra.mxu0 0
    %8165 = vmatprep.subr.bf16.mxu0 0
    %8166 = vmatpush2.bf16.msra.mxu0 0
    %8167 = vmatprep.subr.bf16.mxu0 0
    %8168 = vmatpush2.bf16.msra.mxu0 0
    %8169 = vmatprep.subr.bf16.mxu0 0
    %8170 = vmatpush2.bf16.msra.mxu0 0
    %8171 = vmatprep.subr.bf16.mxu0 0
    %8172 = vmatpush2.bf16.msra.mxu0 0
    %8173 = vmatprep.subr.bf16.mxu0 0
    %8174 = vmatpush2.bf16.msra.mxu0 0
    %8175 = vmatprep.subr.bf16.mxu0 0
    %8176 = vmatpush2.bf16.msra.mxu0 0
    %8177 = vmatprep.mubr.bf16.mxu0 0
    %8178 = vmatmul.mubr.bf16.gmra.mxu0 %v7847
    %v8179 = vpop.f32.mrf.mxu0
    %v8180 = vadd.f32 0.0, %v8179
    %v8181 = vpop.f32.mrf.mxu0
    %v8182 = vadd.f32 0.0, %v8181
    %v8183 = vpop.f32.mrf.mxu0
    %v8184 = vpop.f32.mrf.mxu0
    %8185 = vdwg.mxu0
    %8186 = vmatprep.subr.bf16.mxu0 0
    %8187 = vmatpush1.bf16.msra.mxu0 %v8063
    %8188 = vmatprep.subr.bf16.mxu0 0
    %8189 = vmatpush1.bf16.msra.mxu0 %v8058
    %8190 = vmatprep.subr.bf16.mxu0 0
    %8191 = vmatpush1.bf16.msra.mxu0 %v8053
    %8192 = vmatprep.subr.bf16.mxu0 0
    %8193 = vmatpush1.bf16.msra.mxu0 %v8048
    %8194 = vmatprep.subr.bf16.mxu0 0
    %8195 = vmatpush1.bf16.msra.mxu0 %v8043
    %8196 = vmatprep.subr.bf16.mxu0 0
    %8197 = vmatpush1.bf16.msra.mxu0 %v8038
    %8198 = vmatprep.subr.bf16.mxu0 0
    %8199 = vmatpush1.bf16.msra.mxu0 %v8033
    %8200 = vmatprep.subr.bf16.mxu0 0
    %8201 = vmatpush1.bf16.msra.mxu0 %v8028
    %8202 = vmatprep.subr.bf16.mxu0 0
    %8203 = vmatpush2.bf16.msra.mxu0 0
    %8204 = vmatprep.subr.bf16.mxu0 0
    %8205 = vmatpush2.bf16.msra.mxu0 0
    %8206 = vmatprep.subr.bf16.mxu0 0
    %8207 = vmatpush2.bf16.msra.mxu0 0
    %8208 = vmatprep.subr.bf16.mxu0 0
    %8209 = vmatpush2.bf16.msra.mxu0 0
    %8210 = vmatprep.subr.bf16.mxu0 0
    %8211 = vmatpush2.bf16.msra.mxu0 0
    %8212 = vmatprep.subr.bf16.mxu0 0
    %8213 = vmatpush2.bf16.msra.mxu0 0
    %8214 = vmatprep.subr.bf16.mxu0 0
    %8215 = vmatpush2.bf16.msra.mxu0 0
    %8216 = vmatprep.subr.bf16.mxu0 0
    %8217 = vmatpush2.bf16.msra.mxu0 0
    %8218 = vmatprep.mubr.bf16.mxu0 0
    %8219 = vmatmul.mubr.bf16.gmra.mxu0 %v7847
    %v8220 = vpop.f32.mrf.mxu0
    %v8221 = vadd.f32 0.0, %v8220
    %v8222 = vpop.f32.mrf.mxu0
    %v8223 = vpop.f32.mrf.mxu0
    %v8224 = vpop.f32.mrf.mxu0
    %8225 = vdwg.mxu0
    %v8226 = vadd.f32 %v7749, %v8139
    %s8227 = scalar_lea.vmem [#allocation14], 32
    %8228 = vst [vmem:[%s8227] sm:$0xff] %v8226
    %v8229 = vld [vmem:[#allocation2 + $0xa0] sm:$0xff]
    %v8230 = vld [vmem:[#allocation2 + $0xa8] sm:$0xff]
    %v8231 = vld [vmem:[#allocation2 + $0xb0] sm:$0xff]
    %v8232 = vld [vmem:[#allocation2 + $0xb8] sm:$0xff]
    %v8233 = vadd.f32 %v8229, %v8141
    %v8234 = vadd.f32 %v8230, %v8180
    %v8235 = vadd.f32 %v8231, %v8182
    %v8236 = vadd.f32 %v8232, %v8221
    %v8237 = vadd.f32 %v8233, %v7344
    %v8238 = vadd.f32 %v8234, %v7346
    %v8239 = vadd.f32 %v8235, %v7385
    %v8240 = vadd.f32 %v8236, %v7387
    %v8241 = vxor.u32 %v8237, 2147483648
    %v8242 = vmul.f32 %v8241, 1.442695
    %v8243 = vpow.pop %v8242
    %v8244 = vadd.f32 %v8243, 1.0
    %v8245 = vrcp.pop %v8244
    %v8246 = vmul.f32 1.0, %v8245
    %v8247 = vxor.u32 %v8238, 2147483648
    %v8248 = vmul.f32 %v8247, 1.442695
    %v8249 = vpow.pop %v8248
    %v8250 = vadd.f32 %v8249, 1.0
    %v8251 = vrcp.pop %v8250
    %v8252 = vmul.f32 1.0, %v8251
    %v8253 = vtanh.pop %v8239
    %v8254 = vxor.u32 %v8240, 2147483648
    %v8255 = vmul.f32 %v8254, 1.442695
    %v8256 = vpow.pop %v8255
    %v8257 = vadd.f32 %v8256, 1.0
    %v8258 = vrcp.pop %v8257
    %v8259 = vmul.f32 1.0, %v8258
    %v8260 = vmul.f32 %v8252, %v6839
    %v8261 = vmul.f32 %v8246, %v8253
    %v8262 = vadd.f32 %v8260, %v8261
    %v8263 = vtanh.pop %v8262
    %v8264 = vmul.f32 %v8259, %v8263
    %v8265 = vpack.c.bf16 %v8264, %v8264
    %v8266 = vld [vmem:[#allocation9] sm:$0xff]
    %v8267 = vld [vmem:[#allocation9 + $0x8] sm:$0xff]
    %v8268 = vld [vmem:[#allocation9 + $0x20] sm:$0xff]
    %v8269 = vld [vmem:[#allocation9 + $0x28] sm:$0xff]
    %v8270 = vld [vmem:[#allocation9 + $0x40] sm:$0xff]
    %v8271 = vld [vmem:[#allocation9 + $0x48] sm:$0xff]
    %v8272 = vld [vmem:[#allocation9 + $0x60] sm:$0xff]
    %v8273 = vld [vmem:[#allocation9 + $0x68] sm:$0xff]
    %v8274 = vld [vmem:[#allocation9 + $0x80] sm:$0xff]
    %v8275 = vld [vmem:[#allocation9 + $0x88] sm:$0xff]
    %v8276 = vld [vmem:[#allocation9 + $0xa0] sm:$0xff]
    %v8277 = vld [vmem:[#allocation9 + $0xa8] sm:$0xff]
    %v8278 = vld [vmem:[#allocation9 + $0xc0] sm:$0xff]
    %v8279 = vld [vmem:[#allocation9 + $0xc8] sm:$0xff]
    %v8280 = vld [vmem:[#allocation9 + $0xe0] sm:$0xff]
    %v8281 = vld [vmem:[#allocation9 + $0xe8] sm:$0xff]
    %v8282 = vld [vmem:[#allocation9 + $0x100] sm:$0xff]
    %v8283 = vld [vmem:[#allocation9 + $0x108] sm:$0xff]
    %v8284 = vld [vmem:[#allocation9 + $0x120] sm:$0xff]
    %v8285 = vld [vmem:[#allocation9 + $0x128] sm:$0xff]
    %v8286 = vld [vmem:[#allocation9 + $0x140] sm:$0xff]
    %v8287 = vld [vmem:[#allocation9 + $0x148] sm:$0xff]
    %v8288 = vld [vmem:[#allocation9 + $0x160] sm:$0xff]
    %v8289 = vld [vmem:[#allocation9 + $0x168] sm:$0xff]
    %v8290 = vld [vmem:[#allocation9 + $0x180] sm:$0xff]
    %v8291 = vld [vmem:[#allocation9 + $0x188] sm:$0xff]
    %v8292 = vld [vmem:[#allocation9 + $0x1a0] sm:$0xff]
    %v8293 = vld [vmem:[#allocation9 + $0x1a8] sm:$0xff]
    %v8294 = vld [vmem:[#allocation9 + $0x1c0] sm:$0xff]
    %v8295 = vld [vmem:[#allocation9 + $0x1c8] sm:$0xff]
    %v8296 = vld [vmem:[#allocation9 + $0x1e0] sm:$0xff]
    %v8297 = vld [vmem:[#allocation9 + $0x1e8] sm:$0xff]
    %v8330 = vunpack.c.l.b16 %v8266
    %v8331 = vunpack.c.h.b16 %v8266
    %v8332 = vunpack.c.l.b16 %v8267
    %v8333 = vunpack.c.h.b16 %v8267
    %v8334 = vunpack.c.l.b16 %v8268
    %v8335 = vunpack.c.h.b16 %v8268
    %v8336 = vunpack.c.l.b16 %v8269
    %v8337 = vunpack.c.h.b16 %v8269
    %v8338 = vunpack.c.l.b16 %v8270
    %v8339 = vunpack.c.h.b16 %v8270
    %v8340 = vunpack.c.l.b16 %v8271
    %v8341 = vunpack.c.h.b16 %v8271
    %v8342 = vunpack.c.l.b16 %v8272
    %v8343 = vunpack.c.h.b16 %v8272
    %v8344 = vunpack.c.l.b16 %v8273
    %v8345 = vunpack.c.h.b16 %v8273
    %v8346 = vunpack.c.l.b16 %v8274
    %v8347 = vunpack.c.h.b16 %v8274
    %v8348 = vunpack.c.l.b16 %v8275
    %v8349 = vunpack.c.h.b16 %v8275
    %v8350 = vunpack.c.l.b16 %v8276
    %v8351 = vunpack.c.h.b16 %v8276
    %v8352 = vunpack.c.l.b16 %v8277
    %v8353 = vunpack.c.h.b16 %v8277
    %v8354 = vunpack.c.l.b16 %v8278
    %v8355 = vunpack.c.h.b16 %v8278
    %v8356 = vunpack.c.l.b16 %v8279
    %v8357 = vunpack.c.h.b16 %v8279
    %v8358 = vunpack.c.l.b16 %v8280
    %v8359 = vunpack.c.h.b16 %v8280
    %v8360 = vunpack.c.l.b16 %v8281
    %v8361 = vunpack.c.h.b16 %v8281
    %v8362 = vunpack.c.l.b16 %v8282
    %v8363 = vunpack.c.h.b16 %v8282
    %v8364 = vunpack.c.l.b16 %v8283
    %v8365 = vunpack.c.h.b16 %v8283
    %v8366 = vunpack.c.l.b16 %v8284
    %v8367 = vunpack.c.h.b16 %v8284
    %v8368 = vunpack.c.l.b16 %v8285
    %v8369 = vunpack.c.h.b16 %v8285
    %v8370 = vunpack.c.l.b16 %v8286
    %v8371 = vunpack.c.h.b16 %v8286
    %v8372 = vunpack.c.l.b16 %v8287
    %v8373 = vunpack.c.h.b16 %v8287
    %v8374 = vunpack.c.l.b16 %v8288
    %v8375 = vunpack.c.h.b16 %v8288
    %v8376 = vunpack.c.l.b16 %v8289
    %v8377 = vunpack.c.h.b16 %v8289
    %v8378 = vunpack.c.l.b16 %v8290
    %v8379 = vunpack.c.h.b16 %v8290
    %v8380 = vunpack.c.l.b16 %v8291
    %v8381 = vunpack.c.h.b16 %v8291
    %v8382 = vunpack.c.l.b16 %v8292
    %v8383 = vunpack.c.h.b16 %v8292
    %v8384 = vunpack.c.l.b16 %v8293
    %v8385 = vunpack.c.h.b16 %v8293
    %v8386 = vunpack.c.l.b16 %v8294
    %v8387 = vunpack.c.h.b16 %v8294
    %v8388 = vunpack.c.l.b16 %v8295
    %v8389 = vunpack.c.h.b16 %v8295
    %v8390 = vunpack.c.l.b16 %v8296
    %v8391 = vunpack.c.h.b16 %v8296
    %v8392 = vunpack.c.l.b16 %v8297
    %v8393 = vunpack.c.h.b16 %v8297
    %v8394 = vpack.c.b16 %v8334, %v8330
    %v8395 = vpack.c.b16 %v8335, %v8331
    %v8396 = vpack.c.b16 %v8336, %v8332
    %v8397 = vpack.c.b16 %v8337, %v8333
    %v8398 = vpack.c.b16 %v8342, %v8338
    %v8399 = vpack.c.b16 %v8343, %v8339
    %v8400 = vpack.c.b16 %v8344, %v8340
    %v8401 = vpack.c.b16 %v8345, %v8341
    %v8402 = vpack.c.b16 %v8350, %v8346
    %v8403 = vpack.c.b16 %v8351, %v8347
    %v8404 = vpack.c.b16 %v8352, %v8348
    %v8405 = vpack.c.b16 %v8353, %v8349
    %v8406 = vpack.c.b16 %v8358, %v8354
    %v8407 = vpack.c.b16 %v8359, %v8355
    %v8408 = vpack.c.b16 %v8360, %v8356
    %v8409 = vpack.c.b16 %v8361, %v8357
    %v8410 = vpack.c.b16 %v8366, %v8362
    %v8411 = vpack.c.b16 %v8367, %v8363
    %v8412 = vpack.c.b16 %v8368, %v8364
    %v8413 = vpack.c.b16 %v8369, %v8365
    %v8414 = vpack.c.b16 %v8374, %v8370
    %v8415 = vpack.c.b16 %v8375, %v8371
    %v8416 = vpack.c.b16 %v8376, %v8372
    %v8417 = vpack.c.b16 %v8377, %v8373
    %v8418 = vpack.c.b16 %v8382, %v8378
    %v8419 = vpack.c.b16 %v8383, %v8379
    %v8420 = vpack.c.b16 %v8384, %v8380
    %v8421 = vpack.c.b16 %v8385, %v8381
    %v8422 = vpack.c.b16 %v8390, %v8386
    %v8423 = vpack.c.b16 %v8391, %v8387
    %v8424 = vpack.c.b16 %v8392, %v8388
    %v8425 = vpack.c.b16 %v8393, %v8389
    %8458 = vmatprep.subr.bf16.mxu0 %v8423
    %8459 = vmatpush1.bf16.msra.mxu0 %v8422
    %8460 = vmatprep.subr.bf16.mxu0 %v8419
    %8461 = vmatpush1.bf16.msra.mxu0 %v8418
    %8462 = vmatprep.subr.bf16.mxu0 %v8415
    %8463 = vmatpush1.bf16.msra.mxu0 %v8414
    %8464 = vmatprep.subr.bf16.mxu0 %v8411
    %8465 = vmatpush1.bf16.msra.mxu0 %v8410
    %8466 = vmatprep.subr.bf16.mxu0 %v8407
    %8467 = vmatpush1.bf16.msra.mxu0 %v8406
    %8468 = vmatprep.subr.bf16.mxu0 %v8403
    %8469 = vmatpush1.bf16.msra.mxu0 %v8402
    %8470 = vmatprep.subr.bf16.mxu0 %v8399
    %8471 = vmatpush1.bf16.msra.mxu0 %v8398
    %8472 = vmatprep.subr.bf16.mxu0 %v8395
    %8473 = vmatpush1.bf16.msra.mxu0 %v8394
    %8474 = vmatprep.subr.bf16.mxu0 0
    %8475 = vmatpush2.bf16.msra.mxu0 0
    %8476 = vmatprep.subr.bf16.mxu0 0
    %8477 = vmatpush2.bf16.msra.mxu0 0
    %8478 = vmatprep.subr.bf16.mxu0 0
    %8479 = vmatpush2.bf16.msra.mxu0 0
    %8480 = vmatprep.subr.bf16.mxu0 0
    %8481 = vmatpush2.bf16.msra.mxu0 0
    %8482 = vmatprep.subr.bf16.mxu0 0
    %8483 = vmatpush2.bf16.msra.mxu0 0
    %8484 = vmatprep.subr.bf16.mxu0 0
    %8485 = vmatpush2.bf16.msra.mxu0 0
    %8486 = vmatprep.subr.bf16.mxu0 0
    %8487 = vmatpush2.bf16.msra.mxu0 0
    %8488 = vmatprep.subr.bf16.mxu0 0
    %8489 = vmatpush2.bf16.msra.mxu0 0
    %8490 = vmatprep.mubr.bf16.mxu0 0
    %8491 = vmatmul.mubr.bf16.gmra.mxu0 %v8265
    %v8492 = vpop.f32.mrf.mxu0
    %v8493 = vadd.f32 0.0, %v8492
    %v8494 = vpop.f32.mrf.mxu0
    %v8495 = vadd.f32 0.0, %v8494
    %v8496 = vpop.f32.mrf.mxu0
    %v8497 = vpop.f32.mrf.mxu0
    %8498 = vdwg.mxu0
    %8499 = vmatprep.subr.bf16.mxu0 %v8425
    %8500 = vmatpush1.bf16.msra.mxu0 %v8424
    %8501 = vmatprep.subr.bf16.mxu0 %v8421
    %8502 = vmatpush1.bf16.msra.mxu0 %v8420
    %8503 = vmatprep.subr.bf16.mxu0 %v8417
    %8504 = vmatpush1.bf16.msra.mxu0 %v8416
    %8505 = vmatprep.subr.bf16.mxu0 %v8413
    %8506 = vmatpush1.bf16.msra.mxu0 %v8412
    %8507 = vmatprep.subr.bf16.mxu0 %v8409
    %8508 = vmatpush1.bf16.msra.mxu0 %v8408
    %8509 = vmatprep.subr.bf16.mxu0 %v8405
    %8510 = vmatpush1.bf16.msra.mxu0 %v8404
    %8511 = vmatprep.subr.bf16.mxu0 %v8401
    %8512 = vmatpush1.bf16.msra.mxu0 %v8400
    %8513 = vmatprep.subr.bf16.mxu0 %v8397
    %8514 = vmatpush1.bf16.msra.mxu0 %v8396
    %8515 = vmatprep.subr.bf16.mxu0 0
    %8516 = vmatpush2.bf16.msra.mxu0 0
    %8517 = vmatprep.subr.bf16.mxu0 0
    %8518 = vmatpush2.bf16.msra.mxu0 0
    %8519 = vmatprep.subr.bf16.mxu0 0
    %8520 = vmatpush2.bf16.msra.mxu0 0
    %8521 = vmatprep.subr.bf16.mxu0 0
    %8522 = vmatpush2.bf16.msra.mxu0 0
    %8523 = vmatprep.subr.bf16.mxu0 0
    %8524 = vmatpush2.bf16.msra.mxu0 0
    %8525 = vmatprep.subr.bf16.mxu0 0
    %8526 = vmatpush2.bf16.msra.mxu0 0
    %8527 = vmatprep.subr.bf16.mxu0 0
    %8528 = vmatpush2.bf16.msra.mxu0 0
    %8529 = vmatprep.subr.bf16.mxu0 0
    %8530 = vmatpush2.bf16.msra.mxu0 0
    %8531 = vmatprep.mubr.bf16.mxu0 0
    %8532 = vmatmul.mubr.bf16.gmra.mxu0 %v8265
    %v8533 = vpop.f32.mrf.mxu0
    %v8534 = vadd.f32 0.0, %v8533
    %v8535 = vpop.f32.mrf.mxu0
    %v8536 = vadd.f32 0.0, %v8535
    %v8537 = vpop.f32.mrf.mxu0
    %v8538 = vpop.f32.mrf.mxu0
    %8539 = vdwg.mxu0
    %v8540 = vadd.f32 %v8493, %v7788
    %v8541 = vadd.f32 %v8495, %v7790
    %v8542 = vadd.f32 %v8534, %v7829
    %v8543 = vadd.f32 %v8536, %v7831
    %v8544 = vadd.f32 %v8540, %v120
    %v8545 = vadd.f32 %v8541, %v124
    %v8546 = vadd.f32 %v8542, %v128
    %v8547 = vadd.f32 %v8543, %v132
    %v8548 = vxor.u32 %v8544, 2147483648
    %v8549 = vmul.f32 %v8548, 1.442695
    %v8550 = vpow.pop %v8549
    %v8551 = vadd.f32 %v8550, 1.0
    %v8552 = vrcp.pop %v8551
    %v8553 = vmul.f32 1.0, %v8552
    %v8554 = vxor.u32 %v8545, 2147483648
    %v8555 = vmul.f32 %v8554, 1.442695
    %v8556 = vpow.pop %v8555
    %v8557 = vadd.f32 %v8556, 1.0
    %v8558 = vrcp.pop %v8557
    %v8559 = vmul.f32 1.0, %v8558
    %v8560 = vtanh.pop %v8546
    %v8561 = vxor.u32 %v8547, 2147483648
    %v8562 = vmul.f32 %v8561, 1.442695
    %v8563 = vpow.pop %v8562
    %v8564 = vadd.f32 %v8563, 1.0
    %v8565 = vrcp.pop %v8564
    %v8566 = vmul.f32 1.0, %v8565
    %v8567 = vmul.f32 %v8559, %v7420
    %v8568 = vmul.f32 %v8553, %v8560
    %v8569 = vadd.f32 %v8567, %v8568
    %v8570 = vtanh.pop %v8569
    %v8571 = vmul.f32 %v8566, %v8570
    %v8572 = vpack.c.bf16 %v8571, %v8571
    %v8573 = vld [vmem:[#allocation11] sm:$0xff]
    %v8574 = vld [vmem:[#allocation11 + $0x18] sm:$0xff]
    %v8575 = vld [vmem:[#allocation11 + $0x30] sm:$0xff]
    %v8576 = vld [vmem:[#allocation11 + $0x48] sm:$0xff]
    %v8577 = vld [vmem:[#allocation11 + $0x60] sm:$0xff]
    %v8578 = vld [vmem:[#allocation11 + $0x78] sm:$0xff]
    %v8579 = vld [vmem:[#allocation11 + $0x90] sm:$0xff]
    %v8580 = vld [vmem:[#allocation11 + $0xa8] sm:$0xff]
    %v8581 = vld [vmem:[#allocation11 + $0xc0] sm:$0xff]
    %v8582 = vld [vmem:[#allocation11 + $0xd8] sm:$0xff]
    %v8583 = vld [vmem:[#allocation11 + $0xf0] sm:$0xff]
    %v8584 = vld [vmem:[#allocation11 + $0x108] sm:$0xff]
    %v8585 = vld [vmem:[#allocation11 + $0x120] sm:$0xff]
    %v8586 = vld [vmem:[#allocation11 + $0x138] sm:$0xff]
    %v8587 = vld [vmem:[#allocation11 + $0x150] sm:$0xff]
    %v8588 = vld [vmem:[#allocation11 + $0x168] sm:$0xff]
    %v8605 = vunpack.c.l.b16 %v8573
    %v8606 = vunpack.c.h.b16 %v8573
    %v8607 = vunpack.c.l.b16 %v8574
    %v8608 = vunpack.c.h.b16 %v8574
    %v8609 = vunpack.c.l.b16 %v8575
    %v8610 = vunpack.c.h.b16 %v8575
    %v8611 = vunpack.c.l.b16 %v8576
    %v8612 = vunpack.c.h.b16 %v8576
    %v8613 = vunpack.c.l.b16 %v8577
    %v8614 = vunpack.c.h.b16 %v8577
    %v8615 = vunpack.c.l.b16 %v8578
    %v8616 = vunpack.c.h.b16 %v8578
    %v8617 = vunpack.c.l.b16 %v8579
    %v8618 = vunpack.c.h.b16 %v8579
    %v8619 = vunpack.c.l.b16 %v8580
    %v8620 = vunpack.c.h.b16 %v8580
    %v8621 = vunpack.c.l.b16 %v8581
    %v8622 = vunpack.c.h.b16 %v8581
    %v8623 = vunpack.c.l.b16 %v8582
    %v8624 = vunpack.c.h.b16 %v8582
    %v8625 = vunpack.c.l.b16 %v8583
    %v8626 = vunpack.c.h.b16 %v8583
    %v8627 = vunpack.c.l.b16 %v8584
    %v8628 = vunpack.c.h.b16 %v8584
    %v8629 = vunpack.c.l.b16 %v8585
    %v8630 = vunpack.c.h.b16 %v8585
    %v8631 = vunpack.c.l.b16 %v8586
    %v8632 = vunpack.c.h.b16 %v8586
    %v8633 = vunpack.c.l.b16 %v8587
    %v8634 = vunpack.c.h.b16 %v8587
    %v8635 = vunpack.c.l.b16 %v8588
    %v8636 = vunpack.c.h.b16 %v8588
    %v8637 = vpack.c.b16 %v8607, %v8605
    %v8638 = vpack.c.b16 %v8608, %v8606
    %v8639 = vpack.c.b16 %v8611, %v8609
    %v8640 = vpack.c.b16 %v8612, %v8610
    %v8641 = vpack.c.b16 %v8615, %v8613
    %v8642 = vpack.c.b16 %v8616, %v8614
    %v8643 = vpack.c.b16 %v8619, %v8617
    %v8644 = vpack.c.b16 %v8620, %v8618
    %v8645 = vpack.c.b16 %v8623, %v8621
    %v8646 = vpack.c.b16 %v8624, %v8622
    %v8647 = vpack.c.b16 %v8627, %v8625
    %v8648 = vpack.c.b16 %v8628, %v8626
    %v8649 = vpack.c.b16 %v8631, %v8629
    %v8650 = vpack.c.b16 %v8632, %v8630
    %v8651 = vpack.c.b16 %v8635, %v8633
    %v8652 = vpack.c.b16 %v8636, %v8634
    %8669 = vmatprep.subr.bf16.mxu0 %v8652
    %8670 = vmatpush1.bf16.msra.mxu0 %v8651
    %8671 = vmatprep.subr.bf16.mxu0 %v8650
    %8672 = vmatpush1.bf16.msra.mxu0 %v8649
    %8673 = vmatprep.subr.bf16.mxu0 %v8648
    %8674 = vmatpush1.bf16.msra.mxu0 %v8647
    %8675 = vmatprep.subr.bf16.mxu0 %v8646
    %8676 = vmatpush1.bf16.msra.mxu0 %v8645
    %8677 = vmatprep.subr.bf16.mxu0 %v8644
    %8678 = vmatpush1.bf16.msra.mxu0 %v8643
    %8679 = vmatprep.subr.bf16.mxu0 %v8642
    %8680 = vmatpush1.bf16.msra.mxu0 %v8641
    %8681 = vmatprep.subr.bf16.mxu0 %v8640
    %8682 = vmatpush1.bf16.msra.mxu0 %v8639
    %8683 = vmatprep.subr.bf16.mxu0 %v8638
    %8684 = vmatpush1.bf16.msra.mxu0 %v8637
    %8685 = vmatprep.subr.bf16.mxu0 0
    %8686 = vmatpush2.bf16.msra.mxu0 0
    %8687 = vmatprep.subr.bf16.mxu0 0
    %8688 = vmatpush2.bf16.msra.mxu0 0
    %8689 = vmatprep.subr.bf16.mxu0 0
    %8690 = vmatpush2.bf16.msra.mxu0 0
    %8691 = vmatprep.subr.bf16.mxu0 0
    %8692 = vmatpush2.bf16.msra.mxu0 0
    %8693 = vmatprep.subr.bf16.mxu0 0
    %8694 = vmatpush2.bf16.msra.mxu0 0
    %8695 = vmatprep.subr.bf16.mxu0 0
    %8696 = vmatpush2.bf16.msra.mxu0 0
    %8697 = vmatprep.subr.bf16.mxu0 0
    %8698 = vmatpush2.bf16.msra.mxu0 0
    %8699 = vmatprep.subr.bf16.mxu0 0
    %8700 = vmatpush2.bf16.msra.mxu0 0
    %8701 = vmatprep.mubr.bf16.mxu0 0
    %8702 = vmatmul.mubr.bf16.gmra.mxu0 %v8572
    %v8703 = vpop.f32.mrf.mxu0
    %v8704 = vadd.f32 0.0, %v8703
    %v8705 = vpop.f32.mrf.mxu0
    %v8706 = vadd.f32 0.0, %v8705
    %v8707 = vpop.f32.mrf.mxu0
    %v8708 = vpop.f32.mrf.mxu0
    %8709 = vdwg.mxu0
    %v8710 = vadd.f32 %v8704, %v114
    %8711 = vmax.xlane.f32.xlu0 %v8710
    %v8712 = vpop.xlane.xlu0 %8711
    %v8713 = vsub.f32 %v8710, %v8712
    %v8714 = vmul.f32 %v8713, 1.442695
    %v8715 = vpow.pop %v8714
    %8716 = vadd.xlane.f32.xlu0 %v8715
    %v8717 = vpop.xlane.xlu0 %8716
    %v8718 = vrcp.pop %v8717
    %v8719 = vmul.f32 %v8715, %v8718
    %s8720 = scalar_lea.vmem [#allocation15], 40
    %8721 = vst [vmem:[%s8720] sm:$0xff] %v8719
    %v8722 = vpack.c.bf16 %v8719, %v8719
    %v8723 = vld [vmem:[#allocation12] sm:$0xff]
    %v8724 = vld [vmem:[#allocation12 + $0x14] sm:$0xff]
    %v8725 = vld [vmem:[#allocation12 + $0x28] sm:$0xff]
    %v8726 = vld [vmem:[#allocation12 + $0x3c] sm:$0xff]
    %v8727 = vld [vmem:[#allocation12 + $0x50] sm:$0xff]
    %v8728 = vld [vmem:[#allocation12 + $0x64] sm:$0xff]
    %v8729 = vld [vmem:[#allocation12 + $0x78] sm:$0xff]
    %v8730 = vld [vmem:[#allocation12 + $0x8c] sm:$0xff]
    %v8731 = vld [vmem:[#allocation12 + $0xa0] sm:$0xff]
    %v8732 = vld [vmem:[#allocation12 + $0xb4] sm:$0xff]
    %v8733 = vld [vmem:[#allocation12 + $0xc8] sm:$0xff]
    %v8734 = vld [vmem:[#allocation12 + $0xdc] sm:$0xff]
    %v8735 = vld [vmem:[#allocation12 + $0xf0] sm:$0xff]
    %v8736 = vld [vmem:[#allocation12 + $0x104] sm:$0xff]
    %v8737 = vld [vmem:[#allocation12 + $0x118] sm:$0xff]
    %v8738 = vld [vmem:[#allocation12 + $0x12c] sm:$0xff]
    %v8755 = vunpack.c.l.b16 %v8723
    %v8756 = vunpack.c.h.b16 %v8723
    %v8757 = vunpack.c.l.b16 %v8724
    %v8758 = vunpack.c.h.b16 %v8724
    %v8759 = vunpack.c.l.b16 %v8725
    %v8760 = vunpack.c.h.b16 %v8725
    %v8761 = vunpack.c.l.b16 %v8726
    %v8762 = vunpack.c.h.b16 %v8726
    %v8763 = vunpack.c.l.b16 %v8727
    %v8764 = vunpack.c.h.b16 %v8727
    %v8765 = vunpack.c.l.b16 %v8728
    %v8766 = vunpack.c.h.b16 %v8728
    %v8767 = vunpack.c.l.b16 %v8729
    %v8768 = vunpack.c.h.b16 %v8729
    %v8769 = vunpack.c.l.b16 %v8730
    %v8770 = vunpack.c.h.b16 %v8730
    %v8771 = vunpack.c.l.b16 %v8731
    %v8772 = vunpack.c.h.b16 %v8731
    %v8773 = vunpack.c.l.b16 %v8732
    %v8774 = vunpack.c.h.b16 %v8732
    %v8775 = vunpack.c.l.b16 %v8733
    %v8776 = vunpack.c.h.b16 %v8733
    %v8777 = vunpack.c.l.b16 %v8734
    %v8778 = vunpack.c.h.b16 %v8734
    %v8779 = vunpack.c.l.b16 %v8735
    %v8780 = vunpack.c.h.b16 %v8735
    %v8781 = vunpack.c.l.b16 %v8736
    %v8782 = vunpack.c.h.b16 %v8736
    %v8783 = vunpack.c.l.b16 %v8737
    %v8784 = vunpack.c.h.b16 %v8737
    %v8785 = vunpack.c.l.b16 %v8738
    %v8786 = vunpack.c.h.b16 %v8738
    %v8787 = vpack.c.b16 %v8757, %v8755
    %v8788 = vpack.c.b16 %v8758, %v8756
    %v8789 = vpack.c.b16 %v8761, %v8759
    %v8790 = vpack.c.b16 %v8762, %v8760
    %v8791 = vpack.c.b16 %v8765, %v8763
    %v8792 = vpack.c.b16 %v8766, %v8764
    %v8793 = vpack.c.b16 %v8769, %v8767
    %v8794 = vpack.c.b16 %v8770, %v8768
    %v8795 = vpack.c.b16 %v8773, %v8771
    %v8796 = vpack.c.b16 %v8774, %v8772
    %v8797 = vpack.c.b16 %v8777, %v8775
    %v8798 = vpack.c.b16 %v8778, %v8776
    %v8799 = vpack.c.b16 %v8781, %v8779
    %v8800 = vpack.c.b16 %v8782, %v8780
    %v8801 = vpack.c.b16 %v8785, %v8783
    %v8802 = vpack.c.b16 %v8786, %v8784
    %8819 = vmatprep.subr.bf16.mxu0 %v8802
    %8820 = vmatpush1.bf16.msra.mxu0 %v8801
    %8821 = vmatprep.subr.bf16.mxu0 %v8800
    %8822 = vmatpush1.bf16.msra.mxu0 %v8799
    %8823 = vmatprep.subr.bf16.mxu0 %v8798
    %8824 = vmatpush1.bf16.msra.mxu0 %v8797
    %8825 = vmatprep.subr.bf16.mxu0 %v8796
    %8826 = vmatpush1.bf16.msra.mxu0 %v8795
    %8827 = vmatprep.subr.bf16.mxu0 %v8794
    %8828 = vmatpush1.bf16.msra.mxu0 %v8793
    %8829 = vmatprep.subr.bf16.mxu0 %v8792
    %8830 = vmatpush1.bf16.msra.mxu0 %v8791
    %8831 = vmatprep.subr.bf16.mxu0 %v8790
    %8832 = vmatpush1.bf16.msra.mxu0 %v8789
    %8833 = vmatprep.subr.bf16.mxu0 %v8788
    %8834 = vmatpush1.bf16.msra.mxu0 %v8787
    %8835 = vmatprep.subr.bf16.mxu0 0
    %8836 = vmatpush2.bf16.msra.mxu0 0
    %8837 = vmatprep.subr.bf16.mxu0 0
    %8838 = vmatpush2.bf16.msra.mxu0 0
    %8839 = vmatprep.subr.bf16.mxu0 0
    %8840 = vmatpush2.bf16.msra.mxu0 0
    %8841 = vmatprep.subr.bf16.mxu0 0
    %8842 = vmatpush2.bf16.msra.mxu0 0
    %8843 = vmatprep.subr.bf16.mxu0 0
    %8844 = vmatpush2.bf16.msra.mxu0 0
    %8845 = vmatprep.subr.bf16.mxu0 0
    %8846 = vmatpush2.bf16.msra.mxu0 0
    %8847 = vmatprep.subr.bf16.mxu0 0
    %8848 = vmatpush2.bf16.msra.mxu0 0
    %8849 = vmatprep.subr.bf16.mxu0 0
    %8850 = vmatpush2.bf16.msra.mxu0 0
    %8851 = vmatprep.mubr.bf16.mxu0 0
    %8852 = vmatmul.mubr.bf16.gmra.mxu0 %v8722
    %v8853 = vpop.f32.mrf.mxu0
    %v8854 = vadd.f32 0.0, %v8853
    %v8855 = vpop.f32.mrf.mxu0
    %v8856 = vpop.f32.mrf.mxu0
    %v8857 = vpop.f32.mrf.mxu0
    %8858 = vdwg.mxu0
    %v8859 = vadd.f32 %v8706, %v8854
    %s8860 = scalar_lea.vmem [#allocation14], 40
    %8861 = vst [vmem:[%s8860] sm:$0xff] %v8859
    // Predicated region
    $region58: #{tpu_custom_call.1} parent=1 // pred_check
      _
    $region59: #{tpu_custom_call.1} parent=1 // pred_check_branch
      %8863 = sbr.rel (0) target = $region61
    $region60: #{tpu_custom_call.1} parent=1 // pred_region
      %s8865 = ssub.s32 768, 768
      %8866 = vsyncadd [#allocation5], %s8865
      %s8867 = sshll.u32 [#allocation14], 4
      %s8868 = int_to_ptr.vmem [resolvable:$true] %s8867
      %8873 = dma.vmem_to_hbm [thread:$0]  %s8868, 768, %s8, [#allocation5], 128, 128, 8
    $region61: #{tpu_custom_call.1} parent=1 // pred_fallthru
      _
    // Predicated region
    $region62: #{tpu_custom_call.1} parent=1 // pred_check
      _
    $region63: #{tpu_custom_call.1} parent=1 // pred_check_branch
      %8875 = sbr.rel (0) target = $region65
    $region64: #{tpu_custom_call.1} parent=1 // pred_region
      %s8877 = ssub.s32 768, 768
      %8878 = vsyncadd [#allocation16], %s8877
      %s8879 = sshll.u32 [#allocation15], 4
      %s8880 = int_to_ptr.vmem [resolvable:$true] %s8879
      %8885 = dma.vmem_to_hbm [thread:$0]  %s8880, 768, %s9, [#allocation16], 128, 128, 8
    $region65: #{tpu_custom_call.1} parent=1 // pred_fallthru
      _
    // Predicated region
    $region66: #{tpu_custom_call.1} parent=1 // pred_check
      _
    $region67: #{tpu_custom_call.1} parent=1 // pred_check_branch
      %8887 = sbr.rel (0) target = $region69
    $region68: #{tpu_custom_call.1} parent=1 // pred_region
      %8888 = dma.done [#allocation5], 768
    $region69: #{tpu_custom_call.1} parent=1 // pred_fallthru
      _
    // Predicated region
    $region70: #{tpu_custom_call.1} parent=1 // pred_check
      _
    $region71: #{tpu_custom_call.1} parent=1 // pred_check_branch
      %8890 = sbr.rel (0) target = $region73
    $region72: #{tpu_custom_call.1} parent=1 // pred_region
      %8891 = dma.done [#allocation16], 768
    $region73: #{tpu_custom_call.1} parent=1 // pred_fallthru
      _
    %8892 = vsyncpa [#allocation4], 1
    %8893 = vsyncpa [#allocation7], 1
    %8894 = vsyncpa [#allocation10], 1
    %8895 = vsyncpa [#allocation13], 1
    %8896 = vsyncpa [#allocation5], 1
    %8897 = vsyncpa [#allocation16], 1

</llo_original>
